<compile_context>
chip_gen: v6e
topology: v6e:2x2x1
jax: 0.10.0
libtpu: 0.0.40
codegen_flags: <defaults>
</compile_context>

<pallas_src>
import functools
import math

import jax
import jax.numpy as jnp
from jax import lax
from jax.experimental import pallas as pl
from jax.experimental.pallas import tpu as pltpu


# --------------------------------------------------------------------------
# TPU-generation profile
# --------------------------------------------------------------------------
def _tpu_profile():
    """Returns (preferred Cout tile, scoped vmem_limit_bytes)."""
    kind = ""
    try:
        kind = jax.devices()[0].device_kind.lower()
    except Exception:
        pass
    vmem_cap = None
    try:
        vmem_cap = int(pltpu.get_tpu_info().vmem_capacity_bytes)
    except Exception:
        pass
    small_vmem = (vmem_cap is not None and vmem_cap <= 80 * 1024 * 1024) or "v7" in kind
    if small_vmem:                              # v7x-class: 64 MiB VMEM per TC
        return 128, 44 * 1024 * 1024
    if "v6" in kind:                            # v6e: 256-wide MXU N, 128 MiB VMEM
        return 256, 80 * 1024 * 1024
    return 128, 64 * 1024 * 1024                # v5e + default


def _round_up(v, m):
    return (v + m - 1) // m * m


# --------------------------------------------------------------------------
# Fused kernels: 3x3 conv (folded-K) + InstanceNorm [+ residual] + ReLU
# --------------------------------------------------------------------------
def _conv_instnorm(x_ref, w_ref, mask_ref, row_taps, M, inv_count):
    """(M, ct) f32 InstanceNorm'd 3x3-conv output (pre-ReLU)."""
    acc = None
    for r, taps in enumerate(row_taps):        # 3 kernel rows, statically unrolled
        # fold the 3 taps of this kernel row into the contraction dim: (M, 3*Cin)
        slab = jnp.concatenate(
            [x_ref[0, ph, pl.ds(off, M), :] for ph, off in taps], axis=-1)
        d = jnp.dot(slab, w_ref[r], preferred_element_type=jnp.float32)
        acc = d if acc is None else acc + d
    # conv bias omitted: it cancels exactly under InstanceNorm.
    mask = mask_ref[...]                       # (M, 1) f32, 1 = real output column
    mean = jnp.sum(acc * mask, axis=0, keepdims=True) * inv_count
    cent = (acc - mean) * mask
    var = jnp.sum(cent * cent, axis=0, keepdims=True) * inv_count
    return (acc - mean) * lax.rsqrt(var + 1e-5)   # PyTorch IN: biased var, eps 1e-5


def _k_conv_in_relu(x_ref, w_ref, mask_ref, o_ref, *, row_taps, M, inv_count):
    y = _conv_instnorm(x_ref, w_ref, mask_ref, row_taps, M, inv_count)
    o_ref[0] = jnp.maximum(y, 0.0).astype(o_ref.dtype)


def _k_conv_in_relu_flat(x_ref, w_ref, mask_ref, o_ref, *,
                         row_taps, M, inv_count, head):
    # Emit the stage-1 result directly in the zero-padded flat layout that the
    # following stride-1 stage reads: [head zeros | masked rows | tail zeros].
    # The masked (zeroed) garbage columns double as the zero halo.
    y = _conv_instnorm(x_ref, w_ref, mask_ref, row_taps, M, inv_count)
    y = jnp.maximum(y, 0.0) * mask_ref[...]
    F, ct = o_ref.shape[1], o_ref.shape[2]
    tail = F - head - M
    o_ref[0, pl.ds(0, head), :] = jnp.zeros((head, ct), o_ref.dtype)
    o_ref[0, pl.ds(head, M), :] = y.astype(o_ref.dtype)
    o_ref[0, pl.ds(head + M, tail), :] = jnp.zeros((tail, ct), o_ref.dtype)


def _k_conv_in_add_relu(x_ref, w_ref, mask_ref, id_ref, o_ref, *,
                        row_taps, M, inv_count):
    y = _conv_instnorm(x_ref, w_ref, mask_ref, row_taps, M, inv_count)
    y = y + id_ref[0].astype(jnp.float32)          # bf16 identity, f32 add
    o_ref[0] = jnp.maximum(y, 0.0).astype(o_ref.dtype)


def _k_conv_in_ds_add_relu(x_ref, w_ref, mask_ref, id_ref, wd_ref, bd_ref, o_ref,
                           *, row_taps, M, inv_count):
    y = _conv_instnorm(x_ref, w_ref, mask_ref, row_taps, M, inv_count)
    ident = jnp.dot(id_ref[0], wd_ref[...],
                    preferred_element_type=jnp.float32) + bd_ref[...]
    y = y + ident                                   # fused 1x1-downsample identity
    o_ref[0] = jnp.maximum(y, 0.0).astype(o_ref.dtype)


# --------------------------------------------------------------------------
# Layout prep
# --------------------------------------------------------------------------
def _prep_input(x_nhwc, stride):
    """Zero-pad (halo 1), polyphase-split by stride, flatten rows (bf16).

    Returns x_flat (N, stride^2, Hq*Wq, C), Hq, Wq.
    """
    xp = jnp.pad(x_nhwc.astype(jnp.bfloat16), ((0, 0), (1, 1), (1, 1), (0, 0)))
    N, Hp, Wp, C = xp.shape
    if stride == 1:
        return xp.reshape(N, 1, Hp * Wp, C), Hp, Wp
    phases = []
    for pr in range(stride):
        for pc in range(stride):
            phases.append(xp[:, pr::stride, pc::stride, :])
    Hq = min(p.shape[1] for p in phases)
    Wq = min(p.shape[2] for p in phases)
    phases = [p[:, :Hq, :Wq, :] for p in phases]
    return (jnp.stack(phases, axis=1).reshape(N, stride * stride, Hq * Wq, C),
            Hq, Wq)


def _row_taps(stride, Wq):
    """(phase, flat offset) of each 3x3 tap, grouped by kernel row (kh)."""
    rows = []
    for kh in range(3):
        rows.append(tuple(((kh % stride) * stride + (kw % stride),
                           (kh // stride) * Wq + (kw // stride))
                          for kw in range(3)))
    return tuple(rows)


# --------------------------------------------------------------------------
# One fused conv stage (pallas_call plumbing)
# --------------------------------------------------------------------------
def _conv_stage(x_flat, Wq, Ho, Wo, w, *, stride, residual=None,
                ds_w=None, ds_b=None, flat_out=None, base_off=0,
                out_dtype=jnp.float32):
    """Fused conv3x3(pad=1) + InstanceNorm (+ residual / 1x1-downsample) + ReLU.

    x_flat:   (N, P, F0, Cin) bf16 polyphase-flattened zero-padded input.
    w:        (3, 3, Cin, Cout) with Cout already a multiple of 128.
    residual: (N, M, Cres) bf16; direct add when ds_w is None, else fed through
              the fused 1x1 downsample (ds_w: (Cres, Cout), ds_b: (Cout,)).
    flat_out: None -> output (N, M, Cout); (F_out, head) -> output written in
              the zero-padded flat layout the next stride-1 stage consumes.
    base_off: flat offset at which the logical padded plane starts in x_flat.
    """
    N, P, F0, Cin = x_flat.shape
    Cout = w.shape[-1]
    M = Ho * Wq
    row_taps = tuple(tuple((ph, off + base_off) for ph, off in row)
                     for row in _row_taps(stride, Wq))
    max_off = max(off for row in row_taps for _, off in row)
    slack = max(0, max_off + M - F0)               # tight tap-overrun pad
    if slack:
        x_flat = jnp.pad(x_flat, ((0, 0), (0, 0), (0, slack), (0, 0)))
    F = F0 + slack

    w_r = w.reshape(3, 3 * Cin, Cout).astype(jnp.bfloat16)   # kh-major, kw*Cin+c
    mask = ((jnp.arange(M) % Wq) < Wo).astype(jnp.float32).reshape(M, 1)

    ct_pref, vmem_limit = _tpu_profile()
    ct = ct_pref if Cout % ct_pref == 0 else 128
    grid = (N, Cout // ct)
    inv_count = 1.0 / float(Ho * Wo)
    common = dict(row_taps=row_taps, M=M, inv_count=inv_count)

    in_specs = [
        pl.BlockSpec((1, P, F, Cin), lambda n, j: (n, 0, 0, 0)),
        pl.BlockSpec((3, 3 * Cin, ct), lambda n, j: (0, 0, j)),
        pl.BlockSpec((M, 1), lambda n, j: (0, 0)),
    ]
    inputs = [x_flat, w_r, mask]

    if residual is None:
        if flat_out is None:
            kern = functools.partial(_k_conv_in_relu, **common)
        else:
            kern = functools.partial(_k_conv_in_relu_flat, head=flat_out[1],
                                     **common)
    elif ds_w is None:
        in_specs.append(pl.BlockSpec((1, M, ct), lambda n, j: (n, 0, j)))
        inputs.append(residual)
        kern = functools.partial(_k_conv_in_add_relu, **common)
    else:
        Cd = residual.shape[-1]
        in_specs += [pl.BlockSpec((1, M, Cd), lambda n, j: (n, 0, 0)),
                     pl.BlockSpec((Cd, ct), lambda n, j: (0, j)),
                     pl.BlockSpec((1, ct), lambda n, j: (0, j))]
        inputs += [residual,
                   ds_w.astype(jnp.bfloat16),
                   ds_b.reshape(1, Cout).astype(jnp.float32)]
        kern = functools.partial(_k_conv_in_ds_add_relu, **common)

    out_rows = M if flat_out is None else flat_out[0]
    out_spec = pl.BlockSpec((1, out_rows, ct), lambda n, j: (n, 0, j))

    # keep the largest HBM stream (x_flat) from being duplicated per core on
    # megacore parts: shard across batch when there is one, else across Cout.
    dim_sem = ("parallel", "parallel") if N == 1 else ("parallel", "arbitrary")

    return pl.pallas_call(
        kern,
        out_shape=jax.ShapeDtypeStruct((N, out_rows, Cout), out_dtype),
        grid_spec=pltpu.PrefetchScalarGridSpec(
            num_scalar_prefetch=0,
            grid=grid,
            in_specs=in_specs,
            out_specs=out_spec,
        ),
        compiler_params=pltpu.CompilerParams(
            dimension_semantics=dim_sem,
            vmem_limit_bytes=vmem_limit),
    )(*inputs)


# --------------------------------------------------------------------------
# BasicBlock forward
# --------------------------------------------------------------------------
def basic_block_forward(x_nchw, params, stride=1):
    x = jnp.transpose(x_nchw, (0, 2, 3, 1)).astype(jnp.float32)   # NCHW -> NHWC
    N, H, W, Cin = x.shape
    w1, w2 = params["w1"], params["w2"]
    planes = w1.shape[-1]
    cp = _round_up(planes, 128)                 # lane-dense padded channel count

    # pad Cout (and stage-2 Cin, which consumes the padded activations) to cp;
    # padded channels stay exactly zero through conv + IN + ReLU.
    w1p = jnp.pad(w1, ((0, 0), (0, 0), (0, 0), (0, cp - planes)))
    w2p = jnp.pad(w2, ((0, 0), (0, 0), (0, cp - planes), (0, cp - planes)))

    Ho = (H + 2 - 3) // stride + 1
    Wo = (W + 2 - 3) // stride + 1

    # ---------------- stage 1: conv1 (stride) + IN + ReLU ----------------
    x1_flat, Hq1, Wq1 = _prep_input(x, stride)
    if stride == 1:
        # Stage-1 row pitch Wq1 == Wo+2, so stage 1 can emit its output
        # directly in stage 2's zero-padded flat input layout.
        Wq2, Hq2 = Wo + 2, Ho + 2
        assert Wq1 == Wq2
        M2 = Ho * Wq2
        head = Wq2 + 1                              # zero halo before first data row
        pre = (-head) % 16                          # align bulk store to bf16 tiles
        slack2 = max(0, (2 * Wq2 + 2) + M2 - Hq2 * Wq2)
        F2 = pre + Hq2 * Wq2 + slack2
        out1 = _conv_stage(x1_flat, Wq1, Ho, Wo, w1p, stride=1,
                           flat_out=(F2, pre + head), out_dtype=jnp.bfloat16)
        x2_flat = out1.reshape(N, 1, F2, cp)        # free reshape, no HBM round trip
        base2 = pre
    else:
        out1 = _conv_stage(x1_flat, Wq1, Ho, Wo, w1p, stride=stride,
                           out_dtype=jnp.bfloat16)            # (N, Ho*Wq1, cp)
        out1 = out1.reshape(N, Ho, Wq1, cp)[:, :, :Wo, :]
        x2_flat, Hq2, Wq2 = _prep_input(out1, 1)
        M2 = Ho * Wq2
        base2 = 0

    # ---------------- stage 2: conv2 + IN + identity + ReLU ----------------
    if stride == 1:
        idp = jnp.pad(x.astype(jnp.bfloat16),
                      ((0, 0), (0, 0), (0, Wq2 - W), (0, cp - Cin)))
        idp = idp.reshape(N, M2, cp)
        out = _conv_stage(x2_flat, Wq2, Ho, Wo, w2p, stride=1,
                          residual=idp, base_off=base2, out_dtype=jnp.float32)
    else:
        idx = x[:, ::stride, ::stride, :]                       # (N, Ho, Wo, Cin)
        idp = jnp.pad(idx.astype(jnp.bfloat16),
                      ((0, 0), (0, 0), (0, Wq2 - Wo), (0, 0))).reshape(N, M2, Cin)
        wd = jnp.pad(params["wd"].reshape(Cin, planes), ((0, 0), (0, cp - planes)))
        bd = jnp.pad(params["bd"], (0, cp - planes))
        out = _conv_stage(x2_flat, Wq2, Ho, Wo, w2p, stride=1,
                          residual=idp, ds_w=wd, ds_b=bd, base_off=base2,
                          out_dtype=jnp.float32)

    out = out.reshape(N, Ho, Wq2, cp)[:, :, :Wo, :planes]
    return jnp.transpose(out, (0, 3, 1, 2))                     # NHWC -> NCHW


# --------------------------------------------------------------------------
# Pure-JAX reference (mirrors the kernel's bf16 matmul-operand rounding)
# --------------------------------------------------------------------------
def reference_forward(x_nchw, p, stride=1):
    f32, bf16 = jnp.float32, jnp.bfloat16
    rnd = lambda a: a.astype(bf16).astype(f32)
    x = jnp.transpose(x_nchw, (0, 2, 3, 1)).astype(f32)

    def conv(inp, w, b, s, pad):
        out = lax.conv_general_dilated(
            rnd(inp), rnd(w), window_strides=(s, s),
            padding=((pad, pad), (pad, pad)),
            dimension_numbers=("NHWC", "HWIO", "NHWC"),
            precision=lax.Precision.HIGHEST)
        return out + b.reshape(1, 1, 1, -1)

    def inorm(z):
        mean = jnp.mean(z, axis=(1, 2), keepdims=True)
        var = jnp.mean((z - mean) ** 2, axis=(1, 2), keepdims=True)
        return (z - mean) * lax.rsqrt(var + 1e-5)

    out1 = jax.nn.relu(inorm(conv(x, p["w1"], p["b1"], stride, 1)))
    out1 = rnd(out1)                       # stage-1 activations stored as bf16
    out2 = inorm(conv(out1, p["w2"], p["b2"], 1, 1))
    if stride == 1:
        identity = rnd(x)                  # identity streamed as bf16 in the kernel
    else:
        identity = conv(x, p["wd"], p["bd"], stride, 0)
    out = jax.nn.relu(out2 + identity)
    return jnp.transpose(out, (0, 3, 1, 2))


# --------------------------------------------------------------------------
# Parameter init (PyTorch-style uniform)
# --------------------------------------------------------------------------
def init_params(key, inplanes, planes, stride=1):
    ks = jax.random.split(key, 6)

    def conv_w(k, kh, kw, cin, cout):
        s = 1.0 / math.sqrt(kh * kw * cin)
        return jax.random.uniform(k, (kh, kw, cin, cout), jnp.float32, -s, s)

    def bias(k, cout, fan_in):
        s = 1.0 / math.sqrt(fan_in)
        return jax.random.uniform(k, (cout,), jnp.float32, -s, s)

    p = {
        "w1": conv_w(ks[0], 3, 3, inplanes, planes),
        "b1": bias(ks[1], planes, 9 * inplanes),
        "w2": conv_w(ks[2], 3, 3, planes, planes),
        "b2": bias(ks[3], planes, 9 * planes),
    }
    if stride != 1:
        p["wd"] = conv_w(ks[4], 1, 1, inplanes, planes)
        p["bd"] = bias(ks[5], planes, inplanes)
    return p


if __name__ == "__main__":
    key = jax.random.PRNGKey(0)
    k1, k2, k3, k4 = jax.random.split(key, 4)

    # --- Test 1: stride=1 (identity residual); inplanes == planes ---
    N, C, H, W = 2, 16, 16, 16
    x1 = jax.random.normal(k1, (N, C, H, W), jnp.float32)
    p1 = init_params(k2, C, C, stride=1)
    fwd1 = jax.jit(functools.partial(basic_block_forward, stride=1))
    y1 = jax.block_until_ready(fwd1(x1, p1))
    r1 = reference_forward(x1, p1, stride=1)
    assert y1.shape == (N, C, H, W), y1.shape
    assert bool(jnp.all(jnp.isfinite(y1)))
    assert bool(jnp.allclose(y1, r1, atol=5e-3, rtol=5e-3)), \
        float(jnp.max(jnp.abs(y1 - r1)))

    # --- Test 2: stride=2 with fused 1x1 downsample identity ---
    Cin2, Cout2 = 8, 16
    x2 = jax.random.normal(k3, (N, Cin2, H, W), jnp.float32)
    p2 = init_params(k4, Cin2, Cout2, stride=2)
    fwd2 = jax.jit(functools.partial(basic_block_forward, stride=2))
    y2 = jax.block_until_ready(fwd2(x2, p2))
    r2 = reference_forward(x2, p2, stride=2)
    assert y2.shape == (N, Cout2, H // 2, W // 2), y2.shape
    assert bool(jnp.all(jnp.isfinite(y2)))
    assert bool(jnp.allclose(y2, r2, atol=5e-3, rtol=5e-3)), \
        float(jnp.max(jnp.abs(y2 - r2)))

    print("KERNEL_OK")
</pallas_src>

<mosaic_0001>
module attributes {stable_mosaic.version = 11 : i64} {
  func.func @_k_conv_in_add_relu(%arg0: i32, %arg1: i32, %arg2: memref<1x1x339x128xbf16, #tpu.memory_space<vmem>>, %arg3: memref<3x384x128xbf16, #tpu.memory_space<vmem>>, %arg4: memref<288x1xf32, #tpu.memory_space<vmem>>, %arg5: memref<1x288x128xbf16, #tpu.memory_space<vmem>>, %arg6: memref<1x288x128xf32, #tpu.memory_space<vmem>>) attributes {dimension_semantics = [#tpu.dimension_semantics<parallel>, #tpu.dimension_semantics<arbitrary>], iteration_bounds = array<i64: 2, 1>, scalar_prefetch = 0 : i64, scratch_operands = 0 : i64, tpu.core_type = #tpu.core_type<tc>, window_params = [{transform_indices = @transform_0, window_bounds = array<i64: 1, 1, 339, 128>}, {transform_indices = @transform_1, window_bounds = array<i64: 3, 384, 128>}, {pipeline_mode = #tpu.pipeline_mode<synchronous>, transform_indices = @transform_2, window_bounds = array<i64: 288, 1>}, {transform_indices = @transform_3, window_bounds = array<i64: 1, 288, 128>}, {transform_indices = @transform_4, window_bounds = array<i64: 1, 288, 128>}]} {
    %c0 = arith.constant 0 : index
    %c0_0 = arith.constant 0 : index
    %c13 = arith.constant 13 : index
    %c0_1 = arith.constant 0 : index
    %0 = vector.load %arg2[%c0, %c0_0, %c13, %c0_1] : memref<1x1x339x128xbf16, #tpu.memory_space<vmem>>, vector<1x1x288x128xbf16>
    %1 = vector.shape_cast %0 : vector<1x1x288x128xbf16> to vector<288x128xbf16>
    %c0_2 = arith.constant 0 : index
    %c0_3 = arith.constant 0 : index
    %c14 = arith.constant 14 : index
    %c0_4 = arith.constant 0 : index
    %2 = vector.load %arg2[%c0_2, %c0_3, %c14, %c0_4] : memref<1x1x339x128xbf16, #tpu.memory_space<vmem>>, vector<1x1x288x128xbf16>
    %3 = vector.shape_cast %2 : vector<1x1x288x128xbf16> to vector<288x128xbf16>
    %c0_5 = arith.constant 0 : index
    %c0_6 = arith.constant 0 : index
    %c15 = arith.constant 15 : index
    %c0_7 = arith.constant 0 : index
    %4 = vector.load %arg2[%c0_5, %c0_6, %c15, %c0_7] : memref<1x1x339x128xbf16, #tpu.memory_space<vmem>>, vector<1x1x288x128xbf16>
    %5 = vector.shape_cast %4 : vector<1x1x288x128xbf16> to vector<288x128xbf16>
    %6 = tpu.concatenate %1, %3, %5 in 1 : vector<288x128xbf16>, vector<288x128xbf16>, vector<288x128xbf16> -> vector<288x384xbf16>
    %c0_8 = arith.constant 0 : index
    %c0_9 = arith.constant 0 : index
    %c0_10 = arith.constant 0 : index
    %7 = vector.load %arg3[%c0_8, %c0_9, %c0_10] : memref<3x384x128xbf16, #tpu.memory_space<vmem>>, vector<1x384x128xbf16>
    %8 = vector.shape_cast %7 : vector<1x384x128xbf16> to vector<384x128xbf16>
    %cst = arith.constant dense<0.000000e+00> : vector<288x128xf32>
    %9 = tpu.matmul %6, %8, %cst {dimension_numbers = #tpu.dot_dimension_numbers<[1], [0], [0], [1], [0, 0, 1, 1], [], []>} : vector<288x384xbf16>, vector<384x128xbf16>, vector<288x128xf32> -> vector<288x128xf32>
    %c0_11 = arith.constant 0 : index
    %c0_12 = arith.constant 0 : index
    %c31 = arith.constant 31 : index
    %c0_13 = arith.constant 0 : index
    %10 = vector.load %arg2[%c0_11, %c0_12, %c31, %c0_13] : memref<1x1x339x128xbf16, #tpu.memory_space<vmem>>, vector<1x1x288x128xbf16>
    %11 = vector.shape_cast %10 : vector<1x1x288x128xbf16> to vector<288x128xbf16>
    %c0_14 = arith.constant 0 : index
    %c0_15 = arith.constant 0 : index
    %c32 = arith.constant 32 : index
    %c0_16 = arith.constant 0 : index
    %12 = vector.load %arg2[%c0_14, %c0_15, %c32, %c0_16] : memref<1x1x339x128xbf16, #tpu.memory_space<vmem>>, vector<1x1x288x128xbf16>
    %13 = vector.shape_cast %12 : vector<1x1x288x128xbf16> to vector<288x128xbf16>
    %c0_17 = arith.constant 0 : index
    %c0_18 = arith.constant 0 : index
    %c33 = arith.constant 33 : index
    %c0_19 = arith.constant 0 : index
    %14 = vector.load %arg2[%c0_17, %c0_18, %c33, %c0_19] : memref<1x1x339x128xbf16, #tpu.memory_space<vmem>>, vector<1x1x288x128xbf16>
    %15 = vector.shape_cast %14 : vector<1x1x288x128xbf16> to vector<288x128xbf16>
    %16 = tpu.concatenate %11, %13, %15 in 1 : vector<288x128xbf16>, vector<288x128xbf16>, vector<288x128xbf16> -> vector<288x384xbf16>
    %c1 = arith.constant 1 : index
    %c0_20 = arith.constant 0 : index
    %c0_21 = arith.constant 0 : index
    %17 = vector.load %arg3[%c1, %c0_20, %c0_21] : memref<3x384x128xbf16, #tpu.memory_space<vmem>>, vector<1x384x128xbf16>
    %18 = vector.shape_cast %17 : vector<1x384x128xbf16> to vector<384x128xbf16>
    %cst_22 = arith.constant dense<0.000000e+00> : vector<288x128xf32>
    %19 = tpu.matmul %16, %18, %cst_22 {dimension_numbers = #tpu.dot_dimension_numbers<[1], [0], [0], [1], [0, 0, 1, 1], [], []>} : vector<288x384xbf16>, vector<384x128xbf16>, vector<288x128xf32> -> vector<288x128xf32>
    %20 = arith.addf %9, %19 : vector<288x128xf32>
    %c0_23 = arith.constant 0 : index
    %c0_24 = arith.constant 0 : index
    %c49 = arith.constant 49 : index
    %c0_25 = arith.constant 0 : index
    %21 = vector.load %arg2[%c0_23, %c0_24, %c49, %c0_25] : memref<1x1x339x128xbf16, #tpu.memory_space<vmem>>, vector<1x1x288x128xbf16>
    %22 = vector.shape_cast %21 : vector<1x1x288x128xbf16> to vector<288x128xbf16>
    %c0_26 = arith.constant 0 : index
    %c0_27 = arith.constant 0 : index
    %c50 = arith.constant 50 : index
    %c0_28 = arith.constant 0 : index
    %23 = vector.load %arg2[%c0_26, %c0_27, %c50, %c0_28] : memref<1x1x339x128xbf16, #tpu.memory_space<vmem>>, vector<1x1x288x128xbf16>
    %24 = vector.shape_cast %23 : vector<1x1x288x128xbf16> to vector<288x128xbf16>
    %c0_29 = arith.constant 0 : index
    %c0_30 = arith.constant 0 : index
    %c51 = arith.constant 51 : index
    %c0_31 = arith.constant 0 : index
    %25 = vector.load %arg2[%c0_29, %c0_30, %c51, %c0_31] : memref<1x1x339x128xbf16, #tpu.memory_space<vmem>>, vector<1x1x288x128xbf16>
    %26 = vector.shape_cast %25 : vector<1x1x288x128xbf16> to vector<288x128xbf16>
    %27 = tpu.concatenate %22, %24, %26 in 1 : vector<288x128xbf16>, vector<288x128xbf16>, vector<288x128xbf16> -> vector<288x384xbf16>
    %c2 = arith.constant 2 : index
    %c0_32 = arith.constant 0 : index
    %c0_33 = arith.constant 0 : index
    %28 = vector.load %arg3[%c2, %c0_32, %c0_33] : memref<3x384x128xbf16, #tpu.memory_space<vmem>>, vector<1x384x128xbf16>
    %29 = vector.shape_cast %28 : vector<1x384x128xbf16> to vector<384x128xbf16>
    %cst_34 = arith.constant dense<0.000000e+00> : vector<288x128xf32>
    %30 = tpu.matmul %27, %29, %cst_34 {dimension_numbers = #tpu.dot_dimension_numbers<[1], [0], [0], [1], [0, 0, 1, 1], [], []>} : vector<288x384xbf16>, vector<384x128xbf16>, vector<288x128xf32> -> vector<288x128xf32>
    %31 = arith.addf %20, %30 : vector<288x128xf32>
    %c0_35 = arith.constant 0 : index
    %c0_36 = arith.constant 0 : index
    %32 = vector.load %arg4[%c0_35, %c0_36] : memref<288x1xf32, #tpu.memory_space<vmem>>, vector<288x1xf32>
    %33 = vector.broadcast %32 : vector<288x1xf32> to vector<288x128xf32>
    %34 = arith.mulf %31, %33 : vector<288x128xf32>
    %cst_37 = arith.constant dense<0.000000e+00> : vector<128xf32>
    %35 = vector.multi_reduction <add>, %34, %cst_37 [0] : vector<288x128xf32> to vector<128xf32>
    %36 = vector.shape_cast %35 : vector<128xf32> to vector<1x128xf32>
    %cst_38 = arith.constant 3.906250e-03 : f32
    %37 = vector.broadcast %cst_38 : f32 to vector<1x128xf32>
    %38 = arith.mulf %36, %37 : vector<1x128xf32>
    %39 = vector.broadcast %38 : vector<1x128xf32> to vector<288x128xf32>
    %40 = arith.subf %31, %39 : vector<288x128xf32>
    %41 = vector.broadcast %32 : vector<288x1xf32> to vector<288x128xf32>
    %42 = arith.mulf %40, %41 : vector<288x128xf32>
    %43 = arith.mulf %42, %42 : vector<288x128xf32>
    %cst_39 = arith.constant dense<0.000000e+00> : vector<128xf32>
    %44 = vector.multi_reduction <add>, %43, %cst_39 [0] : vector<288x128xf32> to vector<128xf32>
    %45 = vector.shape_cast %44 : vector<128xf32> to vector<1x128xf32>
    %cst_40 = arith.constant 3.906250e-03 : f32
    %46 = vector.broadcast %cst_40 : f32 to vector<1x128xf32>
    %47 = arith.mulf %45, %46 : vector<1x128xf32>
    %48 = vector.broadcast %38 : vector<1x128xf32> to vector<288x128xf32>
    %49 = arith.subf %31, %48 : vector<288x128xf32>
    %cst_41 = arith.constant 9.99999974E-6 : f32
    %50 = vector.broadcast %cst_41 : f32 to vector<1x128xf32>
    %51 = arith.addf %47, %50 : vector<1x128xf32>
    %52 = math.rsqrt %51 : vector<1x128xf32>
    %53 = vector.broadcast %52 : vector<1x128xf32> to vector<288x128xf32>
    %54 = arith.mulf %49, %53 : vector<288x128xf32>
    %c0_42 = arith.constant 0 : index
    %c0_43 = arith.constant 0 : index
    %c0_44 = arith.constant 0 : index
    %55 = vector.load %arg5[%c0_42, %c0_43, %c0_44] : memref<1x288x128xbf16, #tpu.memory_space<vmem>>, vector<1x288x128xbf16>
    %56 = vector.shape_cast %55 : vector<1x288x128xbf16> to vector<288x128xbf16>
    %57 = arith.extf %56 : vector<288x128xbf16> to vector<288x128xf32>
    %58 = arith.addf %54, %57 : vector<288x128xf32>
    %cst_45 = arith.constant 0.000000e+00 : f32
    %59 = vector.broadcast %cst_45 : f32 to vector<288x128xf32>
    %60 = arith.maximumf %58, %59 : vector<288x128xf32>
    %c0_46 = arith.constant 0 : index
    %c0_47 = arith.constant 0 : index
    %c0_48 = arith.constant 0 : index
    %61 = vector.load %arg6[%c0_46, %c0_47, %c0_48] : memref<1x288x128xf32, #tpu.memory_space<vmem>>, vector<1x288x128xf32>
    %62 = vector.shape_cast %61 : vector<1x288x128xf32> to vector<288x128xf32>
    %63 = vector.shape_cast %60 : vector<288x128xf32> to vector<1x288x128xf32>
    tpu.vector_store %arg6[%c0_46, %c0_47, %c0_48], %63 {strides = array<i32>} : memref<1x288x128xf32, #tpu.memory_space<vmem>>, vector<1x288x128xf32>,
    return
  }
  func.func @transform_0(%arg0: i32, %arg1: i32) -> (i32, i32, i32, i32) {
    %c0_i32 = arith.constant 0 : i32
    %c0_i32_0 = arith.constant 0 : i32
    %c0_i32_1 = arith.constant 0 : i32
    %c0_i32_2 = arith.constant 0 : i32
    return %arg0, %c0_i32, %c0_i32_0, %c0_i32_1 : i32, i32, i32, i32
  }
  func.func @transform_1(%arg0: i32, %arg1: i32) -> (i32, i32, i32) {
    %c0_i32 = arith.constant 0 : i32
    %c0_i32_0 = arith.constant 0 : i32
    %c0_i32_1 = arith.constant 0 : i32
    return %c0_i32, %c0_i32_0, %arg1 : i32, i32, i32
  }
  func.func @transform_2(%arg0: i32, %arg1: i32) -> (i32, i32) {
    %c0_i32 = arith.constant 0 : i32
    %c0_i32_0 = arith.constant 0 : i32
    %c0_i32_1 = arith.constant 0 : i32
    return %c0_i32, %c0_i32_0 : i32, i32
  }
  func.func @transform_3(%arg0: i32, %arg1: i32) -> (i32, i32, i32) {
    %c0_i32 = arith.constant 0 : i32
    %c0_i32_0 = arith.constant 0 : i32
    return %arg0, %c0_i32, %arg1 : i32, i32, i32
  }
  func.func @transform_4(%arg0: i32, %arg1: i32) -> (i32, i32, i32) {
    %c0_i32 = arith.constant 0 : i32
    %c0_i32_0 = arith.constant 0 : i32
    return %arg0, %c0_i32, %arg1 : i32, i32, i32
  }
}

module attributes {stable_mosaic.version = 11 : i64} {
  func.func @_k_conv_in_relu_flat(%arg0: i32, %arg1: i32, %arg2: memref<1x1x326x16xbf16, #tpu.memory_space<vmem>>, %arg3: memref<3x48x128xbf16, #tpu.memory_space<vmem>>, %arg4: memref<288x1xf32, #tpu.memory_space<vmem>>, %arg5: memref<1x339x128xbf16, #tpu.memory_space<vmem>>) attributes {dimension_semantics = [#tpu.dimension_semantics<parallel>, #tpu.dimension_semantics<arbitrary>], iteration_bounds = array<i64: 2, 1>, scalar_prefetch = 0 : i64, scratch_operands = 0 : i64, tpu.core_type = #tpu.core_type<tc>, window_params = [{transform_indices = @transform_0, window_bounds = array<i64: 1, 1, 326, 16>}, {transform_indices = @transform_1, window_bounds = array<i64: 3, 48, 128>}, {pipeline_mode = #tpu.pipeline_mode<synchronous>, transform_indices = @transform_2, window_bounds = array<i64: 288, 1>}, {transform_indices = @transform_3, window_bounds = array<i64: 1, 339, 128>}]} {
    %c0 = arith.constant 0 : index
    %c0_0 = arith.constant 0 : index
    %c0_1 = arith.constant 0 : index
    %c0_2 = arith.constant 0 : index
    %0 = vector.load %arg2[%c0, %c0_0, %c0_1, %c0_2] : memref<1x1x326x16xbf16, #tpu.memory_space<vmem>>, vector<1x1x288x16xbf16>
    %1 = vector.shape_cast %0 : vector<1x1x288x16xbf16> to vector<288x16xbf16>
    %c0_3 = arith.constant 0 : index
    %c0_4 = arith.constant 0 : index
    %c1 = arith.constant 1 : index
    %c0_5 = arith.constant 0 : index
    %2 = vector.load %arg2[%c0_3, %c0_4, %c1, %c0_5] : memref<1x1x326x16xbf16, #tpu.memory_space<vmem>>, vector<1x1x288x16xbf16>
    %3 = vector.shape_cast %2 : vector<1x1x288x16xbf16> to vector<288x16xbf16>
    %c0_6 = arith.constant 0 : index
    %c0_7 = arith.constant 0 : index
    %c2 = arith.constant 2 : index
    %c0_8 = arith.constant 0 : index
    %4 = vector.load %arg2[%c0_6, %c0_7, %c2, %c0_8] : memref<1x1x326x16xbf16, #tpu.memory_space<vmem>>, vector<1x1x288x16xbf16>
    %5 = vector.shape_cast %4 : vector<1x1x288x16xbf16> to vector<288x16xbf16>
    %6 = tpu.concatenate %1, %3, %5 in 1 : vector<288x16xbf16>, vector<288x16xbf16>, vector<288x16xbf16> -> vector<288x48xbf16>
    %c0_9 = arith.constant 0 : index
    %c0_10 = arith.constant 0 : index
    %c0_11 = arith.constant 0 : index
    %7 = vector.load %arg3[%c0_9, %c0_10, %c0_11] : memref<3x48x128xbf16, #tpu.memory_space<vmem>>, vector<1x48x128xbf16>
    %8 = vector.shape_cast %7 : vector<1x48x128xbf16> to vector<48x128xbf16>
    %cst = arith.constant dense<0.000000e+00> : vector<288x128xf32>
    %9 = tpu.matmul %6, %8, %cst {dimension_numbers = #tpu.dot_dimension_numbers<[1], [0], [0], [1], [0, 0, 1, 1], [], []>} : vector<288x48xbf16>, vector<48x128xbf16>, vector<288x128xf32> -> vector<288x128xf32>
    %c0_12 = arith.constant 0 : index
    %c0_13 = arith.constant 0 : index
    %c18 = arith.constant 18 : index
    %c0_14 = arith.constant 0 : index
    %10 = vector.load %arg2[%c0_12, %c0_13, %c18, %c0_14] : memref<1x1x326x16xbf16, #tpu.memory_space<vmem>>, vector<1x1x288x16xbf16>
    %11 = vector.shape_cast %10 : vector<1x1x288x16xbf16> to vector<288x16xbf16>
    %c0_15 = arith.constant 0 : index
    %c0_16 = arith.constant 0 : index
    %c19 = arith.constant 19 : index
    %c0_17 = arith.constant 0 : index
    %12 = vector.load %arg2[%c0_15, %c0_16, %c19, %c0_17] : memref<1x1x326x16xbf16, #tpu.memory_space<vmem>>, vector<1x1x288x16xbf16>
    %13 = vector.shape_cast %12 : vector<1x1x288x16xbf16> to vector<288x16xbf16>
    %c0_18 = arith.constant 0 : index
    %c0_19 = arith.constant 0 : index
    %c20 = arith.constant 20 : index
    %c0_20 = arith.constant 0 : index
    %14 = vector.load %arg2[%c0_18, %c0_19, %c20, %c0_20] : memref<1x1x326x16xbf16, #tpu.memory_space<vmem>>, vector<1x1x288x16xbf16>
    %15 = vector.shape_cast %14 : vector<1x1x288x16xbf16> to vector<288x16xbf16>
    %16 = tpu.concatenate %11, %13, %15 in 1 : vector<288x16xbf16>, vector<288x16xbf16>, vector<288x16xbf16> -> vector<288x48xbf16>
    %c1_21 = arith.constant 1 : index
    %c0_22 = arith.constant 0 : index
    %c0_23 = arith.constant 0 : index
    %17 = vector.load %arg3[%c1_21, %c0_22, %c0_23] : memref<3x48x128xbf16, #tpu.memory_space<vmem>>, vector<1x48x128xbf16>
    %18 = vector.shape_cast %17 : vector<1x48x128xbf16> to vector<48x128xbf16>
    %cst_24 = arith.constant dense<0.000000e+00> : vector<288x128xf32>
    %19 = tpu.matmul %16, %18, %cst_24 {dimension_numbers = #tpu.dot_dimension_numbers<[1], [0], [0], [1], [0, 0, 1, 1], [], []>} : vector<288x48xbf16>, vector<48x128xbf16>, vector<288x128xf32> -> vector<288x128xf32>
    %20 = arith.addf %9, %19 : vector<288x128xf32>
    %c0_25 = arith.constant 0 : index
    %c0_26 = arith.constant 0 : index
    %c36 = arith.constant 36 : index
    %c0_27 = arith.constant 0 : index
    %21 = vector.load %arg2[%c0_25, %c0_26, %c36, %c0_27] : memref<1x1x326x16xbf16, #tpu.memory_space<vmem>>, vector<1x1x288x16xbf16>
    %22 = vector.shape_cast %21 : vector<1x1x288x16xbf16> to vector<288x16xbf16>
    %c0_28 = arith.constant 0 : index
    %c0_29 = arith.constant 0 : index
    %c37 = arith.constant 37 : index
    %c0_30 = arith.constant 0 : index
    %23 = vector.load %arg2[%c0_28, %c0_29, %c37, %c0_30] : memref<1x1x326x16xbf16, #tpu.memory_space<vmem>>, vector<1x1x288x16xbf16>
    %24 = vector.shape_cast %23 : vector<1x1x288x16xbf16> to vector<288x16xbf16>
    %c0_31 = arith.constant 0 : index
    %c0_32 = arith.constant 0 : index
    %c38 = arith.constant 38 : index
    %c0_33 = arith.constant 0 : index
    %25 = vector.load %arg2[%c0_31, %c0_32, %c38, %c0_33] : memref<1x1x326x16xbf16, #tpu.memory_space<vmem>>, vector<1x1x288x16xbf16>
    %26 = vector.shape_cast %25 : vector<1x1x288x16xbf16> to vector<288x16xbf16>
    %27 = tpu.concatenate %22, %24, %26 in 1 : vector<288x16xbf16>, vector<288x16xbf16>, vector<288x16xbf16> -> vector<288x48xbf16>
    %c2_34 = arith.constant 2 : index
    %c0_35 = arith.constant 0 : index
    %c0_36 = arith.constant 0 : index
    %28 = vector.load %arg3[%c2_34, %c0_35, %c0_36] : memref<3x48x128xbf16, #tpu.memory_space<vmem>>, vector<1x48x128xbf16>
    %29 = vector.shape_cast %28 : vector<1x48x128xbf16> to vector<48x128xbf16>
    %cst_37 = arith.constant dense<0.000000e+00> : vector<288x128xf32>
    %30 = tpu.matmul %27, %29, %cst_37 {dimension_numbers = #tpu.dot_dimension_numbers<[1], [0], [0], [1], [0, 0, 1, 1], [], []>} : vector<288x48xbf16>, vector<48x128xbf16>, vector<288x128xf32> -> vector<288x128xf32>
    %31 = arith.addf %20, %30 : vector<288x128xf32>
    %c0_38 = arith.constant 0 : index
    %c0_39 = arith.constant 0 : index
    %32 = vector.load %arg4[%c0_38, %c0_39] : memref<288x1xf32, #tpu.memory_space<vmem>>, vector<288x1xf32>
    %33 = vector.broadcast %32 : vector<288x1xf32> to vector<288x128xf32>
    %34 = arith.mulf %31, %33 : vector<288x128xf32>
    %cst_40 = arith.constant dense<0.000000e+00> : vector<128xf32>
    %35 = vector.multi_reduction <add>, %34, %cst_40 [0] : vector<288x128xf32> to vector<128xf32>
    %36 = vector.shape_cast %35 : vector<128xf32> to vector<1x128xf32>
    %cst_41 = arith.constant 3.906250e-03 : f32
    %37 = vector.broadcast %cst_41 : f32 to vector<1x128xf32>
    %38 = arith.mulf %36, %37 : vector<1x128xf32>
    %39 = vector.broadcast %38 : vector<1x128xf32> to vector<288x128xf32>
    %40 = arith.subf %31, %39 : vector<288x128xf32>
    %41 = vector.broadcast %32 : vector<288x1xf32> to vector<288x128xf32>
    %42 = arith.mulf %40, %41 : vector<288x128xf32>
    %43 = arith.mulf %42, %42 : vector<288x128xf32>
    %cst_42 = arith.constant dense<0.000000e+00> : vector<128xf32>
    %44 = vector.multi_reduction <add>, %43, %cst_42 [0] : vector<288x128xf32> to vector<128xf32>
    %45 = vector.shape_cast %44 : vector<128xf32> to vector<1x128xf32>
    %cst_43 = arith.constant 3.906250e-03 : f32
    %46 = vector.broadcast %cst_43 : f32 to vector<1x128xf32>
    %47 = arith.mulf %45, %46 : vector<1x128xf32>
    %48 = vector.broadcast %38 : vector<1x128xf32> to vector<288x128xf32>
    %49 = arith.subf %31, %48 : vector<288x128xf32>
    %cst_44 = arith.constant 9.99999974E-6 : f32
    %50 = vector.broadcast %cst_44 : f32 to vector<1x128xf32>
    %51 = arith.addf %47, %50 : vector<1x128xf32>
    %52 = math.rsqrt %51 : vector<1x128xf32>
    %53 = vector.broadcast %52 : vector<1x128xf32> to vector<288x128xf32>
    %54 = arith.mulf %49, %53 : vector<288x128xf32>
    %cst_45 = arith.constant 0.000000e+00 : f32
    %55 = vector.broadcast %cst_45 : f32 to vector<288x128xf32>
    %56 = arith.maximumf %54, %55 : vector<288x128xf32>
    %c0_46 = arith.constant 0 : index
    %c0_47 = arith.constant 0 : index
    %57 = vector.load %arg4[%c0_46, %c0_47] : memref<288x1xf32, #tpu.memory_space<vmem>>, vector<288x1xf32>
    %58 = vector.broadcast %57 : vector<288x1xf32> to vector<288x128xf32>
    %59 = arith.mulf %56, %58 : vector<288x128xf32>
    %cst_48 = arith.constant 0.000000e+00 : bf16
    %60 = vector.broadcast %cst_48 : bf16 to vector<32x128xbf16>
    %c0_49 = arith.constant 0 : index
    %c0_50 = arith.constant 0 : index
    %c0_51 = arith.constant 0 : index
    %61 = vector.load %arg5[%c0_49, %c0_50, %c0_51] : memref<1x339x128xbf16, #tpu.memory_space<vmem>>, vector<1x32x128xbf16>
    %62 = vector.shape_cast %61 : vector<1x32x128xbf16> to vector<32x128xbf16>
    %63 = vector.shape_cast %60 : vector<32x128xbf16> to vector<1x32x128xbf16>
    tpu.vector_store %arg5[%c0_49, %c0_50, %c0_51], %63 {strides = array<i32>} : memref<1x339x128xbf16, #tpu.memory_space<vmem>>, vector<1x32x128xbf16>,
    %64 = arith.truncf %59 : vector<288x128xf32> to vector<288x128xbf16>
    %c0_52 = arith.constant 0 : index
    %c32 = arith.constant 32 : index
    %c0_53 = arith.constant 0 : index
    %65 = vector.load %arg5[%c0_52, %c32, %c0_53] : memref<1x339x128xbf16, #tpu.memory_space<vmem>>, vector<1x288x128xbf16>
    %66 = vector.shape_cast %65 : vector<1x288x128xbf16> to vector<288x128xbf16>
    %67 = vector.shape_cast %64 : vector<288x128xbf16> to vector<1x288x128xbf16>
    tpu.vector_store %arg5[%c0_52, %c32, %c0_53], %67 {strides = array<i32>} : memref<1x339x128xbf16, #tpu.memory_space<vmem>>, vector<1x288x128xbf16>,
    %cst_54 = arith.constant 0.000000e+00 : bf16
    %68 = vector.broadcast %cst_54 : bf16 to vector<19x128xbf16>
    %c0_55 = arith.constant 0 : index
    %c320 = arith.constant 320 : index
    %c0_56 = arith.constant 0 : index
    %69 = vector.load %arg5[%c0_55, %c320, %c0_56] : memref<1x339x128xbf16, #tpu.memory_space<vmem>>, vector<1x19x128xbf16>
    %70 = vector.shape_cast %69 : vector<1x19x128xbf16> to vector<19x128xbf16>
    %71 = vector.shape_cast %68 : vector<19x128xbf16> to vector<1x19x128xbf16>
    tpu.vector_store %arg5[%c0_55, %c320, %c0_56], %71 {strides = array<i32>} : memref<1x339x128xbf16, #tpu.memory_space<vmem>>, vector<1x19x128xbf16>,
    return
  }
  func.func @transform_0(%arg0: i32, %arg1: i32) -> (i32, i32, i32, i32) {
    %c0_i32 = arith.constant 0 : i32
    %c0_i32_0 = arith.constant 0 : i32
    %c0_i32_1 = arith.constant 0 : i32
    %c0_i32_2 = arith.constant 0 : i32
    return %arg0, %c0_i32, %c0_i32_0, %c0_i32_1 : i32, i32, i32, i32
  }
  func.func @transform_1(%arg0: i32, %arg1: i32) -> (i32, i32, i32) {
    %c0_i32 = arith.constant 0 : i32
    %c0_i32_0 = arith.constant 0 : i32
    %c0_i32_1 = arith.constant 0 : i32
    return %c0_i32, %c0_i32_0, %arg1 : i32, i32, i32
  }
  func.func @transform_2(%arg0: i32, %arg1: i32) -> (i32, i32) {
    %c0_i32 = arith.constant 0 : i32
    %c0_i32_0 = arith.constant 0 : i32
    %c0_i32_1 = arith.constant 0 : i32
    return %c0_i32, %c0_i32_0 : i32, i32
  }
  func.func @transform_3(%arg0: i32, %arg1: i32) -> (i32, i32, i32) {
    %c0_i32 = arith.constant 0 : i32
    %c0_i32_0 = arith.constant 0 : i32
    return %arg0, %c0_i32, %arg1 : i32, i32, i32
  }
}

</mosaic_0001>

<llo_original>
// kernel: basic_block_forward.2
$region0: #{basic_block_forward.2}
  #allocation0 [shape = 'u32[]', space=smem, size = 0x4, offset = 0x4, fixed_abs, tag = 'smem constant byte address 0x4 - core index']
  #allocation1 [shape = 'u32[144,128]{1,0:T(1,128)}', space=vmem, size = 0x12000, scoped, tag = 'internal scratch']
  %s0 = inlined_call_operand.vmem [shape: bf16[2,1,326,16], index: 0, kind: input, shape index: {}]
  %s1 = inlined_call_operand.vmem [shape: bf16[3,48,128], index: 1, kind: input, shape index: {}]
  %s2 = inlined_call_operand.vmem [shape: f32[288,1], index: 2, kind: input, shape index: {}]
  %s3 = inlined_call_operand.vmem [shape: bf16[2,339,128], index: 3, kind: output, shape index: {}]
  %s4 = sld [smem:[#allocation0]]
  $region45: #{basic_block_forward.2} parent=0
    _
  %s6 = ssub.s32 1, %s4
  %s7 = scalar_select 0, %s6, %s4
  loop: start=0, step=1, limit=4
  $region2: #{basic_block_forward.2} parent=0 // loop_pre_header
    _
  $region3: #{basic_block_forward.2} parent=0 // loop_header
    %s9 = sphi 0, %s13
    %p10 = scmp.ge.s32.totalorder %s9, 4
    %s16 = sphi 0, %s28
    %s17 = sphi 0, %s24
    %s18 = sphi 0, %s16
    %s19 = sphi 0, %s17
    %s20 = sphi 0, %s18
    %s21 = sphi 0, %s19
    %s31 = sphi 0, %s33
    %s34 = sphi 0, %s31
    %s35 = sphi 0, %s34
    %s51 = sphi 0, %s35
    %s57 = sphi 0, %s59
    %s60 = sphi 0, %s57
    %s61 = sphi 0, %s60
    %s77 = sphi 0, %s61
    %s81 = sphi 0, %s81
    %s83 = sphi 0, %s81
    %s84 = sphi 0, %s83
    %s98 = sphi 0, %s84
    %s106 = sphi 0, %s108
    %s109 = sphi 0, %s106
    %s110 = sphi 0, %s109
    %s126 = sphi 0, %s110
  $region4: #{basic_block_forward.2} parent=0 // loop_header_branch
    %12 = sbr.rel (%p10) target = $region8
  $region5: #{basic_block_forward.2} parent=0 // loop_body
    %s14 = ssub.s32 %s9, 1
    %s15 = ssub.s32 %s9, 2
    %s22 = sadd.s32 1, %s17
    %p23 = scmp.ge.s32.totalorder %s22, 1
    %s24 = scalar_select %p23, 0, %s22
    %s25 = sadd.s32 1, %s16
    %s26 = scalar_select %p23, %s25, %s16
    %p27 = scmp.ge.s32.totalorder %s26, 2
    %s28 = scalar_select %p27, 0, %s26
    %s29 = ssub.s32 %s16, %s28
    %p30 = scmp.eq.s32.totalorder %s29, 0
    %s32 = sadd.s32 %s31, 1
    %s33 = scalar_select %p30, %s31, %s32
    %p36 = pneg %p30
    %p37 = scmp.eq.s32.totalorder %s9, 1
    %p38 = por %p36, %p37
    %p39 = scmp.ne.s32.totalorder %s31, %s34
    %p40 = scmp.eq.s32.totalorder %s9, 0
    %p41 = por %p39, %p40
    %p42 = scmp.ne.s32.totalorder %s31, %s34
    %p43 = scmp.eq.s32.totalorder %s14, 1
    %p44 = por %p42, %p43
    %p45 = scmp.ne.s32.totalorder %s34, %s35
    %p46 = scmp.eq.s32.totalorder %s14, 0
    %p47 = por %p45, %p46
    %p48 = scmp.ne.s32.totalorder %s34, %s35
    %p49 = scmp.eq.s32.totalorder %s15, 1
    %p50 = por %p48, %p49
    %p52 = scmp.ne.s32.totalorder %s35, %s51
    %p53 = scmp.eq.s32.totalorder %s15, 0
    %p54 = por %p52, %p53
    %s55 = ssub.s32 %s17, %s24
    %p56 = scmp.eq.s32.totalorder %s55, 0
    %s58 = sadd.s32 %s57, 1
    %s59 = scalar_select %p56, %s57, %s58
    %p62 = pneg %p56
    %p63 = scmp.eq.s32.totalorder %s9, 1
    %p64 = por %p62, %p63
    %p65 = scmp.ne.s32.totalorder %s57, %s60
    %p66 = scmp.eq.s32.totalorder %s9, 0
    %p67 = por %p65, %p66
    %p68 = scmp.ne.s32.totalorder %s57, %s60
    %p69 = scmp.eq.s32.totalorder %s14, 1
    %p70 = por %p68, %p69
    %p71 = scmp.ne.s32.totalorder %s60, %s61
    %p72 = scmp.eq.s32.totalorder %s14, 0
    %p73 = por %p71, %p72
    %p74 = scmp.ne.s32.totalorder %s60, %s61
    %p75 = scmp.eq.s32.totalorder %s15, 1
    %p76 = por %p74, %p75
    %p78 = scmp.ne.s32.totalorder %s61, %s77
    %p79 = scmp.eq.s32.totalorder %s15, 0
    %p80 = por %p78, %p79
    %s82 = sadd.s32 %s81, 1
    %p85 = scmp.eq.s32.totalorder %s9, 1
    %p86 = scmp.ne.s32.totalorder %s81, %s83
    %p87 = scmp.eq.s32.totalorder %s9, 0
    %p88 = por %p86, %p87
    %p89 = scmp.ne.s32.totalorder %s81, %s83
    %p90 = scmp.eq.s32.totalorder %s14, 1
    %p91 = por %p89, %p90
    %p92 = scmp.ne.s32.totalorder %s83, %s84
    %p93 = scmp.eq.s32.totalorder %s14, 0
    %p94 = por %p92, %p93
    %p95 = scmp.ne.s32.totalorder %s83, %s84
    %p96 = scmp.eq.s32.totalorder %s15, 1
    %p97 = por %p95, %p96
    %p99 = scmp.ne.s32.totalorder %s84, %s98
    %p100 = scmp.eq.s32.totalorder %s15, 0
    %p101 = por %p99, %p100
    %s102 = ssub.s32 %s16, %s28
    %s103 = ssub.s32 %s17, %s24
    %s104 = sor.u32 %s102, %s103
    %p105 = scmp.eq.s32.totalorder %s104, 0
    %s107 = sadd.s32 %s106, 1
    %s108 = scalar_select %p105, %s106, %s107
    %p111 = pneg %p105
    %p112 = scmp.eq.s32.totalorder %s9, 1
    %p113 = por %p111, %p112
    %p114 = scmp.ne.s32.totalorder %s106, %s109
    %p115 = scmp.eq.s32.totalorder %s9, 0
    %p116 = por %p114, %p115
    %p117 = scmp.ne.s32.totalorder %s106, %s109
    %p118 = scmp.eq.s32.totalorder %s14, 1
    %p119 = por %p117, %p118
    %p120 = scmp.ne.s32.totalorder %s109, %s110
    %p121 = scmp.eq.s32.totalorder %s14, 0
    %p122 = por %p120, %p121
    %p123 = scmp.ne.s32.totalorder %s109, %s110
    %p124 = scmp.eq.s32.totalorder %s15, 1
    %p125 = por %p123, %p124
    %p127 = scmp.ne.s32.totalorder %s110, %s126
    %p128 = scmp.eq.s32.totalorder %s15, 0
    %p129 = por %p127, %p128
    %p130 = scmp.le.s32.totalorder 1, %s9
    %p131 = scmp.lt.s32.totalorder %s9, 3
    %p132 = pnand %p130, %p131
    %p133 = pneg %p132
    // Predicated region
    $region9: #{basic_block_forward.2} parent=5 // pred_check
      _
    $region10: #{basic_block_forward.2} parent=5 // pred_check_branch
      %135 = sbr.rel (%p132) target = $region12
    $region11: #{basic_block_forward.2} parent=5 // pred_region
      %s136 = ssub.s32 %s9, 1
      // Predicated region
      $region13: #{basic_block_forward.2} parent=11 // pred_check
        %p137 = pneg %p73
      $region14: #{basic_block_forward.2} parent=11 // pred_check_branch
        %139 = sbr.rel (%p137) target = $region16
      $region15: #{basic_block_forward.2} parent=11 // pred_region
        %p140 = scmp.lt.s32.totalorder %s19, 0
        %s141 = scalar_select %p140, %s19, 0
        %s142 = smul.addr %s141, 4
        %s143 = scalar_lea.vmem %s1, %s142
      $region16: #{basic_block_forward.2} parent=11 // pred_fallthru
        _
      // Predicated region
      $region17: #{basic_block_forward.2} parent=11 // pred_check
        %p144 = pneg %p94
      $region18: #{basic_block_forward.2} parent=11 // pred_check_branch
        %146 = sbr.rel (%p144) target = $region20
      $region19: #{basic_block_forward.2} parent=11 // pred_region
        _
      $region20: #{basic_block_forward.2} parent=11 // pred_fallthru
        _
    $region12: #{basic_block_forward.2} parent=5 // pred_fallthru
      _
    %p147 = scmp.lt.s32.totalorder %s9, 2
    // Predicated region
    $region21: #{basic_block_forward.2} parent=5 // pred_check
      %p148 = pneg %p147
    $region22: #{basic_block_forward.2} parent=5 // pred_check_branch
      %150 = sbr.rel (%p148) target = $region24
    $region23: #{basic_block_forward.2} parent=5 // pred_region
      // Predicated region
      $region25: #{basic_block_forward.2} parent=23 // pred_check
        %p151 = pneg %p41
      $region26: #{basic_block_forward.2} parent=23 // pred_check_branch
        %153 = sbr.rel (%p151) target = $region28
      $region27: #{basic_block_forward.2} parent=23 // pred_region
        %p154 = scmp.lt.s32.totalorder %s16, 1
        %s155 = scalar_select %p154, %s16, 1
        %s156 = smul.addr %s155, 41
        %s157 = smul.addr %s156, 4
        %s158 = scalar_lea.vmem %s0, %s157
      $region28: #{basic_block_forward.2} parent=23 // pred_fallthru
        _
    $region24: #{basic_block_forward.2} parent=5 // pred_fallthru
      _
    %p159 = scmp.le.s32.totalorder 1, %s9
    %p160 = scmp.lt.s32.totalorder %s9, 3
    %p161 = pnand %p159, %p160
    %p162 = pneg %p161
    // Predicated region
    $region29: #{basic_block_forward.2} parent=5 // pred_check
      _
    $region30: #{basic_block_forward.2} parent=5 // pred_check_branch
      %164 = sbr.rel (%p161) target = $region32
    $region31: #{basic_block_forward.2} parent=5 // pred_region
      %s165 = ssub.s32 %s9, 1
      %p166 = scmp.lt.s32.totalorder %s18, 1
      %s167 = scalar_select %p166, %s18, 1
      %s168 = smul.addr %s167, 41
      %s169 = smul.addr %s168, 4
      %s170 = scalar_lea.vmem %s0, %s169
      %p171 = pneg %p47
      %p172 = pneg %p44
      %p173 = scmp.lt.s32.totalorder %s19, 0
      %s174 = scalar_select %p173, %s19, 0
      %s175 = smul.addr %s174, 4
      %s176 = scalar_lea.vmem %s1, %s175
      %p177 = pneg %p73
      %p178 = pneg %p70
      %p179 = pneg %p94
      %p180 = pneg %p91
      %p181 = pneg %p122
      %p182 = pneg %p119
      %p183 = scmp.lt.s32.totalorder %s18, 1
      %s184 = scalar_select %p183, %s18, 1
      %p185 = scmp.lt.s32.totalorder %s19, 0
      %s186 = scalar_select %p185, %s19, 0
      %s187 = smul.addr %s184, 43
      %s188 = sadd.s32 %s186, %s187
      %s189 = smul.addr %s188, 4
      %s190 = scalar_lea.vmem %s3, %s189
      %p191 = scmp.lt.s32.totalorder %s18, 1
      %s192 = scalar_select %p191, %s18, 1
      %s193 = smul.addr %s192, 41
      %s194 = smul.addr %s193, 4
      %s195 = scalar_lea.vmem %s0, %s194
      %p196 = scmp.lt.s32.totalorder %s19, 0
      %s197 = scalar_select %p196, %s19, 0
      %s198 = smul.addr %s197, 4
      %s199 = scalar_lea.vmem %s1, %s198
      %p200 = scmp.lt.s32.totalorder %s18, 1
      %s201 = scalar_select %p200, %s18, 1
      %p202 = scmp.lt.s32.totalorder %s19, 0
      %s203 = scalar_select %p202, %s19, 0
      %s204 = smul.addr %s201, 43
      %s205 = sadd.s32 %s203, %s204
      %s206 = smul.addr %s205, 4
      %s207 = scalar_lea.vmem %s3, %s206
      %v209 = vld [vmem:[%s195] sm:$0xf]
      %v210 = vld [vmem:[%s195 + $0x4] sm:$0xf]
      %v211 = vld [vmem:[%s195 + $0x8] sm:$0xf]
      %v212 = vld [vmem:[%s195 + $0xc] sm:$0xf]
      %v213 = vld [vmem:[%s195 + $0x10] sm:$0xf]
      %v214 = vld [vmem:[%s195 + $0x14] sm:$0xf]
      %v215 = vld [vmem:[%s195 + $0x18] sm:$0xf]
      %v216 = vld [vmem:[%s195 + $0x1c] sm:$0xf]
      %v217 = vld [vmem:[%s195 + $0x20] sm:$0xf]
      %v218 = vld [vmem:[%s195 + $0x24] sm:$0xf]
      %v219 = vld [vmem:[%s195 + $0x28] sm:$0xf]
      %v220 = vld [vmem:[%s195 + $0x2c] sm:$0xf]
      %v221 = vld [vmem:[%s195 + $0x30] sm:$0xf]
      %v222 = vld [vmem:[%s195 + $0x34] sm:$0xf]
      %v223 = vld [vmem:[%s195 + $0x38] sm:$0xf]
      %v224 = vld [vmem:[%s195 + $0x3c] sm:$0xf]
      %v225 = vld [vmem:[%s195 + $0x40] sm:$0xf]
      %v226 = vld [vmem:[%s195 + $0x44] sm:$0xf]
      %v227 = vld [vmem:[%s195 + $0x48] sm:$0xf]
      %v228 = vld [vmem:[%s195 + $0x4c] sm:$0xf]
      %v229 = vld [vmem:[%s195 + $0x50] sm:$0xf]
      %v230 = vld [vmem:[%s195 + $0x54] sm:$0xf]
      %v231 = vld [vmem:[%s195 + $0x58] sm:$0xf]
      %v232 = vld [vmem:[%s195 + $0x5c] sm:$0xf]
      %v233 = vld [vmem:[%s195 + $0x60] sm:$0xf]
      %v234 = vld [vmem:[%s195 + $0x64] sm:$0xf]
      %v235 = vld [vmem:[%s195 + $0x68] sm:$0xf]
      %v236 = vld [vmem:[%s195 + $0x6c] sm:$0xf]
      %v237 = vld [vmem:[%s195 + $0x70] sm:$0xf]
      %v238 = vld [vmem:[%s195 + $0x74] sm:$0xf]
      %v239 = vld [vmem:[%s195 + $0x78] sm:$0xf]
      %v240 = vld [vmem:[%s195 + $0x7c] sm:$0xf]
      %v241 = vld [vmem:[%s195 + $0x80] sm:$0xf]
      %v242 = vld [vmem:[%s195 + $0x84] sm:$0xf]
      %v243 = vld [vmem:[%s195 + $0x88] sm:$0xf]
      %v244 = vld [vmem:[%s195 + $0x8c] sm:$0xf]
      %v245 = vld [vmem:[%s195 + $0x90] sm:$0x1]
      %v246 = vld [vmem:[%s195] sm:$0xe]
      %v283 = vunpack.c.l.b16 %v209
      %v284 = vunpack.c.l.b16 %v210
      %v285 = vunpack.c.l.b16 %v211
      %v286 = vunpack.c.l.b16 %v212
      %v287 = vunpack.c.l.b16 %v213
      %v288 = vunpack.c.l.b16 %v214
      %v289 = vunpack.c.l.b16 %v215
      %v290 = vunpack.c.l.b16 %v216
      %v291 = vunpack.c.l.b16 %v217
      %v292 = vunpack.c.l.b16 %v218
      %v293 = vunpack.c.l.b16 %v219
      %v294 = vunpack.c.l.b16 %v220
      %v295 = vunpack.c.l.b16 %v221
      %v296 = vunpack.c.l.b16 %v222
      %v297 = vunpack.c.l.b16 %v223
      %v298 = vunpack.c.l.b16 %v224
      %v299 = vunpack.c.l.b16 %v225
      %v300 = vunpack.c.l.b16 %v226
      %v301 = vunpack.c.l.b16 %v227
      %v302 = vunpack.c.l.b16 %v228
      %v303 = vunpack.c.l.b16 %v229
      %v304 = vunpack.c.l.b16 %v230
      %v305 = vunpack.c.l.b16 %v231
      %v306 = vunpack.c.l.b16 %v232
      %v307 = vunpack.c.l.b16 %v233
      %v308 = vunpack.c.l.b16 %v234
      %v309 = vunpack.c.l.b16 %v235
      %v310 = vunpack.c.l.b16 %v236
      %v311 = vunpack.c.l.b16 %v237
      %v312 = vunpack.c.l.b16 %v238
      %v313 = vunpack.c.l.b16 %v239
      %v314 = vunpack.c.l.b16 %v240
      %v315 = vunpack.c.l.b16 %v241
      %v316 = vunpack.c.l.b16 %v242
      %v317 = vunpack.c.l.b16 %v243
      %v318 = vunpack.c.l.b16 %v244
      %v319 = vpack.c.b16 %v284, %v283
      %v320 = vpack.c.b16 %v286, %v285
      %v321 = vpack.c.b16 %v288, %v287
      %v322 = vpack.c.b16 %v290, %v289
      %v323 = vpack.c.b16 %v292, %v291
      %v324 = vpack.c.b16 %v294, %v293
      %v325 = vpack.c.b16 %v296, %v295
      %v326 = vpack.c.b16 %v298, %v297
      %v327 = vpack.c.b16 %v300, %v299
      %v328 = vpack.c.b16 %v302, %v301
      %v329 = vpack.c.b16 %v304, %v303
      %v330 = vpack.c.b16 %v306, %v305
      %v331 = vpack.c.b16 %v308, %v307
      %v332 = vpack.c.b16 %v310, %v309
      %v333 = vpack.c.b16 %v312, %v311
      %v334 = vpack.c.b16 %v314, %v313
      %v335 = vpack.c.b16 %v316, %v315
      %v336 = vpack.c.b16 %v318, %v317
      %v338 = vunpack.c.l.b16 %v245
      %v339 = vpack.c.b16 %v338, %v338
      %vm340 = vsmask.f32 7424
      %v342 = vshrl.u32 %v319, 16
      %v344 = vshll.u32 %v319, 16
      %v346 = vrot.slane %v344, 1
      %v347 = vor.u32 %v342, %v346
      %v349 = vshll.u32 %v320, 16
      %v351 = vrot.slane %v349, 1
      %v352 = vsel %vm340, %v347, %v351
      %v353 = vshrl.u32 %v320, 16
      %v355 = vor.u32 %v353, %v351
      %v357 = vshll.u32 %v321, 16
      %v359 = vrot.slane %v357, 1
      %v360 = vsel %vm340, %v355, %v359
      %v361 = vshrl.u32 %v321, 16
      %v363 = vor.u32 %v361, %v359
      %v365 = vshll.u32 %v322, 16
      %v367 = vrot.slane %v365, 1
      %v368 = vsel %vm340, %v363, %v367
      %v369 = vshrl.u32 %v322, 16
      %v371 = vor.u32 %v369, %v367
      %v373 = vshll.u32 %v323, 16
      %v375 = vrot.slane %v373, 1
      %v376 = vsel %vm340, %v371, %v375
      %v377 = vshrl.u32 %v323, 16
      %v379 = vor.u32 %v377, %v375
      %v381 = vshll.u32 %v324, 16
      %v383 = vrot.slane %v381, 1
      %v384 = vsel %vm340, %v379, %v383
      %v385 = vshrl.u32 %v324, 16
      %v387 = vor.u32 %v385, %v383
      %v389 = vshll.u32 %v325, 16
      %v391 = vrot.slane %v389, 1
      %v392 = vsel %vm340, %v387, %v391
      %v393 = vshrl.u32 %v325, 16
      %v395 = vor.u32 %v393, %v391
      %v397 = vshll.u32 %v326, 16
      %v399 = vrot.slane %v397, 1
      %v400 = vsel %vm340, %v395, %v399
      %v401 = vshrl.u32 %v326, 16
      %v403 = vor.u32 %v401, %v399
      %v405 = vshll.u32 %v327, 16
      %v407 = vrot.slane %v405, 1
      %v408 = vsel %vm340, %v403, %v407
      %v409 = vshrl.u32 %v327, 16
      %v411 = vor.u32 %v409, %v407
      %v413 = vshll.u32 %v328, 16
      %v415 = vrot.slane %v413, 1
      %v416 = vsel %vm340, %v411, %v415
      %v417 = vshrl.u32 %v328, 16
      %v419 = vor.u32 %v417, %v415
      %v421 = vshll.u32 %v329, 16
      %v423 = vrot.slane %v421, 1
      %v424 = vsel %vm340, %v419, %v423
      %v425 = vshrl.u32 %v329, 16
      %v427 = vor.u32 %v425, %v423
      %v429 = vshll.u32 %v330, 16
      %v431 = vrot.slane %v429, 1
      %v432 = vsel %vm340, %v427, %v431
      %v433 = vshrl.u32 %v330, 16
      %v435 = vor.u32 %v433, %v431
      %v437 = vshll.u32 %v331, 16
      %v439 = vrot.slane %v437, 1
      %v440 = vsel %vm340, %v435, %v439
      %v441 = vshrl.u32 %v331, 16
      %v443 = vor.u32 %v441, %v439
      %v445 = vshll.u32 %v332, 16
      %v447 = vrot.slane %v445, 1
      %v448 = vsel %vm340, %v443, %v447
      %v449 = vshrl.u32 %v332, 16
      %v451 = vor.u32 %v449, %v447
      %v453 = vshll.u32 %v333, 16
      %v455 = vrot.slane %v453, 1
      %v456 = vsel %vm340, %v451, %v455
      %v457 = vshrl.u32 %v333, 16
      %v459 = vor.u32 %v457, %v455
      %v461 = vshll.u32 %v334, 16
      %v463 = vrot.slane %v461, 1
      %v464 = vsel %vm340, %v459, %v463
      %v465 = vshrl.u32 %v334, 16
      %v467 = vor.u32 %v465, %v463
      %v469 = vshll.u32 %v335, 16
      %v471 = vrot.slane %v469, 1
      %v472 = vsel %vm340, %v467, %v471
      %v473 = vshrl.u32 %v335, 16
      %v475 = vor.u32 %v473, %v471
      %v477 = vshll.u32 %v336, 16
      %v479 = vrot.slane %v477, 1
      %v480 = vsel %vm340, %v475, %v479
      %v481 = vshrl.u32 %v336, 16
      %v483 = vor.u32 %v481, %v479
      %v485 = vshll.u32 %v339, 16
      %v487 = vrot.slane %v485, 1
      %v488 = vsel %vm340, %v483, %v487
      %489 = vrot.lane.b32.xlu0 %v352, 16
      %v490 = vpop.permute.xlu0 %489
      %491 = vrot.lane.b32.xlu0 %v360, 16
      %v492 = vpop.permute.xlu0 %491
      %493 = vrot.lane.b32.xlu0 %v368, 16
      %v494 = vpop.permute.xlu0 %493
      %495 = vrot.lane.b32.xlu0 %v376, 16
      %v496 = vpop.permute.xlu0 %495
      %497 = vrot.lane.b32.xlu0 %v384, 16
      %v498 = vpop.permute.xlu0 %497
      %499 = vrot.lane.b32.xlu0 %v392, 16
      %v500 = vpop.permute.xlu0 %499
      %501 = vrot.lane.b32.xlu0 %v400, 16
      %v502 = vpop.permute.xlu0 %501
      %503 = vrot.lane.b32.xlu0 %v408, 16
      %v504 = vpop.permute.xlu0 %503
      %505 = vrot.lane.b32.xlu0 %v416, 16
      %v506 = vpop.permute.xlu0 %505
      %507 = vrot.lane.b32.xlu0 %v424, 16
      %v508 = vpop.permute.xlu0 %507
      %509 = vrot.lane.b32.xlu0 %v432, 16
      %v510 = vpop.permute.xlu0 %509
      %511 = vrot.lane.b32.xlu0 %v440, 16
      %v512 = vpop.permute.xlu0 %511
      %513 = vrot.lane.b32.xlu0 %v448, 16
      %v514 = vpop.permute.xlu0 %513
      %515 = vrot.lane.b32.xlu0 %v456, 16
      %v516 = vpop.permute.xlu0 %515
      %517 = vrot.lane.b32.xlu0 %v464, 16
      %v518 = vpop.permute.xlu0 %517
      %519 = vrot.lane.b32.xlu0 %v472, 16
      %v520 = vpop.permute.xlu0 %519
      %521 = vrot.lane.b32.xlu0 %v480, 16
      %v522 = vpop.permute.xlu0 %521
      %523 = vrot.lane.b32.xlu0 %v488, 16
      %v524 = vpop.permute.xlu0 %523
      %v526 = vunpack.c.l.b16 %v246
      %v527 = vpack.c.b16 %v284, %v526
      %vm528 = vcmask 1046528
      %v529 = vrot.slane %v527, 1
      %v530 = vrot.slane %v320, 1
      %v531 = vsel %vm528, %v529, %v530
      %v532 = vrot.slane %v321, 1
      %v533 = vsel %vm528, %v530, %v532
      %v534 = vrot.slane %v322, 1
      %v535 = vsel %vm528, %v532, %v534
      %v536 = vrot.slane %v323, 1
      %v537 = vsel %vm528, %v534, %v536
      %v538 = vrot.slane %v324, 1
      %v539 = vsel %vm528, %v536, %v538
      %v540 = vrot.slane %v325, 1
      %v541 = vsel %vm528, %v538, %v540
      %v542 = vrot.slane %v326, 1
      %v543 = vsel %vm528, %v540, %v542
      %v544 = vrot.slane %v327, 1
      %v545 = vsel %vm528, %v542, %v544
      %v546 = vrot.slane %v328, 1
      %v547 = vsel %vm528, %v544, %v546
      %v548 = vrot.slane %v329, 1
      %v549 = vsel %vm528, %v546, %v548
      %v550 = vrot.slane %v330, 1
      %v551 = vsel %vm528, %v548, %v550
      %v552 = vrot.slane %v331, 1
      %v553 = vsel %vm528, %v550, %v552
      %v554 = vrot.slane %v332, 1
      %v555 = vsel %vm528, %v552, %v554
      %v556 = vrot.slane %v333, 1
      %v557 = vsel %vm528, %v554, %v556
      %v558 = vrot.slane %v334, 1
      %v559 = vsel %vm528, %v556, %v558
      %v560 = vrot.slane %v335, 1
      %v561 = vsel %vm528, %v558, %v560
      %v562 = vrot.slane %v336, 1
      %v563 = vsel %vm528, %v560, %v562
      %v564 = vrot.slane %v339, 1
      %v565 = vsel %vm528, %v562, %v564
      %566 = vrot.lane.b32.xlu0 %v531, 32
      %v567 = vpop.permute.xlu0 %566
      %568 = vrot.lane.b32.xlu0 %v533, 32
      %v569 = vpop.permute.xlu0 %568
      %570 = vrot.lane.b32.xlu0 %v535, 32
      %v571 = vpop.permute.xlu0 %570
      %572 = vrot.lane.b32.xlu0 %v537, 32
      %v573 = vpop.permute.xlu0 %572
      %574 = vrot.lane.b32.xlu0 %v539, 32
      %v575 = vpop.permute.xlu0 %574
      %576 = vrot.lane.b32.xlu0 %v541, 32
      %v577 = vpop.permute.xlu0 %576
      %578 = vrot.lane.b32.xlu0 %v543, 32
      %v579 = vpop.permute.xlu0 %578
      %580 = vrot.lane.b32.xlu0 %v545, 32
      %v581 = vpop.permute.xlu0 %580
      %582 = vrot.lane.b32.xlu0 %v547, 32
      %v583 = vpop.permute.xlu0 %582
      %584 = vrot.lane.b32.xlu0 %v549, 32
      %v585 = vpop.permute.xlu0 %584
      %586 = vrot.lane.b32.xlu0 %v551, 32
      %v587 = vpop.permute.xlu0 %586
      %588 = vrot.lane.b32.xlu0 %v553, 32
      %v589 = vpop.permute.xlu0 %588
      %590 = vrot.lane.b32.xlu0 %v555, 32
      %v591 = vpop.permute.xlu0 %590
      %592 = vrot.lane.b32.xlu0 %v557, 32
      %v593 = vpop.permute.xlu0 %592
      %594 = vrot.lane.b32.xlu0 %v559, 32
      %v595 = vpop.permute.xlu0 %594
      %596 = vrot.lane.b32.xlu0 %v561, 32
      %v597 = vpop.permute.xlu0 %596
      %598 = vrot.lane.b32.xlu0 %v563, 32
      %v599 = vpop.permute.xlu0 %598
      %600 = vrot.lane.b32.xlu0 %v565, 32
      %v601 = vpop.permute.xlu0 %600
      %vm602 = vcmask 130048
      %v604 = vsel %vm602, %v319, %v490
      %v606 = vsel %vm602, %v320, %v492
      %v608 = vsel %vm602, %v321, %v494
      %v610 = vsel %vm602, %v322, %v496
      %v612 = vsel %vm602, %v323, %v498
      %v614 = vsel %vm602, %v324, %v500
      %v616 = vsel %vm602, %v325, %v502
      %v618 = vsel %vm602, %v326, %v504
      %v620 = vsel %vm602, %v327, %v506
      %v622 = vsel %vm602, %v328, %v508
      %v624 = vsel %vm602, %v329, %v510
      %v626 = vsel %vm602, %v330, %v512
      %v628 = vsel %vm602, %v331, %v514
      %v630 = vsel %vm602, %v332, %v516
      %v632 = vsel %vm602, %v333, %v518
      %v634 = vsel %vm602, %v334, %v520
      %v636 = vsel %vm602, %v335, %v522
      %v638 = vsel %vm602, %v336, %v524
      %vm639 = vcmask 261120
      %v641 = vsel %vm639, %v604, %v567
      %v643 = vsel %vm639, %v606, %v569
      %v645 = vsel %vm639, %v608, %v571
      %v647 = vsel %vm639, %v610, %v573
      %v649 = vsel %vm639, %v612, %v575
      %v651 = vsel %vm639, %v614, %v577
      %v653 = vsel %vm639, %v616, %v579
      %v655 = vsel %vm639, %v618, %v581
      %v657 = vsel %vm639, %v620, %v583
      %v659 = vsel %vm639, %v622, %v585
      %v661 = vsel %vm639, %v624, %v587
      %v663 = vsel %vm639, %v626, %v589
      %v665 = vsel %vm639, %v628, %v591
      %v667 = vsel %vm639, %v630, %v593
      %v669 = vsel %vm639, %v632, %v595
      %v671 = vsel %vm639, %v634, %v597
      %v673 = vsel %vm639, %v636, %v599
      %v675 = vsel %vm639, %v638, %v601
      %v676 = vld [vmem:[%s199] sm:$0xf]
      %v677 = vld [vmem:[%s199 + $0x4] sm:$0xf]
      %v678 = vld [vmem:[%s199 + $0x8] sm:$0xf]
      %v679 = vld [vmem:[%s199 + $0xc] sm:$0xf]
      %v680 = vld [vmem:[%s199 + $0x10] sm:$0xf]
      %v681 = vld [vmem:[%s199 + $0x14] sm:$0xf]
      %v682 = vld [vmem:[%s195 + $0x8] sm:$0xe]
      %v683 = vld [vmem:[%s195 + $0x90] sm:$0xf]
      %v684 = vld [vmem:[%s195 + $0x94] sm:$0xf]
      %v685 = vld [vmem:[%s195 + $0x98] sm:$0x1]
      %v686 = vld [vmem:[%s195 + $0x98] sm:$0x3]
      %v687 = vld [vmem:[%s195 + $0x8] sm:$0xc]
      %v692 = vunpack.c.l.b16 %v682
      %v693 = vunpack.c.l.b16 %v683
      %v694 = vunpack.c.l.b16 %v684
      %v695 = vunpack.c.l.b16 %v685
      %v696 = vpack.c.b16 %v286, %v692
      %v697 = vpack.c.b16 %v694, %v693
      %v698 = vpack.c.b16 %v695, %v695
      %v700 = vunpack.c.l.b16 %v686
      %v701 = vpack.c.b16 %v700, %v700
      %v703 = vshrl.u32 %v696, 16
      %v705 = vshll.u32 %v696, 16
      %v707 = vrot.slane %v705, 1
      %v708 = vor.u32 %v703, %v707
      %v709 = vsel %vm340, %v708, %v359
      %v711 = vshll.u32 %v697, 16
      %v713 = vrot.slane %v711, 1
      %v714 = vsel %vm340, %v483, %v713
      %v715 = vshrl.u32 %v697, 16
      %v717 = vor.u32 %v715, %v713
      %v719 = vshll.u32 %v701, 16
      %v721 = vrot.slane %v719, 1
      %v722 = vsel %vm340, %v717, %v721
      %v723 = vshrl.u32 %v701, 16
      %v725 = vor.u32 %v723, %v721
      %726 = vrot.lane.b32.xlu0 %v709, 16
      %v727 = vpop.permute.xlu0 %726
      %728 = vrot.lane.b32.xlu0 %v714, 16
      %v729 = vpop.permute.xlu0 %728
      %730 = vrot.lane.b32.xlu0 %v722, 16
      %v731 = vpop.permute.xlu0 %730
      %732 = vrot.lane.b32.xlu0 %v725, 16
      %v733 = vpop.permute.xlu0 %732
      %v735 = vunpack.c.l.b16 %v687
      %v736 = vpack.c.b16 %v286, %v735
      %v737 = vrot.slane %v736, 1
      %v738 = vsel %vm528, %v737, %v532
      %v739 = vrot.slane %v697, 1
      %v740 = vsel %vm528, %v562, %v739
      %v741 = vrot.slane %v701, 1
      %v742 = vsel %vm528, %v739, %v741
      %743 = vrot.lane.b32.xlu0 %v738, 32
      %v744 = vpop.permute.xlu0 %743
      %745 = vrot.lane.b32.xlu0 %v740, 32
      %v746 = vpop.permute.xlu0 %745
      %747 = vrot.lane.b32.xlu0 %v742, 32
      %v748 = vpop.permute.xlu0 %747
      %749 = vrot.lane.b32.xlu0 %v741, 32
      %v750 = vpop.permute.xlu0 %749
      %v752 = vsel %vm602, %v696, %v727
      %v754 = vsel %vm602, %v336, %v729
      %v756 = vsel %vm602, %v697, %v731
      %v759 = vsel %vm602, %v698, %v733
      %v761 = vsel %vm639, %v752, %v744
      %v763 = vsel %vm639, %v754, %v746
      %v765 = vsel %vm639, %v756, %v748
      %v767 = vsel %vm639, %v759, %v750
      %s768 = scalar_lea.vmem %s199, 24
      %v769 = vld [vmem:[%s768] sm:$0xf]
      %v770 = vld [vmem:[%s768 + $0x4] sm:$0xf]
      %v771 = vld [vmem:[%s768 + $0x8] sm:$0xf]
      %v772 = vld [vmem:[%s768 + $0xc] sm:$0xf]
      %v773 = vld [vmem:[%s768 + $0x10] sm:$0xf]
      %v774 = vld [vmem:[%s768 + $0x14] sm:$0xf]
      %v794 = vrot.slane %v761, 1
      %v795 = vrot.slane %v645, 1
      %v796 = vsel %vm528, %v794, %v795
      %v797 = vrot.slane %v647, 1
      %v798 = vsel %vm528, %v795, %v797
      %v799 = vrot.slane %v649, 1
      %v800 = vsel %vm528, %v797, %v799
      %v801 = vrot.slane %v651, 1
      %v802 = vsel %vm528, %v799, %v801
      %v803 = vrot.slane %v653, 1
      %v804 = vsel %vm528, %v801, %v803
      %v805 = vrot.slane %v655, 1
      %v806 = vsel %vm528, %v803, %v805
      %v807 = vrot.slane %v657, 1
      %v808 = vsel %vm528, %v805, %v807
      %v809 = vrot.slane %v659, 1
      %v810 = vsel %vm528, %v807, %v809
      %v811 = vrot.slane %v661, 1
      %v812 = vsel %vm528, %v809, %v811
      %v813 = vrot.slane %v663, 1
      %v814 = vsel %vm528, %v811, %v813
      %v815 = vrot.slane %v665, 1
      %v816 = vsel %vm528, %v813, %v815
      %v817 = vrot.slane %v667, 1
      %v818 = vsel %vm528, %v815, %v817
      %v819 = vrot.slane %v669, 1
      %v820 = vsel %vm528, %v817, %v819
      %v821 = vrot.slane %v671, 1
      %v822 = vsel %vm528, %v819, %v821
      %v823 = vrot.slane %v673, 1
      %v824 = vsel %vm528, %v821, %v823
      %v825 = vrot.slane %v763, 1
      %v826 = vsel %vm528, %v823, %v825
      %v827 = vrot.slane %v765, 1
      %v828 = vsel %vm528, %v825, %v827
      %v829 = vrot.slane %v767, 1
      %v830 = vsel %vm528, %v827, %v829
      %v837 = vunpack.c.l.b16 %v769
      %v838 = vunpack.c.l.b16 %v770
      %v839 = vunpack.c.l.b16 %v771
      %v840 = vunpack.c.l.b16 %v772
      %v841 = vunpack.c.l.b16 %v773
      %v842 = vunpack.c.l.b16 %v774
      %v843 = vpack.c.b16 %v838, %v837
      %v844 = vpack.c.b16 %v840, %v839
      %v845 = vpack.c.b16 %v842, %v841
      %vm849 = vcmask 392192
      %v851 = vsel %vm849, %v796, 0
      %v854 = vsel %vm849, %v798, 0
      %v857 = vsel %vm849, %v800, 0
      %v860 = vsel %vm849, %v802, 0
      %v863 = vsel %vm849, %v804, 0
      %v866 = vsel %vm849, %v806, 0
      %v869 = vsel %vm849, %v808, 0
      %v872 = vsel %vm849, %v810, 0
      %v875 = vsel %vm849, %v812, 0
      %v878 = vsel %vm849, %v814, 0
      %v881 = vsel %vm849, %v816, 0
      %v884 = vsel %vm849, %v818, 0
      %v887 = vsel %vm849, %v820, 0
      %v890 = vsel %vm849, %v822, 0
      %v893 = vsel %vm849, %v824, 0
      %v896 = vsel %vm849, %v826, 0
      %v899 = vsel %vm849, %v828, 0
      %v902 = vsel %vm849, %v830, 0
      %904 = vmatprep.subr.bf16.mxu0 0
      %905 = vmatpush1.bf16.msra.mxu0 0
      %906 = vmatprep.subr.bf16.mxu0 0
      %907 = vmatpush1.bf16.msra.mxu0 0
      %908 = vmatprep.subr.bf16.mxu0 0
      %909 = vmatpush1.bf16.msra.mxu0 0
      %910 = vmatprep.subr.bf16.mxu0 0
      %911 = vmatpush1.bf16.msra.mxu0 0
      %912 = vmatprep.subr.bf16.mxu0 0
      %913 = vmatpush1.bf16.msra.mxu0 0
      %914 = vmatprep.subr.bf16.mxu0 0
      %915 = vmatpush1.bf16.msra.mxu0 %v845
      %916 = vmatprep.subr.bf16.mxu0 0
      %917 = vmatpush1.bf16.msra.mxu0 %v844
      %918 = vmatprep.subr.bf16.mxu0 0
      %919 = vmatpush1.bf16.msra.mxu0 %v843
      %920 = vmatprep.subr.bf16.mxu0 0
      %921 = vmatpush2.bf16.msra.mxu0 0
      %922 = vmatprep.subr.bf16.mxu0 0
      %923 = vmatpush2.bf16.msra.mxu0 0
      %924 = vmatprep.subr.bf16.mxu0 0
      %925 = vmatpush2.bf16.msra.mxu0 0
      %926 = vmatprep.subr.bf16.mxu0 0
      %927 = vmatpush2.bf16.msra.mxu0 0
      %928 = vmatprep.subr.bf16.mxu0 0
      %929 = vmatpush2.bf16.msra.mxu0 0
      %930 = vmatprep.subr.bf16.mxu0 0
      %931 = vmatpush2.bf16.msra.mxu0 0
      %932 = vmatprep.subr.bf16.mxu0 0
      %933 = vmatpush2.bf16.msra.mxu0 0
      %934 = vmatprep.subr.bf16.mxu0 0
      %935 = vmatpush2.bf16.msra.mxu0 0
      %936 = vmatprep.mubr.bf16.mxu0 0
      %937 = vmatmul.mubr.bf16.gmra.mxu0 %v851
      %v938 = vpop.f32.mrf.mxu0
      %v939 = vadd.f32 0.0, %v938
      %v940 = vpop.f32.mrf.mxu0
      %v941 = vpop.f32.mrf.mxu0
      %v942 = vadd.f32 0.0, %v941
      %v943 = vpop.f32.mrf.mxu0
      %944 = vmatprep.mubr.bf16.mxu0 0
      %945 = vmatmul.mubr.bf16.gmra.mxu0 %v854
      %v946 = vpop.f32.mrf.mxu0
      %v947 = vadd.f32 0.0, %v946
      %v948 = vpop.f32.mrf.mxu0
      %v949 = vpop.f32.mrf.mxu0
      %v950 = vadd.f32 0.0, %v949
      %v951 = vpop.f32.mrf.mxu0
      %952 = vmatprep.mubr.bf16.mxu0 0
      %953 = vmatmul.mubr.bf16.gmra.mxu0 %v857
      %v954 = vpop.f32.mrf.mxu0
      %v955 = vadd.f32 0.0, %v954
      %v956 = vpop.f32.mrf.mxu0
      %v957 = vpop.f32.mrf.mxu0
      %v958 = vadd.f32 0.0, %v957
      %v959 = vpop.f32.mrf.mxu0
      %960 = vmatprep.mubr.bf16.mxu0 0
      %961 = vmatmul.mubr.bf16.gmra.mxu0 %v860
      %v962 = vpop.f32.mrf.mxu0
      %v963 = vadd.f32 0.0, %v962
      %v964 = vpop.f32.mrf.mxu0
      %v965 = vpop.f32.mrf.mxu0
      %v966 = vadd.f32 0.0, %v965
      %v967 = vpop.f32.mrf.mxu0
      %968 = vmatprep.mubr.bf16.mxu0 0
      %969 = vmatmul.mubr.bf16.gmra.mxu0 %v863
      %v970 = vpop.f32.mrf.mxu0
      %v971 = vadd.f32 0.0, %v970
      %v972 = vpop.f32.mrf.mxu0
      %v973 = vpop.f32.mrf.mxu0
      %v974 = vadd.f32 0.0, %v973
      %v975 = vpop.f32.mrf.mxu0
      %976 = vmatprep.mubr.bf16.mxu0 0
      %977 = vmatmul.mubr.bf16.gmra.mxu0 %v866
      %v978 = vpop.f32.mrf.mxu0
      %v979 = vadd.f32 0.0, %v978
      %v980 = vpop.f32.mrf.mxu0
      %v981 = vpop.f32.mrf.mxu0
      %v982 = vadd.f32 0.0, %v981
      %v983 = vpop.f32.mrf.mxu0
      %984 = vmatprep.mubr.bf16.mxu0 0
      %985 = vmatmul.mubr.bf16.gmra.mxu0 %v869
      %v986 = vpop.f32.mrf.mxu0
      %v987 = vadd.f32 0.0, %v986
      %v988 = vpop.f32.mrf.mxu0
      %v989 = vpop.f32.mrf.mxu0
      %v990 = vadd.f32 0.0, %v989
      %v991 = vpop.f32.mrf.mxu0
      %992 = vmatprep.mubr.bf16.mxu0 0
      %993 = vmatmul.mubr.bf16.gmra.mxu0 %v872
      %v994 = vpop.f32.mrf.mxu0
      %v995 = vadd.f32 0.0, %v994
      %v996 = vpop.f32.mrf.mxu0
      %v997 = vpop.f32.mrf.mxu0
      %v998 = vadd.f32 0.0, %v997
      %v999 = vpop.f32.mrf.mxu0
      %1000 = vmatprep.mubr.bf16.mxu0 0
      %1001 = vmatmul.mubr.bf16.gmra.mxu0 %v875
      %v1002 = vpop.f32.mrf.mxu0
      %v1003 = vadd.f32 0.0, %v1002
      %v1004 = vpop.f32.mrf.mxu0
      %v1005 = vpop.f32.mrf.mxu0
      %v1006 = vadd.f32 0.0, %v1005
      %v1007 = vpop.f32.mrf.mxu0
      %1008 = vmatprep.mubr.bf16.mxu0 0
      %1009 = vmatmul.mubr.bf16.gmra.mxu0 %v878
      %v1010 = vpop.f32.mrf.mxu0
      %v1011 = vadd.f32 0.0, %v1010
      %v1012 = vpop.f32.mrf.mxu0
      %v1013 = vpop.f32.mrf.mxu0
      %v1014 = vadd.f32 0.0, %v1013
      %v1015 = vpop.f32.mrf.mxu0
      %1016 = vmatprep.mubr.bf16.mxu0 0
      %1017 = vmatmul.mubr.bf16.gmra.mxu0 %v881
      %v1018 = vpop.f32.mrf.mxu0
      %v1019 = vadd.f32 0.0, %v1018
      %v1020 = vpop.f32.mrf.mxu0
      %v1021 = vpop.f32.mrf.mxu0
      %v1022 = vadd.f32 0.0, %v1021
      %v1023 = vpop.f32.mrf.mxu0
      %1024 = vmatprep.mubr.bf16.mxu0 0
      %1025 = vmatmul.mubr.bf16.gmra.mxu0 %v884
      %v1026 = vpop.f32.mrf.mxu0
      %v1027 = vadd.f32 0.0, %v1026
      %v1028 = vpop.f32.mrf.mxu0
      %v1029 = vpop.f32.mrf.mxu0
      %v1030 = vadd.f32 0.0, %v1029
      %v1031 = vpop.f32.mrf.mxu0
      %1032 = vmatprep.mubr.bf16.mxu0 0
      %1033 = vmatmul.mubr.bf16.gmra.mxu0 %v887
      %v1034 = vpop.f32.mrf.mxu0
      %v1035 = vadd.f32 0.0, %v1034
      %v1036 = vpop.f32.mrf.mxu0
      %v1037 = vpop.f32.mrf.mxu0
      %v1038 = vadd.f32 0.0, %v1037
      %v1039 = vpop.f32.mrf.mxu0
      %1040 = vmatprep.mubr.bf16.mxu0 0
      %1041 = vmatmul.mubr.bf16.gmra.mxu0 %v890
      %v1042 = vpop.f32.mrf.mxu0
      %v1043 = vadd.f32 0.0, %v1042
      %v1044 = vpop.f32.mrf.mxu0
      %v1045 = vpop.f32.mrf.mxu0
      %v1046 = vadd.f32 0.0, %v1045
      %v1047 = vpop.f32.mrf.mxu0
      %1048 = vmatprep.mubr.bf16.mxu0 0
      %1049 = vmatmul.mubr.bf16.gmra.mxu0 %v893
      %v1050 = vpop.f32.mrf.mxu0
      %v1051 = vadd.f32 0.0, %v1050
      %v1052 = vpop.f32.mrf.mxu0
      %v1053 = vpop.f32.mrf.mxu0
      %v1054 = vadd.f32 0.0, %v1053
      %v1055 = vpop.f32.mrf.mxu0
      %1056 = vmatprep.mubr.bf16.mxu0 0
      %1057 = vmatmul.mubr.bf16.gmra.mxu0 %v896
      %v1058 = vpop.f32.mrf.mxu0
      %v1059 = vadd.f32 0.0, %v1058
      %v1060 = vpop.f32.mrf.mxu0
      %v1061 = vpop.f32.mrf.mxu0
      %v1062 = vadd.f32 0.0, %v1061
      %v1063 = vpop.f32.mrf.mxu0
      %1064 = vmatprep.mubr.bf16.mxu0 0
      %1065 = vmatmul.mubr.bf16.gmra.mxu0 %v899
      %v1066 = vpop.f32.mrf.mxu0
      %v1067 = vadd.f32 0.0, %v1066
      %v1068 = vpop.f32.mrf.mxu0
      %v1069 = vpop.f32.mrf.mxu0
      %v1070 = vadd.f32 0.0, %v1069
      %v1071 = vpop.f32.mrf.mxu0
      %1072 = vmatprep.mubr.bf16.mxu0 0
      %1073 = vmatmul.mubr.bf16.gmra.mxu0 %v902
      %v1074 = vpop.f32.mrf.mxu0
      %v1075 = vadd.f32 0.0, %v1074
      %v1076 = vpop.f32.mrf.mxu0
      %v1077 = vpop.f32.mrf.mxu0
      %v1078 = vadd.f32 0.0, %v1077
      %v1079 = vpop.f32.mrf.mxu0
      %1080 = vdwg.mxu0
      %v1087 = vunpack.c.l.b16 %v676
      %v1088 = vunpack.c.l.b16 %v677
      %v1089 = vunpack.c.l.b16 %v678
      %v1090 = vunpack.c.l.b16 %v679
      %v1091 = vunpack.c.l.b16 %v680
      %v1092 = vunpack.c.l.b16 %v681
      %v1093 = vpack.c.b16 %v1088, %v1087
      %v1094 = vpack.c.b16 %v1090, %v1089
      %v1095 = vpack.c.b16 %v1092, %v1091
      %v1099 = vsel %vm849, %v641, 0
      %v1101 = vsel %vm849, %v643, 0
      %v1103 = vsel %vm849, %v645, 0
      %v1105 = vsel %vm849, %v647, 0
      %v1107 = vsel %vm849, %v649, 0
      %v1109 = vsel %vm849, %v651, 0
      %v1111 = vsel %vm849, %v653, 0
      %v1113 = vsel %vm849, %v655, 0
      %v1115 = vsel %vm849, %v657, 0
      %v1117 = vsel %vm849, %v659, 0
      %v1119 = vsel %vm849, %v661, 0
      %v1121 = vsel %vm849, %v663, 0
      %v1123 = vsel %vm849, %v665, 0
      %v1125 = vsel %vm849, %v667, 0
      %v1127 = vsel %vm849, %v669, 0
      %v1129 = vsel %vm849, %v671, 0
      %v1131 = vsel %vm849, %v673, 0
      %v1133 = vsel %vm849, %v675, 0
      %1135 = vmatprep.subr.bf16.mxu0 0
      %1136 = vmatpush1.bf16.msra.mxu0 0
      %1137 = vmatprep.subr.bf16.mxu0 0
      %1138 = vmatpush1.bf16.msra.mxu0 0
      %1139 = vmatprep.subr.bf16.mxu0 0
      %1140 = vmatpush1.bf16.msra.mxu0 0
      %1141 = vmatprep.subr.bf16.mxu0 0
      %1142 = vmatpush1.bf16.msra.mxu0 0
      %1143 = vmatprep.subr.bf16.mxu0 0
      %1144 = vmatpush1.bf16.msra.mxu0 0
      %1145 = vmatprep.subr.bf16.mxu0 0
      %1146 = vmatpush1.bf16.msra.mxu0 %v1095
      %1147 = vmatprep.subr.bf16.mxu0 0
      %1148 = vmatpush1.bf16.msra.mxu0 %v1094
      %1149 = vmatprep.subr.bf16.mxu0 0
      %1150 = vmatpush1.bf16.msra.mxu0 %v1093
      %1151 = vmatprep.subr.bf16.mxu0 0
      %1152 = vmatpush2.bf16.msra.mxu0 0
      %1153 = vmatprep.subr.bf16.mxu0 0
      %1154 = vmatpush2.bf16.msra.mxu0 0
      %1155 = vmatprep.subr.bf16.mxu0 0
      %1156 = vmatpush2.bf16.msra.mxu0 0
      %1157 = vmatprep.subr.bf16.mxu0 0
      %1158 = vmatpush2.bf16.msra.mxu0 0
      %1159 = vmatprep.subr.bf16.mxu0 0
      %1160 = vmatpush2.bf16.msra.mxu0 0
      %1161 = vmatprep.subr.bf16.mxu0 0
      %1162 = vmatpush2.bf16.msra.mxu0 0
      %1163 = vmatprep.subr.bf16.mxu0 0
      %1164 = vmatpush2.bf16.msra.mxu0 0
      %1165 = vmatprep.subr.bf16.mxu0 0
      %1166 = vmatpush2.bf16.msra.mxu0 0
      %1167 = vmatprep.mubr.bf16.mxu0 0
      %1168 = vmatmul.mubr.bf16.gmra.mxu0 %v1099
      %v1169 = vpop.f32.mrf.mxu0
      %v1170 = vadd.f32 %v939, %v1169
      %v1171 = vpop.f32.mrf.mxu0
      %v1172 = vpop.f32.mrf.mxu0
      %v1173 = vadd.f32 %v942, %v1172
      %v1174 = vpop.f32.mrf.mxu0
      %1175 = vmatprep.mubr.bf16.mxu0 0
      %1176 = vmatmul.mubr.bf16.gmra.mxu0 %v1101
      %v1177 = vpop.f32.mrf.mxu0
      %v1178 = vadd.f32 %v947, %v1177
      %v1179 = vpop.f32.mrf.mxu0
      %v1180 = vpop.f32.mrf.mxu0
      %v1181 = vadd.f32 %v950, %v1180
      %v1182 = vpop.f32.mrf.mxu0
      %1183 = vmatprep.mubr.bf16.mxu0 0
      %1184 = vmatmul.mubr.bf16.gmra.mxu0 %v1103
      %v1185 = vpop.f32.mrf.mxu0
      %v1186 = vadd.f32 %v955, %v1185
      %v1187 = vpop.f32.mrf.mxu0
      %v1188 = vpop.f32.mrf.mxu0
      %v1189 = vadd.f32 %v958, %v1188
      %v1190 = vpop.f32.mrf.mxu0
      %1191 = vmatprep.mubr.bf16.mxu0 0
      %1192 = vmatmul.mubr.bf16.gmra.mxu0 %v1105
      %v1193 = vpop.f32.mrf.mxu0
      %v1194 = vadd.f32 %v963, %v1193
      %v1195 = vpop.f32.mrf.mxu0
      %v1196 = vpop.f32.mrf.mxu0
      %v1197 = vadd.f32 %v966, %v1196
      %v1198 = vpop.f32.mrf.mxu0
      %1199 = vmatprep.mubr.bf16.mxu0 0
      %1200 = vmatmul.mubr.bf16.gmra.mxu0 %v1107
      %v1201 = vpop.f32.mrf.mxu0
      %v1202 = vadd.f32 %v971, %v1201
      %v1203 = vpop.f32.mrf.mxu0
      %v1204 = vpop.f32.mrf.mxu0
      %v1205 = vadd.f32 %v974, %v1204
      %v1206 = vpop.f32.mrf.mxu0
      %1207 = vmatprep.mubr.bf16.mxu0 0
      %1208 = vmatmul.mubr.bf16.gmra.mxu0 %v1109
      %v1209 = vpop.f32.mrf.mxu0
      %v1210 = vadd.f32 %v979, %v1209
      %v1211 = vpop.f32.mrf.mxu0
      %v1212 = vpop.f32.mrf.mxu0
      %v1213 = vadd.f32 %v982, %v1212
      %v1214 = vpop.f32.mrf.mxu0
      %1215 = vmatprep.mubr.bf16.mxu0 0
      %1216 = vmatmul.mubr.bf16.gmra.mxu0 %v1111
      %v1217 = vpop.f32.mrf.mxu0
      %v1218 = vadd.f32 %v987, %v1217
      %v1219 = vpop.f32.mrf.mxu0
      %v1220 = vpop.f32.mrf.mxu0
      %v1221 = vadd.f32 %v990, %v1220
      %v1222 = vpop.f32.mrf.mxu0
      %1223 = vmatprep.mubr.bf16.mxu0 0
      %1224 = vmatmul.mubr.bf16.gmra.mxu0 %v1113
      %v1225 = vpop.f32.mrf.mxu0
      %v1226 = vadd.f32 %v995, %v1225
      %v1227 = vpop.f32.mrf.mxu0
      %v1228 = vpop.f32.mrf.mxu0
      %v1229 = vadd.f32 %v998, %v1228
      %v1230 = vpop.f32.mrf.mxu0
      %1231 = vmatprep.mubr.bf16.mxu0 0
      %1232 = vmatmul.mubr.bf16.gmra.mxu0 %v1115
      %v1233 = vpop.f32.mrf.mxu0
      %v1234 = vadd.f32 %v1003, %v1233
      %v1235 = vpop.f32.mrf.mxu0
      %v1236 = vpop.f32.mrf.mxu0
      %v1237 = vadd.f32 %v1006, %v1236
      %v1238 = vpop.f32.mrf.mxu0
      %1239 = vmatprep.mubr.bf16.mxu0 0
      %1240 = vmatmul.mubr.bf16.gmra.mxu0 %v1117
      %v1241 = vpop.f32.mrf.mxu0
      %v1242 = vadd.f32 %v1011, %v1241
      %v1243 = vpop.f32.mrf.mxu0
      %v1244 = vpop.f32.mrf.mxu0
      %v1245 = vadd.f32 %v1014, %v1244
      %v1246 = vpop.f32.mrf.mxu0
      %1247 = vmatprep.mubr.bf16.mxu0 0
      %1248 = vmatmul.mubr.bf16.gmra.mxu0 %v1119
      %v1249 = vpop.f32.mrf.mxu0
      %v1250 = vadd.f32 %v1019, %v1249
      %v1251 = vpop.f32.mrf.mxu0
      %v1252 = vpop.f32.mrf.mxu0
      %v1253 = vadd.f32 %v1022, %v1252
      %v1254 = vpop.f32.mrf.mxu0
      %1255 = vmatprep.mubr.bf16.mxu0 0
      %1256 = vmatmul.mubr.bf16.gmra.mxu0 %v1121
      %v1257 = vpop.f32.mrf.mxu0
      %v1258 = vadd.f32 %v1027, %v1257
      %v1259 = vpop.f32.mrf.mxu0
      %v1260 = vpop.f32.mrf.mxu0
      %v1261 = vadd.f32 %v1030, %v1260
      %v1262 = vpop.f32.mrf.mxu0
      %1263 = vmatprep.mubr.bf16.mxu0 0
      %1264 = vmatmul.mubr.bf16.gmra.mxu0 %v1123
      %v1265 = vpop.f32.mrf.mxu0
      %v1266 = vadd.f32 %v1035, %v1265
      %v1267 = vpop.f32.mrf.mxu0
      %v1268 = vpop.f32.mrf.mxu0
      %v1269 = vadd.f32 %v1038, %v1268
      %v1270 = vpop.f32.mrf.mxu0
      %1271 = vmatprep.mubr.bf16.mxu0 0
      %1272 = vmatmul.mubr.bf16.gmra.mxu0 %v1125
      %v1273 = vpop.f32.mrf.mxu0
      %v1274 = vadd.f32 %v1043, %v1273
      %v1275 = vpop.f32.mrf.mxu0
      %v1276 = vpop.f32.mrf.mxu0
      %v1277 = vadd.f32 %v1046, %v1276
      %v1278 = vpop.f32.mrf.mxu0
      %1279 = vmatprep.mubr.bf16.mxu0 0
      %1280 = vmatmul.mubr.bf16.gmra.mxu0 %v1127
      %v1281 = vpop.f32.mrf.mxu0
      %v1282 = vadd.f32 %v1051, %v1281
      %v1283 = vpop.f32.mrf.mxu0
      %v1284 = vpop.f32.mrf.mxu0
      %v1285 = vadd.f32 %v1054, %v1284
      %v1286 = vpop.f32.mrf.mxu0
      %1287 = vmatprep.mubr.bf16.mxu0 0
      %1288 = vmatmul.mubr.bf16.gmra.mxu0 %v1129
      %v1289 = vpop.f32.mrf.mxu0
      %v1290 = vadd.f32 %v1059, %v1289
      %v1291 = vpop.f32.mrf.mxu0
      %v1292 = vpop.f32.mrf.mxu0
      %v1293 = vadd.f32 %v1062, %v1292
      %v1294 = vpop.f32.mrf.mxu0
      %1295 = vmatprep.mubr.bf16.mxu0 0
      %1296 = vmatmul.mubr.bf16.gmra.mxu0 %v1131
      %v1297 = vpop.f32.mrf.mxu0
      %v1298 = vadd.f32 %v1067, %v1297
      %v1299 = vpop.f32.mrf.mxu0
      %v1300 = vpop.f32.mrf.mxu0
      %v1301 = vadd.f32 %v1070, %v1300
      %v1302 = vpop.f32.mrf.mxu0
      %1303 = vmatprep.mubr.bf16.mxu0 0
      %1304 = vmatmul.mubr.bf16.gmra.mxu0 %v1133
      %v1305 = vpop.f32.mrf.mxu0
      %v1306 = vadd.f32 %v1075, %v1305
      %v1307 = vpop.f32.mrf.mxu0
      %v1308 = vpop.f32.mrf.mxu0
      %v1309 = vadd.f32 %v1078, %v1308
      %v1310 = vpop.f32.mrf.mxu0
      %1311 = vdwg.mxu0
      %v1312 = vld [vmem:[%s195 + $0x10] sm:$0xc]
      %v1313 = vld [vmem:[%s195 + $0x14] sm:$0xf]
      %v1314 = vld [vmem:[%s195 + $0x18] sm:$0xf]
      %v1315 = vld [vmem:[%s195 + $0x1c] sm:$0xf]
      %v1316 = vld [vmem:[%s195 + $0x20] sm:$0xf]
      %v1317 = vld [vmem:[%s195 + $0x24] sm:$0xf]
      %v1318 = vld [vmem:[%s195 + $0x28] sm:$0xf]
      %v1319 = vld [vmem:[%s195 + $0x2c] sm:$0xf]
      %v1320 = vld [vmem:[%s195 + $0x30] sm:$0xf]
      %v1321 = vld [vmem:[%s195 + $0x34] sm:$0xf]
      %v1322 = vld [vmem:[%s195 + $0x38] sm:$0xf]
      %v1323 = vld [vmem:[%s195 + $0x3c] sm:$0xf]
      %v1324 = vld [vmem:[%s195 + $0x40] sm:$0xf]
      %v1325 = vld [vmem:[%s195 + $0x44] sm:$0xf]
      %v1326 = vld [vmem:[%s195 + $0x48] sm:$0xf]
      %v1327 = vld [vmem:[%s195 + $0x4c] sm:$0xf]
      %v1328 = vld [vmem:[%s195 + $0x50] sm:$0xf]
      %v1329 = vld [vmem:[%s195 + $0x54] sm:$0xf]
      %v1330 = vld [vmem:[%s195 + $0x58] sm:$0xf]
      %v1331 = vld [vmem:[%s195 + $0x5c] sm:$0xf]
      %v1332 = vld [vmem:[%s195 + $0x60] sm:$0xf]
      %v1333 = vld [vmem:[%s195 + $0x64] sm:$0xf]
      %v1334 = vld [vmem:[%s195 + $0x68] sm:$0xf]
      %v1335 = vld [vmem:[%s195 + $0x6c] sm:$0xf]
      %v1336 = vld [vmem:[%s195 + $0x70] sm:$0xf]
      %v1337 = vld [vmem:[%s195 + $0x74] sm:$0xf]
      %v1338 = vld [vmem:[%s195 + $0x78] sm:$0xf]
      %v1339 = vld [vmem:[%s195 + $0x7c] sm:$0xf]
      %v1340 = vld [vmem:[%s195 + $0x80] sm:$0xf]
      %v1341 = vld [vmem:[%s195 + $0x84] sm:$0xf]
      %v1342 = vld [vmem:[%s195 + $0x88] sm:$0xf]
      %v1343 = vld [vmem:[%s195 + $0x8c] sm:$0xf]
      %v1344 = vld [vmem:[%s195 + $0x90] sm:$0xf]
      %v1345 = vld [vmem:[%s195 + $0x94] sm:$0xf]
      %v1346 = vld [vmem:[%s195 + $0x98] sm:$0xf]
      %v1347 = vld [vmem:[%s195 + $0x9c] sm:$0xf]
      %v1348 = vld [vmem:[%s195 + $0xa0] sm:$0x3]
      %v1349 = vld [vmem:[%s195 + $0xa0] sm:$0x7]
      %v1350 = vld [vmem:[%s195 + $0x10] sm:$0x8]
      %v1388 = vunpack.c.l.b16 %v1312
      %v1389 = vunpack.c.l.b16 %v1313
      %v1390 = vunpack.c.l.b16 %v1314
      %v1391 = vunpack.c.l.b16 %v1315
      %v1392 = vunpack.c.l.b16 %v1316
      %v1393 = vunpack.c.l.b16 %v1317
      %v1394 = vunpack.c.l.b16 %v1318
      %v1395 = vunpack.c.l.b16 %v1319
      %v1396 = vunpack.c.l.b16 %v1320
      %v1397 = vunpack.c.l.b16 %v1321
      %v1398 = vunpack.c.l.b16 %v1322
      %v1399 = vunpack.c.l.b16 %v1323
      %v1400 = vunpack.c.l.b16 %v1324
      %v1401 = vunpack.c.l.b16 %v1325
      %v1402 = vunpack.c.l.b16 %v1326
      %v1403 = vunpack.c.l.b16 %v1327
      %v1404 = vunpack.c.l.b16 %v1328
      %v1405 = vunpack.c.l.b16 %v1329
      %v1406 = vunpack.c.l.b16 %v1330
      %v1407 = vunpack.c.l.b16 %v1331
      %v1408 = vunpack.c.l.b16 %v1332
      %v1409 = vunpack.c.l.b16 %v1333
      %v1410 = vunpack.c.l.b16 %v1334
      %v1411 = vunpack.c.l.b16 %v1335
      %v1412 = vunpack.c.l.b16 %v1336
      %v1413 = vunpack.c.l.b16 %v1337
      %v1414 = vunpack.c.l.b16 %v1338
      %v1415 = vunpack.c.l.b16 %v1339
      %v1416 = vunpack.c.l.b16 %v1340
      %v1417 = vunpack.c.l.b16 %v1341
      %v1418 = vunpack.c.l.b16 %v1342
      %v1419 = vunpack.c.l.b16 %v1343
      %v1420 = vunpack.c.l.b16 %v1344
      %v1421 = vunpack.c.l.b16 %v1345
      %v1422 = vunpack.c.l.b16 %v1346
      %v1423 = vunpack.c.l.b16 %v1347
      %v1424 = vunpack.c.l.b16 %v1348
      %v1425 = vpack.c.b16 %v1389, %v1388
      %v1426 = vpack.c.b16 %v1391, %v1390
      %v1427 = vpack.c.b16 %v1393, %v1392
      %v1428 = vpack.c.b16 %v1395, %v1394
      %v1429 = vpack.c.b16 %v1397, %v1396
      %v1430 = vpack.c.b16 %v1399, %v1398
      %v1431 = vpack.c.b16 %v1401, %v1400
      %v1432 = vpack.c.b16 %v1403, %v1402
      %v1433 = vpack.c.b16 %v1405, %v1404
      %v1434 = vpack.c.b16 %v1407, %v1406
      %v1435 = vpack.c.b16 %v1409, %v1408
      %v1436 = vpack.c.b16 %v1411, %v1410
      %v1437 = vpack.c.b16 %v1413, %v1412
      %v1438 = vpack.c.b16 %v1415, %v1414
      %v1439 = vpack.c.b16 %v1417, %v1416
      %v1440 = vpack.c.b16 %v1419, %v1418
      %v1441 = vpack.c.b16 %v1421, %v1420
      %v1442 = vpack.c.b16 %v1423, %v1422
      %v1443 = vpack.c.b16 %v1424, %v1424
      %v1445 = vunpack.c.l.b16 %v1349
      %v1446 = vpack.c.b16 %v1445, %v1445
      %v1448 = vshrl.u32 %v1425, 16
      %v1450 = vshll.u32 %v1425, 16
      %v1452 = vrot.slane %v1450, 1
      %v1453 = vor.u32 %v1448, %v1452
      %v1455 = vshll.u32 %v1426, 16
      %v1457 = vrot.slane %v1455, 1
      %v1458 = vsel %vm340, %v1453, %v1457
      %v1459 = vshrl.u32 %v1426, 16
      %v1461 = vor.u32 %v1459, %v1457
      %v1463 = vshll.u32 %v1427, 16
      %v1465 = vrot.slane %v1463, 1
      %v1466 = vsel %vm340, %v1461, %v1465
      %v1467 = vshrl.u32 %v1427, 16
      %v1469 = vor.u32 %v1467, %v1465
      %v1471 = vshll.u32 %v1428, 16
      %v1473 = vrot.slane %v1471, 1
      %v1474 = vsel %vm340, %v1469, %v1473
      %v1475 = vshrl.u32 %v1428, 16
      %v1477 = vor.u32 %v1475, %v1473
      %v1479 = vshll.u32 %v1429, 16
      %v1481 = vrot.slane %v1479, 1
      %v1482 = vsel %vm340, %v1477, %v1481
      %v1483 = vshrl.u32 %v1429, 16
      %v1485 = vor.u32 %v1483, %v1481
      %v1487 = vshll.u32 %v1430, 16
      %v1489 = vrot.slane %v1487, 1
      %v1490 = vsel %vm340, %v1485, %v1489
      %v1491 = vshrl.u32 %v1430, 16
      %v1493 = vor.u32 %v1491, %v1489
      %v1495 = vshll.u32 %v1431, 16
      %v1497 = vrot.slane %v1495, 1
      %v1498 = vsel %vm340, %v1493, %v1497
      %v1499 = vshrl.u32 %v1431, 16
      %v1501 = vor.u32 %v1499, %v1497
      %v1503 = vshll.u32 %v1432, 16
      %v1505 = vrot.slane %v1503, 1
      %v1506 = vsel %vm340, %v1501, %v1505
      %v1507 = vshrl.u32 %v1432, 16
      %v1509 = vor.u32 %v1507, %v1505
      %v1511 = vshll.u32 %v1433, 16
      %v1513 = vrot.slane %v1511, 1
      %v1514 = vsel %vm340, %v1509, %v1513
      %v1515 = vshrl.u32 %v1433, 16
      %v1517 = vor.u32 %v1515, %v1513
      %v1519 = vshll.u32 %v1434, 16
      %v1521 = vrot.slane %v1519, 1
      %v1522 = vsel %vm340, %v1517, %v1521
      %v1523 = vshrl.u32 %v1434, 16
      %v1525 = vor.u32 %v1523, %v1521
      %v1527 = vshll.u32 %v1435, 16
      %v1529 = vrot.slane %v1527, 1
      %v1530 = vsel %vm340, %v1525, %v1529
      %v1531 = vshrl.u32 %v1435, 16
      %v1533 = vor.u32 %v1531, %v1529
      %v1535 = vshll.u32 %v1436, 16
      %v1537 = vrot.slane %v1535, 1
      %v1538 = vsel %vm340, %v1533, %v1537
      %v1539 = vshrl.u32 %v1436, 16
      %v1541 = vor.u32 %v1539, %v1537
      %v1543 = vshll.u32 %v1437, 16
      %v1545 = vrot.slane %v1543, 1
      %v1546 = vsel %vm340, %v1541, %v1545
      %v1547 = vshrl.u32 %v1437, 16
      %v1549 = vor.u32 %v1547, %v1545
      %v1551 = vshll.u32 %v1438, 16
      %v1553 = vrot.slane %v1551, 1
      %v1554 = vsel %vm340, %v1549, %v1553
      %v1555 = vshrl.u32 %v1438, 16
      %v1557 = vor.u32 %v1555, %v1553
      %v1559 = vshll.u32 %v1439, 16
      %v1561 = vrot.slane %v1559, 1
      %v1562 = vsel %vm340, %v1557, %v1561
      %v1563 = vshrl.u32 %v1439, 16
      %v1565 = vor.u32 %v1563, %v1561
      %v1567 = vshll.u32 %v1440, 16
      %v1569 = vrot.slane %v1567, 1
      %v1570 = vsel %vm340, %v1565, %v1569
      %v1571 = vshrl.u32 %v1440, 16
      %v1573 = vor.u32 %v1571, %v1569
      %v1575 = vshll.u32 %v1441, 16
      %v1577 = vrot.slane %v1575, 1
      %v1578 = vsel %vm340, %v1573, %v1577
      %v1579 = vshrl.u32 %v1441, 16
      %v1581 = vor.u32 %v1579, %v1577
      %v1583 = vshll.u32 %v1442, 16
      %v1585 = vrot.slane %v1583, 1
      %v1586 = vsel %vm340, %v1581, %v1585
      %v1587 = vshrl.u32 %v1442, 16
      %v1589 = vor.u32 %v1587, %v1585
      %v1591 = vshll.u32 %v1446, 16
      %v1593 = vrot.slane %v1591, 1
      %v1594 = vsel %vm340, %v1589, %v1593
      %v1595 = vshrl.u32 %v1446, 16
      %v1597 = vor.u32 %v1595, %v1593
      %1598 = vrot.lane.b32.xlu0 %v1458, 16
      %v1599 = vpop.permute.xlu0 %1598
      %1600 = vrot.lane.b32.xlu0 %v1466, 16
      %v1601 = vpop.permute.xlu0 %1600
      %1602 = vrot.lane.b32.xlu0 %v1474, 16
      %v1603 = vpop.permute.xlu0 %1602
      %1604 = vrot.lane.b32.xlu0 %v1482, 16
      %v1605 = vpop.permute.xlu0 %1604
      %1606 = vrot.lane.b32.xlu0 %v1490, 16
      %v1607 = vpop.permute.xlu0 %1606
      %1608 = vrot.lane.b32.xlu0 %v1498, 16
      %v1609 = vpop.permute.xlu0 %1608
      %1610 = vrot.lane.b32.xlu0 %v1506, 16
      %v1611 = vpop.permute.xlu0 %1610
      %1612 = vrot.lane.b32.xlu0 %v1514, 16
      %v1613 = vpop.permute.xlu0 %1612
      %1614 = vrot.lane.b32.xlu0 %v1522, 16
      %v1615 = vpop.permute.xlu0 %1614
      %1616 = vrot.lane.b32.xlu0 %v1530, 16
      %v1617 = vpop.permute.xlu0 %1616
      %1618 = vrot.lane.b32.xlu0 %v1538, 16
      %v1619 = vpop.permute.xlu0 %1618
      %1620 = vrot.lane.b32.xlu0 %v1546, 16
      %v1621 = vpop.permute.xlu0 %1620
      %1622 = vrot.lane.b32.xlu0 %v1554, 16
      %v1623 = vpop.permute.xlu0 %1622
      %1624 = vrot.lane.b32.xlu0 %v1562, 16
      %v1625 = vpop.permute.xlu0 %1624
      %1626 = vrot.lane.b32.xlu0 %v1570, 16
      %v1627 = vpop.permute.xlu0 %1626
      %1628 = vrot.lane.b32.xlu0 %v1578, 16
      %v1629 = vpop.permute.xlu0 %1628
      %1630 = vrot.lane.b32.xlu0 %v1586, 16
      %v1631 = vpop.permute.xlu0 %1630
      %1632 = vrot.lane.b32.xlu0 %v1594, 16
      %v1633 = vpop.permute.xlu0 %1632
      %1634 = vrot.lane.b32.xlu0 %v1597, 16
      %v1635 = vpop.permute.xlu0 %1634
      %v1637 = vunpack.c.l.b16 %v1350
      %v1638 = vpack.c.b16 %v1389, %v1637
      %v1639 = vrot.slane %v1638, 1
      %v1640 = vrot.slane %v1426, 1
      %v1641 = vsel %vm528, %v1639, %v1640
      %v1642 = vrot.slane %v1427, 1
      %v1643 = vsel %vm528, %v1640, %v1642
      %v1644 = vrot.slane %v1428, 1
      %v1645 = vsel %vm528, %v1642, %v1644
      %v1646 = vrot.slane %v1429, 1
      %v1647 = vsel %vm528, %v1644, %v1646
      %v1648 = vrot.slane %v1430, 1
      %v1649 = vsel %vm528, %v1646, %v1648
      %v1650 = vrot.slane %v1431, 1
      %v1651 = vsel %vm528, %v1648, %v1650
      %v1652 = vrot.slane %v1432, 1
      %v1653 = vsel %vm528, %v1650, %v1652
      %v1654 = vrot.slane %v1433, 1
      %v1655 = vsel %vm528, %v1652, %v1654
      %v1656 = vrot.slane %v1434, 1
      %v1657 = vsel %vm528, %v1654, %v1656
      %v1658 = vrot.slane %v1435, 1
      %v1659 = vsel %vm528, %v1656, %v1658
      %v1660 = vrot.slane %v1436, 1
      %v1661 = vsel %vm528, %v1658, %v1660
      %v1662 = vrot.slane %v1437, 1
      %v1663 = vsel %vm528, %v1660, %v1662
      %v1664 = vrot.slane %v1438, 1
      %v1665 = vsel %vm528, %v1662, %v1664
      %v1666 = vrot.slane %v1439, 1
      %v1667 = vsel %vm528, %v1664, %v1666
      %v1668 = vrot.slane %v1440, 1
      %v1669 = vsel %vm528, %v1666, %v1668
      %v1670 = vrot.slane %v1441, 1
      %v1671 = vsel %vm528, %v1668, %v1670
      %v1672 = vrot.slane %v1442, 1
      %v1673 = vsel %vm528, %v1670, %v1672
      %v1674 = vrot.slane %v1446, 1
      %v1675 = vsel %vm528, %v1672, %v1674
      %1676 = vrot.lane.b32.xlu0 %v1641, 32
      %v1677 = vpop.permute.xlu0 %1676
      %1678 = vrot.lane.b32.xlu0 %v1643, 32
      %v1679 = vpop.permute.xlu0 %1678
      %1680 = vrot.lane.b32.xlu0 %v1645, 32
      %v1681 = vpop.permute.xlu0 %1680
      %1682 = vrot.lane.b32.xlu0 %v1647, 32
      %v1683 = vpop.permute.xlu0 %1682
      %1684 = vrot.lane.b32.xlu0 %v1649, 32
      %v1685 = vpop.permute.xlu0 %1684
      %1686 = vrot.lane.b32.xlu0 %v1651, 32
      %v1687 = vpop.permute.xlu0 %1686
      %1688 = vrot.lane.b32.xlu0 %v1653, 32
      %v1689 = vpop.permute.xlu0 %1688
      %1690 = vrot.lane.b32.xlu0 %v1655, 32
      %v1691 = vpop.permute.xlu0 %1690
      %1692 = vrot.lane.b32.xlu0 %v1657, 32
      %v1693 = vpop.permute.xlu0 %1692
      %1694 = vrot.lane.b32.xlu0 %v1659, 32
      %v1695 = vpop.permute.xlu0 %1694
      %1696 = vrot.lane.b32.xlu0 %v1661, 32
      %v1697 = vpop.permute.xlu0 %1696
      %1698 = vrot.lane.b32.xlu0 %v1663, 32
      %v1699 = vpop.permute.xlu0 %1698
      %1700 = vrot.lane.b32.xlu0 %v1665, 32
      %v1701 = vpop.permute.xlu0 %1700
      %1702 = vrot.lane.b32.xlu0 %v1667, 32
      %v1703 = vpop.permute.xlu0 %1702
      %1704 = vrot.lane.b32.xlu0 %v1669, 32
      %v1705 = vpop.permute.xlu0 %1704
      %1706 = vrot.lane.b32.xlu0 %v1671, 32
      %v1707 = vpop.permute.xlu0 %1706
      %1708 = vrot.lane.b32.xlu0 %v1673, 32
      %v1709 = vpop.permute.xlu0 %1708
      %1710 = vrot.lane.b32.xlu0 %v1675, 32
      %v1711 = vpop.permute.xlu0 %1710
      %1712 = vrot.lane.b32.xlu0 %v1674, 32
      %v1713 = vpop.permute.xlu0 %1712
      %v1715 = vsel %vm602, %v1425, %v1599
      %v1717 = vsel %vm602, %v1426, %v1601
      %v1719 = vsel %vm602, %v1427, %v1603
      %v1721 = vsel %vm602, %v1428, %v1605
      %v1723 = vsel %vm602, %v1429, %v1607
      %v1725 = vsel %vm602, %v1430, %v1609
      %v1727 = vsel %vm602, %v1431, %v1611
      %v1729 = vsel %vm602, %v1432, %v1613
      %v1731 = vsel %vm602, %v1433, %v1615
      %v1733 = vsel %vm602, %v1434, %v1617
      %v1735 = vsel %vm602, %v1435, %v1619
      %v1737 = vsel %vm602, %v1436, %v1621
      %v1739 = vsel %vm602, %v1437, %v1623
      %v1741 = vsel %vm602, %v1438, %v1625
      %v1743 = vsel %vm602, %v1439, %v1627
      %v1745 = vsel %vm602, %v1440, %v1629
      %v1747 = vsel %vm602, %v1441, %v1631
      %v1749 = vsel %vm602, %v1442, %v1633
      %v1752 = vsel %vm602, %v1443, %v1635
      %v1754 = vsel %vm639, %v1715, %v1677
      %v1756 = vsel %vm639, %v1717, %v1679
      %v1758 = vsel %vm639, %v1719, %v1681
      %v1760 = vsel %vm639, %v1721, %v1683
      %v1762 = vsel %vm639, %v1723, %v1685
      %v1764 = vsel %vm639, %v1725, %v1687
      %v1766 = vsel %vm639, %v1727, %v1689
      %v1768 = vsel %vm639, %v1729, %v1691
      %v1770 = vsel %vm639, %v1731, %v1693
      %v1772 = vsel %vm639, %v1733, %v1695
      %v1774 = vsel %vm639, %v1735, %v1697
      %v1776 = vsel %vm639, %v1737, %v1699
      %v1778 = vsel %vm639, %v1739, %v1701
      %v1780 = vsel %vm639, %v1741, %v1703
      %v1782 = vsel %vm639, %v1743, %v1705
      %v1784 = vsel %vm639, %v1745, %v1707
      %v1786 = vsel %vm639, %v1747, %v1709
      %v1788 = vsel %vm639, %v1749, %v1711
      %v1790 = vsel %vm639, %v1752, %v1713
      %s1791 = scalar_lea.vmem %s199, 48
      %v1792 = vld [vmem:[%s1791] sm:$0xf]
      %v1793 = vld [vmem:[%s1791 + $0x4] sm:$0xf]
      %v1794 = vld [vmem:[%s1791 + $0x8] sm:$0xf]
      %v1795 = vld [vmem:[%s1791 + $0xc] sm:$0xf]
      %v1796 = vld [vmem:[%s1791 + $0x10] sm:$0xf]
      %v1797 = vld [vmem:[%s1791 + $0x14] sm:$0xf]
      %vm1817 = vcmask 1045504
      %v1818 = vrot.slane %v1754, 2
      %v1819 = vrot.slane %v1756, 2
      %v1820 = vsel %vm1817, %v1818, %v1819
      %v1821 = vrot.slane %v1758, 2
      %v1822 = vsel %vm1817, %v1819, %v1821
      %v1823 = vrot.slane %v1760, 2
      %v1824 = vsel %vm1817, %v1821, %v1823
      %v1825 = vrot.slane %v1762, 2
      %v1826 = vsel %vm1817, %v1823, %v1825
      %v1827 = vrot.slane %v1764, 2
      %v1828 = vsel %vm1817, %v1825, %v1827
      %v1829 = vrot.slane %v1766, 2
      %v1830 = vsel %vm1817, %v1827, %v1829
      %v1831 = vrot.slane %v1768, 2
      %v1832 = vsel %vm1817, %v1829, %v1831
      %v1833 = vrot.slane %v1770, 2
      %v1834 = vsel %vm1817, %v1831, %v1833
      %v1835 = vrot.slane %v1772, 2
      %v1836 = vsel %vm1817, %v1833, %v1835
      %v1837 = vrot.slane %v1774, 2
      %v1838 = vsel %vm1817, %v1835, %v1837
      %v1839 = vrot.slane %v1776, 2
      %v1840 = vsel %vm1817, %v1837, %v1839
      %v1841 = vrot.slane %v1778, 2
      %v1842 = vsel %vm1817, %v1839, %v1841
      %v1843 = vrot.slane %v1780, 2
      %v1844 = vsel %vm1817, %v1841, %v1843
      %v1845 = vrot.slane %v1782, 2
      %v1846 = vsel %vm1817, %v1843, %v1845
      %v1847 = vrot.slane %v1784, 2
      %v1848 = vsel %vm1817, %v1845, %v1847
      %v1849 = vrot.slane %v1786, 2
      %v1850 = vsel %vm1817, %v1847, %v1849
      %v1851 = vrot.slane %v1788, 2
      %v1852 = vsel %vm1817, %v1849, %v1851
      %v1853 = vrot.slane %v1790, 2
      %v1854 = vsel %vm1817, %v1851, %v1853
      %v1861 = vunpack.c.l.b16 %v1792
      %v1862 = vunpack.c.l.b16 %v1793
      %v1863 = vunpack.c.l.b16 %v1794
      %v1864 = vunpack.c.l.b16 %v1795
      %v1865 = vunpack.c.l.b16 %v1796
      %v1866 = vunpack.c.l.b16 %v1797
      %v1867 = vpack.c.b16 %v1862, %v1861
      %v1868 = vpack.c.b16 %v1864, %v1863
      %v1869 = vpack.c.b16 %v1866, %v1865
      %v1874 = vsel %vm849, %v1820, 0
      %v1877 = vsel %vm849, %v1822, 0
      %v1880 = vsel %vm849, %v1824, 0
      %v1883 = vsel %vm849, %v1826, 0
      %v1886 = vsel %vm849, %v1828, 0
      %v1889 = vsel %vm849, %v1830, 0
      %v1892 = vsel %vm849, %v1832, 0
      %v1895 = vsel %vm849, %v1834, 0
      %v1898 = vsel %vm849, %v1836, 0
      %v1901 = vsel %vm849, %v1838, 0
      %v1904 = vsel %vm849, %v1840, 0
      %v1907 = vsel %vm849, %v1842, 0
      %v1910 = vsel %vm849, %v1844, 0
      %v1913 = vsel %vm849, %v1846, 0
      %v1916 = vsel %vm849, %v1848, 0
      %v1919 = vsel %vm849, %v1850, 0
      %v1922 = vsel %vm849, %v1852, 0
      %v1925 = vsel %vm849, %v1854, 0
      %1927 = vmatprep.subr.bf16.mxu0 0
      %1928 = vmatpush1.bf16.msra.mxu0 0
      %1929 = vmatprep.subr.bf16.mxu0 0
      %1930 = vmatpush1.bf16.msra.mxu0 0
      %1931 = vmatprep.subr.bf16.mxu0 0
      %1932 = vmatpush1.bf16.msra.mxu0 0
      %1933 = vmatprep.subr.bf16.mxu0 0
      %1934 = vmatpush1.bf16.msra.mxu0 0
      %1935 = vmatprep.subr.bf16.mxu0 0
      %1936 = vmatpush1.bf16.msra.mxu0 0
      %1937 = vmatprep.subr.bf16.mxu0 0
      %1938 = vmatpush1.bf16.msra.mxu0 %v1869
      %1939 = vmatprep.subr.bf16.mxu0 0
      %1940 = vmatpush1.bf16.msra.mxu0 %v1868
      %1941 = vmatprep.subr.bf16.mxu0 0
      %1942 = vmatpush1.bf16.msra.mxu0 %v1867
      %1943 = vmatprep.subr.bf16.mxu0 0
      %1944 = vmatpush2.bf16.msra.mxu0 0
      %1945 = vmatprep.subr.bf16.mxu0 0
      %1946 = vmatpush2.bf16.msra.mxu0 0
      %1947 = vmatprep.subr.bf16.mxu0 0
      %1948 = vmatpush2.bf16.msra.mxu0 0
      %1949 = vmatprep.subr.bf16.mxu0 0
      %1950 = vmatpush2.bf16.msra.mxu0 0
      %1951 = vmatprep.subr.bf16.mxu0 0
      %1952 = vmatpush2.bf16.msra.mxu0 0
      %1953 = vmatprep.subr.bf16.mxu0 0
      %1954 = vmatpush2.bf16.msra.mxu0 0
      %1955 = vmatprep.subr.bf16.mxu0 0
      %1956 = vmatpush2.bf16.msra.mxu0 0
      %1957 = vmatprep.subr.bf16.mxu0 0
      %1958 = vmatpush2.bf16.msra.mxu0 0
      %1959 = vmatprep.mubr.bf16.mxu0 0
      %1960 = vmatmul.mubr.bf16.gmra.mxu0 %v1874
      %v1961 = vpop.f32.mrf.mxu0
      %v1962 = vadd.f32 0.0, %v1961
      %v1963 = vpop.f32.mrf.mxu0
      %v1964 = vpop.f32.mrf.mxu0
      %v1965 = vadd.f32 0.0, %v1964
      %v1966 = vpop.f32.mrf.mxu0
      %1967 = vmatprep.mubr.bf16.mxu0 0
      %1968 = vmatmul.mubr.bf16.gmra.mxu0 %v1877
      %v1969 = vpop.f32.mrf.mxu0
      %v1970 = vadd.f32 0.0, %v1969
      %v1971 = vpop.f32.mrf.mxu0
      %v1972 = vpop.f32.mrf.mxu0
      %v1973 = vadd.f32 0.0, %v1972
      %v1974 = vpop.f32.mrf.mxu0
      %1975 = vmatprep.mubr.bf16.mxu0 0
      %1976 = vmatmul.mubr.bf16.gmra.mxu0 %v1880
      %v1977 = vpop.f32.mrf.mxu0
      %v1978 = vadd.f32 0.0, %v1977
      %v1979 = vpop.f32.mrf.mxu0
      %v1980 = vpop.f32.mrf.mxu0
      %v1981 = vadd.f32 0.0, %v1980
      %v1982 = vpop.f32.mrf.mxu0
      %1983 = vmatprep.mubr.bf16.mxu0 0
      %1984 = vmatmul.mubr.bf16.gmra.mxu0 %v1883
      %v1985 = vpop.f32.mrf.mxu0
      %v1986 = vadd.f32 0.0, %v1985
      %v1987 = vpop.f32.mrf.mxu0
      %v1988 = vpop.f32.mrf.mxu0
      %v1989 = vadd.f32 0.0, %v1988
      %v1990 = vpop.f32.mrf.mxu0
      %1991 = vmatprep.mubr.bf16.mxu0 0
      %1992 = vmatmul.mubr.bf16.gmra.mxu0 %v1886
      %v1993 = vpop.f32.mrf.mxu0
      %v1994 = vadd.f32 0.0, %v1993
      %v1995 = vpop.f32.mrf.mxu0
      %v1996 = vpop.f32.mrf.mxu0
      %v1997 = vadd.f32 0.0, %v1996
      %v1998 = vpop.f32.mrf.mxu0
      %1999 = vmatprep.mubr.bf16.mxu0 0
      %2000 = vmatmul.mubr.bf16.gmra.mxu0 %v1889
      %v2001 = vpop.f32.mrf.mxu0
      %v2002 = vadd.f32 0.0, %v2001
      %v2003 = vpop.f32.mrf.mxu0
      %v2004 = vpop.f32.mrf.mxu0
      %v2005 = vadd.f32 0.0, %v2004
      %v2006 = vpop.f32.mrf.mxu0
      %2007 = vmatprep.mubr.bf16.mxu0 0
      %2008 = vmatmul.mubr.bf16.gmra.mxu0 %v1892
      %v2009 = vpop.f32.mrf.mxu0
      %v2010 = vadd.f32 0.0, %v2009
      %v2011 = vpop.f32.mrf.mxu0
      %v2012 = vpop.f32.mrf.mxu0
      %v2013 = vadd.f32 0.0, %v2012
      %v2014 = vpop.f32.mrf.mxu0
      %2015 = vmatprep.mubr.bf16.mxu0 0
      %2016 = vmatmul.mubr.bf16.gmra.mxu0 %v1895
      %v2017 = vpop.f32.mrf.mxu0
      %v2018 = vadd.f32 0.0, %v2017
      %v2019 = vpop.f32.mrf.mxu0
      %v2020 = vpop.f32.mrf.mxu0
      %v2021 = vadd.f32 0.0, %v2020
      %v2022 = vpop.f32.mrf.mxu0
      %2023 = vmatprep.mubr.bf16.mxu0 0
      %2024 = vmatmul.mubr.bf16.gmra.mxu0 %v1898
      %v2025 = vpop.f32.mrf.mxu0
      %v2026 = vadd.f32 0.0, %v2025
      %v2027 = vpop.f32.mrf.mxu0
      %v2028 = vpop.f32.mrf.mxu0
      %v2029 = vadd.f32 0.0, %v2028
      %v2030 = vpop.f32.mrf.mxu0
      %2031 = vmatprep.mubr.bf16.mxu0 0
      %2032 = vmatmul.mubr.bf16.gmra.mxu0 %v1901
      %v2033 = vpop.f32.mrf.mxu0
      %v2034 = vadd.f32 0.0, %v2033
      %v2035 = vpop.f32.mrf.mxu0
      %v2036 = vpop.f32.mrf.mxu0
      %v2037 = vadd.f32 0.0, %v2036
      %v2038 = vpop.f32.mrf.mxu0
      %2039 = vmatprep.mubr.bf16.mxu0 0
      %2040 = vmatmul.mubr.bf16.gmra.mxu0 %v1904
      %v2041 = vpop.f32.mrf.mxu0
      %v2042 = vadd.f32 0.0, %v2041
      %v2043 = vpop.f32.mrf.mxu0
      %v2044 = vpop.f32.mrf.mxu0
      %v2045 = vadd.f32 0.0, %v2044
      %v2046 = vpop.f32.mrf.mxu0
      %2047 = vmatprep.mubr.bf16.mxu0 0
      %2048 = vmatmul.mubr.bf16.gmra.mxu0 %v1907
      %v2049 = vpop.f32.mrf.mxu0
      %v2050 = vadd.f32 0.0, %v2049
      %v2051 = vpop.f32.mrf.mxu0
      %v2052 = vpop.f32.mrf.mxu0
      %v2053 = vadd.f32 0.0, %v2052
      %v2054 = vpop.f32.mrf.mxu0
      %2055 = vmatprep.mubr.bf16.mxu0 0
      %2056 = vmatmul.mubr.bf16.gmra.mxu0 %v1910
      %v2057 = vpop.f32.mrf.mxu0
      %v2058 = vadd.f32 0.0, %v2057
      %v2059 = vpop.f32.mrf.mxu0
      %v2060 = vpop.f32.mrf.mxu0
      %v2061 = vadd.f32 0.0, %v2060
      %v2062 = vpop.f32.mrf.mxu0
      %2063 = vmatprep.mubr.bf16.mxu0 0
      %2064 = vmatmul.mubr.bf16.gmra.mxu0 %v1913
      %v2065 = vpop.f32.mrf.mxu0
      %v2066 = vadd.f32 0.0, %v2065
      %v2067 = vpop.f32.mrf.mxu0
      %v2068 = vpop.f32.mrf.mxu0
      %v2069 = vadd.f32 0.0, %v2068
      %v2070 = vpop.f32.mrf.mxu0
      %2071 = vmatprep.mubr.bf16.mxu0 0
      %2072 = vmatmul.mubr.bf16.gmra.mxu0 %v1916
      %v2073 = vpop.f32.mrf.mxu0
      %v2074 = vadd.f32 0.0, %v2073
      %v2075 = vpop.f32.mrf.mxu0
      %v2076 = vpop.f32.mrf.mxu0
      %v2077 = vadd.f32 0.0, %v2076
      %v2078 = vpop.f32.mrf.mxu0
      %2079 = vmatprep.mubr.bf16.mxu0 0
      %2080 = vmatmul.mubr.bf16.gmra.mxu0 %v1919
      %v2081 = vpop.f32.mrf.mxu0
      %v2082 = vadd.f32 0.0, %v2081
      %v2083 = vpop.f32.mrf.mxu0
      %v2084 = vpop.f32.mrf.mxu0
      %v2085 = vadd.f32 0.0, %v2084
      %v2086 = vpop.f32.mrf.mxu0
      %2087 = vmatprep.mubr.bf16.mxu0 0
      %2088 = vmatmul.mubr.bf16.gmra.mxu0 %v1922
      %v2089 = vpop.f32.mrf.mxu0
      %v2090 = vadd.f32 0.0, %v2089
      %v2091 = vpop.f32.mrf.mxu0
      %v2092 = vpop.f32.mrf.mxu0
      %v2093 = vadd.f32 0.0, %v2092
      %v2094 = vpop.f32.mrf.mxu0
      %2095 = vmatprep.mubr.bf16.mxu0 0
      %2096 = vmatmul.mubr.bf16.gmra.mxu0 %v1925
      %v2097 = vpop.f32.mrf.mxu0
      %v2098 = vadd.f32 0.0, %v2097
      %v2099 = vpop.f32.mrf.mxu0
      %v2100 = vpop.f32.mrf.mxu0
      %v2101 = vadd.f32 0.0, %v2100
      %v2102 = vpop.f32.mrf.mxu0
      %2103 = vdwg.mxu0
      %v2104 = vadd.f32 %v1170, %v1962
      %v2105 = vadd.f32 %v1173, %v1965
      %v2106 = vadd.f32 %v1178, %v1970
      %v2107 = vadd.f32 %v1181, %v1973
      %v2108 = vadd.f32 %v1186, %v1978
      %v2109 = vadd.f32 %v1189, %v1981
      %v2110 = vadd.f32 %v1194, %v1986
      %v2111 = vadd.f32 %v1197, %v1989
      %v2112 = vadd.f32 %v1202, %v1994
      %v2113 = vadd.f32 %v1205, %v1997
      %v2114 = vadd.f32 %v1210, %v2002
      %v2115 = vadd.f32 %v1213, %v2005
      %v2116 = vadd.f32 %v1218, %v2010
      %v2117 = vadd.f32 %v1221, %v2013
      %v2118 = vadd.f32 %v1226, %v2018
      %v2119 = vadd.f32 %v1229, %v2021
      %v2120 = vadd.f32 %v1234, %v2026
      %v2121 = vadd.f32 %v1237, %v2029
      %v2122 = vadd.f32 %v1242, %v2034
      %v2123 = vadd.f32 %v1245, %v2037
      %v2124 = vadd.f32 %v1250, %v2042
      %v2125 = vadd.f32 %v1253, %v2045
      %v2126 = vadd.f32 %v1258, %v2050
      %v2127 = vadd.f32 %v1261, %v2053
      %v2128 = vadd.f32 %v1266, %v2058
      %v2129 = vadd.f32 %v1269, %v2061
      %v2130 = vadd.f32 %v1274, %v2066
      %v2131 = vadd.f32 %v1277, %v2069
      %v2132 = vadd.f32 %v1282, %v2074
      %v2133 = vadd.f32 %v1285, %v2077
      %v2134 = vadd.f32 %v1290, %v2082
      %v2135 = vadd.f32 %v1293, %v2085
      %v2136 = vadd.f32 %v1298, %v2090
      %v2137 = vadd.f32 %v1301, %v2093
      %v2138 = vadd.f32 %v1306, %v2098
      %v2139 = vadd.f32 %v1309, %v2101
      %v2140 = vld [vmem:[%s2] sm:$0xff]
      %v2141 = vld [vmem:[%s2 + $0x8] sm:$0xff]
      %v2142 = vld [vmem:[%s2 + $0x10] sm:$0xff]
      %v2143 = vld [vmem:[%s2 + $0x18] sm:$0xff]
      %v2144 = vld [vmem:[%s2 + $0x20] sm:$0xff]
      %v2145 = vld [vmem:[%s2 + $0x28] sm:$0xff]
      %v2146 = vld [vmem:[%s2 + $0x30] sm:$0xff]
      %v2147 = vld [vmem:[%s2 + $0x38] sm:$0xff]
      %v2148 = vld [vmem:[%s2 + $0x40] sm:$0xff]
      %v2149 = vld [vmem:[%s2 + $0x48] sm:$0xff]
      %v2150 = vld [vmem:[%s2 + $0x50] sm:$0xff]
      %v2151 = vld [vmem:[%s2 + $0x58] sm:$0xff]
      %v2152 = vld [vmem:[%s2 + $0x60] sm:$0xff]
      %v2153 = vld [vmem:[%s2 + $0x68] sm:$0xff]
      %v2154 = vld [vmem:[%s2 + $0x70] sm:$0xff]
      %v2155 = vld [vmem:[%s2 + $0x78] sm:$0xff]
      %v2156 = vld [vmem:[%s2 + $0x80] sm:$0xff]
      %v2157 = vld [vmem:[%s2 + $0x88] sm:$0xff]
      %v2158 = vld [vmem:[%s2 + $0x90] sm:$0xff]
      %v2159 = vld [vmem:[%s2 + $0x98] sm:$0xff]
      %v2160 = vld [vmem:[%s2 + $0xa0] sm:$0xff]
      %v2161 = vld [vmem:[%s2 + $0xa8] sm:$0xff]
      %v2162 = vld [vmem:[%s2 + $0xb0] sm:$0xff]
      %v2163 = vld [vmem:[%s2 + $0xb8] sm:$0xff]
      %v2164 = vld [vmem:[%s2 + $0xc0] sm:$0xff]
      %v2165 = vld [vmem:[%s2 + $0xc8] sm:$0xff]
      %v2166 = vld [vmem:[%s2 + $0xd0] sm:$0xff]
      %v2167 = vld [vmem:[%s2 + $0xd8] sm:$0xff]
      %v2168 = vld [vmem:[%s2 + $0xe0] sm:$0xff]
      %v2169 = vld [vmem:[%s2 + $0xe8] sm:$0xff]
      %v2170 = vld [vmem:[%s2 + $0xf0] sm:$0xff]
      %v2171 = vld [vmem:[%s2 + $0xf8] sm:$0xff]
      %v2172 = vld [vmem:[%s2 + $0x100] sm:$0xff]
      %v2173 = vld [vmem:[%s2 + $0x108] sm:$0xff]
      %v2174 = vld [vmem:[%s2 + $0x110] sm:$0xff]
      %v2175 = vld [vmem:[%s2 + $0x118] sm:$0xff]
      %2177 = vset.pattern.permute.xlu0 0
      %2178 = vperm.xlu0 %2177, %v2140
      %v2179 = vpop.permute.xlu0 %2178
      %2182 = vset.pattern.permute.xlu0 0
      %2183 = vperm.xlu0 %2182, %v2141
      %v2184 = vpop.permute.xlu0 %2183
      %2187 = vset.pattern.permute.xlu0 0
      %2188 = vperm.xlu0 %2187, %v2142
      %v2189 = vpop.permute.xlu0 %2188
      %2192 = vset.pattern.permute.xlu0 0
      %2193 = vperm.xlu0 %2192, %v2143
      %v2194 = vpop.permute.xlu0 %2193
      %2197 = vset.pattern.permute.xlu0 0
      %2198 = vperm.xlu0 %2197, %v2144
      %v2199 = vpop.permute.xlu0 %2198
      %2202 = vset.pattern.permute.xlu0 0
      %2203 = vperm.xlu0 %2202, %v2145
      %v2204 = vpop.permute.xlu0 %2203
      %2207 = vset.pattern.permute.xlu0 0
      %2208 = vperm.xlu0 %2207, %v2146
      %v2209 = vpop.permute.xlu0 %2208
      %2212 = vset.pattern.permute.xlu0 0
      %2213 = vperm.xlu0 %2212, %v2147
      %v2214 = vpop.permute.xlu0 %2213
      %2217 = vset.pattern.permute.xlu0 0
      %2218 = vperm.xlu0 %2217, %v2148
      %v2219 = vpop.permute.xlu0 %2218
      %2222 = vset.pattern.permute.xlu0 0
      %2223 = vperm.xlu0 %2222, %v2149
      %v2224 = vpop.permute.xlu0 %2223
      %2227 = vset.pattern.permute.xlu0 0
      %2228 = vperm.xlu0 %2227, %v2150
      %v2229 = vpop.permute.xlu0 %2228
      %2232 = vset.pattern.permute.xlu0 0
      %2233 = vperm.xlu0 %2232, %v2151
      %v2234 = vpop.permute.xlu0 %2233
      %2237 = vset.pattern.permute.xlu0 0
      %2238 = vperm.xlu0 %2237, %v2152
      %v2239 = vpop.permute.xlu0 %2238
      %2242 = vset.pattern.permute.xlu0 0
      %2243 = vperm.xlu0 %2242, %v2153
      %v2244 = vpop.permute.xlu0 %2243
      %2247 = vset.pattern.permute.xlu0 0
      %2248 = vperm.xlu0 %2247, %v2154
      %v2249 = vpop.permute.xlu0 %2248
      %2252 = vset.pattern.permute.xlu0 0
      %2253 = vperm.xlu0 %2252, %v2155
      %v2254 = vpop.permute.xlu0 %2253
      %2257 = vset.pattern.permute.xlu0 0
      %2258 = vperm.xlu0 %2257, %v2156
      %v2259 = vpop.permute.xlu0 %2258
      %2262 = vset.pattern.permute.xlu0 0
      %2263 = vperm.xlu0 %2262, %v2157
      %v2264 = vpop.permute.xlu0 %2263
      %2267 = vset.pattern.permute.xlu0 0
      %2268 = vperm.xlu0 %2267, %v2158
      %v2269 = vpop.permute.xlu0 %2268
      %2272 = vset.pattern.permute.xlu0 0
      %2273 = vperm.xlu0 %2272, %v2159
      %v2274 = vpop.permute.xlu0 %2273
      %2277 = vset.pattern.permute.xlu0 0
      %2278 = vperm.xlu0 %2277, %v2160
      %v2279 = vpop.permute.xlu0 %2278
      %2282 = vset.pattern.permute.xlu0 0
      %2283 = vperm.xlu0 %2282, %v2161
      %v2284 = vpop.permute.xlu0 %2283
      %2287 = vset.pattern.permute.xlu0 0
      %2288 = vperm.xlu0 %2287, %v2162
      %v2289 = vpop.permute.xlu0 %2288
      %2292 = vset.pattern.permute.xlu0 0
      %2293 = vperm.xlu0 %2292, %v2163
      %v2294 = vpop.permute.xlu0 %2293
      %2297 = vset.pattern.permute.xlu0 0
      %2298 = vperm.xlu0 %2297, %v2164
      %v2299 = vpop.permute.xlu0 %2298
      %2302 = vset.pattern.permute.xlu0 0
      %2303 = vperm.xlu0 %2302, %v2165
      %v2304 = vpop.permute.xlu0 %2303
      %2307 = vset.pattern.permute.xlu0 0
      %2308 = vperm.xlu0 %2307, %v2166
      %v2309 = vpop.permute.xlu0 %2308
      %2312 = vset.pattern.permute.xlu0 0
      %2313 = vperm.xlu0 %2312, %v2167
      %v2314 = vpop.permute.xlu0 %2313
      %2317 = vset.pattern.permute.xlu0 0
      %2318 = vperm.xlu0 %2317, %v2168
      %v2319 = vpop.permute.xlu0 %2318
      %2322 = vset.pattern.permute.xlu0 0
      %2323 = vperm.xlu0 %2322, %v2169
      %v2324 = vpop.permute.xlu0 %2323
      %2327 = vset.pattern.permute.xlu0 0
      %2328 = vperm.xlu0 %2327, %v2170
      %v2329 = vpop.permute.xlu0 %2328
      %2332 = vset.pattern.permute.xlu0 0
      %2333 = vperm.xlu0 %2332, %v2171
      %v2334 = vpop.permute.xlu0 %2333
      %2337 = vset.pattern.permute.xlu0 0
      %2338 = vperm.xlu0 %2337, %v2172
      %v2339 = vpop.permute.xlu0 %2338
      %2342 = vset.pattern.permute.xlu0 0
      %2343 = vperm.xlu0 %2342, %v2173
      %v2344 = vpop.permute.xlu0 %2343
      %2347 = vset.pattern.permute.xlu0 0
      %2348 = vperm.xlu0 %2347, %v2174
      %v2349 = vpop.permute.xlu0 %2348
      %2352 = vset.pattern.permute.xlu0 0
      %2353 = vperm.xlu0 %2352, %v2175
      %v2354 = vpop.permute.xlu0 %2353
      %v2356 = vmul.f32 %v2104, %v2179
      %v2357 = vmul.f32 %v2105, %v2184
      %v2358 = vmul.f32 %v2106, %v2189
      %v2359 = vmul.f32 %v2107, %v2194
      %v2360 = vmul.f32 %v2108, %v2199
      %v2361 = vmul.f32 %v2109, %v2204
      %v2362 = vmul.f32 %v2110, %v2209
      %v2363 = vmul.f32 %v2111, %v2214
      %v2364 = vmul.f32 %v2112, %v2219
      %v2365 = vmul.f32 %v2113, %v2224
      %v2366 = vmul.f32 %v2114, %v2229
      %v2367 = vmul.f32 %v2115, %v2234
      %v2368 = vmul.f32 %v2116, %v2239
      %v2369 = vmul.f32 %v2117, %v2244
      %v2370 = vmul.f32 %v2118, %v2249
      %v2371 = vmul.f32 %v2119, %v2254
      %v2372 = vmul.f32 %v2120, %v2259
      %v2373 = vmul.f32 %v2121, %v2264
      %v2374 = vmul.f32 %v2122, %v2269
      %v2375 = vmul.f32 %v2123, %v2274
      %v2376 = vmul.f32 %v2124, %v2279
      %v2377 = vmul.f32 %v2125, %v2284
      %v2378 = vmul.f32 %v2126, %v2289
      %v2379 = vmul.f32 %v2127, %v2294
      %v2380 = vmul.f32 %v2128, %v2299
      %v2381 = vmul.f32 %v2129, %v2304
      %v2382 = vmul.f32 %v2130, %v2309
      %v2383 = vmul.f32 %v2131, %v2314
      %v2384 = vmul.f32 %v2132, %v2319
      %v2385 = vmul.f32 %v2133, %v2324
      %v2386 = vmul.f32 %v2134, %v2329
      %v2387 = vmul.f32 %v2135, %v2334
      %v2388 = vmul.f32 %v2136, %v2339
      %v2389 = vmul.f32 %v2137, %v2344
      %v2390 = vmul.f32 %v2138, %v2349
      %v2391 = vmul.f32 %v2139, %v2354
      %v2392 = vadd.f32 %v2356, %v2357
      %v2393 = vadd.f32 %v2392, %v2358
      %v2394 = vadd.f32 %v2393, %v2359
      %v2395 = vadd.f32 %v2394, %v2360
      %v2396 = vadd.f32 %v2395, %v2361
      %v2397 = vadd.f32 %v2396, %v2362
      %v2398 = vadd.f32 %v2397, %v2363
      %v2399 = vadd.f32 %v2398, %v2364
      %v2400 = vadd.f32 %v2399, %v2365
      %v2401 = vadd.f32 %v2400, %v2366
      %v2402 = vadd.f32 %v2401, %v2367
      %v2403 = vadd.f32 %v2402, %v2368
      %v2404 = vadd.f32 %v2403, %v2369
      %v2405 = vadd.f32 %v2404, %v2370
      %v2406 = vadd.f32 %v2405, %v2371
      %v2407 = vadd.f32 %v2406, %v2372
      %v2408 = vadd.f32 %v2407, %v2373
      %v2409 = vadd.f32 %v2408, %v2374
      %v2410 = vadd.f32 %v2409, %v2375
      %v2411 = vadd.f32 %v2410, %v2376
      %v2412 = vadd.f32 %v2411, %v2377
      %v2413 = vadd.f32 %v2412, %v2378
      %v2414 = vadd.f32 %v2413, %v2379
      %v2415 = vadd.f32 %v2414, %v2380
      %v2416 = vadd.f32 %v2415, %v2381
      %v2417 = vadd.f32 %v2416, %v2382
      %v2418 = vadd.f32 %v2417, %v2383
      %v2419 = vadd.f32 %v2418, %v2384
      %v2420 = vadd.f32 %v2419, %v2385
      %v2421 = vadd.f32 %v2420, %v2386
      %v2422 = vadd.f32 %v2421, %v2387
      %v2423 = vadd.f32 %v2422, %v2388
      %v2424 = vadd.f32 %v2423, %v2389
      %v2425 = vadd.f32 %v2424, %v2390
      %v2426 = vadd.f32 %v2425, %v2391
      %v2427 = vrot.slane %v2426, 4
      %v2428 = vadd.f32 %v2426, %v2427
      %v2429 = vrot.slane %v2428, 2
      %v2430 = vadd.f32 %v2428, %v2429
      %v2431 = vrot.slane %v2430, 1
      %v2432 = vadd.f32 %v2430, %v2431
      %v2433 = vmul.f32 %v2432, 0.00390625
      %v2434 = vsub.f32 %v2104, %v2433
      %v2435 = vsub.f32 %v2105, %v2433
      %v2436 = vsub.f32 %v2106, %v2433
      %v2437 = vsub.f32 %v2107, %v2433
      %v2438 = vsub.f32 %v2108, %v2433
      %v2439 = vsub.f32 %v2109, %v2433
      %v2440 = vsub.f32 %v2110, %v2433
      %v2441 = vsub.f32 %v2111, %v2433
      %v2442 = vsub.f32 %v2112, %v2433
      %v2443 = vsub.f32 %v2113, %v2433
      %v2444 = vsub.f32 %v2114, %v2433
      %v2445 = vsub.f32 %v2115, %v2433
      %v2446 = vsub.f32 %v2116, %v2433
      %v2447 = vsub.f32 %v2117, %v2433
      %v2448 = vsub.f32 %v2118, %v2433
      %v2449 = vsub.f32 %v2119, %v2433
      %v2450 = vsub.f32 %v2120, %v2433
      %v2451 = vsub.f32 %v2121, %v2433
      %v2452 = vsub.f32 %v2122, %v2433
      %v2453 = vsub.f32 %v2123, %v2433
      %v2454 = vsub.f32 %v2124, %v2433
      %v2455 = vsub.f32 %v2125, %v2433
      %v2456 = vsub.f32 %v2126, %v2433
      %v2457 = vsub.f32 %v2127, %v2433
      %v2458 = vsub.f32 %v2128, %v2433
      %v2459 = vsub.f32 %v2129, %v2433
      %v2460 = vsub.f32 %v2130, %v2433
      %v2461 = vsub.f32 %v2131, %v2433
      %v2462 = vsub.f32 %v2132, %v2433
      %v2463 = vsub.f32 %v2133, %v2433
      %v2464 = vsub.f32 %v2134, %v2433
      %v2465 = vsub.f32 %v2135, %v2433
      %v2466 = vsub.f32 %v2136, %v2433
      %v2467 = vsub.f32 %v2137, %v2433
      %v2468 = vsub.f32 %v2138, %v2433
      %v2469 = vsub.f32 %v2139, %v2433
      %v2470 = vmul.f32 %v2434, %v2179
      %v2471 = vmul.f32 %v2435, %v2184
      %v2472 = vmul.f32 %v2436, %v2189
      %v2473 = vmul.f32 %v2437, %v2194
      %v2474 = vmul.f32 %v2438, %v2199
      %v2475 = vmul.f32 %v2439, %v2204
      %v2476 = vmul.f32 %v2440, %v2209
      %v2477 = vmul.f32 %v2441, %v2214
      %v2478 = vmul.f32 %v2442, %v2219
      %v2479 = vmul.f32 %v2443, %v2224
      %v2480 = vmul.f32 %v2444, %v2229
      %v2481 = vmul.f32 %v2445, %v2234
      %v2482 = vmul.f32 %v2446, %v2239
      %v2483 = vmul.f32 %v2447, %v2244
      %v2484 = vmul.f32 %v2448, %v2249
      %v2485 = vmul.f32 %v2449, %v2254
      %v2486 = vmul.f32 %v2450, %v2259
      %v2487 = vmul.f32 %v2451, %v2264
      %v2488 = vmul.f32 %v2452, %v2269
      %v2489 = vmul.f32 %v2453, %v2274
      %v2490 = vmul.f32 %v2454, %v2279
      %v2491 = vmul.f32 %v2455, %v2284
      %v2492 = vmul.f32 %v2456, %v2289
      %v2493 = vmul.f32 %v2457, %v2294
      %v2494 = vmul.f32 %v2458, %v2299
      %v2495 = vmul.f32 %v2459, %v2304
      %v2496 = vmul.f32 %v2460, %v2309
      %v2497 = vmul.f32 %v2461, %v2314
      %v2498 = vmul.f32 %v2462, %v2319
      %v2499 = vmul.f32 %v2463, %v2324
      %v2500 = vmul.f32 %v2464, %v2329
      %v2501 = vmul.f32 %v2465, %v2334
      %v2502 = vmul.f32 %v2466, %v2339
      %v2503 = vmul.f32 %v2467, %v2344
      %v2504 = vmul.f32 %v2468, %v2349
      %v2505 = vmul.f32 %v2469, %v2354
      %v2506 = vmul.f32 %v2470, %v2470
      %v2507 = vmul.f32 %v2471, %v2471
      %v2508 = vmul.f32 %v2472, %v2472
      %v2509 = vmul.f32 %v2473, %v2473
      %v2510 = vmul.f32 %v2474, %v2474
      %v2511 = vmul.f32 %v2475, %v2475
      %v2512 = vmul.f32 %v2476, %v2476
      %v2513 = vmul.f32 %v2477, %v2477
      %v2514 = vmul.f32 %v2478, %v2478
      %v2515 = vmul.f32 %v2479, %v2479
      %v2516 = vmul.f32 %v2480, %v2480
      %v2517 = vmul.f32 %v2481, %v2481
      %v2518 = vmul.f32 %v2482, %v2482
      %v2519 = vmul.f32 %v2483, %v2483
      %v2520 = vmul.f32 %v2484, %v2484
      %v2521 = vmul.f32 %v2485, %v2485
      %v2522 = vmul.f32 %v2486, %v2486
      %v2523 = vmul.f32 %v2487, %v2487
      %v2524 = vmul.f32 %v2488, %v2488
      %v2525 = vmul.f32 %v2489, %v2489
      %v2526 = vmul.f32 %v2490, %v2490
      %v2527 = vmul.f32 %v2491, %v2491
      %v2528 = vmul.f32 %v2492, %v2492
      %v2529 = vmul.f32 %v2493, %v2493
      %v2530 = vmul.f32 %v2494, %v2494
      %v2531 = vmul.f32 %v2495, %v2495
      %v2532 = vmul.f32 %v2496, %v2496
      %v2533 = vmul.f32 %v2497, %v2497
      %v2534 = vmul.f32 %v2498, %v2498
      %v2535 = vmul.f32 %v2499, %v2499
      %v2536 = vmul.f32 %v2500, %v2500
      %v2537 = vmul.f32 %v2501, %v2501
      %v2538 = vmul.f32 %v2502, %v2502
      %v2539 = vmul.f32 %v2503, %v2503
      %v2540 = vmul.f32 %v2504, %v2504
      %v2541 = vmul.f32 %v2505, %v2505
      %v2542 = vadd.f32 %v2506, %v2507
      %v2543 = vadd.f32 %v2542, %v2508
      %v2544 = vadd.f32 %v2543, %v2509
      %v2545 = vadd.f32 %v2544, %v2510
      %v2546 = vadd.f32 %v2545, %v2511
      %v2547 = vadd.f32 %v2546, %v2512
      %v2548 = vadd.f32 %v2547, %v2513
      %v2549 = vadd.f32 %v2548, %v2514
      %v2550 = vadd.f32 %v2549, %v2515
      %v2551 = vadd.f32 %v2550, %v2516
      %v2552 = vadd.f32 %v2551, %v2517
      %v2553 = vadd.f32 %v2552, %v2518
      %v2554 = vadd.f32 %v2553, %v2519
      %v2555 = vadd.f32 %v2554, %v2520
      %v2556 = vadd.f32 %v2555, %v2521
      %v2557 = vadd.f32 %v2556, %v2522
      %v2558 = vadd.f32 %v2557, %v2523
      %v2559 = vadd.f32 %v2558, %v2524
      %v2560 = vadd.f32 %v2559, %v2525
      %v2561 = vadd.f32 %v2560, %v2526
      %v2562 = vadd.f32 %v2561, %v2527
      %v2563 = vadd.f32 %v2562, %v2528
      %v2564 = vadd.f32 %v2563, %v2529
      %v2565 = vadd.f32 %v2564, %v2530
      %v2566 = vadd.f32 %v2565, %v2531
      %v2567 = vadd.f32 %v2566, %v2532
      %v2568 = vadd.f32 %v2567, %v2533
      %v2569 = vadd.f32 %v2568, %v2534
      %v2570 = vadd.f32 %v2569, %v2535
      %v2571 = vadd.f32 %v2570, %v2536
      %v2572 = vadd.f32 %v2571, %v2537
      %v2573 = vadd.f32 %v2572, %v2538
      %v2574 = vadd.f32 %v2573, %v2539
      %v2575 = vadd.f32 %v2574, %v2540
      %v2576 = vadd.f32 %v2575, %v2541
      %v2577 = vrot.slane %v2576, 4
      %v2578 = vadd.f32 %v2576, %v2577
      %v2579 = vrot.slane %v2578, 2
      %v2580 = vadd.f32 %v2578, %v2579
      %v2581 = vrot.slane %v2580, 1
      %v2582 = vadd.f32 %v2580, %v2581
      %v2583 = vmul.f32 %v2582, 0.00390625
      %v2584 = vadd.f32 %v2583, 1e-05
      %v2585 = vrsqrt.pop %v2584
      %v2586 = vmul.f32 %v2434, %v2585
      %v2587 = vmul.f32 %v2435, %v2585
      %v2588 = vmul.f32 %v2436, %v2585
      %v2589 = vmul.f32 %v2437, %v2585
      %v2590 = vmul.f32 %v2438, %v2585
      %v2591 = vmul.f32 %v2439, %v2585
      %v2592 = vmul.f32 %v2440, %v2585
      %v2593 = vmul.f32 %v2441, %v2585
      %v2594 = vmul.f32 %v2442, %v2585
      %v2595 = vmul.f32 %v2443, %v2585
      %v2596 = vmul.f32 %v2444, %v2585
      %v2597 = vmul.f32 %v2445, %v2585
      %v2598 = vmul.f32 %v2446, %v2585
      %v2599 = vmul.f32 %v2447, %v2585
      %v2600 = vmul.f32 %v2448, %v2585
      %v2601 = vmul.f32 %v2449, %v2585
      %v2602 = vmul.f32 %v2450, %v2585
      %v2603 = vmul.f32 %v2451, %v2585
      %v2604 = vmul.f32 %v2452, %v2585
      %v2605 = vmul.f32 %v2453, %v2585
      %v2606 = vmul.f32 %v2454, %v2585
      %v2607 = vmul.f32 %v2455, %v2585
      %v2608 = vmul.f32 %v2456, %v2585
      %v2609 = vmul.f32 %v2457, %v2585
      %v2610 = vmul.f32 %v2458, %v2585
      %v2611 = vmul.f32 %v2459, %v2585
      %v2612 = vmul.f32 %v2460, %v2585
      %v2613 = vmul.f32 %v2461, %v2585
      %v2614 = vmul.f32 %v2462, %v2585
      %v2615 = vmul.f32 %v2463, %v2585
      %v2616 = vmul.f32 %v2464, %v2585
      %v2617 = vmul.f32 %v2465, %v2585
      %v2618 = vmul.f32 %v2466, %v2585
      %v2619 = vmul.f32 %v2467, %v2585
      %v2620 = vmul.f32 %v2468, %v2585
      %v2621 = vmul.f32 %v2469, %v2585
      %v2622 = vmax.f32 %v2586, 0.0
      %v2623 = vmax.f32 %v2587, 0.0
      %v2624 = vmax.f32 %v2588, 0.0
      %v2625 = vmax.f32 %v2589, 0.0
      %v2626 = vmax.f32 %v2590, 0.0
      %v2627 = vmax.f32 %v2591, 0.0
      %v2628 = vmax.f32 %v2592, 0.0
      %v2629 = vmax.f32 %v2593, 0.0
      %v2630 = vmax.f32 %v2594, 0.0
      %v2631 = vmax.f32 %v2595, 0.0
      %v2632 = vmax.f32 %v2596, 0.0
      %v2633 = vmax.f32 %v2597, 0.0
      %v2634 = vmax.f32 %v2598, 0.0
      %v2635 = vmax.f32 %v2599, 0.0
      %v2636 = vmax.f32 %v2600, 0.0
      %v2637 = vmax.f32 %v2601, 0.0
      %v2638 = vmax.f32 %v2602, 0.0
      %v2639 = vmax.f32 %v2603, 0.0
      %v2640 = vmax.f32 %v2604, 0.0
      %v2641 = vmax.f32 %v2605, 0.0
      %v2642 = vmax.f32 %v2606, 0.0
      %v2643 = vmax.f32 %v2607, 0.0
      %v2644 = vmax.f32 %v2608, 0.0
      %v2645 = vmax.f32 %v2609, 0.0
      %v2646 = vmax.f32 %v2610, 0.0
      %v2647 = vmax.f32 %v2611, 0.0
      %v2648 = vmax.f32 %v2612, 0.0
      %v2649 = vmax.f32 %v2613, 0.0
      %v2650 = vmax.f32 %v2614, 0.0
      %v2651 = vmax.f32 %v2615, 0.0
      %v2652 = vmax.f32 %v2616, 0.0
      %v2653 = vmax.f32 %v2617, 0.0
      %v2654 = vmax.f32 %v2618, 0.0
      %v2655 = vmax.f32 %v2619, 0.0
      %v2656 = vmax.f32 %v2620, 0.0
      %v2657 = vmax.f32 %v2621, 0.0
      %v2658 = vmul.f32 %v2622, %v2179
      %v2659 = vmul.f32 %v2623, %v2184
      %v2660 = vmul.f32 %v2624, %v2189
      %v2661 = vmul.f32 %v2625, %v2194
      %v2662 = vmul.f32 %v2626, %v2199
      %v2663 = vmul.f32 %v2627, %v2204
      %v2664 = vmul.f32 %v2628, %v2209
      %v2665 = vmul.f32 %v2629, %v2214
      %v2666 = vmul.f32 %v2630, %v2219
      %v2667 = vmul.f32 %v2631, %v2224
      %v2668 = vmul.f32 %v2632, %v2229
      %v2669 = vmul.f32 %v2633, %v2234
      %v2670 = vmul.f32 %v2634, %v2239
      %v2671 = vmul.f32 %v2635, %v2244
      %v2672 = vmul.f32 %v2636, %v2249
      %v2673 = vmul.f32 %v2637, %v2254
      %v2674 = vmul.f32 %v2638, %v2259
      %v2675 = vmul.f32 %v2639, %v2264
      %v2676 = vmul.f32 %v2640, %v2269
      %v2677 = vmul.f32 %v2641, %v2274
      %v2678 = vmul.f32 %v2642, %v2279
      %v2679 = vmul.f32 %v2643, %v2284
      %v2680 = vmul.f32 %v2644, %v2289
      %v2681 = vmul.f32 %v2645, %v2294
      %v2682 = vmul.f32 %v2646, %v2299
      %v2683 = vmul.f32 %v2647, %v2304
      %v2684 = vmul.f32 %v2648, %v2309
      %v2685 = vmul.f32 %v2649, %v2314
      %v2686 = vmul.f32 %v2650, %v2319
      %v2687 = vmul.f32 %v2651, %v2324
      %v2688 = vmul.f32 %v2652, %v2329
      %v2689 = vmul.f32 %v2653, %v2334
      %v2690 = vmul.f32 %v2654, %v2339
      %v2691 = vmul.f32 %v2655, %v2344
      %v2692 = vmul.f32 %v2656, %v2349
      %v2693 = vmul.f32 %v2657, %v2354
      %2694 = vst [vmem:[%s207] sm:$0xf] 0
      %2695 = vst [vmem:[%s207 + $0x4] sm:$0xf] 0
      %2696 = vst [vmem:[%s207 + $0x8] sm:$0xf] 0
      %2697 = vst [vmem:[%s207 + $0xc] sm:$0xf] 0
      %v2698 = vpack.c.bf16 %v2659, %v2658
      %v2699 = vpack.c.bf16 %v2661, %v2660
      %v2700 = vpack.c.bf16 %v2663, %v2662
      %v2701 = vpack.c.bf16 %v2665, %v2664
      %v2702 = vpack.c.bf16 %v2667, %v2666
      %v2703 = vpack.c.bf16 %v2669, %v2668
      %v2704 = vpack.c.bf16 %v2671, %v2670
      %v2705 = vpack.c.bf16 %v2673, %v2672
      %v2706 = vpack.c.bf16 %v2675, %v2674
      %v2707 = vpack.c.bf16 %v2677, %v2676
      %v2708 = vpack.c.bf16 %v2679, %v2678
      %v2709 = vpack.c.bf16 %v2681, %v2680
      %v2710 = vpack.c.bf16 %v2683, %v2682
      %v2711 = vpack.c.bf16 %v2685, %v2684
      %v2712 = vpack.c.bf16 %v2687, %v2686
      %v2713 = vpack.c.bf16 %v2689, %v2688
      %v2714 = vpack.c.bf16 %v2691, %v2690
      %v2715 = vpack.c.bf16 %v2693, %v2692
      %v2734 = vunpack.c.l.b16 %v2698
      %v2735 = vunpack.c.h.b16 %v2698
      %v2736 = vunpack.c.l.b16 %v2699
      %v2737 = vunpack.c.h.b16 %v2699
      %v2738 = vunpack.c.l.b16 %v2700
      %v2739 = vunpack.c.h.b16 %v2700
      %v2740 = vunpack.c.l.b16 %v2701
      %v2741 = vunpack.c.h.b16 %v2701
      %v2742 = vunpack.c.l.b16 %v2702
      %v2743 = vunpack.c.h.b16 %v2702
      %v2744 = vunpack.c.l.b16 %v2703
      %v2745 = vunpack.c.h.b16 %v2703
      %v2746 = vunpack.c.l.b16 %v2704
      %v2747 = vunpack.c.h.b16 %v2704
      %v2748 = vunpack.c.l.b16 %v2705
      %v2749 = vunpack.c.h.b16 %v2705
      %v2750 = vunpack.c.l.b16 %v2706
      %v2751 = vunpack.c.h.b16 %v2706
      %v2752 = vunpack.c.l.b16 %v2707
      %v2753 = vunpack.c.h.b16 %v2707
      %v2754 = vunpack.c.l.b16 %v2708
      %v2755 = vunpack.c.h.b16 %v2708
      %v2756 = vunpack.c.l.b16 %v2709
      %v2757 = vunpack.c.h.b16 %v2709
      %v2758 = vunpack.c.l.b16 %v2710
      %v2759 = vunpack.c.h.b16 %v2710
      %v2760 = vunpack.c.l.b16 %v2711
      %v2761 = vunpack.c.h.b16 %v2711
      %v2762 = vunpack.c.l.b16 %v2712
      %v2763 = vunpack.c.h.b16 %v2712
      %v2764 = vunpack.c.l.b16 %v2713
      %v2765 = vunpack.c.h.b16 %v2713
      %v2766 = vunpack.c.l.b16 %v2714
      %v2767 = vunpack.c.h.b16 %v2714
      %v2768 = vunpack.c.l.b16 %v2715
      %v2769 = vunpack.c.h.b16 %v2715
      %v2770 = vpack.c.b16 %v2734, %v2734
      %v2771 = vpack.c.b16 %v2735, %v2735
      %v2772 = vpack.c.b16 %v2736, %v2736
      %v2773 = vpack.c.b16 %v2737, %v2737
      %v2774 = vpack.c.b16 %v2738, %v2738
      %v2775 = vpack.c.b16 %v2739, %v2739
      %v2776 = vpack.c.b16 %v2740, %v2740
      %v2777 = vpack.c.b16 %v2741, %v2741
      %v2778 = vpack.c.b16 %v2742, %v2742
      %v2779 = vpack.c.b16 %v2743, %v2743
      %v2780 = vpack.c.b16 %v2744, %v2744
      %v2781 = vpack.c.b16 %v2745, %v2745
      %v2782 = vpack.c.b16 %v2746, %v2746
      %v2783 = vpack.c.b16 %v2747, %v2747
      %v2784 = vpack.c.b16 %v2748, %v2748
      %v2785 = vpack.c.b16 %v2749, %v2749
      %v2786 = vpack.c.b16 %v2750, %v2750
      %v2787 = vpack.c.b16 %v2751, %v2751
      %v2788 = vpack.c.b16 %v2752, %v2752
      %v2789 = vpack.c.b16 %v2753, %v2753
      %v2790 = vpack.c.b16 %v2754, %v2754
      %v2791 = vpack.c.b16 %v2755, %v2755
      %v2792 = vpack.c.b16 %v2756, %v2756
      %v2793 = vpack.c.b16 %v2757, %v2757
      %v2794 = vpack.c.b16 %v2758, %v2758
      %v2795 = vpack.c.b16 %v2759, %v2759
      %v2796 = vpack.c.b16 %v2760, %v2760
      %v2797 = vpack.c.b16 %v2761, %v2761
      %v2798 = vpack.c.b16 %v2762, %v2762
      %v2799 = vpack.c.b16 %v2763, %v2763
      %v2800 = vpack.c.b16 %v2764, %v2764
      %v2801 = vpack.c.b16 %v2765, %v2765
      %v2802 = vpack.c.b16 %v2766, %v2766
      %v2803 = vpack.c.b16 %v2767, %v2767
      %v2804 = vpack.c.b16 %v2768, %v2768
      %v2805 = vpack.c.b16 %v2769, %v2769
      %2842 = vst [vmem:[%s207 + $0x10] sm:$0xf] %v2770
      %2843 = vst [vmem:[%s207 + $0x14] sm:$0xf] %v2771
      %2844 = vst [vmem:[%s207 + $0x18] sm:$0xf] %v2772
      %2845 = vst [vmem:[%s207 + $0x1c] sm:$0xf] %v2773
      %2846 = vst [vmem:[%s207 + $0x20] sm:$0xf] %v2774
      %2847 = vst [vmem:[%s207 + $0x24] sm:$0xf] %v2775
      %2848 = vst [vmem:[%s207 + $0x28] sm:$0xf] %v2776
      %2849 = vst [vmem:[%s207 + $0x2c] sm:$0xf] %v2777
      %2850 = vst [vmem:[%s207 + $0x30] sm:$0xf] %v2778
      %2851 = vst [vmem:[%s207 + $0x34] sm:$0xf] %v2779
      %2852 = vst [vmem:[%s207 + $0x38] sm:$0xf] %v2780
      %2853 = vst [vmem:[%s207 + $0x3c] sm:$0xf] %v2781
      %2854 = vst [vmem:[%s207 + $0x40] sm:$0xf] %v2782
      %2855 = vst [vmem:[%s207 + $0x44] sm:$0xf] %v2783
      %2856 = vst [vmem:[%s207 + $0x48] sm:$0xf] %v2784
      %2857 = vst [vmem:[%s207 + $0x4c] sm:$0xf] %v2785
      %2858 = vst [vmem:[%s207 + $0x50] sm:$0xf] %v2786
      %2859 = vst [vmem:[%s207 + $0x54] sm:$0xf] %v2787
      %2860 = vst [vmem:[%s207 + $0x58] sm:$0xf] %v2788
      %2861 = vst [vmem:[%s207 + $0x5c] sm:$0xf] %v2789
      %2862 = vst [vmem:[%s207 + $0x60] sm:$0xf] %v2790
      %2863 = vst [vmem:[%s207 + $0x64] sm:$0xf] %v2791
      %2864 = vst [vmem:[%s207 + $0x68] sm:$0xf] %v2792
      %2865 = vst [vmem:[%s207 + $0x6c] sm:$0xf] %v2793
      %2866 = vst [vmem:[%s207 + $0x70] sm:$0xf] %v2794
      %2867 = vst [vmem:[%s207 + $0x74] sm:$0xf] %v2795
      %2868 = vst [vmem:[%s207 + $0x78] sm:$0xf] %v2796
      %2869 = vst [vmem:[%s207 + $0x7c] sm:$0xf] %v2797
      %2870 = vst [vmem:[%s207 + $0x80] sm:$0xf] %v2798
      %2871 = vst [vmem:[%s207 + $0x84] sm:$0xf] %v2799
      %2872 = vst [vmem:[%s207 + $0x88] sm:$0xf] %v2800
      %2873 = vst [vmem:[%s207 + $0x8c] sm:$0xf] %v2801
      %2874 = vst [vmem:[%s207 + $0x90] sm:$0xf] %v2802
      %2875 = vst [vmem:[%s207 + $0x94] sm:$0xf] %v2803
      %2876 = vst [vmem:[%s207 + $0x98] sm:$0xf] %v2804
      %2877 = vst [vmem:[%s207 + $0x9c] sm:$0xf] %v2805
      %2878 = vst [vmem:[%s207 + $0xa0] sm:$0xf] 0
      %2879 = vst [vmem:[%s207 + $0xa4] sm:$0xf] 0
      %vm2880 = vcmask 1041408
      %vm2881 = vsmask.f32 1280
      %vm2882 = vmand %vm2880, %vm2881
      %v2883 = vld [vmem:[%s207 + $0xa8] sm:$0x3]
      %v2884 = vsel %vm2882, 0, %v2883
      %2885 = vst [vmem:[%s207 + $0xa8] sm:$0x3] %v2884
      %p2886 = scmp.lt.s32.totalorder %s18, 1
      %s2887 = scalar_select %p2886, %s18, 1
      %p2888 = scmp.lt.s32.totalorder %s19, 0
      %s2889 = scalar_select %p2888, %s19, 0
      %s2890 = smul.addr %s2887, 43
      %s2891 = sadd.s32 %s2889, %s2890
      %s2892 = smul.addr %s2891, 4
      %s2893 = scalar_lea.vmem %s3, %s2892
      // Predicated region
      $region33: #{basic_block_forward.2} parent=31 // pred_check
        %p2894 = pneg %p119
      $region34: #{basic_block_forward.2} parent=31 // pred_check_branch
        %2896 = sbr.rel (%p2894) target = $region36
      $region35: #{basic_block_forward.2} parent=31 // pred_region
        _
      $region36: #{basic_block_forward.2} parent=31 // pred_fallthru
        _
    $region32: #{basic_block_forward.2} parent=5 // pred_fallthru
      _
    %p2897 = scmp.le.s32.totalorder 2, %s9
    // Predicated region
    $region37: #{basic_block_forward.2} parent=5 // pred_check
      %p2898 = pneg %p2897
    $region38: #{basic_block_forward.2} parent=5 // pred_check_branch
      %2900 = sbr.rel (%p2898) target = $region40
    $region39: #{basic_block_forward.2} parent=5 // pred_region
      %s2901 = ssub.s32 %s9, 2
      // Predicated region
      $region41: #{basic_block_forward.2} parent=39 // pred_check
        %p2902 = pneg %p125
      $region42: #{basic_block_forward.2} parent=39 // pred_check_branch
        %2904 = sbr.rel (%p2902) target = $region44
      $region43: #{basic_block_forward.2} parent=39 // pred_region
        %p2905 = scmp.lt.s32.totalorder %s20, 1
        %s2906 = scalar_select %p2905, %s20, 1
        %p2907 = scmp.lt.s32.totalorder %s21, 0
        %s2908 = scalar_select %p2907, %s21, 0
        %s2909 = smul.addr %s2906, 43
        %s2910 = sadd.s32 %s2908, %s2909
        %s2911 = smul.addr %s2910, 4
        %s2912 = scalar_lea.vmem %s3, %s2911
      $region44: #{basic_block_forward.2} parent=39 // pred_fallthru
        _
    $region40: #{basic_block_forward.2} parent=5 // pred_fallthru
      _
  $region6: #{basic_block_forward.2} parent=0 // loop_footer
    %s13 = sadd.s32 1, %s9
  $region7: #{basic_block_forward.2} parent=0 // loop_footer_branch
    %8 = sbr.rel target = $region3
  $region8: #{basic_block_forward.2} parent=0 // loop_exit
    _

// kernel: basic_block_forward.3
$region0: #{basic_block_forward.3}
  #allocation0 [shape = 'u32[]', space=smem, size = 0x4, offset = 0x4, fixed_abs, tag = 'smem constant byte address 0x4 - core index']
  #allocation1 [shape = 'u32[144,128]{1,0:T(1,128)}', space=vmem, size = 0x12000, scoped, tag = 'internal scratch']
  %s0 = inlined_call_operand.vmem [shape: bf16[2,1,339,128], index: 0, kind: input, shape index: {}]
  %s1 = inlined_call_operand.vmem [shape: bf16[3,384,128], index: 1, kind: input, shape index: {}]
  %s2 = inlined_call_operand.vmem [shape: f32[288,1], index: 2, kind: input, shape index: {}]
  %s3 = inlined_call_operand.vmem [shape: bf16[2,288,128], index: 3, kind: input, shape index: {}]
  %s4 = inlined_call_operand.vmem [shape: f32[2,288,128], index: 4, kind: output, shape index: {}]
  %s5 = sld [smem:[#allocation0]]
  $region49: #{basic_block_forward.3} parent=0
    _
  %s7 = ssub.s32 1, %s5
  %s8 = scalar_select 0, %s7, %s5
  loop: start=0, step=1, limit=4
  $region2: #{basic_block_forward.3} parent=0 // loop_pre_header
    _
  $region3: #{basic_block_forward.3} parent=0 // loop_header
    %s10 = sphi 0, %s14
    %p11 = scmp.ge.s32.totalorder %s10, 4
    %s17 = sphi 0, %s29
    %s18 = sphi 0, %s25
    %s19 = sphi 0, %s17
    %s20 = sphi 0, %s18
    %s21 = sphi 0, %s19
    %s22 = sphi 0, %s20
    %s32 = sphi 0, %s34
    %s35 = sphi 0, %s32
    %s36 = sphi 0, %s35
    %s52 = sphi 0, %s36
    %s58 = sphi 0, %s60
    %s61 = sphi 0, %s58
    %s62 = sphi 0, %s61
    %s78 = sphi 0, %s62
    %s82 = sphi 0, %s82
    %s84 = sphi 0, %s82
    %s85 = sphi 0, %s84
    %s99 = sphi 0, %s85
    %s107 = sphi 0, %s109
    %s110 = sphi 0, %s107
    %s111 = sphi 0, %s110
    %s127 = sphi 0, %s111
    %s135 = sphi 0, %s137
    %s138 = sphi 0, %s135
    %s139 = sphi 0, %s138
    %s155 = sphi 0, %s139
  $region4: #{basic_block_forward.3} parent=0 // loop_header_branch
    %13 = sbr.rel (%p11) target = $region8
  $region5: #{basic_block_forward.3} parent=0 // loop_body
    %s15 = ssub.s32 %s10, 1
    %s16 = ssub.s32 %s10, 2
    %s23 = sadd.s32 1, %s18
    %p24 = scmp.ge.s32.totalorder %s23, 1
    %s25 = scalar_select %p24, 0, %s23
    %s26 = sadd.s32 1, %s17
    %s27 = scalar_select %p24, %s26, %s17
    %p28 = scmp.ge.s32.totalorder %s27, 2
    %s29 = scalar_select %p28, 0, %s27
    %s30 = ssub.s32 %s17, %s29
    %p31 = scmp.eq.s32.totalorder %s30, 0
    %s33 = sadd.s32 %s32, 1
    %s34 = scalar_select %p31, %s32, %s33
    %p37 = pneg %p31
    %p38 = scmp.eq.s32.totalorder %s10, 1
    %p39 = por %p37, %p38
    %p40 = scmp.ne.s32.totalorder %s32, %s35
    %p41 = scmp.eq.s32.totalorder %s10, 0
    %p42 = por %p40, %p41
    %p43 = scmp.ne.s32.totalorder %s32, %s35
    %p44 = scmp.eq.s32.totalorder %s15, 1
    %p45 = por %p43, %p44
    %p46 = scmp.ne.s32.totalorder %s35, %s36
    %p47 = scmp.eq.s32.totalorder %s15, 0
    %p48 = por %p46, %p47
    %p49 = scmp.ne.s32.totalorder %s35, %s36
    %p50 = scmp.eq.s32.totalorder %s16, 1
    %p51 = por %p49, %p50
    %p53 = scmp.ne.s32.totalorder %s36, %s52
    %p54 = scmp.eq.s32.totalorder %s16, 0
    %p55 = por %p53, %p54
    %s56 = ssub.s32 %s18, %s25
    %p57 = scmp.eq.s32.totalorder %s56, 0
    %s59 = sadd.s32 %s58, 1
    %s60 = scalar_select %p57, %s58, %s59
    %p63 = pneg %p57
    %p64 = scmp.eq.s32.totalorder %s10, 1
    %p65 = por %p63, %p64
    %p66 = scmp.ne.s32.totalorder %s58, %s61
    %p67 = scmp.eq.s32.totalorder %s10, 0
    %p68 = por %p66, %p67
    %p69 = scmp.ne.s32.totalorder %s58, %s61
    %p70 = scmp.eq.s32.totalorder %s15, 1
    %p71 = por %p69, %p70
    %p72 = scmp.ne.s32.totalorder %s61, %s62
    %p73 = scmp.eq.s32.totalorder %s15, 0
    %p74 = por %p72, %p73
    %p75 = scmp.ne.s32.totalorder %s61, %s62
    %p76 = scmp.eq.s32.totalorder %s16, 1
    %p77 = por %p75, %p76
    %p79 = scmp.ne.s32.totalorder %s62, %s78
    %p80 = scmp.eq.s32.totalorder %s16, 0
    %p81 = por %p79, %p80
    %s83 = sadd.s32 %s82, 1
    %p86 = scmp.eq.s32.totalorder %s10, 1
    %p87 = scmp.ne.s32.totalorder %s82, %s84
    %p88 = scmp.eq.s32.totalorder %s10, 0
    %p89 = por %p87, %p88
    %p90 = scmp.ne.s32.totalorder %s82, %s84
    %p91 = scmp.eq.s32.totalorder %s15, 1
    %p92 = por %p90, %p91
    %p93 = scmp.ne.s32.totalorder %s84, %s85
    %p94 = scmp.eq.s32.totalorder %s15, 0
    %p95 = por %p93, %p94
    %p96 = scmp.ne.s32.totalorder %s84, %s85
    %p97 = scmp.eq.s32.totalorder %s16, 1
    %p98 = por %p96, %p97
    %p100 = scmp.ne.s32.totalorder %s85, %s99
    %p101 = scmp.eq.s32.totalorder %s16, 0
    %p102 = por %p100, %p101
    %s103 = ssub.s32 %s17, %s29
    %s104 = ssub.s32 %s18, %s25
    %s105 = sor.u32 %s103, %s104
    %p106 = scmp.eq.s32.totalorder %s105, 0
    %s108 = sadd.s32 %s107, 1
    %s109 = scalar_select %p106, %s107, %s108
    %p112 = pneg %p106
    %p113 = scmp.eq.s32.totalorder %s10, 1
    %p114 = por %p112, %p113
    %p115 = scmp.ne.s32.totalorder %s107, %s110
    %p116 = scmp.eq.s32.totalorder %s10, 0
    %p117 = por %p115, %p116
    %p118 = scmp.ne.s32.totalorder %s107, %s110
    %p119 = scmp.eq.s32.totalorder %s15, 1
    %p120 = por %p118, %p119
    %p121 = scmp.ne.s32.totalorder %s110, %s111
    %p122 = scmp.eq.s32.totalorder %s15, 0
    %p123 = por %p121, %p122
    %p124 = scmp.ne.s32.totalorder %s110, %s111
    %p125 = scmp.eq.s32.totalorder %s16, 1
    %p126 = por %p124, %p125
    %p128 = scmp.ne.s32.totalorder %s111, %s127
    %p129 = scmp.eq.s32.totalorder %s16, 0
    %p130 = por %p128, %p129
    %s131 = ssub.s32 %s17, %s29
    %s132 = ssub.s32 %s18, %s25
    %s133 = sor.u32 %s131, %s132
    %p134 = scmp.eq.s32.totalorder %s133, 0
    %s136 = sadd.s32 %s135, 1
    %s137 = scalar_select %p134, %s135, %s136
    %p140 = pneg %p134
    %p141 = scmp.eq.s32.totalorder %s10, 1
    %p142 = por %p140, %p141
    %p143 = scmp.ne.s32.totalorder %s135, %s138
    %p144 = scmp.eq.s32.totalorder %s10, 0
    %p145 = por %p143, %p144
    %p146 = scmp.ne.s32.totalorder %s135, %s138
    %p147 = scmp.eq.s32.totalorder %s15, 1
    %p148 = por %p146, %p147
    %p149 = scmp.ne.s32.totalorder %s138, %s139
    %p150 = scmp.eq.s32.totalorder %s15, 0
    %p151 = por %p149, %p150
    %p152 = scmp.ne.s32.totalorder %s138, %s139
    %p153 = scmp.eq.s32.totalorder %s16, 1
    %p154 = por %p152, %p153
    %p156 = scmp.ne.s32.totalorder %s139, %s155
    %p157 = scmp.eq.s32.totalorder %s16, 0
    %p158 = por %p156, %p157
    %p159 = scmp.le.s32.totalorder 1, %s10
    %p160 = scmp.lt.s32.totalorder %s10, 3
    %p161 = pnand %p159, %p160
    %p162 = pneg %p161
    // Predicated region
    $region9: #{basic_block_forward.3} parent=5 // pred_check
      _
    $region10: #{basic_block_forward.3} parent=5 // pred_check_branch
      %164 = sbr.rel (%p161) target = $region12
    $region11: #{basic_block_forward.3} parent=5 // pred_region
      %s165 = ssub.s32 %s10, 1
      // Predicated region
      $region13: #{basic_block_forward.3} parent=11 // pred_check
        %p166 = pneg %p74
      $region14: #{basic_block_forward.3} parent=11 // pred_check_branch
        %168 = sbr.rel (%p166) target = $region16
      $region15: #{basic_block_forward.3} parent=11 // pred_region
        %p169 = scmp.lt.s32.totalorder %s20, 0
        %s170 = scalar_select %p169, %s20, 0
        %s171 = smul.addr %s170, 4
        %s172 = scalar_lea.vmem %s1, %s171
      $region16: #{basic_block_forward.3} parent=11 // pred_fallthru
        _
      // Predicated region
      $region17: #{basic_block_forward.3} parent=11 // pred_check
        %p173 = pneg %p95
      $region18: #{basic_block_forward.3} parent=11 // pred_check_branch
        %175 = sbr.rel (%p173) target = $region20
      $region19: #{basic_block_forward.3} parent=11 // pred_region
        _
      $region20: #{basic_block_forward.3} parent=11 // pred_fallthru
        _
    $region12: #{basic_block_forward.3} parent=5 // pred_fallthru
      _
    %p176 = scmp.lt.s32.totalorder %s10, 2
    // Predicated region
    $region21: #{basic_block_forward.3} parent=5 // pred_check
      %p177 = pneg %p176
    $region22: #{basic_block_forward.3} parent=5 // pred_check_branch
      %179 = sbr.rel (%p177) target = $region24
    $region23: #{basic_block_forward.3} parent=5 // pred_region
      // Predicated region
      $region25: #{basic_block_forward.3} parent=23 // pred_check
        %p180 = pneg %p42
      $region26: #{basic_block_forward.3} parent=23 // pred_check_branch
        %182 = sbr.rel (%p180) target = $region28
      $region27: #{basic_block_forward.3} parent=23 // pred_region
        %p183 = scmp.lt.s32.totalorder %s17, 1
        %s184 = scalar_select %p183, %s17, 1
        %s185 = smul.addr %s184, 43
        %s186 = smul.addr %s185, 4
        %s187 = scalar_lea.vmem %s0, %s186
      $region28: #{basic_block_forward.3} parent=23 // pred_fallthru
        _
      // Predicated region
      $region29: #{basic_block_forward.3} parent=23 // pred_check
        %p188 = pneg %p117
      $region30: #{basic_block_forward.3} parent=23 // pred_check_branch
        %190 = sbr.rel (%p188) target = $region32
      $region31: #{basic_block_forward.3} parent=23 // pred_region
        %p191 = scmp.lt.s32.totalorder %s17, 1
        %s192 = scalar_select %p191, %s17, 1
        %p193 = scmp.lt.s32.totalorder %s18, 0
        %s194 = scalar_select %p193, %s18, 0
        %s195 = smul.addr %s192, 36
        %s196 = sadd.s32 %s194, %s195
        %s197 = smul.addr %s196, 4
        %s198 = scalar_lea.vmem %s3, %s197
      $region32: #{basic_block_forward.3} parent=23 // pred_fallthru
        _
    $region24: #{basic_block_forward.3} parent=5 // pred_fallthru
      _
    %p199 = scmp.le.s32.totalorder 1, %s10
    %p200 = scmp.lt.s32.totalorder %s10, 3
    %p201 = pnand %p199, %p200
    %p202 = pneg %p201
    // Predicated region
    $region33: #{basic_block_forward.3} parent=5 // pred_check
      _
    $region34: #{basic_block_forward.3} parent=5 // pred_check_branch
      %204 = sbr.rel (%p201) target = $region36
    $region35: #{basic_block_forward.3} parent=5 // pred_region
      %s205 = ssub.s32 %s10, 1
      %p206 = scmp.lt.s32.totalorder %s19, 1
      %s207 = scalar_select %p206, %s19, 1
      %s208 = smul.addr %s207, 43
      %s209 = smul.addr %s208, 4
      %s210 = scalar_lea.vmem %s0, %s209
      %p211 = pneg %p48
      %p212 = pneg %p45
      %p213 = scmp.lt.s32.totalorder %s20, 0
      %s214 = scalar_select %p213, %s20, 0
      %s215 = smul.addr %s214, 4
      %s216 = scalar_lea.vmem %s1, %s215
      %p217 = pneg %p74
      %p218 = pneg %p71
      %p219 = pneg %p95
      %p220 = pneg %p92
      %p221 = scmp.lt.s32.totalorder %s19, 1
      %s222 = scalar_select %p221, %s19, 1
      %p223 = scmp.lt.s32.totalorder %s20, 0
      %s224 = scalar_select %p223, %s20, 0
      %s225 = smul.addr %s222, 36
      %s226 = sadd.s32 %s224, %s225
      %s227 = smul.addr %s226, 4
      %s228 = scalar_lea.vmem %s3, %s227
      %p229 = pneg %p123
      %p230 = pneg %p120
      %p231 = pneg %p151
      %p232 = pneg %p148
      %p233 = scmp.lt.s32.totalorder %s19, 1
      %s234 = scalar_select %p233, %s19, 1
      %p235 = scmp.lt.s32.totalorder %s20, 0
      %s236 = scalar_select %p235, %s20, 0
      %s237 = smul.addr %s234, 36
      %s238 = sadd.s32 %s236, %s237
      %s239 = smul.addr %s238, 8
      %s240 = scalar_lea.vmem %s4, %s239
      %p241 = scmp.lt.s32.totalorder %s19, 1
      %s242 = scalar_select %p241, %s19, 1
      %s243 = smul.addr %s242, 43
      %s244 = smul.addr %s243, 4
      %s245 = scalar_lea.vmem %s0, %s244
      %p246 = scmp.lt.s32.totalorder %s20, 0
      %s247 = scalar_select %p246, %s20, 0
      %s248 = smul.addr %s247, 4
      %s249 = scalar_lea.vmem %s1, %s248
      %p250 = scmp.lt.s32.totalorder %s19, 1
      %s251 = scalar_select %p250, %s19, 1
      %p252 = scmp.lt.s32.totalorder %s20, 0
      %s253 = scalar_select %p252, %s20, 0
      %s254 = smul.addr %s251, 36
      %s255 = sadd.s32 %s253, %s254
      %s256 = smul.addr %s255, 4
      %s257 = scalar_lea.vmem %s3, %s256
      %p258 = scmp.lt.s32.totalorder %s19, 1
      %s259 = scalar_select %p258, %s19, 1
      %p260 = scmp.lt.s32.totalorder %s20, 0
      %s261 = scalar_select %p260, %s20, 0
      %s262 = smul.addr %s259, 36
      %s263 = sadd.s32 %s261, %s262
      %s264 = smul.addr %s263, 8
      %s265 = scalar_lea.vmem %s4, %s264
      %v267 = vld [vmem:[%s245 + $0x4] sm:$0xc]
      %v268 = vld [vmem:[%s245 + $0x8] sm:$0xf]
      %v269 = vld [vmem:[%s245 + $0xc] sm:$0xf]
      %v270 = vld [vmem:[%s245 + $0x10] sm:$0xf]
      %v271 = vld [vmem:[%s245 + $0x14] sm:$0xf]
      %v272 = vld [vmem:[%s245 + $0x18] sm:$0xf]
      %v273 = vld [vmem:[%s245 + $0x1c] sm:$0xf]
      %v274 = vld [vmem:[%s245 + $0x20] sm:$0xf]
      %v275 = vld [vmem:[%s245 + $0x24] sm:$0xf]
      %v276 = vld [vmem:[%s245 + $0x28] sm:$0xf]
      %v277 = vld [vmem:[%s245 + $0x2c] sm:$0xf]
      %v278 = vld [vmem:[%s245 + $0x30] sm:$0xf]
      %v279 = vld [vmem:[%s245 + $0x34] sm:$0xf]
      %v280 = vld [vmem:[%s245 + $0x38] sm:$0xf]
      %v281 = vld [vmem:[%s245 + $0x3c] sm:$0xf]
      %v282 = vld [vmem:[%s245 + $0x40] sm:$0xf]
      %v283 = vld [vmem:[%s245 + $0x44] sm:$0xf]
      %v284 = vld [vmem:[%s245 + $0x48] sm:$0xf]
      %v285 = vld [vmem:[%s245 + $0x4c] sm:$0xf]
      %v286 = vld [vmem:[%s245 + $0x50] sm:$0xf]
      %v287 = vld [vmem:[%s245 + $0x54] sm:$0xf]
      %v288 = vld [vmem:[%s245 + $0x58] sm:$0xf]
      %v289 = vld [vmem:[%s245 + $0x5c] sm:$0xf]
      %v290 = vld [vmem:[%s245 + $0x60] sm:$0xf]
      %v291 = vld [vmem:[%s245 + $0x64] sm:$0xf]
      %v292 = vld [vmem:[%s245 + $0x68] sm:$0xf]
      %v293 = vld [vmem:[%s245 + $0x6c] sm:$0xf]
      %v294 = vld [vmem:[%s245 + $0x70] sm:$0xf]
      %v295 = vld [vmem:[%s245 + $0x74] sm:$0xf]
      %v296 = vld [vmem:[%s245 + $0x78] sm:$0xf]
      %v297 = vld [vmem:[%s245 + $0x7c] sm:$0xf]
      %v298 = vld [vmem:[%s245 + $0x80] sm:$0xf]
      %v299 = vld [vmem:[%s245 + $0x84] sm:$0xf]
      %v300 = vld [vmem:[%s245 + $0x88] sm:$0xf]
      %v301 = vld [vmem:[%s245 + $0x8c] sm:$0xf]
      %v302 = vld [vmem:[%s245 + $0x90] sm:$0xf]
      %v303 = vld [vmem:[%s245 + $0x94] sm:$0x7]
      %v304 = vld [vmem:[%s245 + $0x4] sm:$0x8]
      %v305 = vld [vmem:[%s245 + $0x94] sm:$0xf]
      %v343 = vunpack.c.l.b16 %v267
      %v344 = vunpack.c.l.b16 %v268
      %v345 = vunpack.c.l.b16 %v269
      %v346 = vunpack.c.l.b16 %v270
      %v347 = vunpack.c.l.b16 %v271
      %v348 = vunpack.c.l.b16 %v272
      %v349 = vunpack.c.l.b16 %v273
      %v350 = vunpack.c.l.b16 %v274
      %v351 = vunpack.c.l.b16 %v275
      %v352 = vunpack.c.l.b16 %v276
      %v353 = vunpack.c.l.b16 %v277
      %v354 = vunpack.c.l.b16 %v278
      %v355 = vunpack.c.l.b16 %v279
      %v356 = vunpack.c.l.b16 %v280
      %v357 = vunpack.c.l.b16 %v281
      %v358 = vunpack.c.l.b16 %v282
      %v359 = vunpack.c.l.b16 %v283
      %v360 = vunpack.c.l.b16 %v284
      %v361 = vunpack.c.l.b16 %v285
      %v362 = vunpack.c.l.b16 %v286
      %v363 = vunpack.c.l.b16 %v287
      %v364 = vunpack.c.l.b16 %v288
      %v365 = vunpack.c.l.b16 %v289
      %v366 = vunpack.c.l.b16 %v290
      %v367 = vunpack.c.l.b16 %v291
      %v368 = vunpack.c.l.b16 %v292
      %v369 = vunpack.c.l.b16 %v293
      %v370 = vunpack.c.l.b16 %v294
      %v371 = vunpack.c.l.b16 %v295
      %v372 = vunpack.c.l.b16 %v296
      %v373 = vunpack.c.l.b16 %v297
      %v374 = vunpack.c.l.b16 %v298
      %v375 = vunpack.c.l.b16 %v299
      %v376 = vunpack.c.l.b16 %v300
      %v377 = vunpack.c.l.b16 %v301
      %v378 = vunpack.c.l.b16 %v302
      %v379 = vunpack.c.l.b16 %v303
      %v380 = vpack.c.b16 %v344, %v343
      %v381 = vpack.c.b16 %v346, %v345
      %v382 = vpack.c.b16 %v348, %v347
      %v383 = vpack.c.b16 %v350, %v349
      %v384 = vpack.c.b16 %v352, %v351
      %v385 = vpack.c.b16 %v354, %v353
      %v386 = vpack.c.b16 %v356, %v355
      %v387 = vpack.c.b16 %v358, %v357
      %v388 = vpack.c.b16 %v360, %v359
      %v389 = vpack.c.b16 %v362, %v361
      %v390 = vpack.c.b16 %v364, %v363
      %v391 = vpack.c.b16 %v366, %v365
      %v392 = vpack.c.b16 %v368, %v367
      %v393 = vpack.c.b16 %v370, %v369
      %v394 = vpack.c.b16 %v372, %v371
      %v395 = vpack.c.b16 %v374, %v373
      %v396 = vpack.c.b16 %v376, %v375
      %v397 = vpack.c.b16 %v378, %v377
      %v398 = vpack.c.b16 %v379, %v379
      %v400 = vunpack.c.l.b16 %v304
      %v401 = vpack.c.b16 %v344, %v400
      %vm402 = vsmask.f32 7424
      %v404 = vshrl.u32 %v401, 16
      %v406 = vshll.u32 %v401, 16
      %v408 = vrot.slane %v406, 1
      %v409 = vor.u32 %v404, %v408
      %v411 = vshll.u32 %v381, 16
      %v413 = vrot.slane %v411, 1
      %v414 = vsel %vm402, %v409, %v413
      %v415 = vshrl.u32 %v381, 16
      %v417 = vor.u32 %v415, %v413
      %v419 = vshll.u32 %v382, 16
      %v421 = vrot.slane %v419, 1
      %v422 = vsel %vm402, %v417, %v421
      %v423 = vshrl.u32 %v382, 16
      %v425 = vor.u32 %v423, %v421
      %v427 = vshll.u32 %v383, 16
      %v429 = vrot.slane %v427, 1
      %v430 = vsel %vm402, %v425, %v429
      %v431 = vshrl.u32 %v383, 16
      %v433 = vor.u32 %v431, %v429
      %v435 = vshll.u32 %v384, 16
      %v437 = vrot.slane %v435, 1
      %v438 = vsel %vm402, %v433, %v437
      %v439 = vshrl.u32 %v384, 16
      %v441 = vor.u32 %v439, %v437
      %v443 = vshll.u32 %v385, 16
      %v445 = vrot.slane %v443, 1
      %v446 = vsel %vm402, %v441, %v445
      %v447 = vshrl.u32 %v385, 16
      %v449 = vor.u32 %v447, %v445
      %v451 = vshll.u32 %v386, 16
      %v453 = vrot.slane %v451, 1
      %v454 = vsel %vm402, %v449, %v453
      %v455 = vshrl.u32 %v386, 16
      %v457 = vor.u32 %v455, %v453
      %v459 = vshll.u32 %v387, 16
      %v461 = vrot.slane %v459, 1
      %v462 = vsel %vm402, %v457, %v461
      %v463 = vshrl.u32 %v387, 16
      %v465 = vor.u32 %v463, %v461
      %v467 = vshll.u32 %v388, 16
      %v469 = vrot.slane %v467, 1
      %v470 = vsel %vm402, %v465, %v469
      %v471 = vshrl.u32 %v388, 16
      %v473 = vor.u32 %v471, %v469
      %v475 = vshll.u32 %v389, 16
      %v477 = vrot.slane %v475, 1
      %v478 = vsel %vm402, %v473, %v477
      %v479 = vshrl.u32 %v389, 16
      %v481 = vor.u32 %v479, %v477
      %v483 = vshll.u32 %v390, 16
      %v485 = vrot.slane %v483, 1
      %v486 = vsel %vm402, %v481, %v485
      %v487 = vshrl.u32 %v390, 16
      %v489 = vor.u32 %v487, %v485
      %v491 = vshll.u32 %v391, 16
      %v493 = vrot.slane %v491, 1
      %v494 = vsel %vm402, %v489, %v493
      %v495 = vshrl.u32 %v391, 16
      %v497 = vor.u32 %v495, %v493
      %v499 = vshll.u32 %v392, 16
      %v501 = vrot.slane %v499, 1
      %v502 = vsel %vm402, %v497, %v501
      %v503 = vshrl.u32 %v392, 16
      %v505 = vor.u32 %v503, %v501
      %v507 = vshll.u32 %v393, 16
      %v509 = vrot.slane %v507, 1
      %v510 = vsel %vm402, %v505, %v509
      %v511 = vshrl.u32 %v393, 16
      %v513 = vor.u32 %v511, %v509
      %v515 = vshll.u32 %v394, 16
      %v517 = vrot.slane %v515, 1
      %v518 = vsel %vm402, %v513, %v517
      %v519 = vshrl.u32 %v394, 16
      %v521 = vor.u32 %v519, %v517
      %v523 = vshll.u32 %v395, 16
      %v525 = vrot.slane %v523, 1
      %v526 = vsel %vm402, %v521, %v525
      %v527 = vshrl.u32 %v395, 16
      %v529 = vor.u32 %v527, %v525
      %v531 = vshll.u32 %v396, 16
      %v533 = vrot.slane %v531, 1
      %v534 = vsel %vm402, %v529, %v533
      %v535 = vshrl.u32 %v396, 16
      %v537 = vor.u32 %v535, %v533
      %v539 = vshll.u32 %v397, 16
      %v541 = vrot.slane %v539, 1
      %v542 = vsel %vm402, %v537, %v541
      %v543 = vshrl.u32 %v397, 16
      %v545 = vor.u32 %v543, %v541
      %v547 = vshll.u32 %v398, 16
      %v549 = vrot.slane %v547, 1
      %v550 = vsel %vm402, %v545, %v549
      %v551 = vshrl.u32 %v398, 16
      %v553 = vor.u32 %v551, %v549
      %v555 = vunpack.c.l.b16 %v305
      %v556 = vpack.c.b16 %v555, %v555
      %vm557 = vcmask 1046528
      %v558 = vrot.slane %v401, 1
      %v559 = vrot.slane %v381, 1
      %v560 = vsel %vm557, %v558, %v559
      %v561 = vrot.slane %v382, 1
      %v562 = vsel %vm557, %v559, %v561
      %v563 = vrot.slane %v383, 1
      %v564 = vsel %vm557, %v561, %v563
      %v565 = vrot.slane %v384, 1
      %v566 = vsel %vm557, %v563, %v565
      %v567 = vrot.slane %v385, 1
      %v568 = vsel %vm557, %v565, %v567
      %v569 = vrot.slane %v386, 1
      %v570 = vsel %vm557, %v567, %v569
      %v571 = vrot.slane %v387, 1
      %v572 = vsel %vm557, %v569, %v571
      %v573 = vrot.slane %v388, 1
      %v574 = vsel %vm557, %v571, %v573
      %v575 = vrot.slane %v389, 1
      %v576 = vsel %vm557, %v573, %v575
      %v577 = vrot.slane %v390, 1
      %v578 = vsel %vm557, %v575, %v577
      %v579 = vrot.slane %v391, 1
      %v580 = vsel %vm557, %v577, %v579
      %v581 = vrot.slane %v392, 1
      %v582 = vsel %vm557, %v579, %v581
      %v583 = vrot.slane %v393, 1
      %v584 = vsel %vm557, %v581, %v583
      %v585 = vrot.slane %v394, 1
      %v586 = vsel %vm557, %v583, %v585
      %v587 = vrot.slane %v395, 1
      %v588 = vsel %vm557, %v585, %v587
      %v589 = vrot.slane %v396, 1
      %v590 = vsel %vm557, %v587, %v589
      %v591 = vrot.slane %v397, 1
      %v592 = vsel %vm557, %v589, %v591
      %v593 = vrot.slane %v556, 1
      %v594 = vsel %vm557, %v591, %v593
      %v595 = vld [vmem:[%s249] sm:$0xf]
      %v596 = vld [vmem:[%s249 + $0x4] sm:$0xf]
      %v597 = vld [vmem:[%s249 + $0x8] sm:$0xf]
      %v598 = vld [vmem:[%s249 + $0xc] sm:$0xf]
      %v599 = vld [vmem:[%s249 + $0x10] sm:$0xf]
      %v600 = vld [vmem:[%s249 + $0x14] sm:$0xf]
      %v601 = vld [vmem:[%s249 + $0x18] sm:$0xf]
      %v602 = vld [vmem:[%s249 + $0x1c] sm:$0xf]
      %v603 = vld [vmem:[%s249 + $0x20] sm:$0xf]
      %v604 = vld [vmem:[%s249 + $0x24] sm:$0xf]
      %v605 = vld [vmem:[%s249 + $0x28] sm:$0xf]
      %v606 = vld [vmem:[%s249 + $0x2c] sm:$0xf]
      %v607 = vld [vmem:[%s249 + $0x30] sm:$0xf]
      %v608 = vld [vmem:[%s249 + $0x34] sm:$0xf]
      %v609 = vld [vmem:[%s249 + $0x38] sm:$0xf]
      %v610 = vld [vmem:[%s249 + $0x3c] sm:$0xf]
      %v611 = vld [vmem:[%s249 + $0x40] sm:$0xf]
      %v612 = vld [vmem:[%s249 + $0x44] sm:$0xf]
      %v613 = vld [vmem:[%s249 + $0x48] sm:$0xf]
      %v614 = vld [vmem:[%s249 + $0x4c] sm:$0xf]
      %v615 = vld [vmem:[%s249 + $0x50] sm:$0xf]
      %v616 = vld [vmem:[%s249 + $0x54] sm:$0xf]
      %v617 = vld [vmem:[%s249 + $0x58] sm:$0xf]
      %v618 = vld [vmem:[%s249 + $0x5c] sm:$0xf]
      %v619 = vld [vmem:[%s249 + $0x60] sm:$0xf]
      %v620 = vld [vmem:[%s249 + $0x64] sm:$0xf]
      %v621 = vld [vmem:[%s249 + $0x68] sm:$0xf]
      %v622 = vld [vmem:[%s249 + $0x6c] sm:$0xf]
      %v623 = vld [vmem:[%s249 + $0x70] sm:$0xf]
      %v624 = vld [vmem:[%s249 + $0x74] sm:$0xf]
      %v625 = vld [vmem:[%s249 + $0x78] sm:$0xf]
      %v626 = vld [vmem:[%s249 + $0x7c] sm:$0xf]
      %v627 = vld [vmem:[%s249 + $0x80] sm:$0xf]
      %v628 = vld [vmem:[%s249 + $0x84] sm:$0xf]
      %v629 = vld [vmem:[%s249 + $0x88] sm:$0xf]
      %v630 = vld [vmem:[%s249 + $0x8c] sm:$0xf]
      %v631 = vld [vmem:[%s249 + $0x90] sm:$0xf]
      %v632 = vld [vmem:[%s249 + $0x94] sm:$0xf]
      %v633 = vld [vmem:[%s249 + $0x98] sm:$0xf]
      %v634 = vld [vmem:[%s249 + $0x9c] sm:$0xf]
      %v635 = vld [vmem:[%s249 + $0xa0] sm:$0xf]
      %v636 = vld [vmem:[%s249 + $0xa4] sm:$0xf]
      %v637 = vld [vmem:[%s249 + $0xa8] sm:$0xf]
      %v638 = vld [vmem:[%s249 + $0xac] sm:$0xf]
      %v639 = vld [vmem:[%s249 + $0xb0] sm:$0xf]
      %v640 = vld [vmem:[%s249 + $0xb4] sm:$0xf]
      %v641 = vld [vmem:[%s249 + $0xb8] sm:$0xf]
      %v642 = vld [vmem:[%s249 + $0xbc] sm:$0xf]
      %v643 = vld [vmem:[%s245 + $0xc] sm:$0x8]
      %v644 = vld [vmem:[%s245 + $0x98] sm:$0xf]
      %v645 = vld [vmem:[%s245 + $0x9c] sm:$0xf]
      %v646 = vld [vmem:[%s245 + $0xa0] sm:$0x1]
      %v650 = vunpack.c.l.b16 %v643
      %v651 = vunpack.c.l.b16 %v644
      %v652 = vunpack.c.l.b16 %v645
      %v653 = vpack.c.b16 %v346, %v650
      %v654 = vpack.c.b16 %v651, %v555
      %v655 = vpack.c.b16 %v652, %v652
      %v656 = vpack.c.b16 %v347, %v346
      %v657 = vpack.c.b16 %v349, %v348
      %v658 = vpack.c.b16 %v351, %v350
      %v659 = vpack.c.b16 %v353, %v352
      %v660 = vpack.c.b16 %v355, %v354
      %v661 = vpack.c.b16 %v357, %v356
      %v662 = vpack.c.b16 %v359, %v358
      %v663 = vpack.c.b16 %v361, %v360
      %v664 = vpack.c.b16 %v363, %v362
      %v665 = vpack.c.b16 %v365, %v364
      %v666 = vpack.c.b16 %v367, %v366
      %v667 = vpack.c.b16 %v369, %v368
      %v668 = vpack.c.b16 %v371, %v370
      %v669 = vpack.c.b16 %v373, %v372
      %v670 = vpack.c.b16 %v375, %v374
      %v671 = vpack.c.b16 %v377, %v376
      %v672 = vpack.c.b16 %v555, %v378
      %v673 = vpack.c.b16 %v652, %v651
      %vm674 = vsmask.f32 3328
      %v676 = vshrl.u32 %v656, 16
      %v678 = vrot.slane %v676, 4
      %v679 = vshll.u32 %v656, 16
      %v681 = vrot.slane %v679, 5
      %v682 = vor.u32 %v678, %v681
      %v684 = vshrl.u32 %v657, 16
      %v686 = vrot.slane %v684, 4
      %v687 = vshll.u32 %v657, 16
      %v689 = vrot.slane %v687, 5
      %v690 = vor.u32 %v686, %v689
      %v691 = vsel %vm674, %v682, %v690
      %v693 = vshrl.u32 %v658, 16
      %v695 = vrot.slane %v693, 4
      %v696 = vshll.u32 %v658, 16
      %v698 = vrot.slane %v696, 5
      %v699 = vor.u32 %v695, %v698
      %v700 = vsel %vm674, %v690, %v699
      %v702 = vshrl.u32 %v659, 16
      %v704 = vrot.slane %v702, 4
      %v705 = vshll.u32 %v659, 16
      %v707 = vrot.slane %v705, 5
      %v708 = vor.u32 %v704, %v707
      %v709 = vsel %vm674, %v699, %v708
      %v711 = vshrl.u32 %v660, 16
      %v713 = vrot.slane %v711, 4
      %v714 = vshll.u32 %v660, 16
      %v716 = vrot.slane %v714, 5
      %v717 = vor.u32 %v713, %v716
      %v718 = vsel %vm674, %v708, %v717
      %v720 = vshrl.u32 %v661, 16
      %v722 = vrot.slane %v720, 4
      %v723 = vshll.u32 %v661, 16
      %v725 = vrot.slane %v723, 5
      %v726 = vor.u32 %v722, %v725
      %v727 = vsel %vm674, %v717, %v726
      %v729 = vshrl.u32 %v662, 16
      %v731 = vrot.slane %v729, 4
      %v732 = vshll.u32 %v662, 16
      %v734 = vrot.slane %v732, 5
      %v735 = vor.u32 %v731, %v734
      %v736 = vsel %vm674, %v726, %v735
      %v738 = vshrl.u32 %v663, 16
      %v740 = vrot.slane %v738, 4
      %v741 = vshll.u32 %v663, 16
      %v743 = vrot.slane %v741, 5
      %v744 = vor.u32 %v740, %v743
      %v745 = vsel %vm674, %v735, %v744
      %v747 = vshrl.u32 %v664, 16
      %v749 = vrot.slane %v747, 4
      %v750 = vshll.u32 %v664, 16
      %v752 = vrot.slane %v750, 5
      %v753 = vor.u32 %v749, %v752
      %v754 = vsel %vm674, %v744, %v753
      %v756 = vshrl.u32 %v665, 16
      %v758 = vrot.slane %v756, 4
      %v759 = vshll.u32 %v665, 16
      %v761 = vrot.slane %v759, 5
      %v762 = vor.u32 %v758, %v761
      %v763 = vsel %vm674, %v753, %v762
      %v765 = vshrl.u32 %v666, 16
      %v767 = vrot.slane %v765, 4
      %v768 = vshll.u32 %v666, 16
      %v770 = vrot.slane %v768, 5
      %v771 = vor.u32 %v767, %v770
      %v772 = vsel %vm674, %v762, %v771
      %v774 = vshrl.u32 %v667, 16
      %v776 = vrot.slane %v774, 4
      %v777 = vshll.u32 %v667, 16
      %v779 = vrot.slane %v777, 5
      %v780 = vor.u32 %v776, %v779
      %v781 = vsel %vm674, %v771, %v780
      %v783 = vshrl.u32 %v668, 16
      %v785 = vrot.slane %v783, 4
      %v786 = vshll.u32 %v668, 16
      %v788 = vrot.slane %v786, 5
      %v789 = vor.u32 %v785, %v788
      %v790 = vsel %vm674, %v780, %v789
      %v792 = vshrl.u32 %v669, 16
      %v794 = vrot.slane %v792, 4
      %v795 = vshll.u32 %v669, 16
      %v797 = vrot.slane %v795, 5
      %v798 = vor.u32 %v794, %v797
      %v799 = vsel %vm674, %v789, %v798
      %v801 = vshrl.u32 %v670, 16
      %v803 = vrot.slane %v801, 4
      %v804 = vshll.u32 %v670, 16
      %v806 = vrot.slane %v804, 5
      %v807 = vor.u32 %v803, %v806
      %v808 = vsel %vm674, %v798, %v807
      %v810 = vshrl.u32 %v671, 16
      %v812 = vrot.slane %v810, 4
      %v813 = vshll.u32 %v671, 16
      %v815 = vrot.slane %v813, 5
      %v816 = vor.u32 %v812, %v815
      %v817 = vsel %vm674, %v807, %v816
      %v819 = vshrl.u32 %v672, 16
      %v821 = vrot.slane %v819, 4
      %v822 = vshll.u32 %v672, 16
      %v824 = vrot.slane %v822, 5
      %v825 = vor.u32 %v821, %v824
      %v826 = vsel %vm674, %v816, %v825
      %v828 = vshrl.u32 %v673, 16
      %v830 = vrot.slane %v828, 4
      %v831 = vshll.u32 %v673, 16
      %v833 = vrot.slane %v831, 5
      %v834 = vor.u32 %v830, %v833
      %v835 = vsel %vm674, %v825, %v834
      %v837 = vunpack.c.l.b16 %v646
      %v838 = vpack.c.b16 %v837, %v837
      %vm839 = vcmask 1042432
      %v840 = vrot.slane %v656, 5
      %v841 = vrot.slane %v657, 5
      %v842 = vsel %vm839, %v840, %v841
      %v843 = vrot.slane %v658, 5
      %v844 = vsel %vm839, %v841, %v843
      %v845 = vrot.slane %v659, 5
      %v846 = vsel %vm839, %v843, %v845
      %v847 = vrot.slane %v660, 5
      %v848 = vsel %vm839, %v845, %v847
      %v849 = vrot.slane %v661, 5
      %v850 = vsel %vm839, %v847, %v849
      %v851 = vrot.slane %v662, 5
      %v852 = vsel %vm839, %v849, %v851
      %v853 = vrot.slane %v663, 5
      %v854 = vsel %vm839, %v851, %v853
      %v855 = vrot.slane %v664, 5
      %v856 = vsel %vm839, %v853, %v855
      %v857 = vrot.slane %v665, 5
      %v858 = vsel %vm839, %v855, %v857
      %v859 = vrot.slane %v666, 5
      %v860 = vsel %vm839, %v857, %v859
      %v861 = vrot.slane %v667, 5
      %v862 = vsel %vm839, %v859, %v861
      %v863 = vrot.slane %v668, 5
      %v864 = vsel %vm839, %v861, %v863
      %v865 = vrot.slane %v669, 5
      %v866 = vsel %vm839, %v863, %v865
      %v867 = vrot.slane %v670, 5
      %v868 = vsel %vm839, %v865, %v867
      %v869 = vrot.slane %v671, 5
      %v870 = vsel %vm839, %v867, %v869
      %v871 = vrot.slane %v672, 5
      %v872 = vsel %vm839, %v869, %v871
      %v873 = vrot.slane %v673, 5
      %v874 = vsel %vm839, %v871, %v873
      %v875 = vrot.slane %v838, 5
      %v876 = vsel %vm839, %v873, %v875
      %s877 = scalar_lea.vmem %s249, 192
      %v878 = vld [vmem:[%s877] sm:$0xf]
      %v879 = vld [vmem:[%s877 + $0x4] sm:$0xf]
      %v880 = vld [vmem:[%s877 + $0x8] sm:$0xf]
      %v881 = vld [vmem:[%s877 + $0xc] sm:$0xf]
      %v882 = vld [vmem:[%s877 + $0x10] sm:$0xf]
      %v883 = vld [vmem:[%s877 + $0x14] sm:$0xf]
      %v884 = vld [vmem:[%s877 + $0x18] sm:$0xf]
      %v885 = vld [vmem:[%s877 + $0x1c] sm:$0xf]
      %v886 = vld [vmem:[%s877 + $0x20] sm:$0xf]
      %v887 = vld [vmem:[%s877 + $0x24] sm:$0xf]
      %v888 = vld [vmem:[%s877 + $0x28] sm:$0xf]
      %v889 = vld [vmem:[%s877 + $0x2c] sm:$0xf]
      %v890 = vld [vmem:[%s877 + $0x30] sm:$0xf]
      %v891 = vld [vmem:[%s877 + $0x34] sm:$0xf]
      %v892 = vld [vmem:[%s877 + $0x38] sm:$0xf]
      %v893 = vld [vmem:[%s877 + $0x3c] sm:$0xf]
      %v894 = vld [vmem:[%s877 + $0x40] sm:$0xf]
      %v895 = vld [vmem:[%s877 + $0x44] sm:$0xf]
      %v896 = vld [vmem:[%s877 + $0x48] sm:$0xf]
      %v897 = vld [vmem:[%s877 + $0x4c] sm:$0xf]
      %v898 = vld [vmem:[%s877 + $0x50] sm:$0xf]
      %v899 = vld [vmem:[%s877 + $0x54] sm:$0xf]
      %v900 = vld [vmem:[%s877 + $0x58] sm:$0xf]
      %v901 = vld [vmem:[%s877 + $0x5c] sm:$0xf]
      %v902 = vld [vmem:[%s877 + $0x60] sm:$0xf]
      %v903 = vld [vmem:[%s877 + $0x64] sm:$0xf]
      %v904 = vld [vmem:[%s877 + $0x68] sm:$0xf]
      %v905 = vld [vmem:[%s877 + $0x6c] sm:$0xf]
      %v906 = vld [vmem:[%s877 + $0x70] sm:$0xf]
      %v907 = vld [vmem:[%s877 + $0x74] sm:$0xf]
      %v908 = vld [vmem:[%s877 + $0x78] sm:$0xf]
      %v909 = vld [vmem:[%s877 + $0x7c] sm:$0xf]
      %v910 = vld [vmem:[%s877 + $0x80] sm:$0xf]
      %v911 = vld [vmem:[%s877 + $0x84] sm:$0xf]
      %v912 = vld [vmem:[%s877 + $0x88] sm:$0xf]
      %v913 = vld [vmem:[%s877 + $0x8c] sm:$0xf]
      %v914 = vld [vmem:[%s877 + $0x90] sm:$0xf]
      %v915 = vld [vmem:[%s877 + $0x94] sm:$0xf]
      %v916 = vld [vmem:[%s877 + $0x98] sm:$0xf]
      %v917 = vld [vmem:[%s877 + $0x9c] sm:$0xf]
      %v918 = vld [vmem:[%s877 + $0xa0] sm:$0xf]
      %v919 = vld [vmem:[%s877 + $0xa4] sm:$0xf]
      %v920 = vld [vmem:[%s877 + $0xa8] sm:$0xf]
      %v921 = vld [vmem:[%s877 + $0xac] sm:$0xf]
      %v922 = vld [vmem:[%s877 + $0xb0] sm:$0xf]
      %v923 = vld [vmem:[%s877 + $0xb4] sm:$0xf]
      %v924 = vld [vmem:[%s877 + $0xb8] sm:$0xf]
      %v925 = vld [vmem:[%s877 + $0xbc] sm:$0xf]
      %vm926 = vsmask.f32 4352
      %v928 = vshrl.u32 %v653, 16
      %v930 = vrot.slane %v928, 3
      %v931 = vshll.u32 %v653, 16
      %v933 = vrot.slane %v931, 4
      %v934 = vor.u32 %v930, %v933
      %v935 = vrot.slane %v423, 3
      %v936 = vrot.slane %v419, 4
      %v937 = vor.u32 %v935, %v936
      %v938 = vsel %vm926, %v934, %v937
      %v940 = vshrl.u32 %v682, 16
      %v942 = vrot.slane %v940, 3
      %v943 = vshll.u32 %v682, 16
      %v945 = vrot.slane %v943, 4
      %v946 = vor.u32 %v942, %v945
      %v948 = vshrl.u32 %v691, 16
      %v950 = vrot.slane %v948, 3
      %v951 = vshll.u32 %v691, 16
      %v953 = vrot.slane %v951, 4
      %v954 = vor.u32 %v950, %v953
      %v955 = vsel %vm926, %v946, %v954
      %v957 = vshrl.u32 %v840, 16
      %v959 = vrot.slane %v957, 3
      %v960 = vshll.u32 %v840, 16
      %v962 = vrot.slane %v960, 4
      %v963 = vor.u32 %v959, %v962
      %v965 = vshrl.u32 %v842, 16
      %v967 = vrot.slane %v965, 3
      %v968 = vshll.u32 %v842, 16
      %v970 = vrot.slane %v968, 4
      %v971 = vor.u32 %v967, %v970
      %v972 = vsel %vm926, %v963, %v971
      %v973 = vrot.slane %v431, 3
      %v974 = vrot.slane %v427, 4
      %v975 = vor.u32 %v973, %v974
      %v976 = vsel %vm926, %v937, %v975
      %v978 = vshrl.u32 %v700, 16
      %v980 = vrot.slane %v978, 3
      %v981 = vshll.u32 %v700, 16
      %v983 = vrot.slane %v981, 4
      %v984 = vor.u32 %v980, %v983
      %v985 = vsel %vm926, %v954, %v984
      %v987 = vshrl.u32 %v844, 16
      %v989 = vrot.slane %v987, 3
      %v990 = vshll.u32 %v844, 16
      %v992 = vrot.slane %v990, 4
      %v993 = vor.u32 %v989, %v992
      %v994 = vsel %vm926, %v971, %v993
      %v995 = vrot.slane %v439, 3
      %v996 = vrot.slane %v435, 4
      %v997 = vor.u32 %v995, %v996
      %v998 = vsel %vm926, %v975, %v997
      %v1000 = vshrl.u32 %v709, 16
      %v1002 = vrot.slane %v1000, 3
      %v1003 = vshll.u32 %v709, 16
      %v1005 = vrot.slane %v1003, 4
      %v1006 = vor.u32 %v1002, %v1005
      %v1007 = vsel %vm926, %v984, %v1006
      %v1009 = vshrl.u32 %v846, 16
      %v1011 = vrot.slane %v1009, 3
      %v1012 = vshll.u32 %v846, 16
      %v1014 = vrot.slane %v1012, 4
      %v1015 = vor.u32 %v1011, %v1014
      %v1016 = vsel %vm926, %v993, %v1015
      %v1017 = vrot.slane %v447, 3
      %v1018 = vrot.slane %v443, 4
      %v1019 = vor.u32 %v1017, %v1018
      %v1020 = vsel %vm926, %v997, %v1019
      %v1022 = vshrl.u32 %v718, 16
      %v1024 = vrot.slane %v1022, 3
      %v1025 = vshll.u32 %v718, 16
      %v1027 = vrot.slane %v1025, 4
      %v1028 = vor.u32 %v1024, %v1027
      %v1029 = vsel %vm926, %v1006, %v1028
      %v1031 = vshrl.u32 %v848, 16
      %v1033 = vrot.slane %v1031, 3
      %v1034 = vshll.u32 %v848, 16
      %v1036 = vrot.slane %v1034, 4
      %v1037 = vor.u32 %v1033, %v1036
      %v1038 = vsel %vm926, %v1015, %v1037
      %v1039 = vrot.slane %v455, 3
      %v1040 = vrot.slane %v451, 4
      %v1041 = vor.u32 %v1039, %v1040
      %v1042 = vsel %vm926, %v1019, %v1041
      %v1044 = vshrl.u32 %v727, 16
      %v1046 = vrot.slane %v1044, 3
      %v1047 = vshll.u32 %v727, 16
      %v1049 = vrot.slane %v1047, 4
      %v1050 = vor.u32 %v1046, %v1049
      %v1051 = vsel %vm926, %v1028, %v1050
      %v1053 = vshrl.u32 %v850, 16
      %v1055 = vrot.slane %v1053, 3
      %v1056 = vshll.u32 %v850, 16
      %v1058 = vrot.slane %v1056, 4
      %v1059 = vor.u32 %v1055, %v1058
      %v1060 = vsel %vm926, %v1037, %v1059
      %v1061 = vrot.slane %v463, 3
      %v1062 = vrot.slane %v459, 4
      %v1063 = vor.u32 %v1061, %v1062
      %v1064 = vsel %vm926, %v1041, %v1063
      %v1066 = vshrl.u32 %v736, 16
      %v1068 = vrot.slane %v1066, 3
      %v1069 = vshll.u32 %v736, 16
      %v1071 = vrot.slane %v1069, 4
      %v1072 = vor.u32 %v1068, %v1071
      %v1073 = vsel %vm926, %v1050, %v1072
      %v1075 = vshrl.u32 %v852, 16
      %v1077 = vrot.slane %v1075, 3
      %v1078 = vshll.u32 %v852, 16
      %v1080 = vrot.slane %v1078, 4
      %v1081 = vor.u32 %v1077, %v1080
      %v1082 = vsel %vm926, %v1059, %v1081
      %v1083 = vrot.slane %v471, 3
      %v1084 = vrot.slane %v467, 4
      %v1085 = vor.u32 %v1083, %v1084
      %v1086 = vsel %vm926, %v1063, %v1085
      %v1088 = vshrl.u32 %v745, 16
      %v1090 = vrot.slane %v1088, 3
      %v1091 = vshll.u32 %v745, 16
      %v1093 = vrot.slane %v1091, 4
      %v1094 = vor.u32 %v1090, %v1093
      %v1095 = vsel %vm926, %v1072, %v1094
      %v1097 = vshrl.u32 %v854, 16
      %v1099 = vrot.slane %v1097, 3
      %v1100 = vshll.u32 %v854, 16
      %v1102 = vrot.slane %v1100, 4
      %v1103 = vor.u32 %v1099, %v1102
      %v1104 = vsel %vm926, %v1081, %v1103
      %v1105 = vrot.slane %v479, 3
      %v1106 = vrot.slane %v475, 4
      %v1107 = vor.u32 %v1105, %v1106
      %v1108 = vsel %vm926, %v1085, %v1107
      %v1110 = vshrl.u32 %v754, 16
      %v1112 = vrot.slane %v1110, 3
      %v1113 = vshll.u32 %v754, 16
      %v1115 = vrot.slane %v1113, 4
      %v1116 = vor.u32 %v1112, %v1115
      %v1117 = vsel %vm926, %v1094, %v1116
      %v1119 = vshrl.u32 %v856, 16
      %v1121 = vrot.slane %v1119, 3
      %v1122 = vshll.u32 %v856, 16
      %v1124 = vrot.slane %v1122, 4
      %v1125 = vor.u32 %v1121, %v1124
      %v1126 = vsel %vm926, %v1103, %v1125
      %v1127 = vrot.slane %v487, 3
      %v1128 = vrot.slane %v483, 4
      %v1129 = vor.u32 %v1127, %v1128
      %v1130 = vsel %vm926, %v1107, %v1129
      %v1132 = vshrl.u32 %v763, 16
      %v1134 = vrot.slane %v1132, 3
      %v1135 = vshll.u32 %v763, 16
      %v1137 = vrot.slane %v1135, 4
      %v1138 = vor.u32 %v1134, %v1137
      %v1139 = vsel %vm926, %v1116, %v1138
      %v1141 = vshrl.u32 %v858, 16
      %v1143 = vrot.slane %v1141, 3
      %v1144 = vshll.u32 %v858, 16
      %v1146 = vrot.slane %v1144, 4
      %v1147 = vor.u32 %v1143, %v1146
      %v1148 = vsel %vm926, %v1125, %v1147
      %v1149 = vrot.slane %v495, 3
      %v1150 = vrot.slane %v491, 4
      %v1151 = vor.u32 %v1149, %v1150
      %v1152 = vsel %vm926, %v1129, %v1151
      %v1154 = vshrl.u32 %v772, 16
      %v1156 = vrot.slane %v1154, 3
      %v1157 = vshll.u32 %v772, 16
      %v1159 = vrot.slane %v1157, 4
      %v1160 = vor.u32 %v1156, %v1159
      %v1161 = vsel %vm926, %v1138, %v1160
      %v1163 = vshrl.u32 %v860, 16
      %v1165 = vrot.slane %v1163, 3
      %v1166 = vshll.u32 %v860, 16
      %v1168 = vrot.slane %v1166, 4
      %v1169 = vor.u32 %v1165, %v1168
      %v1170 = vsel %vm926, %v1147, %v1169
      %v1171 = vrot.slane %v503, 3
      %v1172 = vrot.slane %v499, 4
      %v1173 = vor.u32 %v1171, %v1172
      %v1174 = vsel %vm926, %v1151, %v1173
      %v1176 = vshrl.u32 %v781, 16
      %v1178 = vrot.slane %v1176, 3
      %v1179 = vshll.u32 %v781, 16
      %v1181 = vrot.slane %v1179, 4
      %v1182 = vor.u32 %v1178, %v1181
      %v1183 = vsel %vm926, %v1160, %v1182
      %v1185 = vshrl.u32 %v862, 16
      %v1187 = vrot.slane %v1185, 3
      %v1188 = vshll.u32 %v862, 16
      %v1190 = vrot.slane %v1188, 4
      %v1191 = vor.u32 %v1187, %v1190
      %v1192 = vsel %vm926, %v1169, %v1191
      %v1193 = vrot.slane %v511, 3
      %v1194 = vrot.slane %v507, 4
      %v1195 = vor.u32 %v1193, %v1194
      %v1196 = vsel %vm926, %v1173, %v1195
      %v1198 = vshrl.u32 %v790, 16
      %v1200 = vrot.slane %v1198, 3
      %v1201 = vshll.u32 %v790, 16
      %v1203 = vrot.slane %v1201, 4
      %v1204 = vor.u32 %v1200, %v1203
      %v1205 = vsel %vm926, %v1182, %v1204
      %v1207 = vshrl.u32 %v864, 16
      %v1209 = vrot.slane %v1207, 3
      %v1210 = vshll.u32 %v864, 16
      %v1212 = vrot.slane %v1210, 4
      %v1213 = vor.u32 %v1209, %v1212
      %v1214 = vsel %vm926, %v1191, %v1213
      %v1215 = vrot.slane %v519, 3
      %v1216 = vrot.slane %v515, 4
      %v1217 = vor.u32 %v1215, %v1216
      %v1218 = vsel %vm926, %v1195, %v1217
      %v1220 = vshrl.u32 %v799, 16
      %v1222 = vrot.slane %v1220, 3
      %v1223 = vshll.u32 %v799, 16
      %v1225 = vrot.slane %v1223, 4
      %v1226 = vor.u32 %v1222, %v1225
      %v1227 = vsel %vm926, %v1204, %v1226
      %v1229 = vshrl.u32 %v866, 16
      %v1231 = vrot.slane %v1229, 3
      %v1232 = vshll.u32 %v866, 16
      %v1234 = vrot.slane %v1232, 4
      %v1235 = vor.u32 %v1231, %v1234
      %v1236 = vsel %vm926, %v1213, %v1235
      %v1237 = vrot.slane %v527, 3
      %v1238 = vrot.slane %v523, 4
      %v1239 = vor.u32 %v1237, %v1238
      %v1240 = vsel %vm926, %v1217, %v1239
      %v1242 = vshrl.u32 %v808, 16
      %v1244 = vrot.slane %v1242, 3
      %v1245 = vshll.u32 %v808, 16
      %v1247 = vrot.slane %v1245, 4
      %v1248 = vor.u32 %v1244, %v1247
      %v1249 = vsel %vm926, %v1226, %v1248
      %v1251 = vshrl.u32 %v868, 16
      %v1253 = vrot.slane %v1251, 3
      %v1254 = vshll.u32 %v868, 16
      %v1256 = vrot.slane %v1254, 4
      %v1257 = vor.u32 %v1253, %v1256
      %v1258 = vsel %vm926, %v1235, %v1257
      %v1259 = vrot.slane %v535, 3
      %v1260 = vrot.slane %v531, 4
      %v1261 = vor.u32 %v1259, %v1260
      %v1262 = vsel %vm926, %v1239, %v1261
      %v1264 = vshrl.u32 %v817, 16
      %v1266 = vrot.slane %v1264, 3
      %v1267 = vshll.u32 %v817, 16
      %v1269 = vrot.slane %v1267, 4
      %v1270 = vor.u32 %v1266, %v1269
      %v1271 = vsel %vm926, %v1248, %v1270
      %v1273 = vshrl.u32 %v870, 16
      %v1275 = vrot.slane %v1273, 3
      %v1276 = vshll.u32 %v870, 16
      %v1278 = vrot.slane %v1276, 4
      %v1279 = vor.u32 %v1275, %v1278
      %v1280 = vsel %vm926, %v1257, %v1279
      %v1281 = vrot.slane %v543, 3
      %v1282 = vrot.slane %v539, 4
      %v1283 = vor.u32 %v1281, %v1282
      %v1284 = vsel %vm926, %v1261, %v1283
      %v1286 = vshrl.u32 %v826, 16
      %v1288 = vrot.slane %v1286, 3
      %v1289 = vshll.u32 %v826, 16
      %v1291 = vrot.slane %v1289, 4
      %v1292 = vor.u32 %v1288, %v1291
      %v1293 = vsel %vm926, %v1270, %v1292
      %v1295 = vshrl.u32 %v872, 16
      %v1297 = vrot.slane %v1295, 3
      %v1298 = vshll.u32 %v872, 16
      %v1300 = vrot.slane %v1298, 4
      %v1301 = vor.u32 %v1297, %v1300
      %v1302 = vsel %vm926, %v1279, %v1301
      %v1304 = vshrl.u32 %v654, 16
      %v1306 = vrot.slane %v1304, 3
      %v1307 = vshll.u32 %v654, 16
      %v1309 = vrot.slane %v1307, 4
      %v1310 = vor.u32 %v1306, %v1309
      %v1311 = vsel %vm926, %v1283, %v1310
      %v1313 = vshrl.u32 %v835, 16
      %v1315 = vrot.slane %v1313, 3
      %v1316 = vshll.u32 %v835, 16
      %v1318 = vrot.slane %v1316, 4
      %v1319 = vor.u32 %v1315, %v1318
      %v1320 = vsel %vm926, %v1292, %v1319
      %v1322 = vshrl.u32 %v874, 16
      %v1324 = vrot.slane %v1322, 3
      %v1325 = vshll.u32 %v874, 16
      %v1327 = vrot.slane %v1325, 4
      %v1328 = vor.u32 %v1324, %v1327
      %v1329 = vsel %vm926, %v1301, %v1328
      %v1331 = vshrl.u32 %v655, 16
      %v1333 = vrot.slane %v1331, 3
      %v1334 = vshll.u32 %v655, 16
      %v1336 = vrot.slane %v1334, 4
      %v1337 = vor.u32 %v1333, %v1336
      %v1338 = vsel %vm926, %v1310, %v1337
      %v1340 = vshrl.u32 %v834, 16
      %v1342 = vrot.slane %v1340, 3
      %v1343 = vshll.u32 %v834, 16
      %v1345 = vrot.slane %v1343, 4
      %v1346 = vor.u32 %v1342, %v1345
      %v1347 = vsel %vm926, %v1319, %v1346
      %v1349 = vshrl.u32 %v876, 16
      %v1351 = vrot.slane %v1349, 3
      %v1352 = vshll.u32 %v876, 16
      %v1354 = vrot.slane %v1352, 4
      %v1355 = vor.u32 %v1351, %v1354
      %v1356 = vsel %vm926, %v1328, %v1355
      %v1459 = vunpack.c.l.b16 %v878
      %v1460 = vunpack.c.l.b16 %v879
      %v1461 = vunpack.c.l.b16 %v880
      %v1462 = vunpack.c.l.b16 %v881
      %v1463 = vunpack.c.l.b16 %v882
      %v1464 = vunpack.c.l.b16 %v883
      %v1465 = vunpack.c.l.b16 %v884
      %v1466 = vunpack.c.l.b16 %v885
      %v1467 = vunpack.c.l.b16 %v886
      %v1468 = vunpack.c.l.b16 %v887
      %v1469 = vunpack.c.l.b16 %v888
      %v1470 = vunpack.c.l.b16 %v889
      %v1471 = vunpack.c.l.b16 %v890
      %v1472 = vunpack.c.l.b16 %v891
      %v1473 = vunpack.c.l.b16 %v892
      %v1474 = vunpack.c.l.b16 %v893
      %v1475 = vunpack.c.l.b16 %v894
      %v1476 = vunpack.c.l.b16 %v895
      %v1477 = vunpack.c.l.b16 %v896
      %v1478 = vunpack.c.l.b16 %v897
      %v1479 = vunpack.c.l.b16 %v898
      %v1480 = vunpack.c.l.b16 %v899
      %v1481 = vunpack.c.l.b16 %v900
      %v1482 = vunpack.c.l.b16 %v901
      %v1483 = vunpack.c.l.b16 %v902
      %v1484 = vunpack.c.l.b16 %v903
      %v1485 = vunpack.c.l.b16 %v904
      %v1486 = vunpack.c.l.b16 %v905
      %v1487 = vunpack.c.l.b16 %v906
      %v1488 = vunpack.c.l.b16 %v907
      %v1489 = vunpack.c.l.b16 %v908
      %v1490 = vunpack.c.l.b16 %v909
      %v1491 = vunpack.c.l.b16 %v910
      %v1492 = vunpack.c.l.b16 %v911
      %v1493 = vunpack.c.l.b16 %v912
      %v1494 = vunpack.c.l.b16 %v913
      %v1495 = vunpack.c.l.b16 %v914
      %v1496 = vunpack.c.l.b16 %v915
      %v1497 = vunpack.c.l.b16 %v916
      %v1498 = vunpack.c.l.b16 %v917
      %v1499 = vunpack.c.l.b16 %v918
      %v1500 = vunpack.c.l.b16 %v919
      %v1501 = vunpack.c.l.b16 %v920
      %v1502 = vunpack.c.l.b16 %v921
      %v1503 = vunpack.c.l.b16 %v922
      %v1504 = vunpack.c.l.b16 %v923
      %v1505 = vunpack.c.l.b16 %v924
      %v1506 = vunpack.c.l.b16 %v925
      %v1507 = vpack.c.b16 %v1460, %v1459
      %v1508 = vpack.c.b16 %v1462, %v1461
      %v1509 = vpack.c.b16 %v1464, %v1463
      %v1510 = vpack.c.b16 %v1466, %v1465
      %v1511 = vpack.c.b16 %v1468, %v1467
      %v1512 = vpack.c.b16 %v1470, %v1469
      %v1513 = vpack.c.b16 %v1472, %v1471
      %v1514 = vpack.c.b16 %v1474, %v1473
      %v1515 = vpack.c.b16 %v1476, %v1475
      %v1516 = vpack.c.b16 %v1478, %v1477
      %v1517 = vpack.c.b16 %v1480, %v1479
      %v1518 = vpack.c.b16 %v1482, %v1481
      %v1519 = vpack.c.b16 %v1484, %v1483
      %v1520 = vpack.c.b16 %v1486, %v1485
      %v1521 = vpack.c.b16 %v1488, %v1487
      %v1522 = vpack.c.b16 %v1490, %v1489
      %v1523 = vpack.c.b16 %v1492, %v1491
      %v1524 = vpack.c.b16 %v1494, %v1493
      %v1525 = vpack.c.b16 %v1496, %v1495
      %v1526 = vpack.c.b16 %v1498, %v1497
      %v1527 = vpack.c.b16 %v1500, %v1499
      %v1528 = vpack.c.b16 %v1502, %v1501
      %v1529 = vpack.c.b16 %v1504, %v1503
      %v1530 = vpack.c.b16 %v1506, %v1505
      %1555 = vmatprep.subr.bf16.mxu0 0
      %1556 = vmatpush1.bf16.msra.mxu0 %v1514
      %1557 = vmatprep.subr.bf16.mxu0 0
      %1558 = vmatpush1.bf16.msra.mxu0 %v1513
      %1559 = vmatprep.subr.bf16.mxu0 0
      %1560 = vmatpush1.bf16.msra.mxu0 %v1512
      %1561 = vmatprep.subr.bf16.mxu0 0
      %1562 = vmatpush1.bf16.msra.mxu0 %v1511
      %1563 = vmatprep.subr.bf16.mxu0 0
      %1564 = vmatpush1.bf16.msra.mxu0 %v1510
      %1565 = vmatprep.subr.bf16.mxu0 0
      %1566 = vmatpush1.bf16.msra.mxu0 %v1509
      %1567 = vmatprep.subr.bf16.mxu0 0
      %1568 = vmatpush1.bf16.msra.mxu0 %v1508
      %1569 = vmatprep.subr.bf16.mxu0 0
      %1570 = vmatpush1.bf16.msra.mxu0 %v1507
      %1571 = vmatprep.subr.bf16.mxu0 0
      %1572 = vmatpush2.bf16.msra.mxu0 %v1522
      %1573 = vmatprep.subr.bf16.mxu0 0
      %1574 = vmatpush2.bf16.msra.mxu0 %v1521
      %1575 = vmatprep.subr.bf16.mxu0 0
      %1576 = vmatpush2.bf16.msra.mxu0 %v1520
      %1577 = vmatprep.subr.bf16.mxu0 0
      %1578 = vmatpush2.bf16.msra.mxu0 %v1519
      %1579 = vmatprep.subr.bf16.mxu0 0
      %1580 = vmatpush2.bf16.msra.mxu0 %v1518
      %1581 = vmatprep.subr.bf16.mxu0 0
      %1582 = vmatpush2.bf16.msra.mxu0 %v1517
      %1583 = vmatprep.subr.bf16.mxu0 0
      %1584 = vmatpush2.bf16.msra.mxu0 %v1516
      %1585 = vmatprep.subr.bf16.mxu0 0
      %1586 = vmatpush2.bf16.msra.mxu0 %v1515
      %1587 = vmatprep.mubr.bf16.mxu0 %v955
      %1588 = vmatmul.mubr.bf16.gmra.mxu0 %v938
      %v1589 = vpop.f32.mrf.mxu0
      %v1590 = vadd.f32 0.0, %v1589
      %v1591 = vpop.f32.mrf.mxu0
      %v1592 = vpop.f32.mrf.mxu0
      %v1593 = vadd.f32 0.0, %v1592
      %v1594 = vpop.f32.mrf.mxu0
      %1595 = vmatprep.mubr.bf16.mxu0 %v985
      %1596 = vmatmul.mubr.bf16.gmra.mxu0 %v976
      %v1597 = vpop.f32.mrf.mxu0
      %v1598 = vadd.f32 0.0, %v1597
      %v1599 = vpop.f32.mrf.mxu0
      %v1600 = vpop.f32.mrf.mxu0
      %v1601 = vadd.f32 0.0, %v1600
      %v1602 = vpop.f32.mrf.mxu0
      %1603 = vmatprep.mubr.bf16.mxu0 %v1007
      %1604 = vmatmul.mubr.bf16.gmra.mxu0 %v998
      %v1605 = vpop.f32.mrf.mxu0
      %v1606 = vadd.f32 0.0, %v1605
      %v1607 = vpop.f32.mrf.mxu0
      %v1608 = vpop.f32.mrf.mxu0
      %v1609 = vadd.f32 0.0, %v1608
      %v1610 = vpop.f32.mrf.mxu0
      %1611 = vmatprep.mubr.bf16.mxu0 %v1029
      %1612 = vmatmul.mubr.bf16.gmra.mxu0 %v1020
      %v1613 = vpop.f32.mrf.mxu0
      %v1614 = vadd.f32 0.0, %v1613
      %v1615 = vpop.f32.mrf.mxu0
      %v1616 = vpop.f32.mrf.mxu0
      %v1617 = vadd.f32 0.0, %v1616
      %v1618 = vpop.f32.mrf.mxu0
      %1619 = vmatprep.mubr.bf16.mxu0 %v1051
      %1620 = vmatmul.mubr.bf16.gmra.mxu0 %v1042
      %v1621 = vpop.f32.mrf.mxu0
      %v1622 = vadd.f32 0.0, %v1621
      %v1623 = vpop.f32.mrf.mxu0
      %v1624 = vpop.f32.mrf.mxu0
      %v1625 = vadd.f32 0.0, %v1624
      %v1626 = vpop.f32.mrf.mxu0
      %1627 = vmatprep.mubr.bf16.mxu0 %v1073
      %1628 = vmatmul.mubr.bf16.gmra.mxu0 %v1064
      %v1629 = vpop.f32.mrf.mxu0
      %v1630 = vadd.f32 0.0, %v1629
      %v1631 = vpop.f32.mrf.mxu0
      %v1632 = vpop.f32.mrf.mxu0
      %v1633 = vadd.f32 0.0, %v1632
      %v1634 = vpop.f32.mrf.mxu0
      %1635 = vmatprep.mubr.bf16.mxu0 %v1095
      %1636 = vmatmul.mubr.bf16.gmra.mxu0 %v1086
      %v1637 = vpop.f32.mrf.mxu0
      %v1638 = vadd.f32 0.0, %v1637
      %v1639 = vpop.f32.mrf.mxu0
      %v1640 = vpop.f32.mrf.mxu0
      %v1641 = vadd.f32 0.0, %v1640
      %v1642 = vpop.f32.mrf.mxu0
      %1643 = vmatprep.mubr.bf16.mxu0 %v1117
      %1644 = vmatmul.mubr.bf16.gmra.mxu0 %v1108
      %v1645 = vpop.f32.mrf.mxu0
      %v1646 = vadd.f32 0.0, %v1645
      %v1647 = vpop.f32.mrf.mxu0
      %v1648 = vpop.f32.mrf.mxu0
      %v1649 = vadd.f32 0.0, %v1648
      %v1650 = vpop.f32.mrf.mxu0
      %1651 = vmatprep.mubr.bf16.mxu0 %v1139
      %1652 = vmatmul.mubr.bf16.gmra.mxu0 %v1130
      %v1653 = vpop.f32.mrf.mxu0
      %v1654 = vadd.f32 0.0, %v1653
      %v1655 = vpop.f32.mrf.mxu0
      %v1656 = vpop.f32.mrf.mxu0
      %v1657 = vadd.f32 0.0, %v1656
      %v1658 = vpop.f32.mrf.mxu0
      %1659 = vmatprep.mubr.bf16.mxu0 %v1161
      %1660 = vmatmul.mubr.bf16.gmra.mxu0 %v1152
      %v1661 = vpop.f32.mrf.mxu0
      %v1662 = vadd.f32 0.0, %v1661
      %v1663 = vpop.f32.mrf.mxu0
      %v1664 = vpop.f32.mrf.mxu0
      %v1665 = vadd.f32 0.0, %v1664
      %v1666 = vpop.f32.mrf.mxu0
      %1667 = vmatprep.mubr.bf16.mxu0 %v1183
      %1668 = vmatmul.mubr.bf16.gmra.mxu0 %v1174
      %v1669 = vpop.f32.mrf.mxu0
      %v1670 = vadd.f32 0.0, %v1669
      %v1671 = vpop.f32.mrf.mxu0
      %v1672 = vpop.f32.mrf.mxu0
      %v1673 = vadd.f32 0.0, %v1672
      %v1674 = vpop.f32.mrf.mxu0
      %1675 = vmatprep.mubr.bf16.mxu0 %v1205
      %1676 = vmatmul.mubr.bf16.gmra.mxu0 %v1196
      %v1677 = vpop.f32.mrf.mxu0
      %v1678 = vadd.f32 0.0, %v1677
      %v1679 = vpop.f32.mrf.mxu0
      %v1680 = vpop.f32.mrf.mxu0
      %v1681 = vadd.f32 0.0, %v1680
      %v1682 = vpop.f32.mrf.mxu0
      %1683 = vmatprep.mubr.bf16.mxu0 %v1227
      %1684 = vmatmul.mubr.bf16.gmra.mxu0 %v1218
      %v1685 = vpop.f32.mrf.mxu0
      %v1686 = vadd.f32 0.0, %v1685
      %v1687 = vpop.f32.mrf.mxu0
      %v1688 = vpop.f32.mrf.mxu0
      %v1689 = vadd.f32 0.0, %v1688
      %v1690 = vpop.f32.mrf.mxu0
      %1691 = vmatprep.mubr.bf16.mxu0 %v1249
      %1692 = vmatmul.mubr.bf16.gmra.mxu0 %v1240
      %v1693 = vpop.f32.mrf.mxu0
      %v1694 = vadd.f32 0.0, %v1693
      %v1695 = vpop.f32.mrf.mxu0
      %v1696 = vpop.f32.mrf.mxu0
      %v1697 = vadd.f32 0.0, %v1696
      %v1698 = vpop.f32.mrf.mxu0
      %1699 = vmatprep.mubr.bf16.mxu0 %v1271
      %1700 = vmatmul.mubr.bf16.gmra.mxu0 %v1262
      %v1701 = vpop.f32.mrf.mxu0
      %v1702 = vadd.f32 0.0, %v1701
      %v1703 = vpop.f32.mrf.mxu0
      %v1704 = vpop.f32.mrf.mxu0
      %v1705 = vadd.f32 0.0, %v1704
      %v1706 = vpop.f32.mrf.mxu0
      %1707 = vmatprep.mubr.bf16.mxu0 %v1293
      %1708 = vmatmul.mubr.bf16.gmra.mxu0 %v1284
      %v1709 = vpop.f32.mrf.mxu0
      %v1710 = vadd.f32 0.0, %v1709
      %v1711 = vpop.f32.mrf.mxu0
      %v1712 = vpop.f32.mrf.mxu0
      %v1713 = vadd.f32 0.0, %v1712
      %v1714 = vpop.f32.mrf.mxu0
      %1715 = vmatprep.mubr.bf16.mxu0 %v1320
      %1716 = vmatmul.mubr.bf16.gmra.mxu0 %v1311
      %v1717 = vpop.f32.mrf.mxu0
      %v1718 = vadd.f32 0.0, %v1717
      %v1719 = vpop.f32.mrf.mxu0
      %v1720 = vpop.f32.mrf.mxu0
      %v1721 = vadd.f32 0.0, %v1720
      %v1722 = vpop.f32.mrf.mxu0
      %1723 = vmatprep.mubr.bf16.mxu0 %v1347
      %1724 = vmatmul.mubr.bf16.gmra.mxu0 %v1338
      %v1725 = vpop.f32.mrf.mxu0
      %v1726 = vadd.f32 0.0, %v1725
      %v1727 = vpop.f32.mrf.mxu0
      %v1728 = vpop.f32.mrf.mxu0
      %v1729 = vadd.f32 0.0, %v1728
      %v1730 = vpop.f32.mrf.mxu0
      %1731 = vdwg.mxu0
      %1732 = vmatprep.subr.bf16.mxu0 0
      %1733 = vmatpush1.bf16.msra.mxu0 %v1530
      %1734 = vmatprep.subr.bf16.mxu0 0
      %1735 = vmatpush1.bf16.msra.mxu0 %v1529
      %1736 = vmatprep.subr.bf16.mxu0 0
      %1737 = vmatpush1.bf16.msra.mxu0 %v1528
      %1738 = vmatprep.subr.bf16.mxu0 0
      %1739 = vmatpush1.bf16.msra.mxu0 %v1527
      %1740 = vmatprep.subr.bf16.mxu0 0
      %1741 = vmatpush1.bf16.msra.mxu0 %v1526
      %1742 = vmatprep.subr.bf16.mxu0 0
      %1743 = vmatpush1.bf16.msra.mxu0 %v1525
      %1744 = vmatprep.subr.bf16.mxu0 0
      %1745 = vmatpush1.bf16.msra.mxu0 %v1524
      %1746 = vmatprep.subr.bf16.mxu0 0
      %1747 = vmatpush1.bf16.msra.mxu0 %v1523
      %1748 = vmatprep.subr.bf16.mxu0 0
      %1749 = vmatpush2.bf16.msra.mxu0 0
      %1750 = vmatprep.subr.bf16.mxu0 0
      %1751 = vmatpush2.bf16.msra.mxu0 0
      %1752 = vmatprep.subr.bf16.mxu0 0
      %1753 = vmatpush2.bf16.msra.mxu0 0
      %1754 = vmatprep.subr.bf16.mxu0 0
      %1755 = vmatpush2.bf16.msra.mxu0 0
      %1756 = vmatprep.subr.bf16.mxu0 0
      %1757 = vmatpush2.bf16.msra.mxu0 0
      %1758 = vmatprep.subr.bf16.mxu0 0
      %1759 = vmatpush2.bf16.msra.mxu0 0
      %1760 = vmatprep.subr.bf16.mxu0 0
      %1761 = vmatpush2.bf16.msra.mxu0 0
      %1762 = vmatprep.subr.bf16.mxu0 0
      %1763 = vmatpush2.bf16.msra.mxu0 0
      %1764 = vmatprep.mubr.bf16.mxu0 0
      %1765 = vmatmul.mubr.bf16.gmra.mxu0 %v972
      %v1766 = vpop.f32.mrf.mxu0
      %v1767 = vadd.f32 %v1590, %v1766
      %v1768 = vpop.f32.mrf.mxu0
      %v1769 = vpop.f32.mrf.mxu0
      %v1770 = vadd.f32 %v1593, %v1769
      %v1771 = vpop.f32.mrf.mxu0
      %1772 = vmatprep.mubr.bf16.mxu0 0
      %1773 = vmatmul.mubr.bf16.gmra.mxu0 %v994
      %v1774 = vpop.f32.mrf.mxu0
      %v1775 = vadd.f32 %v1598, %v1774
      %v1776 = vpop.f32.mrf.mxu0
      %v1777 = vpop.f32.mrf.mxu0
      %v1778 = vadd.f32 %v1601, %v1777
      %v1779 = vpop.f32.mrf.mxu0
      %1780 = vmatprep.mubr.bf16.mxu0 0
      %1781 = vmatmul.mubr.bf16.gmra.mxu0 %v1016
      %v1782 = vpop.f32.mrf.mxu0
      %v1783 = vadd.f32 %v1606, %v1782
      %v1784 = vpop.f32.mrf.mxu0
      %v1785 = vpop.f32.mrf.mxu0
      %v1786 = vadd.f32 %v1609, %v1785
      %v1787 = vpop.f32.mrf.mxu0
      %1788 = vmatprep.mubr.bf16.mxu0 0
      %1789 = vmatmul.mubr.bf16.gmra.mxu0 %v1038
      %v1790 = vpop.f32.mrf.mxu0
      %v1791 = vadd.f32 %v1614, %v1790
      %v1792 = vpop.f32.mrf.mxu0
      %v1793 = vpop.f32.mrf.mxu0
      %v1794 = vadd.f32 %v1617, %v1793
      %v1795 = vpop.f32.mrf.mxu0
      %1796 = vmatprep.mubr.bf16.mxu0 0
      %1797 = vmatmul.mubr.bf16.gmra.mxu0 %v1060
      %v1798 = vpop.f32.mrf.mxu0
      %v1799 = vadd.f32 %v1622, %v1798
      %v1800 = vpop.f32.mrf.mxu0
      %v1801 = vpop.f32.mrf.mxu0
      %v1802 = vadd.f32 %v1625, %v1801
      %v1803 = vpop.f32.mrf.mxu0
      %1804 = vmatprep.mubr.bf16.mxu0 0
      %1805 = vmatmul.mubr.bf16.gmra.mxu0 %v1082
      %v1806 = vpop.f32.mrf.mxu0
      %v1807 = vadd.f32 %v1630, %v1806
      %v1808 = vpop.f32.mrf.mxu0
      %v1809 = vpop.f32.mrf.mxu0
      %v1810 = vadd.f32 %v1633, %v1809
      %v1811 = vpop.f32.mrf.mxu0
      %1812 = vmatprep.mubr.bf16.mxu0 0
      %1813 = vmatmul.mubr.bf16.gmra.mxu0 %v1104
      %v1814 = vpop.f32.mrf.mxu0
      %v1815 = vadd.f32 %v1638, %v1814
      %v1816 = vpop.f32.mrf.mxu0
      %v1817 = vpop.f32.mrf.mxu0
      %v1818 = vadd.f32 %v1641, %v1817
      %v1819 = vpop.f32.mrf.mxu0
      %1820 = vmatprep.mubr.bf16.mxu0 0
      %1821 = vmatmul.mubr.bf16.gmra.mxu0 %v1126
      %v1822 = vpop.f32.mrf.mxu0
      %v1823 = vadd.f32 %v1646, %v1822
      %v1824 = vpop.f32.mrf.mxu0
      %v1825 = vpop.f32.mrf.mxu0
      %v1826 = vadd.f32 %v1649, %v1825
      %v1827 = vpop.f32.mrf.mxu0
      %1828 = vmatprep.mubr.bf16.mxu0 0
      %1829 = vmatmul.mubr.bf16.gmra.mxu0 %v1148
      %v1830 = vpop.f32.mrf.mxu0
      %v1831 = vadd.f32 %v1654, %v1830
      %v1832 = vpop.f32.mrf.mxu0
      %v1833 = vpop.f32.mrf.mxu0
      %v1834 = vadd.f32 %v1657, %v1833
      %v1835 = vpop.f32.mrf.mxu0
      %1836 = vmatprep.mubr.bf16.mxu0 0
      %1837 = vmatmul.mubr.bf16.gmra.mxu0 %v1170
      %v1838 = vpop.f32.mrf.mxu0
      %v1839 = vadd.f32 %v1662, %v1838
      %v1840 = vpop.f32.mrf.mxu0
      %v1841 = vpop.f32.mrf.mxu0
      %v1842 = vadd.f32 %v1665, %v1841
      %v1843 = vpop.f32.mrf.mxu0
      %1844 = vmatprep.mubr.bf16.mxu0 0
      %1845 = vmatmul.mubr.bf16.gmra.mxu0 %v1192
      %v1846 = vpop.f32.mrf.mxu0
      %v1847 = vadd.f32 %v1670, %v1846
      %v1848 = vpop.f32.mrf.mxu0
      %v1849 = vpop.f32.mrf.mxu0
      %v1850 = vadd.f32 %v1673, %v1849
      %v1851 = vpop.f32.mrf.mxu0
      %1852 = vmatprep.mubr.bf16.mxu0 0
      %1853 = vmatmul.mubr.bf16.gmra.mxu0 %v1214
      %v1854 = vpop.f32.mrf.mxu0
      %v1855 = vadd.f32 %v1678, %v1854
      %v1856 = vpop.f32.mrf.mxu0
      %v1857 = vpop.f32.mrf.mxu0
      %v1858 = vadd.f32 %v1681, %v1857
      %v1859 = vpop.f32.mrf.mxu0
      %1860 = vmatprep.mubr.bf16.mxu0 0
      %1861 = vmatmul.mubr.bf16.gmra.mxu0 %v1236
      %v1862 = vpop.f32.mrf.mxu0
      %v1863 = vadd.f32 %v1686, %v1862
      %v1864 = vpop.f32.mrf.mxu0
      %v1865 = vpop.f32.mrf.mxu0
      %v1866 = vadd.f32 %v1689, %v1865
      %v1867 = vpop.f32.mrf.mxu0
      %1868 = vmatprep.mubr.bf16.mxu0 0
      %1869 = vmatmul.mubr.bf16.gmra.mxu0 %v1258
      %v1870 = vpop.f32.mrf.mxu0
      %v1871 = vadd.f32 %v1694, %v1870
      %v1872 = vpop.f32.mrf.mxu0
      %v1873 = vpop.f32.mrf.mxu0
      %v1874 = vadd.f32 %v1697, %v1873
      %v1875 = vpop.f32.mrf.mxu0
      %1876 = vmatprep.mubr.bf16.mxu0 0
      %1877 = vmatmul.mubr.bf16.gmra.mxu0 %v1280
      %v1878 = vpop.f32.mrf.mxu0
      %v1879 = vadd.f32 %v1702, %v1878
      %v1880 = vpop.f32.mrf.mxu0
      %v1881 = vpop.f32.mrf.mxu0
      %v1882 = vadd.f32 %v1705, %v1881
      %v1883 = vpop.f32.mrf.mxu0
      %1884 = vmatprep.mubr.bf16.mxu0 0
      %1885 = vmatmul.mubr.bf16.gmra.mxu0 %v1302
      %v1886 = vpop.f32.mrf.mxu0
      %v1887 = vadd.f32 %v1710, %v1886
      %v1888 = vpop.f32.mrf.mxu0
      %v1889 = vpop.f32.mrf.mxu0
      %v1890 = vadd.f32 %v1713, %v1889
      %v1891 = vpop.f32.mrf.mxu0
      %1892 = vmatprep.mubr.bf16.mxu0 0
      %1893 = vmatmul.mubr.bf16.gmra.mxu0 %v1329
      %v1894 = vpop.f32.mrf.mxu0
      %v1895 = vadd.f32 %v1718, %v1894
      %v1896 = vpop.f32.mrf.mxu0
      %v1897 = vpop.f32.mrf.mxu0
      %v1898 = vadd.f32 %v1721, %v1897
      %v1899 = vpop.f32.mrf.mxu0
      %1900 = vmatprep.mubr.bf16.mxu0 0
      %1901 = vmatmul.mubr.bf16.gmra.mxu0 %v1356
      %v1902 = vpop.f32.mrf.mxu0
      %v1903 = vadd.f32 %v1726, %v1902
      %v1904 = vpop.f32.mrf.mxu0
      %v1905 = vpop.f32.mrf.mxu0
      %v1906 = vadd.f32 %v1729, %v1905
      %v1907 = vpop.f32.mrf.mxu0
      %1908 = vdwg.mxu0
      %vm1909 = vsmask.f32 5376
      %v1911 = vshrl.u32 %v380, 16
      %v1913 = vrot.slane %v1911, 2
      %v1914 = vshll.u32 %v380, 16
      %v1916 = vrot.slane %v1914, 3
      %v1917 = vor.u32 %v1913, %v1916
      %v1918 = vrot.slane %v415, 2
      %v1919 = vrot.slane %v411, 3
      %v1920 = vor.u32 %v1918, %v1919
      %v1921 = vsel %vm1909, %v1917, %v1920
      %v1923 = vshrl.u32 %v414, 16
      %v1925 = vrot.slane %v1923, 2
      %v1926 = vshll.u32 %v414, 16
      %v1928 = vrot.slane %v1926, 3
      %v1929 = vor.u32 %v1925, %v1928
      %v1931 = vshrl.u32 %v422, 16
      %v1933 = vrot.slane %v1931, 2
      %v1934 = vshll.u32 %v422, 16
      %v1936 = vrot.slane %v1934, 3
      %v1937 = vor.u32 %v1933, %v1936
      %v1938 = vsel %vm1909, %v1929, %v1937
      %v1940 = vshrl.u32 %v560, 16
      %v1942 = vrot.slane %v1940, 2
      %v1943 = vshll.u32 %v560, 16
      %v1945 = vrot.slane %v1943, 3
      %v1946 = vor.u32 %v1942, %v1945
      %v1948 = vshrl.u32 %v562, 16
      %v1950 = vrot.slane %v1948, 2
      %v1951 = vshll.u32 %v562, 16
      %v1953 = vrot.slane %v1951, 3
      %v1954 = vor.u32 %v1950, %v1953
      %v1955 = vsel %vm1909, %v1946, %v1954
      %v1956 = vrot.slane %v423, 2
      %v1957 = vrot.slane %v419, 3
      %v1958 = vor.u32 %v1956, %v1957
      %v1959 = vsel %vm1909, %v1920, %v1958
      %v1961 = vshrl.u32 %v430, 16
      %v1963 = vrot.slane %v1961, 2
      %v1964 = vshll.u32 %v430, 16
      %v1966 = vrot.slane %v1964, 3
      %v1967 = vor.u32 %v1963, %v1966
      %v1968 = vsel %vm1909, %v1937, %v1967
      %v1970 = vshrl.u32 %v564, 16
      %v1972 = vrot.slane %v1970, 2
      %v1973 = vshll.u32 %v564, 16
      %v1975 = vrot.slane %v1973, 3
      %v1976 = vor.u32 %v1972, %v1975
      %v1977 = vsel %vm1909, %v1954, %v1976
      %v1978 = vrot.slane %v431, 2
      %v1979 = vrot.slane %v427, 3
      %v1980 = vor.u32 %v1978, %v1979
      %v1981 = vsel %vm1909, %v1958, %v1980
      %v1983 = vshrl.u32 %v438, 16
      %v1985 = vrot.slane %v1983, 2
      %v1986 = vshll.u32 %v438, 16
      %v1988 = vrot.slane %v1986, 3
      %v1989 = vor.u32 %v1985, %v1988
      %v1990 = vsel %vm1909, %v1967, %v1989
      %v1992 = vshrl.u32 %v566, 16
      %v1994 = vrot.slane %v1992, 2
      %v1995 = vshll.u32 %v566, 16
      %v1997 = vrot.slane %v1995, 3
      %v1998 = vor.u32 %v1994, %v1997
      %v1999 = vsel %vm1909, %v1976, %v1998
      %v2000 = vrot.slane %v439, 2
      %v2001 = vrot.slane %v435, 3
      %v2002 = vor.u32 %v2000, %v2001
      %v2003 = vsel %vm1909, %v1980, %v2002
      %v2005 = vshrl.u32 %v446, 16
      %v2007 = vrot.slane %v2005, 2
      %v2008 = vshll.u32 %v446, 16
      %v2010 = vrot.slane %v2008, 3
      %v2011 = vor.u32 %v2007, %v2010
      %v2012 = vsel %vm1909, %v1989, %v2011
      %v2014 = vshrl.u32 %v568, 16
      %v2016 = vrot.slane %v2014, 2
      %v2017 = vshll.u32 %v568, 16
      %v2019 = vrot.slane %v2017, 3
      %v2020 = vor.u32 %v2016, %v2019
      %v2021 = vsel %vm1909, %v1998, %v2020
      %v2022 = vrot.slane %v447, 2
      %v2023 = vrot.slane %v443, 3
      %v2024 = vor.u32 %v2022, %v2023
      %v2025 = vsel %vm1909, %v2002, %v2024
      %v2027 = vshrl.u32 %v454, 16
      %v2029 = vrot.slane %v2027, 2
      %v2030 = vshll.u32 %v454, 16
      %v2032 = vrot.slane %v2030, 3
      %v2033 = vor.u32 %v2029, %v2032
      %v2034 = vsel %vm1909, %v2011, %v2033
      %v2036 = vshrl.u32 %v570, 16
      %v2038 = vrot.slane %v2036, 2
      %v2039 = vshll.u32 %v570, 16
      %v2041 = vrot.slane %v2039, 3
      %v2042 = vor.u32 %v2038, %v2041
      %v2043 = vsel %vm1909, %v2020, %v2042
      %v2044 = vrot.slane %v455, 2
      %v2045 = vrot.slane %v451, 3
      %v2046 = vor.u32 %v2044, %v2045
      %v2047 = vsel %vm1909, %v2024, %v2046
      %v2049 = vshrl.u32 %v462, 16
      %v2051 = vrot.slane %v2049, 2
      %v2052 = vshll.u32 %v462, 16
      %v2054 = vrot.slane %v2052, 3
      %v2055 = vor.u32 %v2051, %v2054
      %v2056 = vsel %vm1909, %v2033, %v2055
      %v2058 = vshrl.u32 %v572, 16
      %v2060 = vrot.slane %v2058, 2
      %v2061 = vshll.u32 %v572, 16
      %v2063 = vrot.slane %v2061, 3
      %v2064 = vor.u32 %v2060, %v2063
      %v2065 = vsel %vm1909, %v2042, %v2064
      %v2066 = vrot.slane %v463, 2
      %v2067 = vrot.slane %v459, 3
      %v2068 = vor.u32 %v2066, %v2067
      %v2069 = vsel %vm1909, %v2046, %v2068
      %v2071 = vshrl.u32 %v470, 16
      %v2073 = vrot.slane %v2071, 2
      %v2074 = vshll.u32 %v470, 16
      %v2076 = vrot.slane %v2074, 3
      %v2077 = vor.u32 %v2073, %v2076
      %v2078 = vsel %vm1909, %v2055, %v2077
      %v2080 = vshrl.u32 %v574, 16
      %v2082 = vrot.slane %v2080, 2
      %v2083 = vshll.u32 %v574, 16
      %v2085 = vrot.slane %v2083, 3
      %v2086 = vor.u32 %v2082, %v2085
      %v2087 = vsel %vm1909, %v2064, %v2086
      %v2088 = vrot.slane %v471, 2
      %v2089 = vrot.slane %v467, 3
      %v2090 = vor.u32 %v2088, %v2089
      %v2091 = vsel %vm1909, %v2068, %v2090
      %v2093 = vshrl.u32 %v478, 16
      %v2095 = vrot.slane %v2093, 2
      %v2096 = vshll.u32 %v478, 16
      %v2098 = vrot.slane %v2096, 3
      %v2099 = vor.u32 %v2095, %v2098
      %v2100 = vsel %vm1909, %v2077, %v2099
      %v2102 = vshrl.u32 %v576, 16
      %v2104 = vrot.slane %v2102, 2
      %v2105 = vshll.u32 %v576, 16
      %v2107 = vrot.slane %v2105, 3
      %v2108 = vor.u32 %v2104, %v2107
      %v2109 = vsel %vm1909, %v2086, %v2108
      %v2110 = vrot.slane %v479, 2
      %v2111 = vrot.slane %v475, 3
      %v2112 = vor.u32 %v2110, %v2111
      %v2113 = vsel %vm1909, %v2090, %v2112
      %v2115 = vshrl.u32 %v486, 16
      %v2117 = vrot.slane %v2115, 2
      %v2118 = vshll.u32 %v486, 16
      %v2120 = vrot.slane %v2118, 3
      %v2121 = vor.u32 %v2117, %v2120
      %v2122 = vsel %vm1909, %v2099, %v2121
      %v2124 = vshrl.u32 %v578, 16
      %v2126 = vrot.slane %v2124, 2
      %v2127 = vshll.u32 %v578, 16
      %v2129 = vrot.slane %v2127, 3
      %v2130 = vor.u32 %v2126, %v2129
      %v2131 = vsel %vm1909, %v2108, %v2130
      %v2132 = vrot.slane %v487, 2
      %v2133 = vrot.slane %v483, 3
      %v2134 = vor.u32 %v2132, %v2133
      %v2135 = vsel %vm1909, %v2112, %v2134
      %v2137 = vshrl.u32 %v494, 16
      %v2139 = vrot.slane %v2137, 2
      %v2140 = vshll.u32 %v494, 16
      %v2142 = vrot.slane %v2140, 3
      %v2143 = vor.u32 %v2139, %v2142
      %v2144 = vsel %vm1909, %v2121, %v2143
      %v2146 = vshrl.u32 %v580, 16
      %v2148 = vrot.slane %v2146, 2
      %v2149 = vshll.u32 %v580, 16
      %v2151 = vrot.slane %v2149, 3
      %v2152 = vor.u32 %v2148, %v2151
      %v2153 = vsel %vm1909, %v2130, %v2152
      %v2154 = vrot.slane %v495, 2
      %v2155 = vrot.slane %v491, 3
      %v2156 = vor.u32 %v2154, %v2155
      %v2157 = vsel %vm1909, %v2134, %v2156
      %v2159 = vshrl.u32 %v502, 16
      %v2161 = vrot.slane %v2159, 2
      %v2162 = vshll.u32 %v502, 16
      %v2164 = vrot.slane %v2162, 3
      %v2165 = vor.u32 %v2161, %v2164
      %v2166 = vsel %vm1909, %v2143, %v2165
      %v2168 = vshrl.u32 %v582, 16
      %v2170 = vrot.slane %v2168, 2
      %v2171 = vshll.u32 %v582, 16
      %v2173 = vrot.slane %v2171, 3
      %v2174 = vor.u32 %v2170, %v2173
      %v2175 = vsel %vm1909, %v2152, %v2174
      %v2176 = vrot.slane %v503, 2
      %v2177 = vrot.slane %v499, 3
      %v2178 = vor.u32 %v2176, %v2177
      %v2179 = vsel %vm1909, %v2156, %v2178
      %v2181 = vshrl.u32 %v510, 16
      %v2183 = vrot.slane %v2181, 2
      %v2184 = vshll.u32 %v510, 16
      %v2186 = vrot.slane %v2184, 3
      %v2187 = vor.u32 %v2183, %v2186
      %v2188 = vsel %vm1909, %v2165, %v2187
      %v2190 = vshrl.u32 %v584, 16
      %v2192 = vrot.slane %v2190, 2
      %v2193 = vshll.u32 %v584, 16
      %v2195 = vrot.slane %v2193, 3
      %v2196 = vor.u32 %v2192, %v2195
      %v2197 = vsel %vm1909, %v2174, %v2196
      %v2198 = vrot.slane %v511, 2
      %v2199 = vrot.slane %v507, 3
      %v2200 = vor.u32 %v2198, %v2199
      %v2201 = vsel %vm1909, %v2178, %v2200
      %v2203 = vshrl.u32 %v518, 16
      %v2205 = vrot.slane %v2203, 2
      %v2206 = vshll.u32 %v518, 16
      %v2208 = vrot.slane %v2206, 3
      %v2209 = vor.u32 %v2205, %v2208
      %v2210 = vsel %vm1909, %v2187, %v2209
      %v2212 = vshrl.u32 %v586, 16
      %v2214 = vrot.slane %v2212, 2
      %v2215 = vshll.u32 %v586, 16
      %v2217 = vrot.slane %v2215, 3
      %v2218 = vor.u32 %v2214, %v2217
      %v2219 = vsel %vm1909, %v2196, %v2218
      %v2220 = vrot.slane %v519, 2
      %v2221 = vrot.slane %v515, 3
      %v2222 = vor.u32 %v2220, %v2221
      %v2223 = vsel %vm1909, %v2200, %v2222
      %v2225 = vshrl.u32 %v526, 16
      %v2227 = vrot.slane %v2225, 2
      %v2228 = vshll.u32 %v526, 16
      %v2230 = vrot.slane %v2228, 3
      %v2231 = vor.u32 %v2227, %v2230
      %v2232 = vsel %vm1909, %v2209, %v2231
      %v2234 = vshrl.u32 %v588, 16
      %v2236 = vrot.slane %v2234, 2
      %v2237 = vshll.u32 %v588, 16
      %v2239 = vrot.slane %v2237, 3
      %v2240 = vor.u32 %v2236, %v2239
      %v2241 = vsel %vm1909, %v2218, %v2240
      %v2242 = vrot.slane %v527, 2
      %v2243 = vrot.slane %v523, 3
      %v2244 = vor.u32 %v2242, %v2243
      %v2245 = vsel %vm1909, %v2222, %v2244
      %v2247 = vshrl.u32 %v534, 16
      %v2249 = vrot.slane %v2247, 2
      %v2250 = vshll.u32 %v534, 16
      %v2252 = vrot.slane %v2250, 3
      %v2253 = vor.u32 %v2249, %v2252
      %v2254 = vsel %vm1909, %v2231, %v2253
      %v2256 = vshrl.u32 %v590, 16
      %v2258 = vrot.slane %v2256, 2
      %v2259 = vshll.u32 %v590, 16
      %v2261 = vrot.slane %v2259, 3
      %v2262 = vor.u32 %v2258, %v2261
      %v2263 = vsel %vm1909, %v2240, %v2262
      %v2264 = vrot.slane %v535, 2
      %v2265 = vrot.slane %v531, 3
      %v2266 = vor.u32 %v2264, %v2265
      %v2267 = vsel %vm1909, %v2244, %v2266
      %v2269 = vshrl.u32 %v542, 16
      %v2271 = vrot.slane %v2269, 2
      %v2272 = vshll.u32 %v542, 16
      %v2274 = vrot.slane %v2272, 3
      %v2275 = vor.u32 %v2271, %v2274
      %v2276 = vsel %vm1909, %v2253, %v2275
      %v2278 = vshrl.u32 %v592, 16
      %v2280 = vrot.slane %v2278, 2
      %v2281 = vshll.u32 %v592, 16
      %v2283 = vrot.slane %v2281, 3
      %v2284 = vor.u32 %v2280, %v2283
      %v2285 = vsel %vm1909, %v2262, %v2284
      %v2286 = vrot.slane %v543, 2
      %v2287 = vrot.slane %v539, 3
      %v2288 = vor.u32 %v2286, %v2287
      %v2289 = vsel %vm1909, %v2266, %v2288
      %v2291 = vshrl.u32 %v550, 16
      %v2293 = vrot.slane %v2291, 2
      %v2294 = vshll.u32 %v550, 16
      %v2296 = vrot.slane %v2294, 3
      %v2297 = vor.u32 %v2293, %v2296
      %v2298 = vsel %vm1909, %v2275, %v2297
      %v2300 = vshrl.u32 %v594, 16
      %v2302 = vrot.slane %v2300, 2
      %v2303 = vshll.u32 %v594, 16
      %v2305 = vrot.slane %v2303, 3
      %v2306 = vor.u32 %v2302, %v2305
      %v2307 = vsel %vm1909, %v2284, %v2306
      %v2308 = vrot.slane %v551, 2
      %v2309 = vrot.slane %v547, 3
      %v2310 = vor.u32 %v2308, %v2309
      %v2311 = vsel %vm1909, %v2288, %v2310
      %v2313 = vshrl.u32 %v553, 16
      %v2315 = vrot.slane %v2313, 2
      %v2316 = vshll.u32 %v553, 16
      %v2318 = vrot.slane %v2316, 3
      %v2319 = vor.u32 %v2315, %v2318
      %v2320 = vsel %vm1909, %v2297, %v2319
      %v2322 = vshrl.u32 %v593, 16
      %v2324 = vrot.slane %v2322, 2
      %v2325 = vshll.u32 %v593, 16
      %v2327 = vrot.slane %v2325, 3
      %v2328 = vor.u32 %v2324, %v2327
      %v2329 = vsel %vm1909, %v2306, %v2328
      %v2432 = vunpack.c.l.b16 %v595
      %v2433 = vunpack.c.l.b16 %v596
      %v2434 = vunpack.c.l.b16 %v597
      %v2435 = vunpack.c.l.b16 %v598
      %v2436 = vunpack.c.l.b16 %v599
      %v2437 = vunpack.c.l.b16 %v600
      %v2438 = vunpack.c.l.b16 %v601
      %v2439 = vunpack.c.l.b16 %v602
      %v2440 = vunpack.c.l.b16 %v603
      %v2441 = vunpack.c.l.b16 %v604
      %v2442 = vunpack.c.l.b16 %v605
      %v2443 = vunpack.c.l.b16 %v606
      %v2444 = vunpack.c.l.b16 %v607
      %v2445 = vunpack.c.l.b16 %v608
      %v2446 = vunpack.c.l.b16 %v609
      %v2447 = vunpack.c.l.b16 %v610
      %v2448 = vunpack.c.l.b16 %v611
      %v2449 = vunpack.c.l.b16 %v612
      %v2450 = vunpack.c.l.b16 %v613
      %v2451 = vunpack.c.l.b16 %v614
      %v2452 = vunpack.c.l.b16 %v615
      %v2453 = vunpack.c.l.b16 %v616
      %v2454 = vunpack.c.l.b16 %v617
      %v2455 = vunpack.c.l.b16 %v618
      %v2456 = vunpack.c.l.b16 %v619
      %v2457 = vunpack.c.l.b16 %v620
      %v2458 = vunpack.c.l.b16 %v621
      %v2459 = vunpack.c.l.b16 %v622
      %v2460 = vunpack.c.l.b16 %v623
      %v2461 = vunpack.c.l.b16 %v624
      %v2462 = vunpack.c.l.b16 %v625
      %v2463 = vunpack.c.l.b16 %v626
      %v2464 = vunpack.c.l.b16 %v627
      %v2465 = vunpack.c.l.b16 %v628
      %v2466 = vunpack.c.l.b16 %v629
      %v2467 = vunpack.c.l.b16 %v630
      %v2468 = vunpack.c.l.b16 %v631
      %v2469 = vunpack.c.l.b16 %v632
      %v2470 = vunpack.c.l.b16 %v633
      %v2471 = vunpack.c.l.b16 %v634
      %v2472 = vunpack.c.l.b16 %v635
      %v2473 = vunpack.c.l.b16 %v636
      %v2474 = vunpack.c.l.b16 %v637
      %v2475 = vunpack.c.l.b16 %v638
      %v2476 = vunpack.c.l.b16 %v639
      %v2477 = vunpack.c.l.b16 %v640
      %v2478 = vunpack.c.l.b16 %v641
      %v2479 = vunpack.c.l.b16 %v642
      %v2480 = vpack.c.b16 %v2433, %v2432
      %v2481 = vpack.c.b16 %v2435, %v2434
      %v2482 = vpack.c.b16 %v2437, %v2436
      %v2483 = vpack.c.b16 %v2439, %v2438
      %v2484 = vpack.c.b16 %v2441, %v2440
      %v2485 = vpack.c.b16 %v2443, %v2442
      %v2486 = vpack.c.b16 %v2445, %v2444
      %v2487 = vpack.c.b16 %v2447, %v2446
      %v2488 = vpack.c.b16 %v2449, %v2448
      %v2489 = vpack.c.b16 %v2451, %v2450
      %v2490 = vpack.c.b16 %v2453, %v2452
      %v2491 = vpack.c.b16 %v2455, %v2454
      %v2492 = vpack.c.b16 %v2457, %v2456
      %v2493 = vpack.c.b16 %v2459, %v2458
      %v2494 = vpack.c.b16 %v2461, %v2460
      %v2495 = vpack.c.b16 %v2463, %v2462
      %v2496 = vpack.c.b16 %v2465, %v2464
      %v2497 = vpack.c.b16 %v2467, %v2466
      %v2498 = vpack.c.b16 %v2469, %v2468
      %v2499 = vpack.c.b16 %v2471, %v2470
      %v2500 = vpack.c.b16 %v2473, %v2472
      %v2501 = vpack.c.b16 %v2475, %v2474
      %v2502 = vpack.c.b16 %v2477, %v2476
      %v2503 = vpack.c.b16 %v2479, %v2478
      %2528 = vmatprep.subr.bf16.mxu0 0
      %2529 = vmatpush1.bf16.msra.mxu0 %v2487
      %2530 = vmatprep.subr.bf16.mxu0 0
      %2531 = vmatpush1.bf16.msra.mxu0 %v2486
      %2532 = vmatprep.subr.bf16.mxu0 0
      %2533 = vmatpush1.bf16.msra.mxu0 %v2485
      %2534 = vmatprep.subr.bf16.mxu0 0
      %2535 = vmatpush1.bf16.msra.mxu0 %v2484
      %2536 = vmatprep.subr.bf16.mxu0 0
      %2537 = vmatpush1.bf16.msra.mxu0 %v2483
      %2538 = vmatprep.subr.bf16.mxu0 0
      %2539 = vmatpush1.bf16.msra.mxu0 %v2482
      %2540 = vmatprep.subr.bf16.mxu0 0
      %2541 = vmatpush1.bf16.msra.mxu0 %v2481
      %2542 = vmatprep.subr.bf16.mxu0 0
      %2543 = vmatpush1.bf16.msra.mxu0 %v2480
      %2544 = vmatprep.subr.bf16.mxu0 0
      %2545 = vmatpush2.bf16.msra.mxu0 %v2495
      %2546 = vmatprep.subr.bf16.mxu0 0
      %2547 = vmatpush2.bf16.msra.mxu0 %v2494
      %2548 = vmatprep.subr.bf16.mxu0 0
      %2549 = vmatpush2.bf16.msra.mxu0 %v2493
      %2550 = vmatprep.subr.bf16.mxu0 0
      %2551 = vmatpush2.bf16.msra.mxu0 %v2492
      %2552 = vmatprep.subr.bf16.mxu0 0
      %2553 = vmatpush2.bf16.msra.mxu0 %v2491
      %2554 = vmatprep.subr.bf16.mxu0 0
      %2555 = vmatpush2.bf16.msra.mxu0 %v2490
      %2556 = vmatprep.subr.bf16.mxu0 0
      %2557 = vmatpush2.bf16.msra.mxu0 %v2489
      %2558 = vmatprep.subr.bf16.mxu0 0
      %2559 = vmatpush2.bf16.msra.mxu0 %v2488
      %2560 = vmatprep.mubr.bf16.mxu0 %v1938
      %2561 = vmatmul.mubr.bf16.gmra.mxu0 %v1921
      %v2562 = vpop.f32.mrf.mxu0
      %v2563 = vadd.f32 %v1767, %v2562
      %v2564 = vpop.f32.mrf.mxu0
      %v2565 = vpop.f32.mrf.mxu0
      %v2566 = vadd.f32 %v1770, %v2565
      %v2567 = vpop.f32.mrf.mxu0
      %2568 = vmatprep.mubr.bf16.mxu0 %v1968
      %2569 = vmatmul.mubr.bf16.gmra.mxu0 %v1959
      %v2570 = vpop.f32.mrf.mxu0
      %v2571 = vadd.f32 %v1775, %v2570
      %v2572 = vpop.f32.mrf.mxu0
      %v2573 = vpop.f32.mrf.mxu0
      %v2574 = vadd.f32 %v1778, %v2573
      %v2575 = vpop.f32.mrf.mxu0
      %2576 = vmatprep.mubr.bf16.mxu0 %v1990
      %2577 = vmatmul.mubr.bf16.gmra.mxu0 %v1981
      %v2578 = vpop.f32.mrf.mxu0
      %v2579 = vadd.f32 %v1783, %v2578
      %v2580 = vpop.f32.mrf.mxu0
      %v2581 = vpop.f32.mrf.mxu0
      %v2582 = vadd.f32 %v1786, %v2581
      %v2583 = vpop.f32.mrf.mxu0
      %2584 = vmatprep.mubr.bf16.mxu0 %v2012
      %2585 = vmatmul.mubr.bf16.gmra.mxu0 %v2003
      %v2586 = vpop.f32.mrf.mxu0
      %v2587 = vadd.f32 %v1791, %v2586
      %v2588 = vpop.f32.mrf.mxu0
      %v2589 = vpop.f32.mrf.mxu0
      %v2590 = vadd.f32 %v1794, %v2589
      %v2591 = vpop.f32.mrf.mxu0
      %2592 = vmatprep.mubr.bf16.mxu0 %v2034
      %2593 = vmatmul.mubr.bf16.gmra.mxu0 %v2025
      %v2594 = vpop.f32.mrf.mxu0
      %v2595 = vadd.f32 %v1799, %v2594
      %v2596 = vpop.f32.mrf.mxu0
      %v2597 = vpop.f32.mrf.mxu0
      %v2598 = vadd.f32 %v1802, %v2597
      %v2599 = vpop.f32.mrf.mxu0
      %2600 = vmatprep.mubr.bf16.mxu0 %v2056
      %2601 = vmatmul.mubr.bf16.gmra.mxu0 %v2047
      %v2602 = vpop.f32.mrf.mxu0
      %v2603 = vadd.f32 %v1807, %v2602
      %v2604 = vpop.f32.mrf.mxu0
      %v2605 = vpop.f32.mrf.mxu0
      %v2606 = vadd.f32 %v1810, %v2605
      %v2607 = vpop.f32.mrf.mxu0
      %2608 = vmatprep.mubr.bf16.mxu0 %v2078
      %2609 = vmatmul.mubr.bf16.gmra.mxu0 %v2069
      %v2610 = vpop.f32.mrf.mxu0
      %v2611 = vadd.f32 %v1815, %v2610
      %v2612 = vpop.f32.mrf.mxu0
      %v2613 = vpop.f32.mrf.mxu0
      %v2614 = vadd.f32 %v1818, %v2613
      %v2615 = vpop.f32.mrf.mxu0
      %2616 = vmatprep.mubr.bf16.mxu0 %v2100
      %2617 = vmatmul.mubr.bf16.gmra.mxu0 %v2091
      %v2618 = vpop.f32.mrf.mxu0
      %v2619 = vadd.f32 %v1823, %v2618
      %v2620 = vpop.f32.mrf.mxu0
      %v2621 = vpop.f32.mrf.mxu0
      %v2622 = vadd.f32 %v1826, %v2621
      %v2623 = vpop.f32.mrf.mxu0
      %2624 = vmatprep.mubr.bf16.mxu0 %v2122
      %2625 = vmatmul.mubr.bf16.gmra.mxu0 %v2113
      %v2626 = vpop.f32.mrf.mxu0
      %v2627 = vadd.f32 %v1831, %v2626
      %v2628 = vpop.f32.mrf.mxu0
      %v2629 = vpop.f32.mrf.mxu0
      %v2630 = vadd.f32 %v1834, %v2629
      %v2631 = vpop.f32.mrf.mxu0
      %2632 = vmatprep.mubr.bf16.mxu0 %v2144
      %2633 = vmatmul.mubr.bf16.gmra.mxu0 %v2135
      %v2634 = vpop.f32.mrf.mxu0
      %v2635 = vadd.f32 %v1839, %v2634
      %v2636 = vpop.f32.mrf.mxu0
      %v2637 = vpop.f32.mrf.mxu0
      %v2638 = vadd.f32 %v1842, %v2637
      %v2639 = vpop.f32.mrf.mxu0
      %2640 = vmatprep.mubr.bf16.mxu0 %v2166
      %2641 = vmatmul.mubr.bf16.gmra.mxu0 %v2157
      %v2642 = vpop.f32.mrf.mxu0
      %v2643 = vadd.f32 %v1847, %v2642
      %v2644 = vpop.f32.mrf.mxu0
      %v2645 = vpop.f32.mrf.mxu0
      %v2646 = vadd.f32 %v1850, %v2645
      %v2647 = vpop.f32.mrf.mxu0
      %2648 = vmatprep.mubr.bf16.mxu0 %v2188
      %2649 = vmatmul.mubr.bf16.gmra.mxu0 %v2179
      %v2650 = vpop.f32.mrf.mxu0
      %v2651 = vadd.f32 %v1855, %v2650
      %v2652 = vpop.f32.mrf.mxu0
      %v2653 = vpop.f32.mrf.mxu0
      %v2654 = vadd.f32 %v1858, %v2653
      %v2655 = vpop.f32.mrf.mxu0
      %2656 = vmatprep.mubr.bf16.mxu0 %v2210
      %2657 = vmatmul.mubr.bf16.gmra.mxu0 %v2201
      %v2658 = vpop.f32.mrf.mxu0
      %v2659 = vadd.f32 %v1863, %v2658
      %v2660 = vpop.f32.mrf.mxu0
      %v2661 = vpop.f32.mrf.mxu0
      %v2662 = vadd.f32 %v1866, %v2661
      %v2663 = vpop.f32.mrf.mxu0
      %2664 = vmatprep.mubr.bf16.mxu0 %v2232
      %2665 = vmatmul.mubr.bf16.gmra.mxu0 %v2223
      %v2666 = vpop.f32.mrf.mxu0
      %v2667 = vadd.f32 %v1871, %v2666
      %v2668 = vpop.f32.mrf.mxu0
      %v2669 = vpop.f32.mrf.mxu0
      %v2670 = vadd.f32 %v1874, %v2669
      %v2671 = vpop.f32.mrf.mxu0
      %2672 = vmatprep.mubr.bf16.mxu0 %v2254
      %2673 = vmatmul.mubr.bf16.gmra.mxu0 %v2245
      %v2674 = vpop.f32.mrf.mxu0
      %v2675 = vadd.f32 %v1879, %v2674
      %v2676 = vpop.f32.mrf.mxu0
      %v2677 = vpop.f32.mrf.mxu0
      %v2678 = vadd.f32 %v1882, %v2677
      %v2679 = vpop.f32.mrf.mxu0
      %2680 = vmatprep.mubr.bf16.mxu0 %v2276
      %2681 = vmatmul.mubr.bf16.gmra.mxu0 %v2267
      %v2682 = vpop.f32.mrf.mxu0
      %v2683 = vadd.f32 %v1887, %v2682
      %v2684 = vpop.f32.mrf.mxu0
      %v2685 = vpop.f32.mrf.mxu0
      %v2686 = vadd.f32 %v1890, %v2685
      %v2687 = vpop.f32.mrf.mxu0
      %2688 = vmatprep.mubr.bf16.mxu0 %v2298
      %2689 = vmatmul.mubr.bf16.gmra.mxu0 %v2289
      %v2690 = vpop.f32.mrf.mxu0
      %v2691 = vadd.f32 %v1895, %v2690
      %v2692 = vpop.f32.mrf.mxu0
      %v2693 = vpop.f32.mrf.mxu0
      %v2694 = vadd.f32 %v1898, %v2693
      %v2695 = vpop.f32.mrf.mxu0
      %2696 = vmatprep.mubr.bf16.mxu0 %v2320
      %2697 = vmatmul.mubr.bf16.gmra.mxu0 %v2311
      %v2698 = vpop.f32.mrf.mxu0
      %v2699 = vadd.f32 %v1903, %v2698
      %v2700 = vpop.f32.mrf.mxu0
      %v2701 = vpop.f32.mrf.mxu0
      %v2702 = vadd.f32 %v1906, %v2701
      %v2703 = vpop.f32.mrf.mxu0
      %2704 = vdwg.mxu0
      %2705 = vmatprep.subr.bf16.mxu0 0
      %2706 = vmatpush1.bf16.msra.mxu0 %v2503
      %2707 = vmatprep.subr.bf16.mxu0 0
      %2708 = vmatpush1.bf16.msra.mxu0 %v2502
      %2709 = vmatprep.subr.bf16.mxu0 0
      %2710 = vmatpush1.bf16.msra.mxu0 %v2501
      %2711 = vmatprep.subr.bf16.mxu0 0
      %2712 = vmatpush1.bf16.msra.mxu0 %v2500
      %2713 = vmatprep.subr.bf16.mxu0 0
      %2714 = vmatpush1.bf16.msra.mxu0 %v2499
      %2715 = vmatprep.subr.bf16.mxu0 0
      %2716 = vmatpush1.bf16.msra.mxu0 %v2498
      %2717 = vmatprep.subr.bf16.mxu0 0
      %2718 = vmatpush1.bf16.msra.mxu0 %v2497
      %2719 = vmatprep.subr.bf16.mxu0 0
      %2720 = vmatpush1.bf16.msra.mxu0 %v2496
      %2721 = vmatprep.subr.bf16.mxu0 0
      %2722 = vmatpush2.bf16.msra.mxu0 0
      %2723 = vmatprep.subr.bf16.mxu0 0
      %2724 = vmatpush2.bf16.msra.mxu0 0
      %2725 = vmatprep.subr.bf16.mxu0 0
      %2726 = vmatpush2.bf16.msra.mxu0 0
      %2727 = vmatprep.subr.bf16.mxu0 0
      %2728 = vmatpush2.bf16.msra.mxu0 0
      %2729 = vmatprep.subr.bf16.mxu0 0
      %2730 = vmatpush2.bf16.msra.mxu0 0
      %2731 = vmatprep.subr.bf16.mxu0 0
      %2732 = vmatpush2.bf16.msra.mxu0 0
      %2733 = vmatprep.subr.bf16.mxu0 0
      %2734 = vmatpush2.bf16.msra.mxu0 0
      %2735 = vmatprep.subr.bf16.mxu0 0
      %2736 = vmatpush2.bf16.msra.mxu0 0
      %2737 = vmatprep.mubr.bf16.mxu0 0
      %2738 = vmatmul.mubr.bf16.gmra.mxu0 %v1955
      %v2739 = vpop.f32.mrf.mxu0
      %v2740 = vadd.f32 %v2563, %v2739
      %v2741 = vpop.f32.mrf.mxu0
      %v2742 = vpop.f32.mrf.mxu0
      %v2743 = vadd.f32 %v2566, %v2742
      %v2744 = vpop.f32.mrf.mxu0
      %2745 = vmatprep.mubr.bf16.mxu0 0
      %2746 = vmatmul.mubr.bf16.gmra.mxu0 %v1977
      %v2747 = vpop.f32.mrf.mxu0
      %v2748 = vadd.f32 %v2571, %v2747
      %v2749 = vpop.f32.mrf.mxu0
      %v2750 = vpop.f32.mrf.mxu0
      %v2751 = vadd.f32 %v2574, %v2750
      %v2752 = vpop.f32.mrf.mxu0
      %2753 = vmatprep.mubr.bf16.mxu0 0
      %2754 = vmatmul.mubr.bf16.gmra.mxu0 %v1999
      %v2755 = vpop.f32.mrf.mxu0
      %v2756 = vadd.f32 %v2579, %v2755
      %v2757 = vpop.f32.mrf.mxu0
      %v2758 = vpop.f32.mrf.mxu0
      %v2759 = vadd.f32 %v2582, %v2758
      %v2760 = vpop.f32.mrf.mxu0
      %2761 = vmatprep.mubr.bf16.mxu0 0
      %2762 = vmatmul.mubr.bf16.gmra.mxu0 %v2021
      %v2763 = vpop.f32.mrf.mxu0
      %v2764 = vadd.f32 %v2587, %v2763
      %v2765 = vpop.f32.mrf.mxu0
      %v2766 = vpop.f32.mrf.mxu0
      %v2767 = vadd.f32 %v2590, %v2766
      %v2768 = vpop.f32.mrf.mxu0
      %2769 = vmatprep.mubr.bf16.mxu0 0
      %2770 = vmatmul.mubr.bf16.gmra.mxu0 %v2043
      %v2771 = vpop.f32.mrf.mxu0
      %v2772 = vadd.f32 %v2595, %v2771
      %v2773 = vpop.f32.mrf.mxu0
      %v2774 = vpop.f32.mrf.mxu0
      %v2775 = vadd.f32 %v2598, %v2774
      %v2776 = vpop.f32.mrf.mxu0
      %2777 = vmatprep.mubr.bf16.mxu0 0
      %2778 = vmatmul.mubr.bf16.gmra.mxu0 %v2065
      %v2779 = vpop.f32.mrf.mxu0
      %v2780 = vadd.f32 %v2603, %v2779
      %v2781 = vpop.f32.mrf.mxu0
      %v2782 = vpop.f32.mrf.mxu0
      %v2783 = vadd.f32 %v2606, %v2782
      %v2784 = vpop.f32.mrf.mxu0
      %2785 = vmatprep.mubr.bf16.mxu0 0
      %2786 = vmatmul.mubr.bf16.gmra.mxu0 %v2087
      %v2787 = vpop.f32.mrf.mxu0
      %v2788 = vadd.f32 %v2611, %v2787
      %v2789 = vpop.f32.mrf.mxu0
      %v2790 = vpop.f32.mrf.mxu0
      %v2791 = vadd.f32 %v2614, %v2790
      %v2792 = vpop.f32.mrf.mxu0
      %2793 = vmatprep.mubr.bf16.mxu0 0
      %2794 = vmatmul.mubr.bf16.gmra.mxu0 %v2109
      %v2795 = vpop.f32.mrf.mxu0
      %v2796 = vadd.f32 %v2619, %v2795
      %v2797 = vpop.f32.mrf.mxu0
      %v2798 = vpop.f32.mrf.mxu0
      %v2799 = vadd.f32 %v2622, %v2798
      %v2800 = vpop.f32.mrf.mxu0
      %2801 = vmatprep.mubr.bf16.mxu0 0
      %2802 = vmatmul.mubr.bf16.gmra.mxu0 %v2131
      %v2803 = vpop.f32.mrf.mxu0
      %v2804 = vadd.f32 %v2627, %v2803
      %v2805 = vpop.f32.mrf.mxu0
      %v2806 = vpop.f32.mrf.mxu0
      %v2807 = vadd.f32 %v2630, %v2806
      %v2808 = vpop.f32.mrf.mxu0
      %2809 = vmatprep.mubr.bf16.mxu0 0
      %2810 = vmatmul.mubr.bf16.gmra.mxu0 %v2153
      %v2811 = vpop.f32.mrf.mxu0
      %v2812 = vadd.f32 %v2635, %v2811
      %v2813 = vpop.f32.mrf.mxu0
      %v2814 = vpop.f32.mrf.mxu0
      %v2815 = vadd.f32 %v2638, %v2814
      %v2816 = vpop.f32.mrf.mxu0
      %2817 = vmatprep.mubr.bf16.mxu0 0
      %2818 = vmatmul.mubr.bf16.gmra.mxu0 %v2175
      %v2819 = vpop.f32.mrf.mxu0
      %v2820 = vadd.f32 %v2643, %v2819
      %v2821 = vpop.f32.mrf.mxu0
      %v2822 = vpop.f32.mrf.mxu0
      %v2823 = vadd.f32 %v2646, %v2822
      %v2824 = vpop.f32.mrf.mxu0
      %2825 = vmatprep.mubr.bf16.mxu0 0
      %2826 = vmatmul.mubr.bf16.gmra.mxu0 %v2197
      %v2827 = vpop.f32.mrf.mxu0
      %v2828 = vadd.f32 %v2651, %v2827
      %v2829 = vpop.f32.mrf.mxu0
      %v2830 = vpop.f32.mrf.mxu0
      %v2831 = vadd.f32 %v2654, %v2830
      %v2832 = vpop.f32.mrf.mxu0
      %2833 = vmatprep.mubr.bf16.mxu0 0
      %2834 = vmatmul.mubr.bf16.gmra.mxu0 %v2219
      %v2835 = vpop.f32.mrf.mxu0
      %v2836 = vadd.f32 %v2659, %v2835
      %v2837 = vpop.f32.mrf.mxu0
      %v2838 = vpop.f32.mrf.mxu0
      %v2839 = vadd.f32 %v2662, %v2838
      %v2840 = vpop.f32.mrf.mxu0
      %2841 = vmatprep.mubr.bf16.mxu0 0
      %2842 = vmatmul.mubr.bf16.gmra.mxu0 %v2241
      %v2843 = vpop.f32.mrf.mxu0
      %v2844 = vadd.f32 %v2667, %v2843
      %v2845 = vpop.f32.mrf.mxu0
      %v2846 = vpop.f32.mrf.mxu0
      %v2847 = vadd.f32 %v2670, %v2846
      %v2848 = vpop.f32.mrf.mxu0
      %2849 = vmatprep.mubr.bf16.mxu0 0
      %2850 = vmatmul.mubr.bf16.gmra.mxu0 %v2263
      %v2851 = vpop.f32.mrf.mxu0
      %v2852 = vadd.f32 %v2675, %v2851
      %v2853 = vpop.f32.mrf.mxu0
      %v2854 = vpop.f32.mrf.mxu0
      %v2855 = vadd.f32 %v2678, %v2854
      %v2856 = vpop.f32.mrf.mxu0
      %2857 = vmatprep.mubr.bf16.mxu0 0
      %2858 = vmatmul.mubr.bf16.gmra.mxu0 %v2285
      %v2859 = vpop.f32.mrf.mxu0
      %v2860 = vadd.f32 %v2683, %v2859
      %v2861 = vpop.f32.mrf.mxu0
      %v2862 = vpop.f32.mrf.mxu0
      %v2863 = vadd.f32 %v2686, %v2862
      %v2864 = vpop.f32.mrf.mxu0
      %2865 = vmatprep.mubr.bf16.mxu0 0
      %2866 = vmatmul.mubr.bf16.gmra.mxu0 %v2307
      %v2867 = vpop.f32.mrf.mxu0
      %v2868 = vadd.f32 %v2691, %v2867
      %v2869 = vpop.f32.mrf.mxu0
      %v2870 = vpop.f32.mrf.mxu0
      %v2871 = vadd.f32 %v2694, %v2870
      %v2872 = vpop.f32.mrf.mxu0
      %2873 = vmatprep.mubr.bf16.mxu0 0
      %2874 = vmatmul.mubr.bf16.gmra.mxu0 %v2329
      %v2875 = vpop.f32.mrf.mxu0
      %v2876 = vadd.f32 %v2699, %v2875
      %v2877 = vpop.f32.mrf.mxu0
      %v2878 = vpop.f32.mrf.mxu0
      %v2879 = vadd.f32 %v2702, %v2878
      %v2880 = vpop.f32.mrf.mxu0
      %2881 = vdwg.mxu0
      %v2882 = vld [vmem:[%s245 + $0x18] sm:$0xf]
      %v2883 = vld [vmem:[%s245 + $0x1c] sm:$0xf]
      %v2884 = vld [vmem:[%s245 + $0x20] sm:$0xf]
      %v2885 = vld [vmem:[%s245 + $0x24] sm:$0xf]
      %v2886 = vld [vmem:[%s245 + $0x28] sm:$0xf]
      %v2887 = vld [vmem:[%s245 + $0x2c] sm:$0xf]
      %v2888 = vld [vmem:[%s245 + $0x30] sm:$0xf]
      %v2889 = vld [vmem:[%s245 + $0x34] sm:$0xf]
      %v2890 = vld [vmem:[%s245 + $0x38] sm:$0xf]
      %v2891 = vld [vmem:[%s245 + $0x3c] sm:$0xf]
      %v2892 = vld [vmem:[%s245 + $0x40] sm:$0xf]
      %v2893 = vld [vmem:[%s245 + $0x44] sm:$0xf]
      %v2894 = vld [vmem:[%s245 + $0x48] sm:$0xf]
      %v2895 = vld [vmem:[%s245 + $0x4c] sm:$0xf]
      %v2896 = vld [vmem:[%s245 + $0x50] sm:$0xf]
      %v2897 = vld [vmem:[%s245 + $0x54] sm:$0xf]
      %v2898 = vld [vmem:[%s245 + $0x58] sm:$0xf]
      %v2899 = vld [vmem:[%s245 + $0x5c] sm:$0xf]
      %v2900 = vld [vmem:[%s245 + $0x60] sm:$0xf]
      %v2901 = vld [vmem:[%s245 + $0x64] sm:$0xf]
      %v2902 = vld [vmem:[%s245 + $0x68] sm:$0xf]
      %v2903 = vld [vmem:[%s245 + $0x6c] sm:$0xf]
      %v2904 = vld [vmem:[%s245 + $0x70] sm:$0xf]
      %v2905 = vld [vmem:[%s245 + $0x74] sm:$0xf]
      %v2906 = vld [vmem:[%s245 + $0x78] sm:$0xf]
      %v2907 = vld [vmem:[%s245 + $0x7c] sm:$0xf]
      %v2908 = vld [vmem:[%s245 + $0x80] sm:$0xf]
      %v2909 = vld [vmem:[%s245 + $0x84] sm:$0xf]
      %v2910 = vld [vmem:[%s245 + $0x88] sm:$0xf]
      %v2911 = vld [vmem:[%s245 + $0x8c] sm:$0xf]
      %v2912 = vld [vmem:[%s245 + $0x90] sm:$0xf]
      %v2913 = vld [vmem:[%s245 + $0x94] sm:$0xf]
      %v2914 = vld [vmem:[%s245 + $0x98] sm:$0xf]
      %v2915 = vld [vmem:[%s245 + $0x9c] sm:$0xf]
      %v2916 = vld [vmem:[%s245 + $0xa0] sm:$0xf]
      %v2917 = vld [vmem:[%s245 + $0xa4] sm:$0xf]
      %v2918 = vld [vmem:[%s245 + $0xa8] sm:$0x1]
      %v2919 = vld [vmem:[%s245 + $0x18] sm:$0xe]
      %v2920 = vld [vmem:[%s245 + $0xa8] sm:$0x3]
      %v2958 = vunpack.c.l.b16 %v2882
      %v2959 = vunpack.c.l.b16 %v2883
      %v2960 = vunpack.c.l.b16 %v2884
      %v2961 = vunpack.c.l.b16 %v2885
      %v2962 = vunpack.c.l.b16 %v2886
      %v2963 = vunpack.c.l.b16 %v2887
      %v2964 = vunpack.c.l.b16 %v2888
      %v2965 = vunpack.c.l.b16 %v2889
      %v2966 = vunpack.c.l.b16 %v2890
      %v2967 = vunpack.c.l.b16 %v2891
      %v2968 = vunpack.c.l.b16 %v2892
      %v2969 = vunpack.c.l.b16 %v2893
      %v2970 = vunpack.c.l.b16 %v2894
      %v2971 = vunpack.c.l.b16 %v2895
      %v2972 = vunpack.c.l.b16 %v2896
      %v2973 = vunpack.c.l.b16 %v2897
      %v2974 = vunpack.c.l.b16 %v2898
      %v2975 = vunpack.c.l.b16 %v2899
      %v2976 = vunpack.c.l.b16 %v2900
      %v2977 = vunpack.c.l.b16 %v2901
      %v2978 = vunpack.c.l.b16 %v2902
      %v2979 = vunpack.c.l.b16 %v2903
      %v2980 = vunpack.c.l.b16 %v2904
      %v2981 = vunpack.c.l.b16 %v2905
      %v2982 = vunpack.c.l.b16 %v2906
      %v2983 = vunpack.c.l.b16 %v2907
      %v2984 = vunpack.c.l.b16 %v2908
      %v2985 = vunpack.c.l.b16 %v2909
      %v2986 = vunpack.c.l.b16 %v2910
      %v2987 = vunpack.c.l.b16 %v2911
      %v2988 = vunpack.c.l.b16 %v2912
      %v2989 = vunpack.c.l.b16 %v2913
      %v2990 = vunpack.c.l.b16 %v2914
      %v2991 = vunpack.c.l.b16 %v2915
      %v2992 = vunpack.c.l.b16 %v2916
      %v2993 = vunpack.c.l.b16 %v2917
      %v2994 = vunpack.c.l.b16 %v2918
      %v2995 = vpack.c.b16 %v2959, %v2958
      %v2996 = vpack.c.b16 %v2961, %v2960
      %v2997 = vpack.c.b16 %v2963, %v2962
      %v2998 = vpack.c.b16 %v2965, %v2964
      %v2999 = vpack.c.b16 %v2967, %v2966
      %v3000 = vpack.c.b16 %v2969, %v2968
      %v3001 = vpack.c.b16 %v2971, %v2970
      %v3002 = vpack.c.b16 %v2973, %v2972
      %v3003 = vpack.c.b16 %v2975, %v2974
      %v3004 = vpack.c.b16 %v2977, %v2976
      %v3005 = vpack.c.b16 %v2979, %v2978
      %v3006 = vpack.c.b16 %v2981, %v2980
      %v3007 = vpack.c.b16 %v2983, %v2982
      %v3008 = vpack.c.b16 %v2985, %v2984
      %v3009 = vpack.c.b16 %v2987, %v2986
      %v3010 = vpack.c.b16 %v2989, %v2988
      %v3011 = vpack.c.b16 %v2991, %v2990
      %v3012 = vpack.c.b16 %v2993, %v2992
      %v3013 = vpack.c.b16 %v2994, %v2994
      %v3015 = vunpack.c.l.b16 %v2919
      %v3016 = vpack.c.b16 %v2959, %v3015
      %v3018 = vshrl.u32 %v3016, 16
      %v3020 = vshll.u32 %v3016, 16
      %v3022 = vrot.slane %v3020, 1
      %v3023 = vor.u32 %v3018, %v3022
      %v3025 = vshll.u32 %v2996, 16
      %v3027 = vrot.slane %v3025, 1
      %v3028 = vsel %vm402, %v3023, %v3027
      %v3029 = vshrl.u32 %v2996, 16
      %v3031 = vor.u32 %v3029, %v3027
      %v3033 = vshll.u32 %v2997, 16
      %v3035 = vrot.slane %v3033, 1
      %v3036 = vsel %vm402, %v3031, %v3035
      %v3037 = vshrl.u32 %v2997, 16
      %v3039 = vor.u32 %v3037, %v3035
      %v3041 = vshll.u32 %v2998, 16
      %v3043 = vrot.slane %v3041, 1
      %v3044 = vsel %vm402, %v3039, %v3043
      %v3045 = vshrl.u32 %v2998, 16
      %v3047 = vor.u32 %v3045, %v3043
      %v3049 = vshll.u32 %v2999, 16
      %v3051 = vrot.slane %v3049, 1
      %v3052 = vsel %vm402, %v3047, %v3051
      %v3053 = vshrl.u32 %v2999, 16
      %v3055 = vor.u32 %v3053, %v3051
      %v3057 = vshll.u32 %v3000, 16
      %v3059 = vrot.slane %v3057, 1
      %v3060 = vsel %vm402, %v3055, %v3059
      %v3061 = vshrl.u32 %v3000, 16
      %v3063 = vor.u32 %v3061, %v3059
      %v3065 = vshll.u32 %v3001, 16
      %v3067 = vrot.slane %v3065, 1
      %v3068 = vsel %vm402, %v3063, %v3067
      %v3069 = vshrl.u32 %v3001, 16
      %v3071 = vor.u32 %v3069, %v3067
      %v3073 = vshll.u32 %v3002, 16
      %v3075 = vrot.slane %v3073, 1
      %v3076 = vsel %vm402, %v3071, %v3075
      %v3077 = vshrl.u32 %v3002, 16
      %v3079 = vor.u32 %v3077, %v3075
      %v3081 = vshll.u32 %v3003, 16
      %v3083 = vrot.slane %v3081, 1
      %v3084 = vsel %vm402, %v3079, %v3083
      %v3085 = vshrl.u32 %v3003, 16
      %v3087 = vor.u32 %v3085, %v3083
      %v3089 = vshll.u32 %v3004, 16
      %v3091 = vrot.slane %v3089, 1
      %v3092 = vsel %vm402, %v3087, %v3091
      %v3093 = vshrl.u32 %v3004, 16
      %v3095 = vor.u32 %v3093, %v3091
      %v3097 = vshll.u32 %v3005, 16
      %v3099 = vrot.slane %v3097, 1
      %v3100 = vsel %vm402, %v3095, %v3099
      %v3101 = vshrl.u32 %v3005, 16
      %v3103 = vor.u32 %v3101, %v3099
      %v3105 = vshll.u32 %v3006, 16
      %v3107 = vrot.slane %v3105, 1
      %v3108 = vsel %vm402, %v3103, %v3107
      %v3109 = vshrl.u32 %v3006, 16
      %v3111 = vor.u32 %v3109, %v3107
      %v3113 = vshll.u32 %v3007, 16
      %v3115 = vrot.slane %v3113, 1
      %v3116 = vsel %vm402, %v3111, %v3115
      %v3117 = vshrl.u32 %v3007, 16
      %v3119 = vor.u32 %v3117, %v3115
      %v3121 = vshll.u32 %v3008, 16
      %v3123 = vrot.slane %v3121, 1
      %v3124 = vsel %vm402, %v3119, %v3123
      %v3125 = vshrl.u32 %v3008, 16
      %v3127 = vor.u32 %v3125, %v3123
      %v3129 = vshll.u32 %v3009, 16
      %v3131 = vrot.slane %v3129, 1
      %v3132 = vsel %vm402, %v3127, %v3131
      %v3133 = vshrl.u32 %v3009, 16
      %v3135 = vor.u32 %v3133, %v3131
      %v3137 = vshll.u32 %v3010, 16
      %v3139 = vrot.slane %v3137, 1
      %v3140 = vsel %vm402, %v3135, %v3139
      %v3141 = vshrl.u32 %v3010, 16
      %v3143 = vor.u32 %v3141, %v3139
      %v3145 = vshll.u32 %v3011, 16
      %v3147 = vrot.slane %v3145, 1
      %v3148 = vsel %vm402, %v3143, %v3147
      %v3149 = vshrl.u32 %v3011, 16
      %v3151 = vor.u32 %v3149, %v3147
      %v3153 = vshll.u32 %v3012, 16
      %v3155 = vrot.slane %v3153, 1
      %v3156 = vsel %vm402, %v3151, %v3155
      %v3157 = vshrl.u32 %v3012, 16
      %v3159 = vor.u32 %v3157, %v3155
      %v3161 = vshll.u32 %v3013, 16
      %v3163 = vrot.slane %v3161, 1
      %v3164 = vsel %vm402, %v3159, %v3163
      %v3165 = vshrl.u32 %v3013, 16
      %v3168 = vunpack.c.l.b16 %v2920
      %v3169 = vpack.c.b16 %v3168, %v3168
      %v3170 = vrot.slane %v3016, 1
      %v3171 = vrot.slane %v2996, 1
      %v3172 = vsel %vm557, %v3170, %v3171
      %v3173 = vrot.slane %v2997, 1
      %v3174 = vsel %vm557, %v3171, %v3173
      %v3175 = vrot.slane %v2998, 1
      %v3176 = vsel %vm557, %v3173, %v3175
      %v3177 = vrot.slane %v2999, 1
      %v3178 = vsel %vm557, %v3175, %v3177
      %v3179 = vrot.slane %v3000, 1
      %v3180 = vsel %vm557, %v3177, %v3179
      %v3181 = vrot.slane %v3001, 1
      %v3182 = vsel %vm557, %v3179, %v3181
      %v3183 = vrot.slane %v3002, 1
      %v3184 = vsel %vm557, %v3181, %v3183
      %v3185 = vrot.slane %v3003, 1
      %v3186 = vsel %vm557, %v3183, %v3185
      %v3187 = vrot.slane %v3004, 1
      %v3188 = vsel %vm557, %v3185, %v3187
      %v3189 = vrot.slane %v3005, 1
      %v3190 = vsel %vm557, %v3187, %v3189
      %v3191 = vrot.slane %v3006, 1
      %v3192 = vsel %vm557, %v3189, %v3191
      %v3193 = vrot.slane %v3007, 1
      %v3194 = vsel %vm557, %v3191, %v3193
      %v3195 = vrot.slane %v3008, 1
      %v3196 = vsel %vm557, %v3193, %v3195
      %v3197 = vrot.slane %v3009, 1
      %v3198 = vsel %vm557, %v3195, %v3197
      %v3199 = vrot.slane %v3010, 1
      %v3200 = vsel %vm557, %v3197, %v3199
      %v3201 = vrot.slane %v3011, 1
      %v3202 = vsel %vm557, %v3199, %v3201
      %v3203 = vrot.slane %v3012, 1
      %v3204 = vsel %vm557, %v3201, %v3203
      %v3205 = vrot.slane %v3169, 1
      %v3206 = vsel %vm557, %v3203, %v3205
      %s3207 = scalar_lea.vmem %s249, 384
      %v3208 = vld [vmem:[%s3207] sm:$0xf]
      %v3209 = vld [vmem:[%s3207 + $0x4] sm:$0xf]
      %v3210 = vld [vmem:[%s3207 + $0x8] sm:$0xf]
      %v3211 = vld [vmem:[%s3207 + $0xc] sm:$0xf]
      %v3212 = vld [vmem:[%s3207 + $0x10] sm:$0xf]
      %v3213 = vld [vmem:[%s3207 + $0x14] sm:$0xf]
      %v3214 = vld [vmem:[%s3207 + $0x18] sm:$0xf]
      %v3215 = vld [vmem:[%s3207 + $0x1c] sm:$0xf]
      %v3216 = vld [vmem:[%s3207 + $0x20] sm:$0xf]
      %v3217 = vld [vmem:[%s3207 + $0x24] sm:$0xf]
      %v3218 = vld [vmem:[%s3207 + $0x28] sm:$0xf]
      %v3219 = vld [vmem:[%s3207 + $0x2c] sm:$0xf]
      %v3220 = vld [vmem:[%s3207 + $0x30] sm:$0xf]
      %v3221 = vld [vmem:[%s3207 + $0x34] sm:$0xf]
      %v3222 = vld [vmem:[%s3207 + $0x38] sm:$0xf]
      %v3223 = vld [vmem:[%s3207 + $0x3c] sm:$0xf]
      %v3224 = vld [vmem:[%s3207 + $0x40] sm:$0xf]
      %v3225 = vld [vmem:[%s3207 + $0x44] sm:$0xf]
      %v3226 = vld [vmem:[%s3207 + $0x48] sm:$0xf]
      %v3227 = vld [vmem:[%s3207 + $0x4c] sm:$0xf]
      %v3228 = vld [vmem:[%s3207 + $0x50] sm:$0xf]
      %v3229 = vld [vmem:[%s3207 + $0x54] sm:$0xf]
      %v3230 = vld [vmem:[%s3207 + $0x58] sm:$0xf]
      %v3231 = vld [vmem:[%s3207 + $0x5c] sm:$0xf]
      %v3232 = vld [vmem:[%s3207 + $0x60] sm:$0xf]
      %v3233 = vld [vmem:[%s3207 + $0x64] sm:$0xf]
      %v3234 = vld [vmem:[%s3207 + $0x68] sm:$0xf]
      %v3235 = vld [vmem:[%s3207 + $0x6c] sm:$0xf]
      %v3236 = vld [vmem:[%s3207 + $0x70] sm:$0xf]
      %v3237 = vld [vmem:[%s3207 + $0x74] sm:$0xf]
      %v3238 = vld [vmem:[%s3207 + $0x78] sm:$0xf]
      %v3239 = vld [vmem:[%s3207 + $0x7c] sm:$0xf]
      %v3240 = vld [vmem:[%s3207 + $0x80] sm:$0xf]
      %v3241 = vld [vmem:[%s3207 + $0x84] sm:$0xf]
      %v3242 = vld [vmem:[%s3207 + $0x88] sm:$0xf]
      %v3243 = vld [vmem:[%s3207 + $0x8c] sm:$0xf]
      %v3244 = vld [vmem:[%s3207 + $0x90] sm:$0xf]
      %v3245 = vld [vmem:[%s3207 + $0x94] sm:$0xf]
      %v3246 = vld [vmem:[%s3207 + $0x98] sm:$0xf]
      %v3247 = vld [vmem:[%s3207 + $0x9c] sm:$0xf]
      %v3248 = vld [vmem:[%s3207 + $0xa0] sm:$0xf]
      %v3249 = vld [vmem:[%s3207 + $0xa4] sm:$0xf]
      %v3250 = vld [vmem:[%s3207 + $0xa8] sm:$0xf]
      %v3251 = vld [vmem:[%s3207 + $0xac] sm:$0xf]
      %v3252 = vld [vmem:[%s3207 + $0xb0] sm:$0xf]
      %v3253 = vld [vmem:[%s3207 + $0xb4] sm:$0xf]
      %v3254 = vld [vmem:[%s3207 + $0xb8] sm:$0xf]
      %v3255 = vld [vmem:[%s3207 + $0xbc] sm:$0xf]
      %v3257 = vshrl.u32 %v2995, 16
      %v3259 = vshll.u32 %v2995, 16
      %v3261 = vrot.slane %v3259, 1
      %v3262 = vor.u32 %v3257, %v3261
      %v3263 = vsel %vm402, %v3262, %v3027
      %v3265 = vshrl.u32 %v3028, 16
      %v3267 = vshll.u32 %v3028, 16
      %v3269 = vrot.slane %v3267, 1
      %v3270 = vor.u32 %v3265, %v3269
      %v3272 = vshll.u32 %v3036, 16
      %v3274 = vrot.slane %v3272, 1
      %v3275 = vsel %vm402, %v3270, %v3274
      %v3277 = vshrl.u32 %v3172, 16
      %v3279 = vshll.u32 %v3172, 16
      %v3281 = vrot.slane %v3279, 1
      %v3282 = vor.u32 %v3277, %v3281
      %v3284 = vshll.u32 %v3174, 16
      %v3286 = vrot.slane %v3284, 1
      %v3287 = vsel %vm402, %v3282, %v3286
      %v3288 = vshrl.u32 %v3036, 16
      %v3290 = vor.u32 %v3288, %v3274
      %v3292 = vshll.u32 %v3044, 16
      %v3294 = vrot.slane %v3292, 1
      %v3295 = vsel %vm402, %v3290, %v3294
      %v3296 = vshrl.u32 %v3174, 16
      %v3298 = vor.u32 %v3296, %v3286
      %v3300 = vshll.u32 %v3176, 16
      %v3302 = vrot.slane %v3300, 1
      %v3303 = vsel %vm402, %v3298, %v3302
      %v3304 = vshrl.u32 %v3044, 16
      %v3306 = vor.u32 %v3304, %v3294
      %v3308 = vshll.u32 %v3052, 16
      %v3310 = vrot.slane %v3308, 1
      %v3311 = vsel %vm402, %v3306, %v3310
      %v3312 = vshrl.u32 %v3176, 16
      %v3314 = vor.u32 %v3312, %v3302
      %v3316 = vshll.u32 %v3178, 16
      %v3318 = vrot.slane %v3316, 1
      %v3319 = vsel %vm402, %v3314, %v3318
      %v3320 = vshrl.u32 %v3052, 16
      %v3322 = vor.u32 %v3320, %v3310
      %v3324 = vshll.u32 %v3060, 16
      %v3326 = vrot.slane %v3324, 1
      %v3327 = vsel %vm402, %v3322, %v3326
      %v3328 = vshrl.u32 %v3178, 16
      %v3330 = vor.u32 %v3328, %v3318
      %v3332 = vshll.u32 %v3180, 16
      %v3334 = vrot.slane %v3332, 1
      %v3335 = vsel %vm402, %v3330, %v3334
      %v3336 = vshrl.u32 %v3060, 16
      %v3338 = vor.u32 %v3336, %v3326
      %v3340 = vshll.u32 %v3068, 16
      %v3342 = vrot.slane %v3340, 1
      %v3343 = vsel %vm402, %v3338, %v3342
      %v3344 = vshrl.u32 %v3180, 16
      %v3346 = vor.u32 %v3344, %v3334
      %v3348 = vshll.u32 %v3182, 16
      %v3350 = vrot.slane %v3348, 1
      %v3351 = vsel %vm402, %v3346, %v3350
      %v3352 = vshrl.u32 %v3068, 16
      %v3354 = vor.u32 %v3352, %v3342
      %v3356 = vshll.u32 %v3076, 16
      %v3358 = vrot.slane %v3356, 1
      %v3359 = vsel %vm402, %v3354, %v3358
      %v3360 = vshrl.u32 %v3182, 16
      %v3362 = vor.u32 %v3360, %v3350
      %v3364 = vshll.u32 %v3184, 16
      %v3366 = vrot.slane %v3364, 1
      %v3367 = vsel %vm402, %v3362, %v3366
      %v3368 = vshrl.u32 %v3076, 16
      %v3370 = vor.u32 %v3368, %v3358
      %v3372 = vshll.u32 %v3084, 16
      %v3374 = vrot.slane %v3372, 1
      %v3375 = vsel %vm402, %v3370, %v3374
      %v3376 = vshrl.u32 %v3184, 16
      %v3378 = vor.u32 %v3376, %v3366
      %v3380 = vshll.u32 %v3186, 16
      %v3382 = vrot.slane %v3380, 1
      %v3383 = vsel %vm402, %v3378, %v3382
      %v3384 = vshrl.u32 %v3084, 16
      %v3386 = vor.u32 %v3384, %v3374
      %v3388 = vshll.u32 %v3092, 16
      %v3390 = vrot.slane %v3388, 1
      %v3391 = vsel %vm402, %v3386, %v3390
      %v3392 = vshrl.u32 %v3186, 16
      %v3394 = vor.u32 %v3392, %v3382
      %v3396 = vshll.u32 %v3188, 16
      %v3398 = vrot.slane %v3396, 1
      %v3399 = vsel %vm402, %v3394, %v3398
      %v3400 = vshrl.u32 %v3092, 16
      %v3402 = vor.u32 %v3400, %v3390
      %v3404 = vshll.u32 %v3100, 16
      %v3406 = vrot.slane %v3404, 1
      %v3407 = vsel %vm402, %v3402, %v3406
      %v3408 = vshrl.u32 %v3188, 16
      %v3410 = vor.u32 %v3408, %v3398
      %v3412 = vshll.u32 %v3190, 16
      %v3414 = vrot.slane %v3412, 1
      %v3415 = vsel %vm402, %v3410, %v3414
      %v3416 = vshrl.u32 %v3100, 16
      %v3418 = vor.u32 %v3416, %v3406
      %v3420 = vshll.u32 %v3108, 16
      %v3422 = vrot.slane %v3420, 1
      %v3423 = vsel %vm402, %v3418, %v3422
      %v3424 = vshrl.u32 %v3190, 16
      %v3426 = vor.u32 %v3424, %v3414
      %v3428 = vshll.u32 %v3192, 16
      %v3430 = vrot.slane %v3428, 1
      %v3431 = vsel %vm402, %v3426, %v3430
      %v3432 = vshrl.u32 %v3108, 16
      %v3434 = vor.u32 %v3432, %v3422
      %v3436 = vshll.u32 %v3116, 16
      %v3438 = vrot.slane %v3436, 1
      %v3439 = vsel %vm402, %v3434, %v3438
      %v3440 = vshrl.u32 %v3192, 16
      %v3442 = vor.u32 %v3440, %v3430
      %v3444 = vshll.u32 %v3194, 16
      %v3446 = vrot.slane %v3444, 1
      %v3447 = vsel %vm402, %v3442, %v3446
      %v3448 = vshrl.u32 %v3116, 16
      %v3450 = vor.u32 %v3448, %v3438
      %v3452 = vshll.u32 %v3124, 16
      %v3454 = vrot.slane %v3452, 1
      %v3455 = vsel %vm402, %v3450, %v3454
      %v3456 = vshrl.u32 %v3194, 16
      %v3458 = vor.u32 %v3456, %v3446
      %v3460 = vshll.u32 %v3196, 16
      %v3462 = vrot.slane %v3460, 1
      %v3463 = vsel %vm402, %v3458, %v3462
      %v3464 = vshrl.u32 %v3124, 16
      %v3466 = vor.u32 %v3464, %v3454
      %v3468 = vshll.u32 %v3132, 16
      %v3470 = vrot.slane %v3468, 1
      %v3471 = vsel %vm402, %v3466, %v3470
      %v3472 = vshrl.u32 %v3196, 16
      %v3474 = vor.u32 %v3472, %v3462
      %v3476 = vshll.u32 %v3198, 16
      %v3478 = vrot.slane %v3476, 1
      %v3479 = vsel %vm402, %v3474, %v3478
      %v3480 = vshrl.u32 %v3132, 16
      %v3482 = vor.u32 %v3480, %v3470
      %v3484 = vshll.u32 %v3140, 16
      %v3486 = vrot.slane %v3484, 1
      %v3487 = vsel %vm402, %v3482, %v3486
      %v3488 = vshrl.u32 %v3198, 16
      %v3490 = vor.u32 %v3488, %v3478
      %v3492 = vshll.u32 %v3200, 16
      %v3494 = vrot.slane %v3492, 1
      %v3495 = vsel %vm402, %v3490, %v3494
      %v3496 = vshrl.u32 %v3140, 16
      %v3498 = vor.u32 %v3496, %v3486
      %v3500 = vshll.u32 %v3148, 16
      %v3502 = vrot.slane %v3500, 1
      %v3503 = vsel %vm402, %v3498, %v3502
      %v3504 = vshrl.u32 %v3200, 16
      %v3506 = vor.u32 %v3504, %v3494
      %v3508 = vshll.u32 %v3202, 16
      %v3510 = vrot.slane %v3508, 1
      %v3511 = vsel %vm402, %v3506, %v3510
      %v3512 = vshrl.u32 %v3148, 16
      %v3514 = vor.u32 %v3512, %v3502
      %v3516 = vshll.u32 %v3156, 16
      %v3518 = vrot.slane %v3516, 1
      %v3519 = vsel %vm402, %v3514, %v3518
      %v3520 = vshrl.u32 %v3202, 16
      %v3522 = vor.u32 %v3520, %v3510
      %v3524 = vshll.u32 %v3204, 16
      %v3526 = vrot.slane %v3524, 1
      %v3527 = vsel %vm402, %v3522, %v3526
      %v3528 = vshrl.u32 %v3156, 16
      %v3530 = vor.u32 %v3528, %v3518
      %v3532 = vshll.u32 %v3164, 16
      %v3534 = vrot.slane %v3532, 1
      %v3535 = vsel %vm402, %v3530, %v3534
      %v3536 = vshrl.u32 %v3204, 16
      %v3538 = vor.u32 %v3536, %v3526
      %v3540 = vshll.u32 %v3206, 16
      %v3542 = vrot.slane %v3540, 1
      %v3543 = vsel %vm402, %v3538, %v3542
      %v3544 = vshrl.u32 %v3164, 16
      %v3546 = vor.u32 %v3544, %v3534
      %v3548 = vshll.u32 %v3165, 16
      %v3550 = vrot.slane %v3548, 1
      %v3551 = vsel %vm402, %v3546, %v3550
      %v3552 = vshrl.u32 %v3206, 16
      %v3554 = vor.u32 %v3552, %v3542
      %v3556 = vshll.u32 %v3205, 16
      %v3558 = vrot.slane %v3556, 1
      %v3559 = vsel %vm402, %v3554, %v3558
      %v3662 = vunpack.c.l.b16 %v3208
      %v3663 = vunpack.c.l.b16 %v3209
      %v3664 = vunpack.c.l.b16 %v3210
      %v3665 = vunpack.c.l.b16 %v3211
      %v3666 = vunpack.c.l.b16 %v3212
      %v3667 = vunpack.c.l.b16 %v3213
      %v3668 = vunpack.c.l.b16 %v3214
      %v3669 = vunpack.c.l.b16 %v3215
      %v3670 = vunpack.c.l.b16 %v3216
      %v3671 = vunpack.c.l.b16 %v3217
      %v3672 = vunpack.c.l.b16 %v3218
      %v3673 = vunpack.c.l.b16 %v3219
      %v3674 = vunpack.c.l.b16 %v3220
      %v3675 = vunpack.c.l.b16 %v3221
      %v3676 = vunpack.c.l.b16 %v3222
      %v3677 = vunpack.c.l.b16 %v3223
      %v3678 = vunpack.c.l.b16 %v3224
      %v3679 = vunpack.c.l.b16 %v3225
      %v3680 = vunpack.c.l.b16 %v3226
      %v3681 = vunpack.c.l.b16 %v3227
      %v3682 = vunpack.c.l.b16 %v3228
      %v3683 = vunpack.c.l.b16 %v3229
      %v3684 = vunpack.c.l.b16 %v3230
      %v3685 = vunpack.c.l.b16 %v3231
      %v3686 = vunpack.c.l.b16 %v3232
      %v3687 = vunpack.c.l.b16 %v3233
      %v3688 = vunpack.c.l.b16 %v3234
      %v3689 = vunpack.c.l.b16 %v3235
      %v3690 = vunpack.c.l.b16 %v3236
      %v3691 = vunpack.c.l.b16 %v3237
      %v3692 = vunpack.c.l.b16 %v3238
      %v3693 = vunpack.c.l.b16 %v3239
      %v3694 = vunpack.c.l.b16 %v3240
      %v3695 = vunpack.c.l.b16 %v3241
      %v3696 = vunpack.c.l.b16 %v3242
      %v3697 = vunpack.c.l.b16 %v3243
      %v3698 = vunpack.c.l.b16 %v3244
      %v3699 = vunpack.c.l.b16 %v3245
      %v3700 = vunpack.c.l.b16 %v3246
      %v3701 = vunpack.c.l.b16 %v3247
      %v3702 = vunpack.c.l.b16 %v3248
      %v3703 = vunpack.c.l.b16 %v3249
      %v3704 = vunpack.c.l.b16 %v3250
      %v3705 = vunpack.c.l.b16 %v3251
      %v3706 = vunpack.c.l.b16 %v3252
      %v3707 = vunpack.c.l.b16 %v3253
      %v3708 = vunpack.c.l.b16 %v3254
      %v3709 = vunpack.c.l.b16 %v3255
      %v3710 = vpack.c.b16 %v3663, %v3662
      %v3711 = vpack.c.b16 %v3665, %v3664
      %v3712 = vpack.c.b16 %v3667, %v3666
      %v3713 = vpack.c.b16 %v3669, %v3668
      %v3714 = vpack.c.b16 %v3671, %v3670
      %v3715 = vpack.c.b16 %v3673, %v3672
      %v3716 = vpack.c.b16 %v3675, %v3674
      %v3717 = vpack.c.b16 %v3677, %v3676
      %v3718 = vpack.c.b16 %v3679, %v3678
      %v3719 = vpack.c.b16 %v3681, %v3680
      %v3720 = vpack.c.b16 %v3683, %v3682
      %v3721 = vpack.c.b16 %v3685, %v3684
      %v3722 = vpack.c.b16 %v3687, %v3686
      %v3723 = vpack.c.b16 %v3689, %v3688
      %v3724 = vpack.c.b16 %v3691, %v3690
      %v3725 = vpack.c.b16 %v3693, %v3692
      %v3726 = vpack.c.b16 %v3695, %v3694
      %v3727 = vpack.c.b16 %v3697, %v3696
      %v3728 = vpack.c.b16 %v3699, %v3698
      %v3729 = vpack.c.b16 %v3701, %v3700
      %v3730 = vpack.c.b16 %v3703, %v3702
      %v3731 = vpack.c.b16 %v3705, %v3704
      %v3732 = vpack.c.b16 %v3707, %v3706
      %v3733 = vpack.c.b16 %v3709, %v3708
      %3758 = vmatprep.subr.bf16.mxu0 0
      %3759 = vmatpush1.bf16.msra.mxu0 %v3717
      %3760 = vmatprep.subr.bf16.mxu0 0
      %3761 = vmatpush1.bf16.msra.mxu0 %v3716
      %3762 = vmatprep.subr.bf16.mxu0 0
      %3763 = vmatpush1.bf16.msra.mxu0 %v3715
      %3764 = vmatprep.subr.bf16.mxu0 0
      %3765 = vmatpush1.bf16.msra.mxu0 %v3714
      %3766 = vmatprep.subr.bf16.mxu0 0
      %3767 = vmatpush1.bf16.msra.mxu0 %v3713
      %3768 = vmatprep.subr.bf16.mxu0 0
      %3769 = vmatpush1.bf16.msra.mxu0 %v3712
      %3770 = vmatprep.subr.bf16.mxu0 0
      %3771 = vmatpush1.bf16.msra.mxu0 %v3711
      %3772 = vmatprep.subr.bf16.mxu0 0
      %3773 = vmatpush1.bf16.msra.mxu0 %v3710
      %3774 = vmatprep.subr.bf16.mxu0 0
      %3775 = vmatpush2.bf16.msra.mxu0 %v3725
      %3776 = vmatprep.subr.bf16.mxu0 0
      %3777 = vmatpush2.bf16.msra.mxu0 %v3724
      %3778 = vmatprep.subr.bf16.mxu0 0
      %3779 = vmatpush2.bf16.msra.mxu0 %v3723
      %3780 = vmatprep.subr.bf16.mxu0 0
      %3781 = vmatpush2.bf16.msra.mxu0 %v3722
      %3782 = vmatprep.subr.bf16.mxu0 0
      %3783 = vmatpush2.bf16.msra.mxu0 %v3721
      %3784 = vmatprep.subr.bf16.mxu0 0
      %3785 = vmatpush2.bf16.msra.mxu0 %v3720
      %3786 = vmatprep.subr.bf16.mxu0 0
      %3787 = vmatpush2.bf16.msra.mxu0 %v3719
      %3788 = vmatprep.subr.bf16.mxu0 0
      %3789 = vmatpush2.bf16.msra.mxu0 %v3718
      %3790 = vmatprep.mubr.bf16.mxu0 %v3275
      %3791 = vmatmul.mubr.bf16.gmra.mxu0 %v3263
      %v3792 = vpop.f32.mrf.mxu0
      %v3793 = vadd.f32 0.0, %v3792
      %v3794 = vpop.f32.mrf.mxu0
      %v3795 = vpop.f32.mrf.mxu0
      %v3796 = vadd.f32 0.0, %v3795
      %v3797 = vpop.f32.mrf.mxu0
      %3798 = vmatprep.mubr.bf16.mxu0 %v3295
      %3799 = vmatmul.mubr.bf16.gmra.mxu0 %v3036
      %v3800 = vpop.f32.mrf.mxu0
      %v3801 = vadd.f32 0.0, %v3800
      %v3802 = vpop.f32.mrf.mxu0
      %v3803 = vpop.f32.mrf.mxu0
      %v3804 = vadd.f32 0.0, %v3803
      %v3805 = vpop.f32.mrf.mxu0
      %3806 = vmatprep.mubr.bf16.mxu0 %v3311
      %3807 = vmatmul.mubr.bf16.gmra.mxu0 %v3044
      %v3808 = vpop.f32.mrf.mxu0
      %v3809 = vadd.f32 0.0, %v3808
      %v3810 = vpop.f32.mrf.mxu0
      %v3811 = vpop.f32.mrf.mxu0
      %v3812 = vadd.f32 0.0, %v3811
      %v3813 = vpop.f32.mrf.mxu0
      %3814 = vmatprep.mubr.bf16.mxu0 %v3327
      %3815 = vmatmul.mubr.bf16.gmra.mxu0 %v3052
      %v3816 = vpop.f32.mrf.mxu0
      %v3817 = vadd.f32 0.0, %v3816
      %v3818 = vpop.f32.mrf.mxu0
      %v3819 = vpop.f32.mrf.mxu0
      %v3820 = vadd.f32 0.0, %v3819
      %v3821 = vpop.f32.mrf.mxu0
      %3822 = vmatprep.mubr.bf16.mxu0 %v3343
      %3823 = vmatmul.mubr.bf16.gmra.mxu0 %v3060
      %v3824 = vpop.f32.mrf.mxu0
      %v3825 = vadd.f32 0.0, %v3824
      %v3826 = vpop.f32.mrf.mxu0
      %v3827 = vpop.f32.mrf.mxu0
      %v3828 = vadd.f32 0.0, %v3827
      %v3829 = vpop.f32.mrf.mxu0
      %3830 = vmatprep.mubr.bf16.mxu0 %v3359
      %3831 = vmatmul.mubr.bf16.gmra.mxu0 %v3068
      %v3832 = vpop.f32.mrf.mxu0
      %v3833 = vadd.f32 0.0, %v3832
      %v3834 = vpop.f32.mrf.mxu0
      %v3835 = vpop.f32.mrf.mxu0
      %v3836 = vadd.f32 0.0, %v3835
      %v3837 = vpop.f32.mrf.mxu0
      %3838 = vmatprep.mubr.bf16.mxu0 %v3375
      %3839 = vmatmul.mubr.bf16.gmra.mxu0 %v3076
      %v3840 = vpop.f32.mrf.mxu0
      %v3841 = vadd.f32 0.0, %v3840
      %v3842 = vpop.f32.mrf.mxu0
      %v3843 = vpop.f32.mrf.mxu0
      %v3844 = vadd.f32 0.0, %v3843
      %v3845 = vpop.f32.mrf.mxu0
      %3846 = vmatprep.mubr.bf16.mxu0 %v3391
      %3847 = vmatmul.mubr.bf16.gmra.mxu0 %v3084
      %v3848 = vpop.f32.mrf.mxu0
      %v3849 = vadd.f32 0.0, %v3848
      %v3850 = vpop.f32.mrf.mxu0
      %v3851 = vpop.f32.mrf.mxu0
      %v3852 = vadd.f32 0.0, %v3851
      %v3853 = vpop.f32.mrf.mxu0
      %3854 = vmatprep.mubr.bf16.mxu0 %v3407
      %3855 = vmatmul.mubr.bf16.gmra.mxu0 %v3092
      %v3856 = vpop.f32.mrf.mxu0
      %v3857 = vadd.f32 0.0, %v3856
      %v3858 = vpop.f32.mrf.mxu0
      %v3859 = vpop.f32.mrf.mxu0
      %v3860 = vadd.f32 0.0, %v3859
      %v3861 = vpop.f32.mrf.mxu0
      %3862 = vmatprep.mubr.bf16.mxu0 %v3423
      %3863 = vmatmul.mubr.bf16.gmra.mxu0 %v3100
      %v3864 = vpop.f32.mrf.mxu0
      %v3865 = vadd.f32 0.0, %v3864
      %v3866 = vpop.f32.mrf.mxu0
      %v3867 = vpop.f32.mrf.mxu0
      %v3868 = vadd.f32 0.0, %v3867
      %v3869 = vpop.f32.mrf.mxu0
      %3870 = vmatprep.mubr.bf16.mxu0 %v3439
      %3871 = vmatmul.mubr.bf16.gmra.mxu0 %v3108
      %v3872 = vpop.f32.mrf.mxu0
      %v3873 = vadd.f32 0.0, %v3872
      %v3874 = vpop.f32.mrf.mxu0
      %v3875 = vpop.f32.mrf.mxu0
      %v3876 = vadd.f32 0.0, %v3875
      %v3877 = vpop.f32.mrf.mxu0
      %3878 = vmatprep.mubr.bf16.mxu0 %v3455
      %3879 = vmatmul.mubr.bf16.gmra.mxu0 %v3116
      %v3880 = vpop.f32.mrf.mxu0
      %v3881 = vadd.f32 0.0, %v3880
      %v3882 = vpop.f32.mrf.mxu0
      %v3883 = vpop.f32.mrf.mxu0
      %v3884 = vadd.f32 0.0, %v3883
      %v3885 = vpop.f32.mrf.mxu0
      %3886 = vmatprep.mubr.bf16.mxu0 %v3471
      %3887 = vmatmul.mubr.bf16.gmra.mxu0 %v3124
      %v3888 = vpop.f32.mrf.mxu0
      %v3889 = vadd.f32 0.0, %v3888
      %v3890 = vpop.f32.mrf.mxu0
      %v3891 = vpop.f32.mrf.mxu0
      %v3892 = vadd.f32 0.0, %v3891
      %v3893 = vpop.f32.mrf.mxu0
      %3894 = vmatprep.mubr.bf16.mxu0 %v3487
      %3895 = vmatmul.mubr.bf16.gmra.mxu0 %v3132
      %v3896 = vpop.f32.mrf.mxu0
      %v3897 = vadd.f32 0.0, %v3896
      %v3898 = vpop.f32.mrf.mxu0
      %v3899 = vpop.f32.mrf.mxu0
      %v3900 = vadd.f32 0.0, %v3899
      %v3901 = vpop.f32.mrf.mxu0
      %3902 = vmatprep.mubr.bf16.mxu0 %v3503
      %3903 = vmatmul.mubr.bf16.gmra.mxu0 %v3140
      %v3904 = vpop.f32.mrf.mxu0
      %v3905 = vadd.f32 0.0, %v3904
      %v3906 = vpop.f32.mrf.mxu0
      %v3907 = vpop.f32.mrf.mxu0
      %v3908 = vadd.f32 0.0, %v3907
      %v3909 = vpop.f32.mrf.mxu0
      %3910 = vmatprep.mubr.bf16.mxu0 %v3519
      %3911 = vmatmul.mubr.bf16.gmra.mxu0 %v3148
      %v3912 = vpop.f32.mrf.mxu0
      %v3913 = vadd.f32 0.0, %v3912
      %v3914 = vpop.f32.mrf.mxu0
      %v3915 = vpop.f32.mrf.mxu0
      %v3916 = vadd.f32 0.0, %v3915
      %v3917 = vpop.f32.mrf.mxu0
      %3918 = vmatprep.mubr.bf16.mxu0 %v3535
      %3919 = vmatmul.mubr.bf16.gmra.mxu0 %v3156
      %v3920 = vpop.f32.mrf.mxu0
      %v3921 = vadd.f32 0.0, %v3920
      %v3922 = vpop.f32.mrf.mxu0
      %v3923 = vpop.f32.mrf.mxu0
      %v3924 = vadd.f32 0.0, %v3923
      %v3925 = vpop.f32.mrf.mxu0
      %3926 = vmatprep.mubr.bf16.mxu0 %v3551
      %3927 = vmatmul.mubr.bf16.gmra.mxu0 %v3164
      %v3928 = vpop.f32.mrf.mxu0
      %v3929 = vadd.f32 0.0, %v3928
      %v3930 = vpop.f32.mrf.mxu0
      %v3931 = vpop.f32.mrf.mxu0
      %v3932 = vadd.f32 0.0, %v3931
      %v3933 = vpop.f32.mrf.mxu0
      %3934 = vdwg.mxu0
      %3935 = vmatprep.subr.bf16.mxu0 0
      %3936 = vmatpush1.bf16.msra.mxu0 %v3733
      %3937 = vmatprep.subr.bf16.mxu0 0
      %3938 = vmatpush1.bf16.msra.mxu0 %v3732
      %3939 = vmatprep.subr.bf16.mxu0 0
      %3940 = vmatpush1.bf16.msra.mxu0 %v3731
      %3941 = vmatprep.subr.bf16.mxu0 0
      %3942 = vmatpush1.bf16.msra.mxu0 %v3730
      %3943 = vmatprep.subr.bf16.mxu0 0
      %3944 = vmatpush1.bf16.msra.mxu0 %v3729
      %3945 = vmatprep.subr.bf16.mxu0 0
      %3946 = vmatpush1.bf16.msra.mxu0 %v3728
      %3947 = vmatprep.subr.bf16.mxu0 0
      %3948 = vmatpush1.bf16.msra.mxu0 %v3727
      %3949 = vmatprep.subr.bf16.mxu0 0
      %3950 = vmatpush1.bf16.msra.mxu0 %v3726
      %3951 = vmatprep.subr.bf16.mxu0 0
      %3952 = vmatpush2.bf16.msra.mxu0 0
      %3953 = vmatprep.subr.bf16.mxu0 0
      %3954 = vmatpush2.bf16.msra.mxu0 0
      %3955 = vmatprep.subr.bf16.mxu0 0
      %3956 = vmatpush2.bf16.msra.mxu0 0
      %3957 = vmatprep.subr.bf16.mxu0 0
      %3958 = vmatpush2.bf16.msra.mxu0 0
      %3959 = vmatprep.subr.bf16.mxu0 0
      %3960 = vmatpush2.bf16.msra.mxu0 0
      %3961 = vmatprep.subr.bf16.mxu0 0
      %3962 = vmatpush2.bf16.msra.mxu0 0
      %3963 = vmatprep.subr.bf16.mxu0 0
      %3964 = vmatpush2.bf16.msra.mxu0 0
      %3965 = vmatprep.subr.bf16.mxu0 0
      %3966 = vmatpush2.bf16.msra.mxu0 0
      %3967 = vmatprep.mubr.bf16.mxu0 0
      %3968 = vmatmul.mubr.bf16.gmra.mxu0 %v3287
      %v3969 = vpop.f32.mrf.mxu0
      %v3970 = vadd.f32 %v3793, %v3969
      %v3971 = vpop.f32.mrf.mxu0
      %v3972 = vpop.f32.mrf.mxu0
      %v3973 = vadd.f32 %v3796, %v3972
      %v3974 = vpop.f32.mrf.mxu0
      %3975 = vmatprep.mubr.bf16.mxu0 0
      %3976 = vmatmul.mubr.bf16.gmra.mxu0 %v3303
      %v3977 = vpop.f32.mrf.mxu0
      %v3978 = vadd.f32 %v3801, %v3977
      %v3979 = vpop.f32.mrf.mxu0
      %v3980 = vpop.f32.mrf.mxu0
      %v3981 = vadd.f32 %v3804, %v3980
      %v3982 = vpop.f32.mrf.mxu0
      %3983 = vmatprep.mubr.bf16.mxu0 0
      %3984 = vmatmul.mubr.bf16.gmra.mxu0 %v3319
      %v3985 = vpop.f32.mrf.mxu0
      %v3986 = vadd.f32 %v3809, %v3985
      %v3987 = vpop.f32.mrf.mxu0
      %v3988 = vpop.f32.mrf.mxu0
      %v3989 = vadd.f32 %v3812, %v3988
      %v3990 = vpop.f32.mrf.mxu0
      %3991 = vmatprep.mubr.bf16.mxu0 0
      %3992 = vmatmul.mubr.bf16.gmra.mxu0 %v3335
      %v3993 = vpop.f32.mrf.mxu0
      %v3994 = vadd.f32 %v3817, %v3993
      %v3995 = vpop.f32.mrf.mxu0
      %v3996 = vpop.f32.mrf.mxu0
      %v3997 = vadd.f32 %v3820, %v3996
      %v3998 = vpop.f32.mrf.mxu0
      %3999 = vmatprep.mubr.bf16.mxu0 0
      %4000 = vmatmul.mubr.bf16.gmra.mxu0 %v3351
      %v4001 = vpop.f32.mrf.mxu0
      %v4002 = vadd.f32 %v3825, %v4001
      %v4003 = vpop.f32.mrf.mxu0
      %v4004 = vpop.f32.mrf.mxu0
      %v4005 = vadd.f32 %v3828, %v4004
      %v4006 = vpop.f32.mrf.mxu0
      %4007 = vmatprep.mubr.bf16.mxu0 0
      %4008 = vmatmul.mubr.bf16.gmra.mxu0 %v3367
      %v4009 = vpop.f32.mrf.mxu0
      %v4010 = vadd.f32 %v3833, %v4009
      %v4011 = vpop.f32.mrf.mxu0
      %v4012 = vpop.f32.mrf.mxu0
      %v4013 = vadd.f32 %v3836, %v4012
      %v4014 = vpop.f32.mrf.mxu0
      %4015 = vmatprep.mubr.bf16.mxu0 0
      %4016 = vmatmul.mubr.bf16.gmra.mxu0 %v3383
      %v4017 = vpop.f32.mrf.mxu0
      %v4018 = vadd.f32 %v3841, %v4017
      %v4019 = vpop.f32.mrf.mxu0
      %v4020 = vpop.f32.mrf.mxu0
      %v4021 = vadd.f32 %v3844, %v4020
      %v4022 = vpop.f32.mrf.mxu0
      %4023 = vmatprep.mubr.bf16.mxu0 0
      %4024 = vmatmul.mubr.bf16.gmra.mxu0 %v3399
      %v4025 = vpop.f32.mrf.mxu0
      %v4026 = vadd.f32 %v3849, %v4025
      %v4027 = vpop.f32.mrf.mxu0
      %v4028 = vpop.f32.mrf.mxu0
      %v4029 = vadd.f32 %v3852, %v4028
      %v4030 = vpop.f32.mrf.mxu0
      %4031 = vmatprep.mubr.bf16.mxu0 0
      %4032 = vmatmul.mubr.bf16.gmra.mxu0 %v3415
      %v4033 = vpop.f32.mrf.mxu0
      %v4034 = vadd.f32 %v3857, %v4033
      %v4035 = vpop.f32.mrf.mxu0
      %v4036 = vpop.f32.mrf.mxu0
      %v4037 = vadd.f32 %v3860, %v4036
      %v4038 = vpop.f32.mrf.mxu0
      %4039 = vmatprep.mubr.bf16.mxu0 0
      %4040 = vmatmul.mubr.bf16.gmra.mxu0 %v3431
      %v4041 = vpop.f32.mrf.mxu0
      %v4042 = vadd.f32 %v3865, %v4041
      %v4043 = vpop.f32.mrf.mxu0
      %v4044 = vpop.f32.mrf.mxu0
      %v4045 = vadd.f32 %v3868, %v4044
      %v4046 = vpop.f32.mrf.mxu0
      %4047 = vmatprep.mubr.bf16.mxu0 0
      %4048 = vmatmul.mubr.bf16.gmra.mxu0 %v3447
      %v4049 = vpop.f32.mrf.mxu0
      %v4050 = vadd.f32 %v3873, %v4049
      %v4051 = vpop.f32.mrf.mxu0
      %v4052 = vpop.f32.mrf.mxu0
      %v4053 = vadd.f32 %v3876, %v4052
      %v4054 = vpop.f32.mrf.mxu0
      %4055 = vmatprep.mubr.bf16.mxu0 0
      %4056 = vmatmul.mubr.bf16.gmra.mxu0 %v3463
      %v4057 = vpop.f32.mrf.mxu0
      %v4058 = vadd.f32 %v3881, %v4057
      %v4059 = vpop.f32.mrf.mxu0
      %v4060 = vpop.f32.mrf.mxu0
      %v4061 = vadd.f32 %v3884, %v4060
      %v4062 = vpop.f32.mrf.mxu0
      %4063 = vmatprep.mubr.bf16.mxu0 0
      %4064 = vmatmul.mubr.bf16.gmra.mxu0 %v3479
      %v4065 = vpop.f32.mrf.mxu0
      %v4066 = vadd.f32 %v3889, %v4065
      %v4067 = vpop.f32.mrf.mxu0
      %v4068 = vpop.f32.mrf.mxu0
      %v4069 = vadd.f32 %v3892, %v4068
      %v4070 = vpop.f32.mrf.mxu0
      %4071 = vmatprep.mubr.bf16.mxu0 0
      %4072 = vmatmul.mubr.bf16.gmra.mxu0 %v3495
      %v4073 = vpop.f32.mrf.mxu0
      %v4074 = vadd.f32 %v3897, %v4073
      %v4075 = vpop.f32.mrf.mxu0
      %v4076 = vpop.f32.mrf.mxu0
      %v4077 = vadd.f32 %v3900, %v4076
      %v4078 = vpop.f32.mrf.mxu0
      %4079 = vmatprep.mubr.bf16.mxu0 0
      %4080 = vmatmul.mubr.bf16.gmra.mxu0 %v3511
      %v4081 = vpop.f32.mrf.mxu0
      %v4082 = vadd.f32 %v3905, %v4081
      %v4083 = vpop.f32.mrf.mxu0
      %v4084 = vpop.f32.mrf.mxu0
      %v4085 = vadd.f32 %v3908, %v4084
      %v4086 = vpop.f32.mrf.mxu0
      %4087 = vmatprep.mubr.bf16.mxu0 0
      %4088 = vmatmul.mubr.bf16.gmra.mxu0 %v3527
      %v4089 = vpop.f32.mrf.mxu0
      %v4090 = vadd.f32 %v3913, %v4089
      %v4091 = vpop.f32.mrf.mxu0
      %v4092 = vpop.f32.mrf.mxu0
      %v4093 = vadd.f32 %v3916, %v4092
      %v4094 = vpop.f32.mrf.mxu0
      %4095 = vmatprep.mubr.bf16.mxu0 0
      %4096 = vmatmul.mubr.bf16.gmra.mxu0 %v3543
      %v4097 = vpop.f32.mrf.mxu0
      %v4098 = vadd.f32 %v3921, %v4097
      %v4099 = vpop.f32.mrf.mxu0
      %v4100 = vpop.f32.mrf.mxu0
      %v4101 = vadd.f32 %v3924, %v4100
      %v4102 = vpop.f32.mrf.mxu0
      %4103 = vmatprep.mubr.bf16.mxu0 0
      %4104 = vmatmul.mubr.bf16.gmra.mxu0 %v3559
      %v4105 = vpop.f32.mrf.mxu0
      %v4106 = vadd.f32 %v3929, %v4105
      %v4107 = vpop.f32.mrf.mxu0
      %v4108 = vpop.f32.mrf.mxu0
      %v4109 = vadd.f32 %v3932, %v4108
      %v4110 = vpop.f32.mrf.mxu0
      %4111 = vdwg.mxu0
      %v4112 = vadd.f32 %v2740, %v3970
      %v4113 = vadd.f32 %v2743, %v3973
      %v4114 = vadd.f32 %v2748, %v3978
      %v4115 = vadd.f32 %v2751, %v3981
      %v4116 = vadd.f32 %v2756, %v3986
      %v4117 = vadd.f32 %v2759, %v3989
      %v4118 = vadd.f32 %v2764, %v3994
      %v4119 = vadd.f32 %v2767, %v3997
      %v4120 = vadd.f32 %v2772, %v4002
      %v4121 = vadd.f32 %v2775, %v4005
      %v4122 = vadd.f32 %v2780, %v4010
      %v4123 = vadd.f32 %v2783, %v4013
      %v4124 = vadd.f32 %v2788, %v4018
      %v4125 = vadd.f32 %v2791, %v4021
      %v4126 = vadd.f32 %v2796, %v4026
      %v4127 = vadd.f32 %v2799, %v4029
      %v4128 = vadd.f32 %v2804, %v4034
      %v4129 = vadd.f32 %v2807, %v4037
      %v4130 = vadd.f32 %v2812, %v4042
      %v4131 = vadd.f32 %v2815, %v4045
      %v4132 = vadd.f32 %v2820, %v4050
      %v4133 = vadd.f32 %v2823, %v4053
      %v4134 = vadd.f32 %v2828, %v4058
      %v4135 = vadd.f32 %v2831, %v4061
      %v4136 = vadd.f32 %v2836, %v4066
      %v4137 = vadd.f32 %v2839, %v4069
      %v4138 = vadd.f32 %v2844, %v4074
      %v4139 = vadd.f32 %v2847, %v4077
      %v4140 = vadd.f32 %v2852, %v4082
      %v4141 = vadd.f32 %v2855, %v4085
      %v4142 = vadd.f32 %v2860, %v4090
      %v4143 = vadd.f32 %v2863, %v4093
      %v4144 = vadd.f32 %v2868, %v4098
      %v4145 = vadd.f32 %v2871, %v4101
      %v4146 = vadd.f32 %v2876, %v4106
      %v4147 = vadd.f32 %v2879, %v4109
      %v4148 = vld [vmem:[%s2] sm:$0xff]
      %v4149 = vld [vmem:[%s2 + $0x8] sm:$0xff]
      %v4150 = vld [vmem:[%s2 + $0x10] sm:$0xff]
      %v4151 = vld [vmem:[%s2 + $0x18] sm:$0xff]
      %v4152 = vld [vmem:[%s2 + $0x20] sm:$0xff]
      %v4153 = vld [vmem:[%s2 + $0x28] sm:$0xff]
      %v4154 = vld [vmem:[%s2 + $0x30] sm:$0xff]
      %v4155 = vld [vmem:[%s2 + $0x38] sm:$0xff]
      %v4156 = vld [vmem:[%s2 + $0x40] sm:$0xff]
      %v4157 = vld [vmem:[%s2 + $0x48] sm:$0xff]
      %v4158 = vld [vmem:[%s2 + $0x50] sm:$0xff]
      %v4159 = vld [vmem:[%s2 + $0x58] sm:$0xff]
      %v4160 = vld [vmem:[%s2 + $0x60] sm:$0xff]
      %v4161 = vld [vmem:[%s2 + $0x68] sm:$0xff]
      %v4162 = vld [vmem:[%s2 + $0x70] sm:$0xff]
      %v4163 = vld [vmem:[%s2 + $0x78] sm:$0xff]
      %v4164 = vld [vmem:[%s2 + $0x80] sm:$0xff]
      %v4165 = vld [vmem:[%s2 + $0x88] sm:$0xff]
      %v4166 = vld [vmem:[%s2 + $0x90] sm:$0xff]
      %v4167 = vld [vmem:[%s2 + $0x98] sm:$0xff]
      %v4168 = vld [vmem:[%s2 + $0xa0] sm:$0xff]
      %v4169 = vld [vmem:[%s2 + $0xa8] sm:$0xff]
      %v4170 = vld [vmem:[%s2 + $0xb0] sm:$0xff]
      %v4171 = vld [vmem:[%s2 + $0xb8] sm:$0xff]
      %v4172 = vld [vmem:[%s2 + $0xc0] sm:$0xff]
      %v4173 = vld [vmem:[%s2 + $0xc8] sm:$0xff]
      %v4174 = vld [vmem:[%s2 + $0xd0] sm:$0xff]
      %v4175 = vld [vmem:[%s2 + $0xd8] sm:$0xff]
      %v4176 = vld [vmem:[%s2 + $0xe0] sm:$0xff]
      %v4177 = vld [vmem:[%s2 + $0xe8] sm:$0xff]
      %v4178 = vld [vmem:[%s2 + $0xf0] sm:$0xff]
      %v4179 = vld [vmem:[%s2 + $0xf8] sm:$0xff]
      %v4180 = vld [vmem:[%s2 + $0x100] sm:$0xff]
      %v4181 = vld [vmem:[%s2 + $0x108] sm:$0xff]
      %v4182 = vld [vmem:[%s2 + $0x110] sm:$0xff]
      %v4183 = vld [vmem:[%s2 + $0x118] sm:$0xff]
      %4185 = vset.pattern.permute.xlu0 0
      %4186 = vperm.xlu0 %4185, %v4148
      %v4187 = vpop.permute.xlu0 %4186
      %4190 = vset.pattern.permute.xlu0 0
      %4191 = vperm.xlu0 %4190, %v4149
      %v4192 = vpop.permute.xlu0 %4191
      %4195 = vset.pattern.permute.xlu0 0
      %4196 = vperm.xlu0 %4195, %v4150
      %v4197 = vpop.permute.xlu0 %4196
      %4200 = vset.pattern.permute.xlu0 0
      %4201 = vperm.xlu0 %4200, %v4151
      %v4202 = vpop.permute.xlu0 %4201
      %4205 = vset.pattern.permute.xlu0 0
      %4206 = vperm.xlu0 %4205, %v4152
      %v4207 = vpop.permute.xlu0 %4206
      %4210 = vset.pattern.permute.xlu0 0
      %4211 = vperm.xlu0 %4210, %v4153
      %v4212 = vpop.permute.xlu0 %4211
      %4215 = vset.pattern.permute.xlu0 0
      %4216 = vperm.xlu0 %4215, %v4154
      %v4217 = vpop.permute.xlu0 %4216
      %4220 = vset.pattern.permute.xlu0 0
      %4221 = vperm.xlu0 %4220, %v4155
      %v4222 = vpop.permute.xlu0 %4221
      %4225 = vset.pattern.permute.xlu0 0
      %4226 = vperm.xlu0 %4225, %v4156
      %v4227 = vpop.permute.xlu0 %4226
      %4230 = vset.pattern.permute.xlu0 0
      %4231 = vperm.xlu0 %4230, %v4157
      %v4232 = vpop.permute.xlu0 %4231
      %4235 = vset.pattern.permute.xlu0 0
      %4236 = vperm.xlu0 %4235, %v4158
      %v4237 = vpop.permute.xlu0 %4236
      %4240 = vset.pattern.permute.xlu0 0
      %4241 = vperm.xlu0 %4240, %v4159
      %v4242 = vpop.permute.xlu0 %4241
      %4245 = vset.pattern.permute.xlu0 0
      %4246 = vperm.xlu0 %4245, %v4160
      %v4247 = vpop.permute.xlu0 %4246
      %4250 = vset.pattern.permute.xlu0 0
      %4251 = vperm.xlu0 %4250, %v4161
      %v4252 = vpop.permute.xlu0 %4251
      %4255 = vset.pattern.permute.xlu0 0
      %4256 = vperm.xlu0 %4255, %v4162
      %v4257 = vpop.permute.xlu0 %4256
      %4260 = vset.pattern.permute.xlu0 0
      %4261 = vperm.xlu0 %4260, %v4163
      %v4262 = vpop.permute.xlu0 %4261
      %4265 = vset.pattern.permute.xlu0 0
      %4266 = vperm.xlu0 %4265, %v4164
      %v4267 = vpop.permute.xlu0 %4266
      %4270 = vset.pattern.permute.xlu0 0
      %4271 = vperm.xlu0 %4270, %v4165
      %v4272 = vpop.permute.xlu0 %4271
      %4275 = vset.pattern.permute.xlu0 0
      %4276 = vperm.xlu0 %4275, %v4166
      %v4277 = vpop.permute.xlu0 %4276
      %4280 = vset.pattern.permute.xlu0 0
      %4281 = vperm.xlu0 %4280, %v4167
      %v4282 = vpop.permute.xlu0 %4281
      %4285 = vset.pattern.permute.xlu0 0
      %4286 = vperm.xlu0 %4285, %v4168
      %v4287 = vpop.permute.xlu0 %4286
      %4290 = vset.pattern.permute.xlu0 0
      %4291 = vperm.xlu0 %4290, %v4169
      %v4292 = vpop.permute.xlu0 %4291
      %4295 = vset.pattern.permute.xlu0 0
      %4296 = vperm.xlu0 %4295, %v4170
      %v4297 = vpop.permute.xlu0 %4296
      %4300 = vset.pattern.permute.xlu0 0
      %4301 = vperm.xlu0 %4300, %v4171
      %v4302 = vpop.permute.xlu0 %4301
      %4305 = vset.pattern.permute.xlu0 0
      %4306 = vperm.xlu0 %4305, %v4172
      %v4307 = vpop.permute.xlu0 %4306
      %4310 = vset.pattern.permute.xlu0 0
      %4311 = vperm.xlu0 %4310, %v4173
      %v4312 = vpop.permute.xlu0 %4311
      %4315 = vset.pattern.permute.xlu0 0
      %4316 = vperm.xlu0 %4315, %v4174
      %v4317 = vpop.permute.xlu0 %4316
      %4320 = vset.pattern.permute.xlu0 0
      %4321 = vperm.xlu0 %4320, %v4175
      %v4322 = vpop.permute.xlu0 %4321
      %4325 = vset.pattern.permute.xlu0 0
      %4326 = vperm.xlu0 %4325, %v4176
      %v4327 = vpop.permute.xlu0 %4326
      %4330 = vset.pattern.permute.xlu0 0
      %4331 = vperm.xlu0 %4330, %v4177
      %v4332 = vpop.permute.xlu0 %4331
      %4335 = vset.pattern.permute.xlu0 0
      %4336 = vperm.xlu0 %4335, %v4178
      %v4337 = vpop.permute.xlu0 %4336
      %4340 = vset.pattern.permute.xlu0 0
      %4341 = vperm.xlu0 %4340, %v4179
      %v4342 = vpop.permute.xlu0 %4341
      %4345 = vset.pattern.permute.xlu0 0
      %4346 = vperm.xlu0 %4345, %v4180
      %v4347 = vpop.permute.xlu0 %4346
      %4350 = vset.pattern.permute.xlu0 0
      %4351 = vperm.xlu0 %4350, %v4181
      %v4352 = vpop.permute.xlu0 %4351
      %4355 = vset.pattern.permute.xlu0 0
      %4356 = vperm.xlu0 %4355, %v4182
      %v4357 = vpop.permute.xlu0 %4356
      %4360 = vset.pattern.permute.xlu0 0
      %4361 = vperm.xlu0 %4360, %v4183
      %v4362 = vpop.permute.xlu0 %4361
      %v4364 = vmul.f32 %v4112, %v4187
      %v4365 = vmul.f32 %v4113, %v4192
      %v4366 = vmul.f32 %v4114, %v4197
      %v4367 = vmul.f32 %v4115, %v4202
      %v4368 = vmul.f32 %v4116, %v4207
      %v4369 = vmul.f32 %v4117, %v4212
      %v4370 = vmul.f32 %v4118, %v4217
      %v4371 = vmul.f32 %v4119, %v4222
      %v4372 = vmul.f32 %v4120, %v4227
      %v4373 = vmul.f32 %v4121, %v4232
      %v4374 = vmul.f32 %v4122, %v4237
      %v4375 = vmul.f32 %v4123, %v4242
      %v4376 = vmul.f32 %v4124, %v4247
      %v4377 = vmul.f32 %v4125, %v4252
      %v4378 = vmul.f32 %v4126, %v4257
      %v4379 = vmul.f32 %v4127, %v4262
      %v4380 = vmul.f32 %v4128, %v4267
      %v4381 = vmul.f32 %v4129, %v4272
      %v4382 = vmul.f32 %v4130, %v4277
      %v4383 = vmul.f32 %v4131, %v4282
      %v4384 = vmul.f32 %v4132, %v4287
      %v4385 = vmul.f32 %v4133, %v4292
      %v4386 = vmul.f32 %v4134, %v4297
      %v4387 = vmul.f32 %v4135, %v4302
      %v4388 = vmul.f32 %v4136, %v4307
      %v4389 = vmul.f32 %v4137, %v4312
      %v4390 = vmul.f32 %v4138, %v4317
      %v4391 = vmul.f32 %v4139, %v4322
      %v4392 = vmul.f32 %v4140, %v4327
      %v4393 = vmul.f32 %v4141, %v4332
      %v4394 = vmul.f32 %v4142, %v4337
      %v4395 = vmul.f32 %v4143, %v4342
      %v4396 = vmul.f32 %v4144, %v4347
      %v4397 = vmul.f32 %v4145, %v4352
      %v4398 = vmul.f32 %v4146, %v4357
      %v4399 = vmul.f32 %v4147, %v4362
      %v4400 = vadd.f32 %v4364, %v4365
      %v4401 = vadd.f32 %v4400, %v4366
      %v4402 = vadd.f32 %v4401, %v4367
      %v4403 = vadd.f32 %v4402, %v4368
      %v4404 = vadd.f32 %v4403, %v4369
      %v4405 = vadd.f32 %v4404, %v4370
      %v4406 = vadd.f32 %v4405, %v4371
      %v4407 = vadd.f32 %v4406, %v4372
      %v4408 = vadd.f32 %v4407, %v4373
      %v4409 = vadd.f32 %v4408, %v4374
      %v4410 = vadd.f32 %v4409, %v4375
      %v4411 = vadd.f32 %v4410, %v4376
      %v4412 = vadd.f32 %v4411, %v4377
      %v4413 = vadd.f32 %v4412, %v4378
      %v4414 = vadd.f32 %v4413, %v4379
      %v4415 = vadd.f32 %v4414, %v4380
      %v4416 = vadd.f32 %v4415, %v4381
      %v4417 = vadd.f32 %v4416, %v4382
      %v4418 = vadd.f32 %v4417, %v4383
      %v4419 = vadd.f32 %v4418, %v4384
      %v4420 = vadd.f32 %v4419, %v4385
      %v4421 = vadd.f32 %v4420, %v4386
      %v4422 = vadd.f32 %v4421, %v4387
      %v4423 = vadd.f32 %v4422, %v4388
      %v4424 = vadd.f32 %v4423, %v4389
      %v4425 = vadd.f32 %v4424, %v4390
      %v4426 = vadd.f32 %v4425, %v4391
      %v4427 = vadd.f32 %v4426, %v4392
      %v4428 = vadd.f32 %v4427, %v4393
      %v4429 = vadd.f32 %v4428, %v4394
      %v4430 = vadd.f32 %v4429, %v4395
      %v4431 = vadd.f32 %v4430, %v4396
      %v4432 = vadd.f32 %v4431, %v4397
      %v4433 = vadd.f32 %v4432, %v4398
      %v4434 = vadd.f32 %v4433, %v4399
      %v4435 = vrot.slane %v4434, 4
      %v4436 = vadd.f32 %v4434, %v4435
      %v4437 = vrot.slane %v4436, 2
      %v4438 = vadd.f32 %v4436, %v4437
      %v4439 = vrot.slane %v4438, 1
      %v4440 = vadd.f32 %v4438, %v4439
      %v4441 = vmul.f32 %v4440, 0.00390625
      %v4442 = vsub.f32 %v4112, %v4441
      %v4443 = vsub.f32 %v4113, %v4441
      %v4444 = vsub.f32 %v4114, %v4441
      %v4445 = vsub.f32 %v4115, %v4441
      %v4446 = vsub.f32 %v4116, %v4441
      %v4447 = vsub.f32 %v4117, %v4441
      %v4448 = vsub.f32 %v4118, %v4441
      %v4449 = vsub.f32 %v4119, %v4441
      %v4450 = vsub.f32 %v4120, %v4441
      %v4451 = vsub.f32 %v4121, %v4441
      %v4452 = vsub.f32 %v4122, %v4441
      %v4453 = vsub.f32 %v4123, %v4441
      %v4454 = vsub.f32 %v4124, %v4441
      %v4455 = vsub.f32 %v4125, %v4441
      %v4456 = vsub.f32 %v4126, %v4441
      %v4457 = vsub.f32 %v4127, %v4441
      %v4458 = vsub.f32 %v4128, %v4441
      %v4459 = vsub.f32 %v4129, %v4441
      %v4460 = vsub.f32 %v4130, %v4441
      %v4461 = vsub.f32 %v4131, %v4441
      %v4462 = vsub.f32 %v4132, %v4441
      %v4463 = vsub.f32 %v4133, %v4441
      %v4464 = vsub.f32 %v4134, %v4441
      %v4465 = vsub.f32 %v4135, %v4441
      %v4466 = vsub.f32 %v4136, %v4441
      %v4467 = vsub.f32 %v4137, %v4441
      %v4468 = vsub.f32 %v4138, %v4441
      %v4469 = vsub.f32 %v4139, %v4441
      %v4470 = vsub.f32 %v4140, %v4441
      %v4471 = vsub.f32 %v4141, %v4441
      %v4472 = vsub.f32 %v4142, %v4441
      %v4473 = vsub.f32 %v4143, %v4441
      %v4474 = vsub.f32 %v4144, %v4441
      %v4475 = vsub.f32 %v4145, %v4441
      %v4476 = vsub.f32 %v4146, %v4441
      %v4477 = vsub.f32 %v4147, %v4441
      %v4478 = vmul.f32 %v4442, %v4187
      %v4479 = vmul.f32 %v4443, %v4192
      %v4480 = vmul.f32 %v4444, %v4197
      %v4481 = vmul.f32 %v4445, %v4202
      %v4482 = vmul.f32 %v4446, %v4207
      %v4483 = vmul.f32 %v4447, %v4212
      %v4484 = vmul.f32 %v4448, %v4217
      %v4485 = vmul.f32 %v4449, %v4222
      %v4486 = vmul.f32 %v4450, %v4227
      %v4487 = vmul.f32 %v4451, %v4232
      %v4488 = vmul.f32 %v4452, %v4237
      %v4489 = vmul.f32 %v4453, %v4242
      %v4490 = vmul.f32 %v4454, %v4247
      %v4491 = vmul.f32 %v4455, %v4252
      %v4492 = vmul.f32 %v4456, %v4257
      %v4493 = vmul.f32 %v4457, %v4262
      %v4494 = vmul.f32 %v4458, %v4267
      %v4495 = vmul.f32 %v4459, %v4272
      %v4496 = vmul.f32 %v4460, %v4277
      %v4497 = vmul.f32 %v4461, %v4282
      %v4498 = vmul.f32 %v4462, %v4287
      %v4499 = vmul.f32 %v4463, %v4292
      %v4500 = vmul.f32 %v4464, %v4297
      %v4501 = vmul.f32 %v4465, %v4302
      %v4502 = vmul.f32 %v4466, %v4307
      %v4503 = vmul.f32 %v4467, %v4312
      %v4504 = vmul.f32 %v4468, %v4317
      %v4505 = vmul.f32 %v4469, %v4322
      %v4506 = vmul.f32 %v4470, %v4327
      %v4507 = vmul.f32 %v4471, %v4332
      %v4508 = vmul.f32 %v4472, %v4337
      %v4509 = vmul.f32 %v4473, %v4342
      %v4510 = vmul.f32 %v4474, %v4347
      %v4511 = vmul.f32 %v4475, %v4352
      %v4512 = vmul.f32 %v4476, %v4357
      %v4513 = vmul.f32 %v4477, %v4362
      %v4514 = vmul.f32 %v4478, %v4478
      %v4515 = vmul.f32 %v4479, %v4479
      %v4516 = vmul.f32 %v4480, %v4480
      %v4517 = vmul.f32 %v4481, %v4481
      %v4518 = vmul.f32 %v4482, %v4482
      %v4519 = vmul.f32 %v4483, %v4483
      %v4520 = vmul.f32 %v4484, %v4484
      %v4521 = vmul.f32 %v4485, %v4485
      %v4522 = vmul.f32 %v4486, %v4486
      %v4523 = vmul.f32 %v4487, %v4487
      %v4524 = vmul.f32 %v4488, %v4488
      %v4525 = vmul.f32 %v4489, %v4489
      %v4526 = vmul.f32 %v4490, %v4490
      %v4527 = vmul.f32 %v4491, %v4491
      %v4528 = vmul.f32 %v4492, %v4492
      %v4529 = vmul.f32 %v4493, %v4493
      %v4530 = vmul.f32 %v4494, %v4494
      %v4531 = vmul.f32 %v4495, %v4495
      %v4532 = vmul.f32 %v4496, %v4496
      %v4533 = vmul.f32 %v4497, %v4497
      %v4534 = vmul.f32 %v4498, %v4498
      %v4535 = vmul.f32 %v4499, %v4499
      %v4536 = vmul.f32 %v4500, %v4500
      %v4537 = vmul.f32 %v4501, %v4501
      %v4538 = vmul.f32 %v4502, %v4502
      %v4539 = vmul.f32 %v4503, %v4503
      %v4540 = vmul.f32 %v4504, %v4504
      %v4541 = vmul.f32 %v4505, %v4505
      %v4542 = vmul.f32 %v4506, %v4506
      %v4543 = vmul.f32 %v4507, %v4507
      %v4544 = vmul.f32 %v4508, %v4508
      %v4545 = vmul.f32 %v4509, %v4509
      %v4546 = vmul.f32 %v4510, %v4510
      %v4547 = vmul.f32 %v4511, %v4511
      %v4548 = vmul.f32 %v4512, %v4512
      %v4549 = vmul.f32 %v4513, %v4513
      %v4550 = vadd.f32 %v4514, %v4515
      %v4551 = vadd.f32 %v4550, %v4516
      %v4552 = vadd.f32 %v4551, %v4517
      %v4553 = vadd.f32 %v4552, %v4518
      %v4554 = vadd.f32 %v4553, %v4519
      %v4555 = vadd.f32 %v4554, %v4520
      %v4556 = vadd.f32 %v4555, %v4521
      %v4557 = vadd.f32 %v4556, %v4522
      %v4558 = vadd.f32 %v4557, %v4523
      %v4559 = vadd.f32 %v4558, %v4524
      %v4560 = vadd.f32 %v4559, %v4525
      %v4561 = vadd.f32 %v4560, %v4526
      %v4562 = vadd.f32 %v4561, %v4527
      %v4563 = vadd.f32 %v4562, %v4528
      %v4564 = vadd.f32 %v4563, %v4529
      %v4565 = vadd.f32 %v4564, %v4530
      %v4566 = vadd.f32 %v4565, %v4531
      %v4567 = vadd.f32 %v4566, %v4532
      %v4568 = vadd.f32 %v4567, %v4533
      %v4569 = vadd.f32 %v4568, %v4534
      %v4570 = vadd.f32 %v4569, %v4535
      %v4571 = vadd.f32 %v4570, %v4536
      %v4572 = vadd.f32 %v4571, %v4537
      %v4573 = vadd.f32 %v4572, %v4538
      %v4574 = vadd.f32 %v4573, %v4539
      %v4575 = vadd.f32 %v4574, %v4540
      %v4576 = vadd.f32 %v4575, %v4541
      %v4577 = vadd.f32 %v4576, %v4542
      %v4578 = vadd.f32 %v4577, %v4543
      %v4579 = vadd.f32 %v4578, %v4544
      %v4580 = vadd.f32 %v4579, %v4545
      %v4581 = vadd.f32 %v4580, %v4546
      %v4582 = vadd.f32 %v4581, %v4547
      %v4583 = vadd.f32 %v4582, %v4548
      %v4584 = vadd.f32 %v4583, %v4549
      %v4585 = vrot.slane %v4584, 4
      %v4586 = vadd.f32 %v4584, %v4585
      %v4587 = vrot.slane %v4586, 2
      %v4588 = vadd.f32 %v4586, %v4587
      %v4589 = vrot.slane %v4588, 1
      %v4590 = vadd.f32 %v4588, %v4589
      %v4591 = vmul.f32 %v4590, 0.00390625
      %v4592 = vadd.f32 %v4591, 1e-05
      %v4593 = vrsqrt.pop %v4592
      %v4594 = vmul.f32 %v4442, %v4593
      %v4595 = vmul.f32 %v4443, %v4593
      %v4596 = vmul.f32 %v4444, %v4593
      %v4597 = vmul.f32 %v4445, %v4593
      %v4598 = vmul.f32 %v4446, %v4593
      %v4599 = vmul.f32 %v4447, %v4593
      %v4600 = vmul.f32 %v4448, %v4593
      %v4601 = vmul.f32 %v4449, %v4593
      %v4602 = vmul.f32 %v4450, %v4593
      %v4603 = vmul.f32 %v4451, %v4593
      %v4604 = vmul.f32 %v4452, %v4593
      %v4605 = vmul.f32 %v4453, %v4593
      %v4606 = vmul.f32 %v4454, %v4593
      %v4607 = vmul.f32 %v4455, %v4593
      %v4608 = vmul.f32 %v4456, %v4593
      %v4609 = vmul.f32 %v4457, %v4593
      %v4610 = vmul.f32 %v4458, %v4593
      %v4611 = vmul.f32 %v4459, %v4593
      %v4612 = vmul.f32 %v4460, %v4593
      %v4613 = vmul.f32 %v4461, %v4593
      %v4614 = vmul.f32 %v4462, %v4593
      %v4615 = vmul.f32 %v4463, %v4593
      %v4616 = vmul.f32 %v4464, %v4593
      %v4617 = vmul.f32 %v4465, %v4593
      %v4618 = vmul.f32 %v4466, %v4593
      %v4619 = vmul.f32 %v4467, %v4593
      %v4620 = vmul.f32 %v4468, %v4593
      %v4621 = vmul.f32 %v4469, %v4593
      %v4622 = vmul.f32 %v4470, %v4593
      %v4623 = vmul.f32 %v4471, %v4593
      %v4624 = vmul.f32 %v4472, %v4593
      %v4625 = vmul.f32 %v4473, %v4593
      %v4626 = vmul.f32 %v4474, %v4593
      %v4627 = vmul.f32 %v4475, %v4593
      %v4628 = vmul.f32 %v4476, %v4593
      %v4629 = vmul.f32 %v4477, %v4593
      %v4630 = vld [vmem:[%s257] sm:$0xf]
      %v4631 = vld [vmem:[%s257 + $0x4] sm:$0xf]
      %v4632 = vld [vmem:[%s257 + $0x8] sm:$0xf]
      %v4633 = vld [vmem:[%s257 + $0xc] sm:$0xf]
      %v4634 = vld [vmem:[%s257 + $0x10] sm:$0xf]
      %v4635 = vld [vmem:[%s257 + $0x14] sm:$0xf]
      %v4636 = vld [vmem:[%s257 + $0x18] sm:$0xf]
      %v4637 = vld [vmem:[%s257 + $0x1c] sm:$0xf]
      %v4638 = vld [vmem:[%s257 + $0x20] sm:$0xf]
      %v4639 = vld [vmem:[%s257 + $0x24] sm:$0xf]
      %v4640 = vld [vmem:[%s257 + $0x28] sm:$0xf]
      %v4641 = vld [vmem:[%s257 + $0x2c] sm:$0xf]
      %v4642 = vld [vmem:[%s257 + $0x30] sm:$0xf]
      %v4643 = vld [vmem:[%s257 + $0x34] sm:$0xf]
      %v4644 = vld [vmem:[%s257 + $0x38] sm:$0xf]
      %v4645 = vld [vmem:[%s257 + $0x3c] sm:$0xf]
      %v4646 = vld [vmem:[%s257 + $0x40] sm:$0xf]
      %v4647 = vld [vmem:[%s257 + $0x44] sm:$0xf]
      %v4648 = vld [vmem:[%s257 + $0x48] sm:$0xf]
      %v4649 = vld [vmem:[%s257 + $0x4c] sm:$0xf]
      %v4650 = vld [vmem:[%s257 + $0x50] sm:$0xf]
      %v4651 = vld [vmem:[%s257 + $0x54] sm:$0xf]
      %v4652 = vld [vmem:[%s257 + $0x58] sm:$0xf]
      %v4653 = vld [vmem:[%s257 + $0x5c] sm:$0xf]
      %v4654 = vld [vmem:[%s257 + $0x60] sm:$0xf]
      %v4655 = vld [vmem:[%s257 + $0x64] sm:$0xf]
      %v4656 = vld [vmem:[%s257 + $0x68] sm:$0xf]
      %v4657 = vld [vmem:[%s257 + $0x6c] sm:$0xf]
      %v4658 = vld [vmem:[%s257 + $0x70] sm:$0xf]
      %v4659 = vld [vmem:[%s257 + $0x74] sm:$0xf]
      %v4660 = vld [vmem:[%s257 + $0x78] sm:$0xf]
      %v4661 = vld [vmem:[%s257 + $0x7c] sm:$0xf]
      %v4662 = vld [vmem:[%s257 + $0x80] sm:$0xf]
      %v4663 = vld [vmem:[%s257 + $0x84] sm:$0xf]
      %v4664 = vld [vmem:[%s257 + $0x88] sm:$0xf]
      %v4665 = vld [vmem:[%s257 + $0x8c] sm:$0xf]
      %v4666 = vunpack.c.l.bf16 %v4630
      %v4667 = vunpack.c.l.bf16 %v4631
      %v4668 = vunpack.c.l.bf16 %v4632
      %v4669 = vunpack.c.l.bf16 %v4633
      %v4670 = vunpack.c.l.bf16 %v4634
      %v4671 = vunpack.c.l.bf16 %v4635
      %v4672 = vunpack.c.l.bf16 %v4636
      %v4673 = vunpack.c.l.bf16 %v4637
      %v4674 = vunpack.c.l.bf16 %v4638
      %v4675 = vunpack.c.l.bf16 %v4639
      %v4676 = vunpack.c.l.bf16 %v4640
      %v4677 = vunpack.c.l.bf16 %v4641
      %v4678 = vunpack.c.l.bf16 %v4642
      %v4679 = vunpack.c.l.bf16 %v4643
      %v4680 = vunpack.c.l.bf16 %v4644
      %v4681 = vunpack.c.l.bf16 %v4645
      %v4682 = vunpack.c.l.bf16 %v4646
      %v4683 = vunpack.c.l.bf16 %v4647
      %v4684 = vunpack.c.l.bf16 %v4648
      %v4685 = vunpack.c.l.bf16 %v4649
      %v4686 = vunpack.c.l.bf16 %v4650
      %v4687 = vunpack.c.l.bf16 %v4651
      %v4688 = vunpack.c.l.bf16 %v4652
      %v4689 = vunpack.c.l.bf16 %v4653
      %v4690 = vunpack.c.l.bf16 %v4654
      %v4691 = vunpack.c.l.bf16 %v4655
      %v4692 = vunpack.c.l.bf16 %v4656
      %v4693 = vunpack.c.l.bf16 %v4657
      %v4694 = vunpack.c.l.bf16 %v4658
      %v4695 = vunpack.c.l.bf16 %v4659
      %v4696 = vunpack.c.l.bf16 %v4660
      %v4697 = vunpack.c.l.bf16 %v4661
      %v4698 = vunpack.c.l.bf16 %v4662
      %v4699 = vunpack.c.l.bf16 %v4663
      %v4700 = vunpack.c.l.bf16 %v4664
      %v4701 = vunpack.c.l.bf16 %v4665
      %v4702 = vadd.f32 %v4594, %v4666
      %v4703 = vadd.f32 %v4595, %v4667
      %v4704 = vadd.f32 %v4596, %v4668
      %v4705 = vadd.f32 %v4597, %v4669
      %v4706 = vadd.f32 %v4598, %v4670
      %v4707 = vadd.f32 %v4599, %v4671
      %v4708 = vadd.f32 %v4600, %v4672
      %v4709 = vadd.f32 %v4601, %v4673
      %v4710 = vadd.f32 %v4602, %v4674
      %v4711 = vadd.f32 %v4603, %v4675
      %v4712 = vadd.f32 %v4604, %v4676
      %v4713 = vadd.f32 %v4605, %v4677
      %v4714 = vadd.f32 %v4606, %v4678
      %v4715 = vadd.f32 %v4607, %v4679
      %v4716 = vadd.f32 %v4608, %v4680
      %v4717 = vadd.f32 %v4609, %v4681
      %v4718 = vadd.f32 %v4610, %v4682
      %v4719 = vadd.f32 %v4611, %v4683
      %v4720 = vadd.f32 %v4612, %v4684
      %v4721 = vadd.f32 %v4613, %v4685
      %v4722 = vadd.f32 %v4614, %v4686
      %v4723 = vadd.f32 %v4615, %v4687
      %v4724 = vadd.f32 %v4616, %v4688
      %v4725 = vadd.f32 %v4617, %v4689
      %v4726 = vadd.f32 %v4618, %v4690
      %v4727 = vadd.f32 %v4619, %v4691
      %v4728 = vadd.f32 %v4620, %v4692
      %v4729 = vadd.f32 %v4621, %v4693
      %v4730 = vadd.f32 %v4622, %v4694
      %v4731 = vadd.f32 %v4623, %v4695
      %v4732 = vadd.f32 %v4624, %v4696
      %v4733 = vadd.f32 %v4625, %v4697
      %v4734 = vadd.f32 %v4626, %v4698
      %v4735 = vadd.f32 %v4627, %v4699
      %v4736 = vadd.f32 %v4628, %v4700
      %v4737 = vadd.f32 %v4629, %v4701
      %v4738 = vmax.f32 %v4702, 0.0
      %v4739 = vmax.f32 %v4703, 0.0
      %v4740 = vmax.f32 %v4704, 0.0
      %v4741 = vmax.f32 %v4705, 0.0
      %v4742 = vmax.f32 %v4706, 0.0
      %v4743 = vmax.f32 %v4707, 0.0
      %v4744 = vmax.f32 %v4708, 0.0
      %v4745 = vmax.f32 %v4709, 0.0
      %v4746 = vmax.f32 %v4710, 0.0
      %v4747 = vmax.f32 %v4711, 0.0
      %v4748 = vmax.f32 %v4712, 0.0
      %v4749 = vmax.f32 %v4713, 0.0
      %v4750 = vmax.f32 %v4714, 0.0
      %v4751 = vmax.f32 %v4715, 0.0
      %v4752 = vmax.f32 %v4716, 0.0
      %v4753 = vmax.f32 %v4717, 0.0
      %v4754 = vmax.f32 %v4718, 0.0
      %v4755 = vmax.f32 %v4719, 0.0
      %v4756 = vmax.f32 %v4720, 0.0
      %v4757 = vmax.f32 %v4721, 0.0
      %v4758 = vmax.f32 %v4722, 0.0
      %v4759 = vmax.f32 %v4723, 0.0
      %v4760 = vmax.f32 %v4724, 0.0
      %v4761 = vmax.f32 %v4725, 0.0
      %v4762 = vmax.f32 %v4726, 0.0
      %v4763 = vmax.f32 %v4727, 0.0
      %v4764 = vmax.f32 %v4728, 0.0
      %v4765 = vmax.f32 %v4729, 0.0
      %v4766 = vmax.f32 %v4730, 0.0
      %v4767 = vmax.f32 %v4731, 0.0
      %v4768 = vmax.f32 %v4732, 0.0
      %v4769 = vmax.f32 %v4733, 0.0
      %v4770 = vmax.f32 %v4734, 0.0
      %v4771 = vmax.f32 %v4735, 0.0
      %v4772 = vmax.f32 %v4736, 0.0
      %v4773 = vmax.f32 %v4737, 0.0
      %4774 = vst [vmem:[%s265] sm:$0xff] %v4738
      %4775 = vst [vmem:[%s265 + $0x8] sm:$0xff] %v4739
      %4776 = vst [vmem:[%s265 + $0x10] sm:$0xff] %v4740
      %4777 = vst [vmem:[%s265 + $0x18] sm:$0xff] %v4741
      %4778 = vst [vmem:[%s265 + $0x20] sm:$0xff] %v4742
      %4779 = vst [vmem:[%s265 + $0x28] sm:$0xff] %v4743
      %4780 = vst [vmem:[%s265 + $0x30] sm:$0xff] %v4744
      %4781 = vst [vmem:[%s265 + $0x38] sm:$0xff] %v4745
      %4782 = vst [vmem:[%s265 + $0x40] sm:$0xff] %v4746
      %4783 = vst [vmem:[%s265 + $0x48] sm:$0xff] %v4747
      %4784 = vst [vmem:[%s265 + $0x50] sm:$0xff] %v4748
      %4785 = vst [vmem:[%s265 + $0x58] sm:$0xff] %v4749
      %4786 = vst [vmem:[%s265 + $0x60] sm:$0xff] %v4750
      %4787 = vst [vmem:[%s265 + $0x68] sm:$0xff] %v4751
      %4788 = vst [vmem:[%s265 + $0x70] sm:$0xff] %v4752
      %4789 = vst [vmem:[%s265 + $0x78] sm:$0xff] %v4753
      %4790 = vst [vmem:[%s265 + $0x80] sm:$0xff] %v4754
      %4791 = vst [vmem:[%s265 + $0x88] sm:$0xff] %v4755
      %4792 = vst [vmem:[%s265 + $0x90] sm:$0xff] %v4756
      %4793 = vst [vmem:[%s265 + $0x98] sm:$0xff] %v4757
      %4794 = vst [vmem:[%s265 + $0xa0] sm:$0xff] %v4758
      %4795 = vst [vmem:[%s265 + $0xa8] sm:$0xff] %v4759
      %4796 = vst [vmem:[%s265 + $0xb0] sm:$0xff] %v4760
      %4797 = vst [vmem:[%s265 + $0xb8] sm:$0xff] %v4761
      %4798 = vst [vmem:[%s265 + $0xc0] sm:$0xff] %v4762
      %4799 = vst [vmem:[%s265 + $0xc8] sm:$0xff] %v4763
      %4800 = vst [vmem:[%s265 + $0xd0] sm:$0xff] %v4764
      %4801 = vst [vmem:[%s265 + $0xd8] sm:$0xff] %v4765
      %4802 = vst [vmem:[%s265 + $0xe0] sm:$0xff] %v4766
      %4803 = vst [vmem:[%s265 + $0xe8] sm:$0xff] %v4767
      %4804 = vst [vmem:[%s265 + $0xf0] sm:$0xff] %v4768
      %4805 = vst [vmem:[%s265 + $0xf8] sm:$0xff] %v4769
      %4806 = vst [vmem:[%s265 + $0x100] sm:$0xff] %v4770
      %4807 = vst [vmem:[%s265 + $0x108] sm:$0xff] %v4771
      %4808 = vst [vmem:[%s265 + $0x110] sm:$0xff] %v4772
      %4809 = vst [vmem:[%s265 + $0x118] sm:$0xff] %v4773
      %p4810 = scmp.lt.s32.totalorder %s19, 1
      %s4811 = scalar_select %p4810, %s19, 1
      %p4812 = scmp.lt.s32.totalorder %s20, 0
      %s4813 = scalar_select %p4812, %s20, 0
      %s4814 = smul.addr %s4811, 36
      %s4815 = sadd.s32 %s4813, %s4814
      %s4816 = smul.addr %s4815, 8
      %s4817 = scalar_lea.vmem %s4, %s4816
      // Predicated region
      $region37: #{basic_block_forward.3} parent=35 // pred_check
        %p4818 = pneg %p148
      $region38: #{basic_block_forward.3} parent=35 // pred_check_branch
        %4820 = sbr.rel (%p4818) target = $region40
      $region39: #{basic_block_forward.3} parent=35 // pred_region
        _
      $region40: #{basic_block_forward.3} parent=35 // pred_fallthru
        _
    $region36: #{basic_block_forward.3} parent=5 // pred_fallthru
      _
    %p4821 = scmp.le.s32.totalorder 2, %s10
    // Predicated region
    $region41: #{basic_block_forward.3} parent=5 // pred_check
      %p4822 = pneg %p4821
    $region42: #{basic_block_forward.3} parent=5 // pred_check_branch
      %4824 = sbr.rel (%p4822) target = $region44
    $region43: #{basic_block_forward.3} parent=5 // pred_region
      %s4825 = ssub.s32 %s10, 2
      // Predicated region
      $region45: #{basic_block_forward.3} parent=43 // pred_check
        %p4826 = pneg %p154
      $region46: #{basic_block_forward.3} parent=43 // pred_check_branch
        %4828 = sbr.rel (%p4826) target = $region48
      $region47: #{basic_block_forward.3} parent=43 // pred_region
        %p4829 = scmp.lt.s32.totalorder %s21, 1
        %s4830 = scalar_select %p4829, %s21, 1
        %p4831 = scmp.lt.s32.totalorder %s22, 0
        %s4832 = scalar_select %p4831, %s22, 0
        %s4833 = smul.addr %s4830, 36
        %s4834 = sadd.s32 %s4832, %s4833
        %s4835 = smul.addr %s4834, 8
        %s4836 = scalar_lea.vmem %s4, %s4835
      $region48: #{basic_block_forward.3} parent=43 // pred_fallthru
        _
    $region44: #{basic_block_forward.3} parent=5 // pred_fallthru
      _
  $region6: #{basic_block_forward.3} parent=0 // loop_footer
    %s14 = sadd.s32 1, %s10
  $region7: #{basic_block_forward.3} parent=0 // loop_footer_branch
    %9 = sbr.rel target = $region3
  $region8: #{basic_block_forward.3} parent=0 // loop_exit
    _

</llo_original>
